<compile_context>
chip_gen: v7x
topology: tpu7x:2x2x1
jax: 0.10.0
libtpu: 0.0.40
codegen_flags: <defaults>
</compile_context>

<pallas_src>
import jax
import jax.numpy as jnp
from jax import lax
from jax.experimental import pallas as pl
from jax.experimental.pallas import tpu as pltpu


# ---------------------------------------------------------------------------
# Kernel factory: one grid step = bt examples; inner fori_loop over N-chunks.
# ---------------------------------------------------------------------------
def _build_kernel(bt, nc, n_chunks):
    f32 = jnp.float32

    def kernel(
        x_ref,                                                   # (bt, N, 3) f32
        sw1_ref, sb1_ref, sw2_ref, sb2_ref, sw3_ref, sb3_ref,    # STN convs 3->64->128->1024
        fw1_ref, fb1_ref, fw2_ref, fb2_ref, fw3_ref, fb3_ref,    # STN fcs 1024->512->256->9(pad128)
        w1_ref, b1_ref, w2_ref, b2_ref, w3_ref, b3_ref,          # feat convs (BN folded, eval)
        w4_ref, b4_ref, w5_ref, b5_ref,
        gfeat_ref, trans_ref,                                    # (1,bt,1024), (1,bt,128)
    ):
        def mm(a, w_ref, b_ref):
            # MXU matmul: bf16 weights, bf16-cast activations, f32 accumulation + f32 bias.
            return jnp.dot(a.astype(w_ref.dtype), w_ref[...],
                           preferred_element_type=f32) + b_ref[...]

        def per_example_max(h):
            # h: (bt*nc, C) -> per-example max over the chunk's points: (bt, C).
            parts = [jnp.max(h[bi * nc:(bi + 1) * nc, :], axis=0, keepdims=True)
                     for bi in range(bt)]
            return parts[0] if bt == 1 else jnp.concatenate(parts, axis=0)

        def conv1_over_chunk(off, row_triples, bias_ref):
            # K=3 conv done as 3 broadcast FMAs on the VPU (per example, since the feat
            # conv1 weight has the per-example 3x3 transform folded in).
            parts = []
            for bi in range(bt):
                r0, r1, r2 = row_triples[bi]                      # each (1, 64)
                xb = x_ref[bi, pl.ds(off, nc), :]                 # (nc, 3)
                parts.append(xb[:, 0:1] * r0 + xb[:, 1:2] * r1 + xb[:, 2:3] * r2)
            h = parts[0] if bt == 1 else jnp.concatenate(parts, axis=0)   # (bt*nc, 64)
            return jnp.maximum(h + bias_ref[...], 0.0)

        init = jnp.full((bt, 1024), -jnp.inf, f32)

        # ---------------- Pass 1: STN3d backbone 3->64->128->1024, chunked running max ----
        stn_rows = [(sw1_ref[0:1, :], sw1_ref[1:2, :], sw1_ref[2:3, :])] * bt

        def stn_chunk(c, acc):
            off = pl.multiple_of(c * nc, nc)
            h = conv1_over_chunk(off, stn_rows, sb1_ref)          # (bt*nc, 64)
            h = jnp.maximum(mm(h, sw2_ref, sb2_ref), 0.0)         # (bt*nc, 128)
            h = jnp.maximum(mm(h, sw3_ref, sb3_ref), 0.0)         # (bt*nc, 1024)
            return jnp.maximum(acc, per_example_max(h))

        pooled = lax.fori_loop(0, n_chunks, stn_chunk, init)      # (bt, 1024)

        # ---------------- STN3d head: fc 1024->512->256->9 (+identity folded into bias) ----
        f = jnp.maximum(mm(pooled, fw1_ref, fb1_ref), 0.0)        # (bt, 512)
        f = jnp.maximum(mm(f, fw2_ref, fb2_ref), 0.0)             # (bt, 256)
        t = mm(f, fw3_ref, fb3_ref)                               # (bt, 128); lanes 9..127 = 0
        trans_ref[0] = t                                          # lane-dense trans output

        # ------------- fold trans into conv1 (VPU): w1_eff[b,i,:] = sum_j t[b,3i+j]*w1[j,:] --
        w1e = []
        for i in range(3):
            w1e.append(t[:, 3 * i + 0:3 * i + 1] * w1_ref[0:1, :]
                       + t[:, 3 * i + 1:3 * i + 2] * w1_ref[1:2, :]
                       + t[:, 3 * i + 2:3 * i + 3] * w1_ref[2:3, :])        # (bt, 64)
        feat_rows = [(w1e[0][bi:bi + 1, :], w1e[1][bi:bi + 1, :], w1e[2][bi:bi + 1, :])
                     for bi in range(bt)]

        # ---------------- Pass 2: feat convs 3->64->64->64->128->1024, chunked running max --
        def feat_chunk(c, acc):
            off = pl.multiple_of(c * nc, nc)
            # relu((x @ trans) @ w1 + b1) == relu(x @ (trans @ w1) + b1)
            h = conv1_over_chunk(off, feat_rows, b1_ref)          # (bt*nc, 64)
            h = jnp.maximum(mm(h, w2_ref, b2_ref), 0.0)
            # (pointfeat = h here; unused because global_feat=True, feature_transform=False)
            h = jnp.maximum(mm(h, w3_ref, b3_ref), 0.0)
            h = jnp.maximum(mm(h, w4_ref, b4_ref), 0.0)
            h = mm(h, w5_ref, b5_ref)                             # no ReLU after bn5(conv5)
            return jnp.maximum(acc, per_example_max(h))

        gfeat_ref[0] = lax.fori_loop(0, n_chunks, feat_chunk, init)   # (bt, 1024)

    return kernel


def _pick_chunk(n, limit):
    """Largest divisor of n that is <= limit, preferring multiples of 8."""
    limit = max(1, min(n, limit))
    best, best8 = 1, None
    for c in range(1, limit + 1):
        if n % c == 0:
            best = c
            if c % 8 == 0:
                best8 = c
    return best8 if best8 is not None else best


def pointnetfeat_fused(x, kernel_weights, *, bt=None, nc=None):
    """x: (B, N, 3) f32. kernel_weights: flat tuple in kernel order.
    Returns (global_feat (B, 1024), trans (B, 3, 3))."""
    B, N, _ = x.shape
    bt = max(1, min(8 if bt is None else bt, B))                  # examples per grid step
    G = -(-B // bt)
    B_pad = G * bt
    if nc is None:
        nc = max(8, 1024 // bt)                                   # target ~1024 matmul rows/chunk
    nc = _pick_chunk(N, nc)
    n_chunks = N // nc
    if B_pad != B:
        x = jnp.concatenate([x, jnp.zeros((B_pad - B, N, 3), x.dtype)], axis=0)

    in_specs = [pl.BlockSpec((bt, N, 3), lambda g: (g, 0, 0))]
    # Weights/biases stay VMEM-resident across the whole batch grid (constant index maps).
    in_specs += [pl.BlockSpec(w.shape, lambda g: (0, 0)) for w in kernel_weights]

    gfeat, trans_pad = pl.pallas_call(
        _build_kernel(bt, nc, n_chunks),
        out_shape=(
            jax.ShapeDtypeStruct((G, bt, 1024), jnp.float32),
            jax.ShapeDtypeStruct((G, bt, 128), jnp.float32),
        ),
        grid_spec=pltpu.PrefetchScalarGridSpec(
            num_scalar_prefetch=0,
            grid=(G,),
            in_specs=in_specs,
            out_specs=[
                pl.BlockSpec((1, bt, 1024), lambda g: (g, 0, 0)),
                pl.BlockSpec((1, bt, 128), lambda g: (g, 0, 0)),
            ],
        ),
        compiler_params=pltpu.CompilerParams(
            dimension_semantics=("parallel",),
            vmem_limit_bytes=48 * 1024 * 1024,
        ),
    )(x, *kernel_weights)

    gfeat = gfeat.reshape(B_pad, 1024)[:B]
    trans = trans_pad.reshape(B_pad, 128)[:B, :9].reshape(B, 3, 3)
    return gfeat, trans


# ---------------------------------------------------------------------------
# Parameter setup (deterministic, synthetic), BN folding, bf16 packing, forward.
# ---------------------------------------------------------------------------
def _lin(key, cin, cout, scale=0.05):
    kw, kb = jax.random.split(key)
    w = scale * jax.random.normal(kw, (cin, cout), jnp.float32)
    b = scale * jax.random.normal(kb, (1, cout), jnp.float32)
    return w, b


def _bn_params(key, c):
    k1, k2, k3, k4 = jax.random.split(key, 4)
    gamma = 1.0 + 0.1 * jax.random.normal(k1, (c,), jnp.float32)
    beta = 0.1 * jax.random.normal(k2, (c,), jnp.float32)
    mean = 0.1 * jax.random.normal(k3, (c,), jnp.float32)
    var = 1.0 + 0.1 * jax.random.uniform(k4, (c,), jnp.float32)
    return gamma, beta, mean, var


def _fold_bn(w, b, bn, eps=1e-5):
    gamma, beta, mean, var = bn
    scale = gamma / jnp.sqrt(var + eps)
    return w * scale[None, :], b * scale[None, :] + (beta - mean * scale)[None, :]


def make_params(key):
    ks = jax.random.split(key, 16)
    params = {}
    # STN3d(k=3, use_bn=False): conv 3->64->128->1024, fc 1024->512->256->9.
    # NOTE: PyTorch zero-inits fc3; small nonzero values here so the learned-transform
    # path (fold into conv1) is numerically exercised by the test.
    params["stn"] = dict(
        c1=_lin(ks[0], 3, 64), c2=_lin(ks[1], 64, 128), c3=_lin(ks[2], 128, 1024),
        f1=_lin(ks[3], 1024, 512), f2=_lin(ks[4], 512, 256),
        f3=_lin(ks[5], 256, 9, scale=0.02),
    )
    # PointNetfeat convs (+ BN, eval mode, folded): 3->64->64->64->128->1024
    convs = [_lin(ks[6], 3, 64), _lin(ks[7], 64, 64), _lin(ks[8], 64, 64),
             _lin(ks[9], 64, 128), _lin(ks[10], 128, 1024)]
    bns = [_bn_params(ks[11], 64), _bn_params(ks[12], 64), _bn_params(ks[13], 64),
           _bn_params(ks[14], 128), _bn_params(ks[15], 1024)]
    params["feat"] = [_fold_bn(w, b, bn) for (w, b), bn in zip(convs, bns)]
    return params


def prepare_kernel_params(params):
    """Cast MXU weights to bf16, pad fc3 to 128 lanes, fold the 3x3 identity into fc3 bias."""
    bf16 = jnp.bfloat16
    stn = params["stn"]
    sw1, sb1 = stn["c1"]                       # K=3 layer -> VPU, keep f32
    sw2, sb2 = stn["c2"]
    sw3, sb3 = stn["c3"]
    fw1, fb1 = stn["f1"]
    fw2, fb2 = stn["f2"]
    fw3, fb3 = stn["f3"]
    fw3p = jnp.zeros((fw3.shape[0], 128), jnp.float32).at[:, :9].set(fw3)
    iden = jnp.eye(3, dtype=jnp.float32).reshape(1, 9)
    fb3p = jnp.zeros((1, 128), jnp.float32).at[:, :9].set(fb3 + iden)
    (w1, b1), (w2, b2), (w3, b3), (w4, b4), (w5, b5) = params["feat"]
    cast = lambda a: a.astype(bf16)
    return (
        sw1, sb1, cast(sw2), sb2, cast(sw3), sb3,
        cast(fw1), fb1, cast(fw2), fb2, cast(fw3p), fb3p,
        w1, b1, cast(w2), b2, cast(w3), b3, cast(w4), b4, cast(w5), b5,
    )


def pointnetfeat_forward(x_nchw, params, *, bt=None, nc=None):
    """x_nchw: (B, 1, N, 3) f32 (PyTorch NCHW). Returns (global_feat (B,1024), trans (B,3,3))."""
    x = x_nchw[:, 0, :, :]                                        # torch.squeeze(x) -> (B, N, 3)
    kernel_weights = prepare_kernel_params(params)
    return pointnetfeat_fused(x, kernel_weights, bt=bt, nc=nc)


# ---------------------------------------------------------------------------
# Pure-JAX reference with the same weight quantization (for correctness check).
# ---------------------------------------------------------------------------
def pointnetfeat_reference(x_nchw, kw):
    (sw1, sb1, sw2, sb2, sw3, sb3,
     fw1, fb1, fw2, fb2, fw3p, fb3p,
     w1, b1, w2, b2, w3, b3, w4, b4, w5, b5) = kw
    f32 = jnp.float32
    hi = lax.Precision.HIGHEST

    def mm(a, w):
        return jnp.dot(a.astype(w.dtype), w, preferred_element_type=f32, precision=hi)

    x = x_nchw[:, 0, :, :].astype(f32)
    B, N, _ = x.shape
    h = x.reshape(B * N, 3)
    h = jax.nn.relu(mm(h, sw1) + sb1)
    h = jax.nn.relu(mm(h, sw2) + sb2)
    h = jax.nn.relu(mm(h, sw3) + sb3)
    pooled = jnp.max(h.reshape(B, N, 1024), axis=1)
    f = jax.nn.relu(mm(pooled, fw1) + fb1)
    f = jax.nn.relu(mm(f, fw2) + fb2)
    t = mm(f, fw3p) + fb3p
    trans = t[:, :9].reshape(B, 3, 3)
    xt = jnp.einsum("bni,bij->bnj", x, trans, precision=hi).reshape(B * N, 3)
    h = jax.nn.relu(mm(xt, w1) + b1)
    h = jax.nn.relu(mm(h, w2) + b2)
    h = jax.nn.relu(mm(h, w3) + b3)
    h = jax.nn.relu(mm(h, w4) + b4)
    h = mm(h, w5) + b5
    gfeat = jnp.max(h.reshape(B, N, 1024), axis=1)
    return gfeat, trans


if __name__ == "__main__":
    key = jax.random.PRNGKey(0)
    k_param, k_x = jax.random.split(key)
    B, N = 4, 256                                                 # small test size
    params = make_params(k_param)
    x = jax.random.normal(k_x, (B, 1, N, 3), jnp.float32)

    # bt=2 examples per grid step -> grid=(2,); nc=128-point chunks -> 2 chunks per step,
    # exercising both the batch grid and the in-kernel running-max N-loop.
    gfeat, trans = pointnetfeat_forward(x, params, bt=2, nc=128)
    jax.block_until_ready((gfeat, trans))

    assert gfeat.shape == (B, 1024) and trans.shape == (B, 3, 3)
    assert bool(jnp.all(jnp.isfinite(gfeat))) and bool(jnp.all(jnp.isfinite(trans)))

    gfeat_want, trans_want = pointnetfeat_reference(x, prepare_kernel_params(params))
    assert bool(jnp.allclose(trans, trans_want, atol=1e-2, rtol=1e-2)), "trans mismatch"
    assert bool(jnp.allclose(gfeat, gfeat_want, atol=1e-2, rtol=1e-2)), "global feature mismatch"
    print("KERNEL_OK")
</pallas_src>

<mosaic_0001>
module attributes {stable_mosaic.version = 11 : i64} {
  func.func @kernel(%arg0: i32, %arg1: memref<2x256x3xf32, #tpu.memory_space<vmem>>, %arg2: memref<3x64xf32, #tpu.memory_space<vmem>>, %arg3: memref<1x64xf32, #tpu.memory_space<vmem>>, %arg4: memref<64x128xbf16, #tpu.memory_space<vmem>>, %arg5: memref<1x128xf32, #tpu.memory_space<vmem>>, %arg6: memref<128x1024xbf16, #tpu.memory_space<vmem>>, %arg7: memref<1x1024xf32, #tpu.memory_space<vmem>>, %arg8: memref<1024x512xbf16, #tpu.memory_space<vmem>>, %arg9: memref<1x512xf32, #tpu.memory_space<vmem>>, %arg10: memref<512x256xbf16, #tpu.memory_space<vmem>>, %arg11: memref<1x256xf32, #tpu.memory_space<vmem>>, %arg12: memref<256x128xbf16, #tpu.memory_space<vmem>>, %arg13: memref<1x128xf32, #tpu.memory_space<vmem>>, %arg14: memref<3x64xf32, #tpu.memory_space<vmem>>, %arg15: memref<1x64xf32, #tpu.memory_space<vmem>>, %arg16: memref<64x64xbf16, #tpu.memory_space<vmem>>, %arg17: memref<1x64xf32, #tpu.memory_space<vmem>>, %arg18: memref<64x64xbf16, #tpu.memory_space<vmem>>, %arg19: memref<1x64xf32, #tpu.memory_space<vmem>>, %arg20: memref<64x128xbf16, #tpu.memory_space<vmem>>, %arg21: memref<1x128xf32, #tpu.memory_space<vmem>>, %arg22: memref<128x1024xbf16, #tpu.memory_space<vmem>>, %arg23: memref<1x1024xf32, #tpu.memory_space<vmem>>, %arg24: memref<1x2x1024xf32, #tpu.memory_space<vmem>>, %arg25: memref<1x2x128xf32, #tpu.memory_space<vmem>>) attributes {dimension_semantics = [#tpu.dimension_semantics<parallel>], iteration_bounds = array<i64: 2>, scalar_prefetch = 0 : i64, scratch_operands = 0 : i64, tpu.core_type = #tpu.core_type<tc>, window_params = [{transform_indices = @transform_0, window_bounds = array<i64: 2, 256, 3>}, {pipeline_mode = #tpu.pipeline_mode<synchronous>, transform_indices = @transform_1, window_bounds = array<i64: 3, 64>}, {pipeline_mode = #tpu.pipeline_mode<synchronous>, transform_indices = @transform_2, window_bounds = array<i64: 1, 64>}, {pipeline_mode = #tpu.pipeline_mode<synchronous>, transform_indices = @transform_3, window_bounds = array<i64: 64, 128>}, {pipeline_mode = #tpu.pipeline_mode<synchronous>, transform_indices = @transform_4, window_bounds = array<i64: 1, 128>}, {pipeline_mode = #tpu.pipeline_mode<synchronous>, transform_indices = @transform_5, window_bounds = array<i64: 128, 1024>}, {pipeline_mode = #tpu.pipeline_mode<synchronous>, transform_indices = @transform_6, window_bounds = array<i64: 1, 1024>}, {pipeline_mode = #tpu.pipeline_mode<synchronous>, transform_indices = @transform_7, window_bounds = array<i64: 1024, 512>}, {pipeline_mode = #tpu.pipeline_mode<synchronous>, transform_indices = @transform_8, window_bounds = array<i64: 1, 512>}, {pipeline_mode = #tpu.pipeline_mode<synchronous>, transform_indices = @transform_9, window_bounds = array<i64: 512, 256>}, {pipeline_mode = #tpu.pipeline_mode<synchronous>, transform_indices = @transform_10, window_bounds = array<i64: 1, 256>}, {pipeline_mode = #tpu.pipeline_mode<synchronous>, transform_indices = @transform_11, window_bounds = array<i64: 256, 128>}, {pipeline_mode = #tpu.pipeline_mode<synchronous>, transform_indices = @transform_12, window_bounds = array<i64: 1, 128>}, {pipeline_mode = #tpu.pipeline_mode<synchronous>, transform_indices = @transform_13, window_bounds = array<i64: 3, 64>}, {pipeline_mode = #tpu.pipeline_mode<synchronous>, transform_indices = @transform_14, window_bounds = array<i64: 1, 64>}, {pipeline_mode = #tpu.pipeline_mode<synchronous>, transform_indices = @transform_15, window_bounds = array<i64: 64, 64>}, {pipeline_mode = #tpu.pipeline_mode<synchronous>, transform_indices = @transform_16, window_bounds = array<i64: 1, 64>}, {pipeline_mode = #tpu.pipeline_mode<synchronous>, transform_indices = @transform_17, window_bounds = array<i64: 64, 64>}, {pipeline_mode = #tpu.pipeline_mode<synchronous>, transform_indices = @transform_18, window_bounds = array<i64: 1, 64>}, {pipeline_mode = #tpu.pipeline_mode<synchronous>, transform_indices = @transform_19, window_bounds = array<i64: 64, 128>}, {pipeline_mode = #tpu.pipeline_mode<synchronous>, transform_indices = @transform_20, window_bounds = array<i64: 1, 128>}, {pipeline_mode = #tpu.pipeline_mode<synchronous>, transform_indices = @transform_21, window_bounds = array<i64: 128, 1024>}, {pipeline_mode = #tpu.pipeline_mode<synchronous>, transform_indices = @transform_22, window_bounds = array<i64: 1, 1024>}, {transform_indices = @transform_23, window_bounds = array<i64: 1, 2, 1024>}, {transform_indices = @transform_24, window_bounds = array<i64: 1, 2, 128>}]} {
    %cst = arith.constant 0xFF800000 : f32
    %0 = vector.broadcast %cst : f32 to vector<2x1024xf32>
    %c0 = arith.constant 0 : index
    %c0_0 = arith.constant 0 : index
    %1 = vector.load %arg2[%c0, %c0_0] : memref<3x64xf32, #tpu.memory_space<vmem>>, vector<1x64xf32>
    %c1 = arith.constant 1 : index
    %c0_1 = arith.constant 0 : index
    %2 = vector.load %arg2[%c1, %c0_1] : memref<3x64xf32, #tpu.memory_space<vmem>>, vector<1x64xf32>
    %c2 = arith.constant 2 : index
    %c0_2 = arith.constant 0 : index
    %3 = vector.load %arg2[%c2, %c0_2] : memref<3x64xf32, #tpu.memory_space<vmem>>, vector<1x64xf32>
    %c0_i32 = arith.constant 0 : i32
    %c2_i32 = arith.constant 2 : i32
    %4 = arith.addi %c0_i32, %c2_i32 : i32
    %c1_i32 = arith.constant 1 : i32
    %5 = scf.for %arg26 = %c0_i32 to %4 step %c1_i32 iter_args(%arg27 = %0) -> (vector<2x1024xf32>)  : i32 {
      %c128_i32 = arith.constant 128 : i32
      %93 = arith.muli %arg26, %c128_i32 : i32
      %94 = tpu.assume_multiple %93, 128 : i32
      %c0_49 = arith.constant 0 : index
      %95 = arith.index_cast %94 : i32 to index
      %c0_50 = arith.constant 0 : index
      %96 = vector.load %arg1[%c0_49, %95, %c0_50] : memref<2x256x3xf32, #tpu.memory_space<vmem>>, vector<1x128x3xf32>
      %97 = vector.shape_cast %96 : vector<1x128x3xf32> to vector<128x3xf32>
      %98 = vector.extract_strided_slice %97 {offsets = [0, 0], sizes = [128, 1], strides = [1, 1]} : vector<128x3xf32> to vector<128x1xf32>
      %99 = vector.broadcast %98 : vector<128x1xf32> to vector<128x64xf32>
      %100 = vector.broadcast %1 : vector<1x64xf32> to vector<128x64xf32>
      %101 = arith.mulf %99, %100 : vector<128x64xf32>
      %102 = vector.extract_strided_slice %97 {offsets = [0, 1], sizes = [128, 1], strides = [1, 1]} : vector<128x3xf32> to vector<128x1xf32>
      %103 = vector.broadcast %102 : vector<128x1xf32> to vector<128x64xf32>
      %104 = vector.broadcast %2 : vector<1x64xf32> to vector<128x64xf32>
      %105 = arith.mulf %103, %104 : vector<128x64xf32>
      %106 = arith.addf %101, %105 : vector<128x64xf32>
      %107 = vector.extract_strided_slice %97 {offsets = [0, 2], sizes = [128, 1], strides = [1, 1]} : vector<128x3xf32> to vector<128x1xf32>
      %108 = vector.broadcast %107 : vector<128x1xf32> to vector<128x64xf32>
      %109 = vector.broadcast %3 : vector<1x64xf32> to vector<128x64xf32>
      %110 = arith.mulf %108, %109 : vector<128x64xf32>
      %111 = arith.addf %106, %110 : vector<128x64xf32>
      %c1_51 = arith.constant 1 : index
      %112 = arith.index_cast %94 : i32 to index
      %c0_52 = arith.constant 0 : index
      %113 = vector.load %arg1[%c1_51, %112, %c0_52] : memref<2x256x3xf32, #tpu.memory_space<vmem>>, vector<1x128x3xf32>
      %114 = vector.shape_cast %113 : vector<1x128x3xf32> to vector<128x3xf32>
      %115 = vector.extract_strided_slice %114 {offsets = [0, 0], sizes = [128, 1], strides = [1, 1]} : vector<128x3xf32> to vector<128x1xf32>
      %116 = vector.broadcast %115 : vector<128x1xf32> to vector<128x64xf32>
      %117 = vector.broadcast %1 : vector<1x64xf32> to vector<128x64xf32>
      %118 = arith.mulf %116, %117 : vector<128x64xf32>
      %119 = vector.extract_strided_slice %114 {offsets = [0, 1], sizes = [128, 1], strides = [1, 1]} : vector<128x3xf32> to vector<128x1xf32>
      %120 = vector.broadcast %119 : vector<128x1xf32> to vector<128x64xf32>
      %121 = vector.broadcast %2 : vector<1x64xf32> to vector<128x64xf32>
      %122 = arith.mulf %120, %121 : vector<128x64xf32>
      %123 = arith.addf %118, %122 : vector<128x64xf32>
      %124 = vector.extract_strided_slice %114 {offsets = [0, 2], sizes = [128, 1], strides = [1, 1]} : vector<128x3xf32> to vector<128x1xf32>
      %125 = vector.broadcast %124 : vector<128x1xf32> to vector<128x64xf32>
      %126 = vector.broadcast %3 : vector<1x64xf32> to vector<128x64xf32>
      %127 = arith.mulf %125, %126 : vector<128x64xf32>
      %128 = arith.addf %123, %127 : vector<128x64xf32>
      %129 = tpu.concatenate %111, %128 in 0 : vector<128x64xf32>, vector<128x64xf32> -> vector<256x64xf32>
      %c0_53 = arith.constant 0 : index
      %c0_54 = arith.constant 0 : index
      %130 = vector.load %arg3[%c0_53, %c0_54] : memref<1x64xf32, #tpu.memory_space<vmem>>, vector<1x64xf32>
      %131 = vector.broadcast %130 : vector<1x64xf32> to vector<256x64xf32>
      %132 = arith.addf %129, %131 : vector<256x64xf32>
      %cst_55 = arith.constant 0.000000e+00 : f32
      %133 = vector.broadcast %cst_55 : f32 to vector<256x64xf32>
      %134 = arith.maximumf %132, %133 : vector<256x64xf32>
      %135 = arith.truncf %134 : vector<256x64xf32> to vector<256x64xbf16>
      %c0_56 = arith.constant 0 : index
      %c0_57 = arith.constant 0 : index
      %136 = vector.load %arg4[%c0_56, %c0_57] : memref<64x128xbf16, #tpu.memory_space<vmem>>, vector<64x128xbf16>
      %cst_58 = arith.constant dense<0.000000e+00> : vector<256x128xf32>
      %137 = tpu.matmul %135, %136, %cst_58 {dimension_numbers = #tpu.dot_dimension_numbers<[1], [0], [0], [1], [0, 0, 1, 1], [], []>} : vector<256x64xbf16>, vector<64x128xbf16>, vector<256x128xf32> -> vector<256x128xf32>
      %c0_59 = arith.constant 0 : index
      %c0_60 = arith.constant 0 : index
      %138 = vector.load %arg5[%c0_59, %c0_60] : memref<1x128xf32, #tpu.memory_space<vmem>>, vector<1x128xf32>
      %139 = vector.broadcast %138 : vector<1x128xf32> to vector<256x128xf32>
      %140 = arith.addf %137, %139 : vector<256x128xf32>
      %cst_61 = arith.constant 0.000000e+00 : f32
      %141 = vector.broadcast %cst_61 : f32 to vector<256x128xf32>
      %142 = arith.maximumf %140, %141 : vector<256x128xf32>
      %143 = arith.truncf %142 : vector<256x128xf32> to vector<256x128xbf16>
      %c0_62 = arith.constant 0 : index
      %c0_63 = arith.constant 0 : index
      %144 = vector.load %arg6[%c0_62, %c0_63] : memref<128x1024xbf16, #tpu.memory_space<vmem>>, vector<128x1024xbf16>
      %cst_64 = arith.constant dense<0.000000e+00> : vector<256x1024xf32>
      %145 = tpu.matmul %143, %144, %cst_64 {dimension_numbers = #tpu.dot_dimension_numbers<[1], [0], [0], [1], [0, 0, 1, 1], [], []>} : vector<256x128xbf16>, vector<128x1024xbf16>, vector<256x1024xf32> -> vector<256x1024xf32>
      %c0_65 = arith.constant 0 : index
      %c0_66 = arith.constant 0 : index
      %146 = vector.load %arg7[%c0_65, %c0_66] : memref<1x1024xf32, #tpu.memory_space<vmem>>, vector<1x1024xf32>
      %147 = vector.broadcast %146 : vector<1x1024xf32> to vector<256x1024xf32>
      %148 = arith.addf %145, %147 : vector<256x1024xf32>
      %cst_67 = arith.constant 0.000000e+00 : f32
      %149 = vector.broadcast %cst_67 : f32 to vector<256x1024xf32>
      %150 = arith.maximumf %148, %149 : vector<256x1024xf32>
      %151 = vector.extract_strided_slice %150 {offsets = [0, 0], sizes = [128, 1024], strides = [1, 1]} : vector<256x1024xf32> to vector<128x1024xf32>
      %cst_68 = arith.constant dense<0xFF800000> : vector<1024xf32>
      %152 = vector.multi_reduction <maximumf>, %151, %cst_68 [0] : vector<128x1024xf32> to vector<1024xf32>
      %153 = vector.shape_cast %152 : vector<1024xf32> to vector<1x1024xf32>
      %154 = vector.extract_strided_slice %150 {offsets = [128, 0], sizes = [128, 1024], strides = [1, 1]} : vector<256x1024xf32> to vector<128x1024xf32>
      %cst_69 = arith.constant dense<0xFF800000> : vector<1024xf32>
      %155 = vector.multi_reduction <maximumf>, %154, %cst_69 [0] : vector<128x1024xf32> to vector<1024xf32>
      %156 = vector.shape_cast %155 : vector<1024xf32> to vector<1x1024xf32>
      %157 = tpu.concatenate %153, %156 in 0 : vector<1x1024xf32>, vector<1x1024xf32> -> vector<2x1024xf32>
      %158 = arith.maximumf %arg27, %157 : vector<2x1024xf32>
      scf.yield %158 : vector<2x1024xf32>
    }
    %c2_i32_3 = arith.constant 2 : i32
    %6 = arith.truncf %5 : vector<2x1024xf32> to vector<2x1024xbf16>
    %c0_4 = arith.constant 0 : index
    %c0_5 = arith.constant 0 : index
    %7 = vector.load %arg8[%c0_4, %c0_5] : memref<1024x512xbf16, #tpu.memory_space<vmem>>, vector<1024x512xbf16>
    %cst_6 = arith.constant dense<0.000000e+00> : vector<2x512xf32>
    %8 = tpu.matmul %6, %7, %cst_6 {dimension_numbers = #tpu.dot_dimension_numbers<[1], [0], [0], [1], [0, 0, 1, 1], [], []>} : vector<2x1024xbf16>, vector<1024x512xbf16>, vector<2x512xf32> -> vector<2x512xf32>
    %c0_7 = arith.constant 0 : index
    %c0_8 = arith.constant 0 : index
    %9 = vector.load %arg9[%c0_7, %c0_8] : memref<1x512xf32, #tpu.memory_space<vmem>>, vector<1x512xf32>
    %10 = vector.broadcast %9 : vector<1x512xf32> to vector<2x512xf32>
    %11 = arith.addf %8, %10 : vector<2x512xf32>
    %cst_9 = arith.constant 0.000000e+00 : f32
    %12 = vector.broadcast %cst_9 : f32 to vector<2x512xf32>
    %13 = arith.maximumf %11, %12 : vector<2x512xf32>
    %14 = arith.truncf %13 : vector<2x512xf32> to vector<2x512xbf16>
    %c0_10 = arith.constant 0 : index
    %c0_11 = arith.constant 0 : index
    %15 = vector.load %arg10[%c0_10, %c0_11] : memref<512x256xbf16, #tpu.memory_space<vmem>>, vector<512x256xbf16>
    %cst_12 = arith.constant dense<0.000000e+00> : vector<2x256xf32>
    %16 = tpu.matmul %14, %15, %cst_12 {dimension_numbers = #tpu.dot_dimension_numbers<[1], [0], [0], [1], [0, 0, 1, 1], [], []>} : vector<2x512xbf16>, vector<512x256xbf16>, vector<2x256xf32> -> vector<2x256xf32>
    %c0_13 = arith.constant 0 : index
    %c0_14 = arith.constant 0 : index
    %17 = vector.load %arg11[%c0_13, %c0_14] : memref<1x256xf32, #tpu.memory_space<vmem>>, vector<1x256xf32>
    %18 = vector.broadcast %17 : vector<1x256xf32> to vector<2x256xf32>
    %19 = arith.addf %16, %18 : vector<2x256xf32>
    %cst_15 = arith.constant 0.000000e+00 : f32
    %20 = vector.broadcast %cst_15 : f32 to vector<2x256xf32>
    %21 = arith.maximumf %19, %20 : vector<2x256xf32>
    %22 = arith.truncf %21 : vector<2x256xf32> to vector<2x256xbf16>
    %c0_16 = arith.constant 0 : index
    %c0_17 = arith.constant 0 : index
    %23 = vector.load %arg12[%c0_16, %c0_17] : memref<256x128xbf16, #tpu.memory_space<vmem>>, vector<256x128xbf16>
    %cst_18 = arith.constant dense<0.000000e+00> : vector<2x128xf32>
    %24 = tpu.matmul %22, %23, %cst_18 {dimension_numbers = #tpu.dot_dimension_numbers<[1], [0], [0], [1], [0, 0, 1, 1], [], []>} : vector<2x256xbf16>, vector<256x128xbf16>, vector<2x128xf32> -> vector<2x128xf32>
    %c0_19 = arith.constant 0 : index
    %c0_20 = arith.constant 0 : index
    %25 = vector.load %arg13[%c0_19, %c0_20] : memref<1x128xf32, #tpu.memory_space<vmem>>, vector<1x128xf32>
    %26 = vector.broadcast %25 : vector<1x128xf32> to vector<2x128xf32>
    %27 = arith.addf %24, %26 : vector<2x128xf32>
    %c0_21 = arith.constant 0 : index
    %c0_22 = arith.constant 0 : index
    %c0_23 = arith.constant 0 : index
    %28 = vector.load %arg25[%c0_21, %c0_22, %c0_23] : memref<1x2x128xf32, #tpu.memory_space<vmem>>, vector<1x2x128xf32>
    %29 = vector.shape_cast %28 : vector<1x2x128xf32> to vector<2x128xf32>
    %30 = vector.shape_cast %27 : vector<2x128xf32> to vector<1x2x128xf32>
    tpu.vector_store %arg25[%c0_21, %c0_22, %c0_23], %30 {strides = array<i32>} : memref<1x2x128xf32, #tpu.memory_space<vmem>>, vector<1x2x128xf32>,
    %31 = vector.extract_strided_slice %27 {offsets = [0, 0], sizes = [2, 1], strides = [1, 1]} : vector<2x128xf32> to vector<2x1xf32>
    %c0_24 = arith.constant 0 : index
    %c0_25 = arith.constant 0 : index
    %32 = vector.load %arg14[%c0_24, %c0_25] : memref<3x64xf32, #tpu.memory_space<vmem>>, vector<1x64xf32>
    %33 = vector.broadcast %31 : vector<2x1xf32> to vector<2x64xf32>
    %34 = vector.broadcast %32 : vector<1x64xf32> to vector<2x64xf32>
    %35 = arith.mulf %33, %34 : vector<2x64xf32>
    %36 = vector.extract_strided_slice %27 {offsets = [0, 1], sizes = [2, 1], strides = [1, 1]} : vector<2x128xf32> to vector<2x1xf32>
    %c1_26 = arith.constant 1 : index
    %c0_27 = arith.constant 0 : index
    %37 = vector.load %arg14[%c1_26, %c0_27] : memref<3x64xf32, #tpu.memory_space<vmem>>, vector<1x64xf32>
    %38 = vector.broadcast %36 : vector<2x1xf32> to vector<2x64xf32>
    %39 = vector.broadcast %37 : vector<1x64xf32> to vector<2x64xf32>
    %40 = arith.mulf %38, %39 : vector<2x64xf32>
    %41 = arith.addf %35, %40 : vector<2x64xf32>
    %42 = vector.extract_strided_slice %27 {offsets = [0, 2], sizes = [2, 1], strides = [1, 1]} : vector<2x128xf32> to vector<2x1xf32>
    %c2_28 = arith.constant 2 : index
    %c0_29 = arith.constant 0 : index
    %43 = vector.load %arg14[%c2_28, %c0_29] : memref<3x64xf32, #tpu.memory_space<vmem>>, vector<1x64xf32>
    %44 = vector.broadcast %42 : vector<2x1xf32> to vector<2x64xf32>
    %45 = vector.broadcast %43 : vector<1x64xf32> to vector<2x64xf32>
    %46 = arith.mulf %44, %45 : vector<2x64xf32>
    %47 = arith.addf %41, %46 : vector<2x64xf32>
    %48 = vector.extract_strided_slice %27 {offsets = [0, 3], sizes = [2, 1], strides = [1, 1]} : vector<2x128xf32> to vector<2x1xf32>
    %c0_30 = arith.constant 0 : index
    %c0_31 = arith.constant 0 : index
    %49 = vector.load %arg14[%c0_30, %c0_31] : memref<3x64xf32, #tpu.memory_space<vmem>>, vector<1x64xf32>
    %50 = vector.broadcast %48 : vector<2x1xf32> to vector<2x64xf32>
    %51 = vector.broadcast %49 : vector<1x64xf32> to vector<2x64xf32>
    %52 = arith.mulf %50, %51 : vector<2x64xf32>
    %53 = vector.extract_strided_slice %27 {offsets = [0, 4], sizes = [2, 1], strides = [1, 1]} : vector<2x128xf32> to vector<2x1xf32>
    %c1_32 = arith.constant 1 : index
    %c0_33 = arith.constant 0 : index
    %54 = vector.load %arg14[%c1_32, %c0_33] : memref<3x64xf32, #tpu.memory_space<vmem>>, vector<1x64xf32>
    %55 = vector.broadcast %53 : vector<2x1xf32> to vector<2x64xf32>
    %56 = vector.broadcast %54 : vector<1x64xf32> to vector<2x64xf32>
    %57 = arith.mulf %55, %56 : vector<2x64xf32>
    %58 = arith.addf %52, %57 : vector<2x64xf32>
    %59 = vector.extract_strided_slice %27 {offsets = [0, 5], sizes = [2, 1], strides = [1, 1]} : vector<2x128xf32> to vector<2x1xf32>
    %c2_34 = arith.constant 2 : index
    %c0_35 = arith.constant 0 : index
    %60 = vector.load %arg14[%c2_34, %c0_35] : memref<3x64xf32, #tpu.memory_space<vmem>>, vector<1x64xf32>
    %61 = vector.broadcast %59 : vector<2x1xf32> to vector<2x64xf32>
    %62 = vector.broadcast %60 : vector<1x64xf32> to vector<2x64xf32>
    %63 = arith.mulf %61, %62 : vector<2x64xf32>
    %64 = arith.addf %58, %63 : vector<2x64xf32>
    %65 = vector.extract_strided_slice %27 {offsets = [0, 6], sizes = [2, 1], strides = [1, 1]} : vector<2x128xf32> to vector<2x1xf32>
    %c0_36 = arith.constant 0 : index
    %c0_37 = arith.constant 0 : index
    %66 = vector.load %arg14[%c0_36, %c0_37] : memref<3x64xf32, #tpu.memory_space<vmem>>, vector<1x64xf32>
    %67 = vector.broadcast %65 : vector<2x1xf32> to vector<2x64xf32>
    %68 = vector.broadcast %66 : vector<1x64xf32> to vector<2x64xf32>
    %69 = arith.mulf %67, %68 : vector<2x64xf32>
    %70 = vector.extract_strided_slice %27 {offsets = [0, 7], sizes = [2, 1], strides = [1, 1]} : vector<2x128xf32> to vector<2x1xf32>
    %c1_38 = arith.constant 1 : index
    %c0_39 = arith.constant 0 : index
    %71 = vector.load %arg14[%c1_38, %c0_39] : memref<3x64xf32, #tpu.memory_space<vmem>>, vector<1x64xf32>
    %72 = vector.broadcast %70 : vector<2x1xf32> to vector<2x64xf32>
    %73 = vector.broadcast %71 : vector<1x64xf32> to vector<2x64xf32>
    %74 = arith.mulf %72, %73 : vector<2x64xf32>
    %75 = arith.addf %69, %74 : vector<2x64xf32>
    %76 = vector.extract_strided_slice %27 {offsets = [0, 8], sizes = [2, 1], strides = [1, 1]} : vector<2x128xf32> to vector<2x1xf32>
    %c2_40 = arith.constant 2 : index
    %c0_41 = arith.constant 0 : index
    %77 = vector.load %arg14[%c2_40, %c0_41] : memref<3x64xf32, #tpu.memory_space<vmem>>, vector<1x64xf32>
    %78 = vector.broadcast %76 : vector<2x1xf32> to vector<2x64xf32>
    %79 = vector.broadcast %77 : vector<1x64xf32> to vector<2x64xf32>
    %80 = arith.mulf %78, %79 : vector<2x64xf32>
    %81 = arith.addf %75, %80 : vector<2x64xf32>
    %82 = vector.extract_strided_slice %47 {offsets = [0, 0], sizes = [1, 64], strides = [1, 1]} : vector<2x64xf32> to vector<1x64xf32>
    %83 = vector.extract_strided_slice %64 {offsets = [0, 0], sizes = [1, 64], strides = [1, 1]} : vector<2x64xf32> to vector<1x64xf32>
    %84 = vector.extract_strided_slice %81 {offsets = [0, 0], sizes = [1, 64], strides = [1, 1]} : vector<2x64xf32> to vector<1x64xf32>
    %85 = vector.extract_strided_slice %47 {offsets = [1, 0], sizes = [1, 64], strides = [1, 1]} : vector<2x64xf32> to vector<1x64xf32>
    %86 = vector.extract_strided_slice %64 {offsets = [1, 0], sizes = [1, 64], strides = [1, 1]} : vector<2x64xf32> to vector<1x64xf32>
    %87 = vector.extract_strided_slice %81 {offsets = [1, 0], sizes = [1, 64], strides = [1, 1]} : vector<2x64xf32> to vector<1x64xf32>
    %c0_i32_42 = arith.constant 0 : i32
    %c2_i32_43 = arith.constant 2 : i32
    %88 = arith.addi %c0_i32_42, %c2_i32_43 : i32
    %c1_i32_44 = arith.constant 1 : i32
    %89 = scf.for %arg26 = %c0_i32_42 to %88 step %c1_i32_44 iter_args(%arg27 = %0) -> (vector<2x1024xf32>)  : i32 {
      %c128_i32 = arith.constant 128 : i32
      %93 = arith.muli %arg26, %c128_i32 : i32
      %94 = tpu.assume_multiple %93, 128 : i32
      %c0_49 = arith.constant 0 : index
      %95 = arith.index_cast %94 : i32 to index
      %c0_50 = arith.constant 0 : index
      %96 = vector.load %arg1[%c0_49, %95, %c0_50] : memref<2x256x3xf32, #tpu.memory_space<vmem>>, vector<1x128x3xf32>
      %97 = vector.shape_cast %96 : vector<1x128x3xf32> to vector<128x3xf32>
      %98 = vector.extract_strided_slice %97 {offsets = [0, 0], sizes = [128, 1], strides = [1, 1]} : vector<128x3xf32> to vector<128x1xf32>
      %99 = vector.broadcast %98 : vector<128x1xf32> to vector<128x64xf32>
      %100 = vector.broadcast %82 : vector<1x64xf32> to vector<128x64xf32>
      %101 = arith.mulf %99, %100 : vector<128x64xf32>
      %102 = vector.extract_strided_slice %97 {offsets = [0, 1], sizes = [128, 1], strides = [1, 1]} : vector<128x3xf32> to vector<128x1xf32>
      %103 = vector.broadcast %102 : vector<128x1xf32> to vector<128x64xf32>
      %104 = vector.broadcast %83 : vector<1x64xf32> to vector<128x64xf32>
      %105 = arith.mulf %103, %104 : vector<128x64xf32>
      %106 = arith.addf %101, %105 : vector<128x64xf32>
      %107 = vector.extract_strided_slice %97 {offsets = [0, 2], sizes = [128, 1], strides = [1, 1]} : vector<128x3xf32> to vector<128x1xf32>
      %108 = vector.broadcast %107 : vector<128x1xf32> to vector<128x64xf32>
      %109 = vector.broadcast %84 : vector<1x64xf32> to vector<128x64xf32>
      %110 = arith.mulf %108, %109 : vector<128x64xf32>
      %111 = arith.addf %106, %110 : vector<128x64xf32>
      %c1_51 = arith.constant 1 : index
      %112 = arith.index_cast %94 : i32 to index
      %c0_52 = arith.constant 0 : index
      %113 = vector.load %arg1[%c1_51, %112, %c0_52] : memref<2x256x3xf32, #tpu.memory_space<vmem>>, vector<1x128x3xf32>
      %114 = vector.shape_cast %113 : vector<1x128x3xf32> to vector<128x3xf32>
      %115 = vector.extract_strided_slice %114 {offsets = [0, 0], sizes = [128, 1], strides = [1, 1]} : vector<128x3xf32> to vector<128x1xf32>
      %116 = vector.broadcast %115 : vector<128x1xf32> to vector<128x64xf32>
      %117 = vector.broadcast %85 : vector<1x64xf32> to vector<128x64xf32>
      %118 = arith.mulf %116, %117 : vector<128x64xf32>
      %119 = vector.extract_strided_slice %114 {offsets = [0, 1], sizes = [128, 1], strides = [1, 1]} : vector<128x3xf32> to vector<128x1xf32>
      %120 = vector.broadcast %119 : vector<128x1xf32> to vector<128x64xf32>
      %121 = vector.broadcast %86 : vector<1x64xf32> to vector<128x64xf32>
      %122 = arith.mulf %120, %121 : vector<128x64xf32>
      %123 = arith.addf %118, %122 : vector<128x64xf32>
      %124 = vector.extract_strided_slice %114 {offsets = [0, 2], sizes = [128, 1], strides = [1, 1]} : vector<128x3xf32> to vector<128x1xf32>
      %125 = vector.broadcast %124 : vector<128x1xf32> to vector<128x64xf32>
      %126 = vector.broadcast %87 : vector<1x64xf32> to vector<128x64xf32>
      %127 = arith.mulf %125, %126 : vector<128x64xf32>
      %128 = arith.addf %123, %127 : vector<128x64xf32>
      %129 = tpu.concatenate %111, %128 in 0 : vector<128x64xf32>, vector<128x64xf32> -> vector<256x64xf32>
      %c0_53 = arith.constant 0 : index
      %c0_54 = arith.constant 0 : index
      %130 = vector.load %arg15[%c0_53, %c0_54] : memref<1x64xf32, #tpu.memory_space<vmem>>, vector<1x64xf32>
      %131 = vector.broadcast %130 : vector<1x64xf32> to vector<256x64xf32>
      %132 = arith.addf %129, %131 : vector<256x64xf32>
      %cst_55 = arith.constant 0.000000e+00 : f32
      %133 = vector.broadcast %cst_55 : f32 to vector<256x64xf32>
      %134 = arith.maximumf %132, %133 : vector<256x64xf32>
      %135 = arith.truncf %134 : vector<256x64xf32> to vector<256x64xbf16>
      %c0_56 = arith.constant 0 : index
      %c0_57 = arith.constant 0 : index
      %136 = vector.load %arg16[%c0_56, %c0_57] : memref<64x64xbf16, #tpu.memory_space<vmem>>, vector<64x64xbf16>
      %cst_58 = arith.constant dense<0.000000e+00> : vector<256x64xf32>
      %137 = tpu.matmul %135, %136, %cst_58 {dimension_numbers = #tpu.dot_dimension_numbers<[1], [0], [0], [1], [0, 0, 1, 1], [], []>} : vector<256x64xbf16>, vector<64x64xbf16>, vector<256x64xf32> -> vector<256x64xf32>
      %c0_59 = arith.constant 0 : index
      %c0_60 = arith.constant 0 : index
      %138 = vector.load %arg17[%c0_59, %c0_60] : memref<1x64xf32, #tpu.memory_space<vmem>>, vector<1x64xf32>
      %139 = vector.broadcast %138 : vector<1x64xf32> to vector<256x64xf32>
      %140 = arith.addf %137, %139 : vector<256x64xf32>
      %cst_61 = arith.constant 0.000000e+00 : f32
      %141 = vector.broadcast %cst_61 : f32 to vector<256x64xf32>
      %142 = arith.maximumf %140, %141 : vector<256x64xf32>
      %143 = arith.truncf %142 : vector<256x64xf32> to vector<256x64xbf16>
      %c0_62 = arith.constant 0 : index
      %c0_63 = arith.constant 0 : index
      %144 = vector.load %arg18[%c0_62, %c0_63] : memref<64x64xbf16, #tpu.memory_space<vmem>>, vector<64x64xbf16>
      %cst_64 = arith.constant dense<0.000000e+00> : vector<256x64xf32>
      %145 = tpu.matmul %143, %144, %cst_64 {dimension_numbers = #tpu.dot_dimension_numbers<[1], [0], [0], [1], [0, 0, 1, 1], [], []>} : vector<256x64xbf16>, vector<64x64xbf16>, vector<256x64xf32> -> vector<256x64xf32>
      %c0_65 = arith.constant 0 : index
      %c0_66 = arith.constant 0 : index
      %146 = vector.load %arg19[%c0_65, %c0_66] : memref<1x64xf32, #tpu.memory_space<vmem>>, vector<1x64xf32>
      %147 = vector.broadcast %146 : vector<1x64xf32> to vector<256x64xf32>
      %148 = arith.addf %145, %147 : vector<256x64xf32>
      %cst_67 = arith.constant 0.000000e+00 : f32
      %149 = vector.broadcast %cst_67 : f32 to vector<256x64xf32>
      %150 = arith.maximumf %148, %149 : vector<256x64xf32>
      %151 = arith.truncf %150 : vector<256x64xf32> to vector<256x64xbf16>
      %c0_68 = arith.constant 0 : index
      %c0_69 = arith.constant 0 : index
      %152 = vector.load %arg20[%c0_68, %c0_69] : memref<64x128xbf16, #tpu.memory_space<vmem>>, vector<64x128xbf16>
      %cst_70 = arith.constant dense<0.000000e+00> : vector<256x128xf32>
      %153 = tpu.matmul %151, %152, %cst_70 {dimension_numbers = #tpu.dot_dimension_numbers<[1], [0], [0], [1], [0, 0, 1, 1], [], []>} : vector<256x64xbf16>, vector<64x128xbf16>, vector<256x128xf32> -> vector<256x128xf32>
      %c0_71 = arith.constant 0 : index
      %c0_72 = arith.constant 0 : index
      %154 = vector.load %arg21[%c0_71, %c0_72] : memref<1x128xf32, #tpu.memory_space<vmem>>, vector<1x128xf32>
      %155 = vector.broadcast %154 : vector<1x128xf32> to vector<256x128xf32>
      %156 = arith.addf %153, %155 : vector<256x128xf32>
      %cst_73 = arith.constant 0.000000e+00 : f32
      %157 = vector.broadcast %cst_73 : f32 to vector<256x128xf32>
      %158 = arith.maximumf %156, %157 : vector<256x128xf32>
      %159 = arith.truncf %158 : vector<256x128xf32> to vector<256x128xbf16>
      %c0_74 = arith.constant 0 : index
      %c0_75 = arith.constant 0 : index
      %160 = vector.load %arg22[%c0_74, %c0_75] : memref<128x1024xbf16, #tpu.memory_space<vmem>>, vector<128x1024xbf16>
      %cst_76 = arith.constant dense<0.000000e+00> : vector<256x1024xf32>
      %161 = tpu.matmul %159, %160, %cst_76 {dimension_numbers = #tpu.dot_dimension_numbers<[1], [0], [0], [1], [0, 0, 1, 1], [], []>} : vector<256x128xbf16>, vector<128x1024xbf16>, vector<256x1024xf32> -> vector<256x1024xf32>
      %c0_77 = arith.constant 0 : index
      %c0_78 = arith.constant 0 : index
      %162 = vector.load %arg23[%c0_77, %c0_78] : memref<1x1024xf32, #tpu.memory_space<vmem>>, vector<1x1024xf32>
      %163 = vector.broadcast %162 : vector<1x1024xf32> to vector<256x1024xf32>
      %164 = arith.addf %161, %163 : vector<256x1024xf32>
      %165 = vector.extract_strided_slice %164 {offsets = [0, 0], sizes = [128, 1024], strides = [1, 1]} : vector<256x1024xf32> to vector<128x1024xf32>
      %cst_79 = arith.constant dense<0xFF800000> : vector<1024xf32>
      %166 = vector.multi_reduction <maximumf>, %165, %cst_79 [0] : vector<128x1024xf32> to vector<1024xf32>
      %167 = vector.shape_cast %166 : vector<1024xf32> to vector<1x1024xf32>
      %168 = vector.extract_strided_slice %164 {offsets = [128, 0], sizes = [128, 1024], strides = [1, 1]} : vector<256x1024xf32> to vector<128x1024xf32>
      %cst_80 = arith.constant dense<0xFF800000> : vector<1024xf32>
      %169 = vector.multi_reduction <maximumf>, %168, %cst_80 [0] : vector<128x1024xf32> to vector<1024xf32>
      %170 = vector.shape_cast %169 : vector<1024xf32> to vector<1x1024xf32>
      %171 = tpu.concatenate %167, %170 in 0 : vector<1x1024xf32>, vector<1x1024xf32> -> vector<2x1024xf32>
      %172 = arith.maximumf %arg27, %171 : vector<2x1024xf32>
      scf.yield %172 : vector<2x1024xf32>
    }
    %c2_i32_45 = arith.constant 2 : i32
    %c0_46 = arith.constant 0 : index
    %c0_47 = arith.constant 0 : index
    %c0_48 = arith.constant 0 : index
    %90 = vector.load %arg24[%c0_46, %c0_47, %c0_48] : memref<1x2x1024xf32, #tpu.memory_space<vmem>>, vector<1x2x1024xf32>
    %91 = vector.shape_cast %90 : vector<1x2x1024xf32> to vector<2x1024xf32>
    %92 = vector.shape_cast %89 : vector<2x1024xf32> to vector<1x2x1024xf32>
    tpu.vector_store %arg24[%c0_46, %c0_47, %c0_48], %92 {strides = array<i32>} : memref<1x2x1024xf32, #tpu.memory_space<vmem>>, vector<1x2x1024xf32>,
    return
  }
  func.func @transform_0(%arg0: i32) -> (i32, i32, i32) {
    %c0_i32 = arith.constant 0 : i32
    %c0_i32_0 = arith.constant 0 : i32
    %c0_i32_1 = arith.constant 0 : i32
    return %arg0, %c0_i32, %c0_i32_0 : i32, i32, i32
  }
  func.func @transform_1(%arg0: i32) -> (i32, i32) {
    %c0_i32 = arith.constant 0 : i32
    %c0_i32_0 = arith.constant 0 : i32
    %c0_i32_1 = arith.constant 0 : i32
    return %c0_i32, %c0_i32_0 : i32, i32
  }
  func.func @transform_2(%arg0: i32) -> (i32, i32) {
    %c0_i32 = arith.constant 0 : i32
    %c0_i32_0 = arith.constant 0 : i32
    %c0_i32_1 = arith.constant 0 : i32
    return %c0_i32, %c0_i32_0 : i32, i32
  }
  func.func @transform_3(%arg0: i32) -> (i32, i32) {
    %c0_i32 = arith.constant 0 : i32
    %c0_i32_0 = arith.constant 0 : i32
    %c0_i32_1 = arith.constant 0 : i32
    return %c0_i32, %c0_i32_0 : i32, i32
  }
  func.func @transform_4(%arg0: i32) -> (i32, i32) {
    %c0_i32 = arith.constant 0 : i32
    %c0_i32_0 = arith.constant 0 : i32
    %c0_i32_1 = arith.constant 0 : i32
    return %c0_i32, %c0_i32_0 : i32, i32
  }
  func.func @transform_5(%arg0: i32) -> (i32, i32) {
    %c0_i32 = arith.constant 0 : i32
    %c0_i32_0 = arith.constant 0 : i32
    %c0_i32_1 = arith.constant 0 : i32
    return %c0_i32, %c0_i32_0 : i32, i32
  }
  func.func @transform_6(%arg0: i32) -> (i32, i32) {
    %c0_i32 = arith.constant 0 : i32
    %c0_i32_0 = arith.constant 0 : i32
    %c0_i32_1 = arith.constant 0 : i32
    return %c0_i32, %c0_i32_0 : i32, i32
  }
  func.func @transform_7(%arg0: i32) -> (i32, i32) {
    %c0_i32 = arith.constant 0 : i32
    %c0_i32_0 = arith.constant 0 : i32
    %c0_i32_1 = arith.constant 0 : i32
    return %c0_i32, %c0_i32_0 : i32, i32
  }
  func.func @transform_8(%arg0: i32) -> (i32, i32) {
    %c0_i32 = arith.constant 0 : i32
    %c0_i32_0 = arith.constant 0 : i32
    %c0_i32_1 = arith.constant 0 : i32
    return %c0_i32, %c0_i32_0 : i32, i32
  }
  func.func @transform_9(%arg0: i32) -> (i32, i32) {
    %c0_i32 = arith.constant 0 : i32
    %c0_i32_0 = arith.constant 0 : i32
    %c0_i32_1 = arith.constant 0 : i32
    return %c0_i32, %c0_i32_0 : i32, i32
  }
  func.func @transform_10(%arg0: i32) -> (i32, i32) {
    %c0_i32 = arith.constant 0 : i32
    %c0_i32_0 = arith.constant 0 : i32
    %c0_i32_1 = arith.constant 0 : i32
    return %c0_i32, %c0_i32_0 : i32, i32
  }
  func.func @transform_11(%arg0: i32) -> (i32, i32) {
    %c0_i32 = arith.constant 0 : i32
    %c0_i32_0 = arith.constant 0 : i32
    %c0_i32_1 = arith.constant 0 : i32
    return %c0_i32, %c0_i32_0 : i32, i32
  }
  func.func @transform_12(%arg0: i32) -> (i32, i32) {
    %c0_i32 = arith.constant 0 : i32
    %c0_i32_0 = arith.constant 0 : i32
    %c0_i32_1 = arith.constant 0 : i32
    return %c0_i32, %c0_i32_0 : i32, i32
  }
  func.func @transform_13(%arg0: i32) -> (i32, i32) {
    %c0_i32 = arith.constant 0 : i32
    %c0_i32_0 = arith.constant 0 : i32
    %c0_i32_1 = arith.constant 0 : i32
    return %c0_i32, %c0_i32_0 : i32, i32
  }
  func.func @transform_14(%arg0: i32) -> (i32, i32) {
    %c0_i32 = arith.constant 0 : i32
    %c0_i32_0 = arith.constant 0 : i32
    %c0_i32_1 = arith.constant 0 : i32
    return %c0_i32, %c0_i32_0 : i32, i32
  }
  func.func @transform_15(%arg0: i32) -> (i32, i32) {
    %c0_i32 = arith.constant 0 : i32
    %c0_i32_0 = arith.constant 0 : i32
    %c0_i32_1 = arith.constant 0 : i32
    return %c0_i32, %c0_i32_0 : i32, i32
  }
  func.func @transform_16(%arg0: i32) -> (i32, i32) {
    %c0_i32 = arith.constant 0 : i32
    %c0_i32_0 = arith.constant 0 : i32
    %c0_i32_1 = arith.constant 0 : i32
    return %c0_i32, %c0_i32_0 : i32, i32
  }
  func.func @transform_17(%arg0: i32) -> (i32, i32) {
    %c0_i32 = arith.constant 0 : i32
    %c0_i32_0 = arith.constant 0 : i32
    %c0_i32_1 = arith.constant 0 : i32
    return %c0_i32, %c0_i32_0 : i32, i32
  }
  func.func @transform_18(%arg0: i32) -> (i32, i32) {
    %c0_i32 = arith.constant 0 : i32
    %c0_i32_0 = arith.constant 0 : i32
    %c0_i32_1 = arith.constant 0 : i32
    return %c0_i32, %c0_i32_0 : i32, i32
  }
  func.func @transform_19(%arg0: i32) -> (i32, i32) {
    %c0_i32 = arith.constant 0 : i32
    %c0_i32_0 = arith.constant 0 : i32
    %c0_i32_1 = arith.constant 0 : i32
    return %c0_i32, %c0_i32_0 : i32, i32
  }
  func.func @transform_20(%arg0: i32) -> (i32, i32) {
    %c0_i32 = arith.constant 0 : i32
    %c0_i32_0 = arith.constant 0 : i32
    %c0_i32_1 = arith.constant 0 : i32
    return %c0_i32, %c0_i32_0 : i32, i32
  }
  func.func @transform_21(%arg0: i32) -> (i32, i32) {
    %c0_i32 = arith.constant 0 : i32
    %c0_i32_0 = arith.constant 0 : i32
    %c0_i32_1 = arith.constant 0 : i32
    return %c0_i32, %c0_i32_0 : i32, i32
  }
  func.func @transform_22(%arg0: i32) -> (i32, i32) {
    %c0_i32 = arith.constant 0 : i32
    %c0_i32_0 = arith.constant 0 : i32
    %c0_i32_1 = arith.constant 0 : i32
    return %c0_i32, %c0_i32_0 : i32, i32
  }
  func.func @transform_23(%arg0: i32) -> (i32, i32, i32) {
    %c0_i32 = arith.constant 0 : i32
    %c0_i32_0 = arith.constant 0 : i32
    %c0_i32_1 = arith.constant 0 : i32
    return %arg0, %c0_i32, %c0_i32_0 : i32, i32, i32
  }
  func.func @transform_24(%arg0: i32) -> (i32, i32, i32) {
    %c0_i32 = arith.constant 0 : i32
    %c0_i32_0 = arith.constant 0 : i32
    %c0_i32_1 = arith.constant 0 : i32
    return %arg0, %c0_i32, %c0_i32_0 : i32, i32, i32
  }
}

</mosaic_0001>

<llo_original>
// kernel: tpu_custom_call.1
$region0: #{tpu_custom_call.1}
  #allocation0 [shape = 'u32[]', space=smem, size = 0x4, offset = 0x4, fixed_abs, tag = 'smem constant byte address 0x4 - core index']
  #allocation1 [shape = 'u32[144,128]{1,0:T(1,128)}', space=vmem, size = 0x12000, scoped, tag = 'internal scratch']
  %s0 = inlined_call_operand.vmem [shape: f32[4,256,3], index: 0, kind: input, shape index: {}]
  %s1 = inlined_call_operand.hbm [shape: f32[3,64], index: 1, kind: input, shape index: {}]
  %s2 = inlined_call_operand.vmem [shape: f32[1,64], index: 2, kind: input, shape index: {}]
  %s3 = inlined_call_operand.vmem [shape: bf16[64,128], index: 3, kind: input, shape index: {}]
  %s4 = inlined_call_operand.hbm [shape: f32[1,128], index: 4, kind: input, shape index: {}]
  %s5 = inlined_call_operand.vmem [shape: bf16[128,1024], index: 5, kind: input, shape index: {}]
  %s6 = inlined_call_operand.hbm [shape: f32[1,1024], index: 6, kind: input, shape index: {}]
  %s7 = inlined_call_operand.hbm [shape: bf16[1024,512], index: 7, kind: input, shape index: {}]
  %s8 = inlined_call_operand.vmem [shape: f32[1,512], index: 8, kind: input, shape index: {}]
  %s9 = inlined_call_operand.vmem [shape: bf16[512,256], index: 9, kind: input, shape index: {}]
  %s10 = inlined_call_operand.hbm [shape: f32[1,256], index: 10, kind: input, shape index: {}]
  %s11 = inlined_call_operand.hbm [shape: bf16[256,128], index: 11, kind: input, shape index: {}]
  %s12 = inlined_call_operand.hbm [shape: f32[1,128], index: 12, kind: input, shape index: {}]
  %s13 = inlined_call_operand.hbm [shape: f32[3,64], index: 13, kind: input, shape index: {}]
  %s14 = inlined_call_operand.hbm [shape: f32[1,64], index: 14, kind: input, shape index: {}]
  %s15 = inlined_call_operand.vmem [shape: bf16[64,64], index: 15, kind: input, shape index: {}]
  %s16 = inlined_call_operand.vmem [shape: f32[1,64], index: 16, kind: input, shape index: {}]
  %s17 = inlined_call_operand.hbm [shape: bf16[64,64], index: 17, kind: input, shape index: {}]
  %s18 = inlined_call_operand.vmem [shape: f32[1,64], index: 18, kind: input, shape index: {}]
  %s19 = inlined_call_operand.hbm [shape: bf16[64,128], index: 19, kind: input, shape index: {}]
  %s20 = inlined_call_operand.vmem [shape: f32[1,128], index: 20, kind: input, shape index: {}]
  %s21 = inlined_call_operand.hbm [shape: bf16[128,1024], index: 21, kind: input, shape index: {}]
  %s22 = inlined_call_operand.vmem [shape: f32[1,1024], index: 22, kind: input, shape index: {}]
  %s23 = inlined_call_operand.hbm [shape: f32[2,2,1024], index: 23, kind: output, shape index: {0}]
  %s24 = inlined_call_operand.hbm [shape: f32[2,2,128], index: 24, kind: output, shape index: {1}]
  %25 = xla_tuple %s23, %s24
  %s26 = sld [smem:[#allocation0]]
  $region195: #{tpu_custom_call.1} parent=0
    _
  %s28 = ssub.s32 1, %s26
  %s29 = scalar_select 0, %s28, %s26
  $region1: #{tpu_custom_call.1} parent=0
    #allocation2 [shape = 'u8[2048]{0}', space=vmem, size = 0x800, scoped, tag = 'input window, operand 1, single buffered']
    #allocation3 [shape = 's32[2]{0}', space=sflag, size = 0x8, scoped, tag = 'scoped memory for tpu_custom_call.1']
    #allocation4 [shape = 's32[2]{0}', space=sflag, size = 0x8, scoped, tag = 'scoped memory for tpu_custom_call.1']
    #allocation5 [shape = 'u8[512]{0}', space=vmem, size = 0x400, scoped, tag = 'input window, operand 4, single buffered']
    #allocation6 [shape = 's32[1]{0}', space=sflag, size = 0x4, scoped, tag = 'scoped memory for tpu_custom_call.1']
    #allocation7 [shape = 'u8[4096]{0}', space=vmem, size = 0x1000, scoped, tag = 'input window, operand 6, single buffered']
    #allocation8 [shape = 'u8[1048576]{0}', space=vmem, size = 0x100000, scoped, tag = 'input window, operand 7, single buffered']
    #allocation9 [shape = 's32[1]{0}', space=sflag, size = 0x4, scoped, tag = 'scoped memory for tpu_custom_call.1']
    #allocation10 [shape = 'u8[1024]{0}', space=vmem, size = 0x400, scoped, tag = 'input window, operand 10, single buffered']
    #allocation11 [shape = 'u8[65536]{0}', space=vmem, size = 0x10000, scoped, tag = 'input window, operand 11, single buffered']
    #allocation12 [shape = 's32[1]{0}', space=sflag, size = 0x4, scoped, tag = 'scoped memory for tpu_custom_call.1']
    #allocation13 [shape = 'u8[512]{0}', space=vmem, size = 0x400, scoped, tag = 'input window, operand 12, single buffered']
    #allocation14 [shape = 'u8[2048]{0}', space=vmem, size = 0x800, scoped, tag = 'input window, operand 13, single buffered']
    #allocation15 [shape = 's32[1]{0}', space=sflag, size = 0x4, scoped, tag = 'scoped memory for tpu_custom_call.1']
    #allocation16 [shape = 'u8[512]{0}', space=vmem, size = 0x400, scoped, tag = 'input window, operand 14, single buffered']
    #allocation17 [shape = 'u8[16384]{0}', space=vmem, size = 0x4000, scoped, tag = 'input window, operand 17, single buffered']
    #allocation18 [shape = 's32[1]{0}', space=sflag, size = 0x4, scoped, tag = 'scoped memory for tpu_custom_call.1']
    #allocation19 [shape = 'u8[16384]{0}', space=vmem, size = 0x4000, scoped, tag = 'input window, operand 19, single buffered']
    #allocation20 [shape = 'u8[262144]{0}', space=vmem, size = 0x40000, scoped, tag = 'input window, operand 21, single buffered']
    #allocation21 [shape = 's32[1]{0}', space=sflag, size = 0x4, scoped, tag = 'scoped memory for tpu_custom_call.1']
    #allocation22 [shape = 'u8[16384]{0}', space=vmem, size = 0x4000, scoped, tag = 'output window, operand 0']
    #allocation23 [shape = 'u8[2048]{0}', space=vmem, size = 0x800, scoped, tag = 'output window, operand 1']
    #allocation24 [shape = 's32[2]{0}', space=sflag, size = 0x8, scoped, tag = 'scoped memory for tpu_custom_call.1']
    %30 = vsyncpa [#allocation3], 0
    %31 = vsyncpa [#allocation6], 0
    %32 = vsyncpa [#allocation9], 0
    %33 = vsyncpa [#allocation12], 0
    %34 = vsyncpa [#allocation15], 0
    %35 = vsyncpa [#allocation18], 0
    %36 = vsyncpa [#allocation21], 0
    %37 = vsyncpa [#allocation4], 0
    %s38 = scalar_lea.sflag [#allocation4], 1
    %39 = vsyncpa %s38, 0
    %40 = vsyncpa [#allocation24], 0
    %s41 = scalar_lea.sflag [#allocation24], 1
    %42 = vsyncpa %s41, 0
    loop: start=0, step=1, limit=4
    $region2: #{tpu_custom_call.1} parent=1 // loop_pre_header
      _
    $region3: #{tpu_custom_call.1} parent=1 // loop_header
      %s44 = sphi 0, %s48
      %p45 = scmp.ge.s32.totalorder %s44, 4
      %s54 = sphi 0, %s56
      %s57 = sphi 0, %s54
      %s58 = sphi 0, %s57
      %s74 = sphi 0, %s58
      %s78 = sphi 0, %s78
      %s80 = sphi 0, %s78
      %s81 = sphi 0, %s80
      %s95 = sphi 0, %s81
      %s99 = sphi 0, %s99
      %s101 = sphi 0, %s99
      %s102 = sphi 0, %s101
      %s116 = sphi 0, %s102
      %s120 = sphi 0, %s120
      %s122 = sphi 0, %s120
      %s123 = sphi 0, %s122
      %s137 = sphi 0, %s123
      %s141 = sphi 0, %s141
      %s143 = sphi 0, %s141
      %s144 = sphi 0, %s143
      %s158 = sphi 0, %s144
      %s162 = sphi 0, %s162
      %s164 = sphi 0, %s162
      %s165 = sphi 0, %s164
      %s179 = sphi 0, %s165
      %s183 = sphi 0, %s183
      %s185 = sphi 0, %s183
      %s186 = sphi 0, %s185
      %s200 = sphi 0, %s186
      %s204 = sphi 0, %s204
      %s206 = sphi 0, %s204
      %s207 = sphi 0, %s206
      %s221 = sphi 0, %s207
      %s225 = sphi 0, %s225
      %s227 = sphi 0, %s225
      %s228 = sphi 0, %s227
      %s242 = sphi 0, %s228
      %s246 = sphi 0, %s246
      %s248 = sphi 0, %s246
      %s249 = sphi 0, %s248
      %s263 = sphi 0, %s249
      %s267 = sphi 0, %s267
      %s269 = sphi 0, %s267
      %s270 = sphi 0, %s269
      %s284 = sphi 0, %s270
      %s288 = sphi 0, %s288
      %s290 = sphi 0, %s288
      %s291 = sphi 0, %s290
      %s305 = sphi 0, %s291
      %s309 = sphi 0, %s309
      %s311 = sphi 0, %s309
      %s312 = sphi 0, %s311
      %s326 = sphi 0, %s312
      %s330 = sphi 0, %s330
      %s332 = sphi 0, %s330
      %s333 = sphi 0, %s332
      %s347 = sphi 0, %s333
      %s351 = sphi 0, %s351
      %s353 = sphi 0, %s351
      %s354 = sphi 0, %s353
      %s368 = sphi 0, %s354
      %s372 = sphi 0, %s372
      %s374 = sphi 0, %s372
      %s375 = sphi 0, %s374
      %s389 = sphi 0, %s375
      %s393 = sphi 0, %s393
      %s395 = sphi 0, %s393
      %s396 = sphi 0, %s395
      %s410 = sphi 0, %s396
      %s414 = sphi 0, %s414
      %s416 = sphi 0, %s414
      %s417 = sphi 0, %s416
      %s431 = sphi 0, %s417
      %s435 = sphi 0, %s435
      %s437 = sphi 0, %s435
      %s438 = sphi 0, %s437
      %s452 = sphi 0, %s438
      %s456 = sphi 0, %s456
      %s458 = sphi 0, %s456
      %s459 = sphi 0, %s458
      %s473 = sphi 0, %s459
      %s477 = sphi 0, %s477
      %s479 = sphi 0, %s477
      %s480 = sphi 0, %s479
      %s494 = sphi 0, %s480
      %s498 = sphi 0, %s498
      %s500 = sphi 0, %s498
      %s501 = sphi 0, %s500
      %s515 = sphi 0, %s501
      %s519 = sphi 0, %s519
      %s521 = sphi 0, %s519
      %s522 = sphi 0, %s521
      %s536 = sphi 0, %s522
      %s542 = sphi 0, %s544
      %s545 = sphi 0, %s542
      %s546 = sphi 0, %s545
      %s562 = sphi 0, %s546
      %s568 = sphi 0, %s570
      %s571 = sphi 0, %s568
      %s572 = sphi 0, %s571
      %s588 = sphi 0, %s572
    $region4: #{tpu_custom_call.1} parent=1 // loop_header_branch
      %47 = sbr.rel (%p45) target = $region8
    $region5: #{tpu_custom_call.1} parent=1 // loop_body
      %s49 = ssub.s32 %s44, 1
      %s50 = ssub.s32 %s44, 2
      %s51 = sadd.s32 %s44, 1
      %s52 = ssub.s32 %s44, %s51
      %p53 = scmp.eq.s32.totalorder %s52, 0
      %s55 = sadd.s32 %s54, 1
      %s56 = scalar_select %p53, %s54, %s55
      %p59 = pneg %p53
      %p60 = scmp.eq.s32.totalorder %s44, 1
      %p61 = por %p59, %p60
      %p62 = scmp.ne.s32.totalorder %s54, %s57
      %p63 = scmp.eq.s32.totalorder %s44, 0
      %p64 = por %p62, %p63
      %p65 = scmp.ne.s32.totalorder %s54, %s57
      %p66 = scmp.eq.s32.totalorder %s49, 1
      %p67 = por %p65, %p66
      %p68 = scmp.ne.s32.totalorder %s57, %s58
      %p69 = scmp.eq.s32.totalorder %s49, 0
      %p70 = por %p68, %p69
      %p71 = scmp.ne.s32.totalorder %s57, %s58
      %p72 = scmp.eq.s32.totalorder %s50, 1
      %p73 = por %p71, %p72
      %p75 = scmp.ne.s32.totalorder %s58, %s74
      %p76 = scmp.eq.s32.totalorder %s50, 0
      %p77 = por %p75, %p76
      %s79 = sadd.s32 %s78, 1
      %p82 = scmp.eq.s32.totalorder %s44, 1
      %p83 = scmp.ne.s32.totalorder %s78, %s80
      %p84 = scmp.eq.s32.totalorder %s44, 0
      %p85 = por %p83, %p84
      %p86 = scmp.ne.s32.totalorder %s78, %s80
      %p87 = scmp.eq.s32.totalorder %s49, 1
      %p88 = por %p86, %p87
      %p89 = scmp.ne.s32.totalorder %s80, %s81
      %p90 = scmp.eq.s32.totalorder %s49, 0
      %p91 = por %p89, %p90
      %p92 = scmp.ne.s32.totalorder %s80, %s81
      %p93 = scmp.eq.s32.totalorder %s50, 1
      %p94 = por %p92, %p93
      %p96 = scmp.ne.s32.totalorder %s81, %s95
      %p97 = scmp.eq.s32.totalorder %s50, 0
      %p98 = por %p96, %p97
      %s100 = sadd.s32 %s99, 1
      %p103 = scmp.eq.s32.totalorder %s44, 1
      %p104 = scmp.ne.s32.totalorder %s99, %s101
      %p105 = scmp.eq.s32.totalorder %s44, 0
      %p106 = por %p104, %p105
      %p107 = scmp.ne.s32.totalorder %s99, %s101
      %p108 = scmp.eq.s32.totalorder %s49, 1
      %p109 = por %p107, %p108
      %p110 = scmp.ne.s32.totalorder %s101, %s102
      %p111 = scmp.eq.s32.totalorder %s49, 0
      %p112 = por %p110, %p111
      %p113 = scmp.ne.s32.totalorder %s101, %s102
      %p114 = scmp.eq.s32.totalorder %s50, 1
      %p115 = por %p113, %p114
      %p117 = scmp.ne.s32.totalorder %s102, %s116
      %p118 = scmp.eq.s32.totalorder %s50, 0
      %p119 = por %p117, %p118
      %s121 = sadd.s32 %s120, 1
      %p124 = scmp.eq.s32.totalorder %s44, 1
      %p125 = scmp.ne.s32.totalorder %s120, %s122
      %p126 = scmp.eq.s32.totalorder %s44, 0
      %p127 = por %p125, %p126
      %p128 = scmp.ne.s32.totalorder %s120, %s122
      %p129 = scmp.eq.s32.totalorder %s49, 1
      %p130 = por %p128, %p129
      %p131 = scmp.ne.s32.totalorder %s122, %s123
      %p132 = scmp.eq.s32.totalorder %s49, 0
      %p133 = por %p131, %p132
      %p134 = scmp.ne.s32.totalorder %s122, %s123
      %p135 = scmp.eq.s32.totalorder %s50, 1
      %p136 = por %p134, %p135
      %p138 = scmp.ne.s32.totalorder %s123, %s137
      %p139 = scmp.eq.s32.totalorder %s50, 0
      %p140 = por %p138, %p139
      %s142 = sadd.s32 %s141, 1
      %p145 = scmp.eq.s32.totalorder %s44, 1
      %p146 = scmp.ne.s32.totalorder %s141, %s143
      %p147 = scmp.eq.s32.totalorder %s44, 0
      %p148 = por %p146, %p147
      %p149 = scmp.ne.s32.totalorder %s141, %s143
      %p150 = scmp.eq.s32.totalorder %s49, 1
      %p151 = por %p149, %p150
      %p152 = scmp.ne.s32.totalorder %s143, %s144
      %p153 = scmp.eq.s32.totalorder %s49, 0
      %p154 = por %p152, %p153
      %p155 = scmp.ne.s32.totalorder %s143, %s144
      %p156 = scmp.eq.s32.totalorder %s50, 1
      %p157 = por %p155, %p156
      %p159 = scmp.ne.s32.totalorder %s144, %s158
      %p160 = scmp.eq.s32.totalorder %s50, 0
      %p161 = por %p159, %p160
      %s163 = sadd.s32 %s162, 1
      %p166 = scmp.eq.s32.totalorder %s44, 1
      %p167 = scmp.ne.s32.totalorder %s162, %s164
      %p168 = scmp.eq.s32.totalorder %s44, 0
      %p169 = por %p167, %p168
      %p170 = scmp.ne.s32.totalorder %s162, %s164
      %p171 = scmp.eq.s32.totalorder %s49, 1
      %p172 = por %p170, %p171
      %p173 = scmp.ne.s32.totalorder %s164, %s165
      %p174 = scmp.eq.s32.totalorder %s49, 0
      %p175 = por %p173, %p174
      %p176 = scmp.ne.s32.totalorder %s164, %s165
      %p177 = scmp.eq.s32.totalorder %s50, 1
      %p178 = por %p176, %p177
      %p180 = scmp.ne.s32.totalorder %s165, %s179
      %p181 = scmp.eq.s32.totalorder %s50, 0
      %p182 = por %p180, %p181
      %s184 = sadd.s32 %s183, 1
      %p187 = scmp.eq.s32.totalorder %s44, 1
      %p188 = scmp.ne.s32.totalorder %s183, %s185
      %p189 = scmp.eq.s32.totalorder %s44, 0
      %p190 = por %p188, %p189
      %p191 = scmp.ne.s32.totalorder %s183, %s185
      %p192 = scmp.eq.s32.totalorder %s49, 1
      %p193 = por %p191, %p192
      %p194 = scmp.ne.s32.totalorder %s185, %s186
      %p195 = scmp.eq.s32.totalorder %s49, 0
      %p196 = por %p194, %p195
      %p197 = scmp.ne.s32.totalorder %s185, %s186
      %p198 = scmp.eq.s32.totalorder %s50, 1
      %p199 = por %p197, %p198
      %p201 = scmp.ne.s32.totalorder %s186, %s200
      %p202 = scmp.eq.s32.totalorder %s50, 0
      %p203 = por %p201, %p202
      %s205 = sadd.s32 %s204, 1
      %p208 = scmp.eq.s32.totalorder %s44, 1
      %p209 = scmp.ne.s32.totalorder %s204, %s206
      %p210 = scmp.eq.s32.totalorder %s44, 0
      %p211 = por %p209, %p210
      %p212 = scmp.ne.s32.totalorder %s204, %s206
      %p213 = scmp.eq.s32.totalorder %s49, 1
      %p214 = por %p212, %p213
      %p215 = scmp.ne.s32.totalorder %s206, %s207
      %p216 = scmp.eq.s32.totalorder %s49, 0
      %p217 = por %p215, %p216
      %p218 = scmp.ne.s32.totalorder %s206, %s207
      %p219 = scmp.eq.s32.totalorder %s50, 1
      %p220 = por %p218, %p219
      %p222 = scmp.ne.s32.totalorder %s207, %s221
      %p223 = scmp.eq.s32.totalorder %s50, 0
      %p224 = por %p222, %p223
      %s226 = sadd.s32 %s225, 1
      %p229 = scmp.eq.s32.totalorder %s44, 1
      %p230 = scmp.ne.s32.totalorder %s225, %s227
      %p231 = scmp.eq.s32.totalorder %s44, 0
      %p232 = por %p230, %p231
      %p233 = scmp.ne.s32.totalorder %s225, %s227
      %p234 = scmp.eq.s32.totalorder %s49, 1
      %p235 = por %p233, %p234
      %p236 = scmp.ne.s32.totalorder %s227, %s228
      %p237 = scmp.eq.s32.totalorder %s49, 0
      %p238 = por %p236, %p237
      %p239 = scmp.ne.s32.totalorder %s227, %s228
      %p240 = scmp.eq.s32.totalorder %s50, 1
      %p241 = por %p239, %p240
      %p243 = scmp.ne.s32.totalorder %s228, %s242
      %p244 = scmp.eq.s32.totalorder %s50, 0
      %p245 = por %p243, %p244
      %s247 = sadd.s32 %s246, 1
      %p250 = scmp.eq.s32.totalorder %s44, 1
      %p251 = scmp.ne.s32.totalorder %s246, %s248
      %p252 = scmp.eq.s32.totalorder %s44, 0
      %p253 = por %p251, %p252
      %p254 = scmp.ne.s32.totalorder %s246, %s248
      %p255 = scmp.eq.s32.totalorder %s49, 1
      %p256 = por %p254, %p255
      %p257 = scmp.ne.s32.totalorder %s248, %s249
      %p258 = scmp.eq.s32.totalorder %s49, 0
      %p259 = por %p257, %p258
      %p260 = scmp.ne.s32.totalorder %s248, %s249
      %p261 = scmp.eq.s32.totalorder %s50, 1
      %p262 = por %p260, %p261
      %p264 = scmp.ne.s32.totalorder %s249, %s263
      %p265 = scmp.eq.s32.totalorder %s50, 0
      %p266 = por %p264, %p265
      %s268 = sadd.s32 %s267, 1
      %p271 = scmp.eq.s32.totalorder %s44, 1
      %p272 = scmp.ne.s32.totalorder %s267, %s269
      %p273 = scmp.eq.s32.totalorder %s44, 0
      %p274 = por %p272, %p273
      %p275 = scmp.ne.s32.totalorder %s267, %s269
      %p276 = scmp.eq.s32.totalorder %s49, 1
      %p277 = por %p275, %p276
      %p278 = scmp.ne.s32.totalorder %s269, %s270
      %p279 = scmp.eq.s32.totalorder %s49, 0
      %p280 = por %p278, %p279
      %p281 = scmp.ne.s32.totalorder %s269, %s270
      %p282 = scmp.eq.s32.totalorder %s50, 1
      %p283 = por %p281, %p282
      %p285 = scmp.ne.s32.totalorder %s270, %s284
      %p286 = scmp.eq.s32.totalorder %s50, 0
      %p287 = por %p285, %p286
      %s289 = sadd.s32 %s288, 1
      %p292 = scmp.eq.s32.totalorder %s44, 1
      %p293 = scmp.ne.s32.totalorder %s288, %s290
      %p294 = scmp.eq.s32.totalorder %s44, 0
      %p295 = por %p293, %p294
      %p296 = scmp.ne.s32.totalorder %s288, %s290
      %p297 = scmp.eq.s32.totalorder %s49, 1
      %p298 = por %p296, %p297
      %p299 = scmp.ne.s32.totalorder %s290, %s291
      %p300 = scmp.eq.s32.totalorder %s49, 0
      %p301 = por %p299, %p300
      %p302 = scmp.ne.s32.totalorder %s290, %s291
      %p303 = scmp.eq.s32.totalorder %s50, 1
      %p304 = por %p302, %p303
      %p306 = scmp.ne.s32.totalorder %s291, %s305
      %p307 = scmp.eq.s32.totalorder %s50, 0
      %p308 = por %p306, %p307
      %s310 = sadd.s32 %s309, 1
      %p313 = scmp.eq.s32.totalorder %s44, 1
      %p314 = scmp.ne.s32.totalorder %s309, %s311
      %p315 = scmp.eq.s32.totalorder %s44, 0
      %p316 = por %p314, %p315
      %p317 = scmp.ne.s32.totalorder %s309, %s311
      %p318 = scmp.eq.s32.totalorder %s49, 1
      %p319 = por %p317, %p318
      %p320 = scmp.ne.s32.totalorder %s311, %s312
      %p321 = scmp.eq.s32.totalorder %s49, 0
      %p322 = por %p320, %p321
      %p323 = scmp.ne.s32.totalorder %s311, %s312
      %p324 = scmp.eq.s32.totalorder %s50, 1
      %p325 = por %p323, %p324
      %p327 = scmp.ne.s32.totalorder %s312, %s326
      %p328 = scmp.eq.s32.totalorder %s50, 0
      %p329 = por %p327, %p328
      %s331 = sadd.s32 %s330, 1
      %p334 = scmp.eq.s32.totalorder %s44, 1
      %p335 = scmp.ne.s32.totalorder %s330, %s332
      %p336 = scmp.eq.s32.totalorder %s44, 0
      %p337 = por %p335, %p336
      %p338 = scmp.ne.s32.totalorder %s330, %s332
      %p339 = scmp.eq.s32.totalorder %s49, 1
      %p340 = por %p338, %p339
      %p341 = scmp.ne.s32.totalorder %s332, %s333
      %p342 = scmp.eq.s32.totalorder %s49, 0
      %p343 = por %p341, %p342
      %p344 = scmp.ne.s32.totalorder %s332, %s333
      %p345 = scmp.eq.s32.totalorder %s50, 1
      %p346 = por %p344, %p345
      %p348 = scmp.ne.s32.totalorder %s333, %s347
      %p349 = scmp.eq.s32.totalorder %s50, 0
      %p350 = por %p348, %p349
      %s352 = sadd.s32 %s351, 1
      %p355 = scmp.eq.s32.totalorder %s44, 1
      %p356 = scmp.ne.s32.totalorder %s351, %s353
      %p357 = scmp.eq.s32.totalorder %s44, 0
      %p358 = por %p356, %p357
      %p359 = scmp.ne.s32.totalorder %s351, %s353
      %p360 = scmp.eq.s32.totalorder %s49, 1
      %p361 = por %p359, %p360
      %p362 = scmp.ne.s32.totalorder %s353, %s354
      %p363 = scmp.eq.s32.totalorder %s49, 0
      %p364 = por %p362, %p363
      %p365 = scmp.ne.s32.totalorder %s353, %s354
      %p366 = scmp.eq.s32.totalorder %s50, 1
      %p367 = por %p365, %p366
      %p369 = scmp.ne.s32.totalorder %s354, %s368
      %p370 = scmp.eq.s32.totalorder %s50, 0
      %p371 = por %p369, %p370
      %s373 = sadd.s32 %s372, 1
      %p376 = scmp.eq.s32.totalorder %s44, 1
      %p377 = scmp.ne.s32.totalorder %s372, %s374
      %p378 = scmp.eq.s32.totalorder %s44, 0
      %p379 = por %p377, %p378
      %p380 = scmp.ne.s32.totalorder %s372, %s374
      %p381 = scmp.eq.s32.totalorder %s49, 1
      %p382 = por %p380, %p381
      %p383 = scmp.ne.s32.totalorder %s374, %s375
      %p384 = scmp.eq.s32.totalorder %s49, 0
      %p385 = por %p383, %p384
      %p386 = scmp.ne.s32.totalorder %s374, %s375
      %p387 = scmp.eq.s32.totalorder %s50, 1
      %p388 = por %p386, %p387
      %p390 = scmp.ne.s32.totalorder %s375, %s389
      %p391 = scmp.eq.s32.totalorder %s50, 0
      %p392 = por %p390, %p391
      %s394 = sadd.s32 %s393, 1
      %p397 = scmp.eq.s32.totalorder %s44, 1
      %p398 = scmp.ne.s32.totalorder %s393, %s395
      %p399 = scmp.eq.s32.totalorder %s44, 0
      %p400 = por %p398, %p399
      %p401 = scmp.ne.s32.totalorder %s393, %s395
      %p402 = scmp.eq.s32.totalorder %s49, 1
      %p403 = por %p401, %p402
      %p404 = scmp.ne.s32.totalorder %s395, %s396
      %p405 = scmp.eq.s32.totalorder %s49, 0
      %p406 = por %p404, %p405
      %p407 = scmp.ne.s32.totalorder %s395, %s396
      %p408 = scmp.eq.s32.totalorder %s50, 1
      %p409 = por %p407, %p408
      %p411 = scmp.ne.s32.totalorder %s396, %s410
      %p412 = scmp.eq.s32.totalorder %s50, 0
      %p413 = por %p411, %p412
      %s415 = sadd.s32 %s414, 1
      %p418 = scmp.eq.s32.totalorder %s44, 1
      %p419 = scmp.ne.s32.totalorder %s414, %s416
      %p420 = scmp.eq.s32.totalorder %s44, 0
      %p421 = por %p419, %p420
      %p422 = scmp.ne.s32.totalorder %s414, %s416
      %p423 = scmp.eq.s32.totalorder %s49, 1
      %p424 = por %p422, %p423
      %p425 = scmp.ne.s32.totalorder %s416, %s417
      %p426 = scmp.eq.s32.totalorder %s49, 0
      %p427 = por %p425, %p426
      %p428 = scmp.ne.s32.totalorder %s416, %s417
      %p429 = scmp.eq.s32.totalorder %s50, 1
      %p430 = por %p428, %p429
      %p432 = scmp.ne.s32.totalorder %s417, %s431
      %p433 = scmp.eq.s32.totalorder %s50, 0
      %p434 = por %p432, %p433
      %s436 = sadd.s32 %s435, 1
      %p439 = scmp.eq.s32.totalorder %s44, 1
      %p440 = scmp.ne.s32.totalorder %s435, %s437
      %p441 = scmp.eq.s32.totalorder %s44, 0
      %p442 = por %p440, %p441
      %p443 = scmp.ne.s32.totalorder %s435, %s437
      %p444 = scmp.eq.s32.totalorder %s49, 1
      %p445 = por %p443, %p444
      %p446 = scmp.ne.s32.totalorder %s437, %s438
      %p447 = scmp.eq.s32.totalorder %s49, 0
      %p448 = por %p446, %p447
      %p449 = scmp.ne.s32.totalorder %s437, %s438
      %p450 = scmp.eq.s32.totalorder %s50, 1
      %p451 = por %p449, %p450
      %p453 = scmp.ne.s32.totalorder %s438, %s452
      %p454 = scmp.eq.s32.totalorder %s50, 0
      %p455 = por %p453, %p454
      %s457 = sadd.s32 %s456, 1
      %p460 = scmp.eq.s32.totalorder %s44, 1
      %p461 = scmp.ne.s32.totalorder %s456, %s458
      %p462 = scmp.eq.s32.totalorder %s44, 0
      %p463 = por %p461, %p462
      %p464 = scmp.ne.s32.totalorder %s456, %s458
      %p465 = scmp.eq.s32.totalorder %s49, 1
      %p466 = por %p464, %p465
      %p467 = scmp.ne.s32.totalorder %s458, %s459
      %p468 = scmp.eq.s32.totalorder %s49, 0
      %p469 = por %p467, %p468
      %p470 = scmp.ne.s32.totalorder %s458, %s459
      %p471 = scmp.eq.s32.totalorder %s50, 1
      %p472 = por %p470, %p471
      %p474 = scmp.ne.s32.totalorder %s459, %s473
      %p475 = scmp.eq.s32.totalorder %s50, 0
      %p476 = por %p474, %p475
      %s478 = sadd.s32 %s477, 1
      %p481 = scmp.eq.s32.totalorder %s44, 1
      %p482 = scmp.ne.s32.totalorder %s477, %s479
      %p483 = scmp.eq.s32.totalorder %s44, 0
      %p484 = por %p482, %p483
      %p485 = scmp.ne.s32.totalorder %s477, %s479
      %p486 = scmp.eq.s32.totalorder %s49, 1
      %p487 = por %p485, %p486
      %p488 = scmp.ne.s32.totalorder %s479, %s480
      %p489 = scmp.eq.s32.totalorder %s49, 0
      %p490 = por %p488, %p489
      %p491 = scmp.ne.s32.totalorder %s479, %s480
      %p492 = scmp.eq.s32.totalorder %s50, 1
      %p493 = por %p491, %p492
      %p495 = scmp.ne.s32.totalorder %s480, %s494
      %p496 = scmp.eq.s32.totalorder %s50, 0
      %p497 = por %p495, %p496
      %s499 = sadd.s32 %s498, 1
      %p502 = scmp.eq.s32.totalorder %s44, 1
      %p503 = scmp.ne.s32.totalorder %s498, %s500
      %p504 = scmp.eq.s32.totalorder %s44, 0
      %p505 = por %p503, %p504
      %p506 = scmp.ne.s32.totalorder %s498, %s500
      %p507 = scmp.eq.s32.totalorder %s49, 1
      %p508 = por %p506, %p507
      %p509 = scmp.ne.s32.totalorder %s500, %s501
      %p510 = scmp.eq.s32.totalorder %s49, 0
      %p511 = por %p509, %p510
      %p512 = scmp.ne.s32.totalorder %s500, %s501
      %p513 = scmp.eq.s32.totalorder %s50, 1
      %p514 = por %p512, %p513
      %p516 = scmp.ne.s32.totalorder %s501, %s515
      %p517 = scmp.eq.s32.totalorder %s50, 0
      %p518 = por %p516, %p517
      %s520 = sadd.s32 %s519, 1
      %p523 = scmp.eq.s32.totalorder %s44, 1
      %p524 = scmp.ne.s32.totalorder %s519, %s521
      %p525 = scmp.eq.s32.totalorder %s44, 0
      %p526 = por %p524, %p525
      %p527 = scmp.ne.s32.totalorder %s519, %s521
      %p528 = scmp.eq.s32.totalorder %s49, 1
      %p529 = por %p527, %p528
      %p530 = scmp.ne.s32.totalorder %s521, %s522
      %p531 = scmp.eq.s32.totalorder %s49, 0
      %p532 = por %p530, %p531
      %p533 = scmp.ne.s32.totalorder %s521, %s522
      %p534 = scmp.eq.s32.totalorder %s50, 1
      %p535 = por %p533, %p534
      %p537 = scmp.ne.s32.totalorder %s522, %s536
      %p538 = scmp.eq.s32.totalorder %s50, 0
      %p539 = por %p537, %p538
      %s540 = ssub.s32 %s44, %s51
      %p541 = scmp.eq.s32.totalorder %s540, 0
      %s543 = sadd.s32 %s542, 1
      %s544 = scalar_select %p541, %s542, %s543
      %p547 = pneg %p541
      %p548 = scmp.eq.s32.totalorder %s44, 1
      %p549 = por %p547, %p548
      %p550 = scmp.ne.s32.totalorder %s542, %s545
      %p551 = scmp.eq.s32.totalorder %s44, 0
      %p552 = por %p550, %p551
      %p553 = scmp.ne.s32.totalorder %s542, %s545
      %p554 = scmp.eq.s32.totalorder %s49, 1
      %p555 = por %p553, %p554
      %p556 = scmp.ne.s32.totalorder %s545, %s546
      %p557 = scmp.eq.s32.totalorder %s49, 0
      %p558 = por %p556, %p557
      %p559 = scmp.ne.s32.totalorder %s545, %s546
      %p560 = scmp.eq.s32.totalorder %s50, 1
      %p561 = por %p559, %p560
      %p563 = scmp.ne.s32.totalorder %s546, %s562
      %p564 = scmp.eq.s32.totalorder %s50, 0
      %p565 = por %p563, %p564
      %s566 = ssub.s32 %s44, %s51
      %p567 = scmp.eq.s32.totalorder %s566, 0
      %s569 = sadd.s32 %s568, 1
      %s570 = scalar_select %p567, %s568, %s569
      %p573 = pneg %p567
      %p574 = scmp.eq.s32.totalorder %s44, 1
      %p575 = por %p573, %p574
      %p576 = scmp.ne.s32.totalorder %s568, %s571
      %p577 = scmp.eq.s32.totalorder %s44, 0
      %p578 = por %p576, %p577
      %p579 = scmp.ne.s32.totalorder %s568, %s571
      %p580 = scmp.eq.s32.totalorder %s49, 1
      %p581 = por %p579, %p580
      %p582 = scmp.ne.s32.totalorder %s571, %s572
      %p583 = scmp.eq.s32.totalorder %s49, 0
      %p584 = por %p582, %p583
      %p585 = scmp.ne.s32.totalorder %s571, %s572
      %p586 = scmp.eq.s32.totalorder %s50, 1
      %p587 = por %p585, %p586
      %p589 = scmp.ne.s32.totalorder %s572, %s588
      %p590 = scmp.eq.s32.totalorder %s50, 0
      %p591 = por %p589, %p590
      %p592 = scmp.le.s32.totalorder 1, %s44
      %p593 = scmp.lt.s32.totalorder %s44, 3
      %p594 = pnand %p592, %p593
      %p595 = pneg %p594
      // Predicated region
      $region9: #{tpu_custom_call.1} parent=5 // pred_check
        _
      $region10: #{tpu_custom_call.1} parent=5 // pred_check_branch
        %597 = sbr.rel (%p594) target = $region12
      $region11: #{tpu_custom_call.1} parent=5 // pred_region
        %s598 = ssub.s32 %s44, 1
        // Predicated region
        $region13: #{tpu_custom_call.1} parent=11 // pred_check
          %p599 = pneg %p91
        $region14: #{tpu_custom_call.1} parent=11 // pred_check_branch
          %601 = sbr.rel (%p599) target = $region16
        $region15: #{tpu_custom_call.1} parent=11 // pred_region
          %s603 = ssub.s32 64, 64
          %604 = vsyncadd [#allocation3], %s603
          %s606 = sshll.u32 [#allocation2], 4
          %s607 = int_to_ptr.vmem [resolvable:$true] %s606
          %609 = dma.hbm_to_vmem [thread:$0]  %s1, 64, %s607, [#allocation3]
        $region16: #{tpu_custom_call.1} parent=11 // pred_fallthru
          _
        // Predicated region
        $region17: #{tpu_custom_call.1} parent=11 // pred_check
          %p610 = pneg %p112
        $region18: #{tpu_custom_call.1} parent=11 // pred_check_branch
          %612 = sbr.rel (%p610) target = $region20
        $region19: #{tpu_custom_call.1} parent=11 // pred_region
          _
        $region20: #{tpu_custom_call.1} parent=11 // pred_fallthru
          _
        // Predicated region
        $region21: #{tpu_custom_call.1} parent=11 // pred_check
          %p613 = pneg %p133
        $region22: #{tpu_custom_call.1} parent=11 // pred_check_branch
          %615 = sbr.rel (%p613) target = $region24
        $region23: #{tpu_custom_call.1} parent=11 // pred_region
          _
        $region24: #{tpu_custom_call.1} parent=11 // pred_fallthru
          _
        // Predicated region
        $region25: #{tpu_custom_call.1} parent=11 // pred_check
          %p616 = pneg %p154
        $region26: #{tpu_custom_call.1} parent=11 // pred_check_branch
          %618 = sbr.rel (%p616) target = $region28
        $region27: #{tpu_custom_call.1} parent=11 // pred_region
          %s620 = ssub.s32 16, 16
          %621 = vsyncadd [#allocation6], %s620
          %s623 = sshll.u32 [#allocation5], 4
          %s624 = int_to_ptr.vmem [resolvable:$true] %s623
          %626 = dma.hbm_to_vmem [thread:$0]  %s4, 16, %s624, [#allocation6]
        $region28: #{tpu_custom_call.1} parent=11 // pred_fallthru
          _
        // Predicated region
        $region29: #{tpu_custom_call.1} parent=11 // pred_check
          %p627 = pneg %p175
        $region30: #{tpu_custom_call.1} parent=11 // pred_check_branch
          %629 = sbr.rel (%p627) target = $region32
        $region31: #{tpu_custom_call.1} parent=11 // pred_region
          _
        $region32: #{tpu_custom_call.1} parent=11 // pred_fallthru
          _
        // Predicated region
        $region33: #{tpu_custom_call.1} parent=11 // pred_check
          %p630 = pneg %p196
        $region34: #{tpu_custom_call.1} parent=11 // pred_check_branch
          %632 = sbr.rel (%p630) target = $region36
        $region35: #{tpu_custom_call.1} parent=11 // pred_region
          %s634 = ssub.s32 128, 128
          %635 = vsyncadd [#allocation6], %s634
          %s637 = sshll.u32 [#allocation7], 4
          %s638 = int_to_ptr.vmem [resolvable:$true] %s637
          %640 = dma.hbm_to_vmem [thread:$0]  %s6, 128, %s638, [#allocation6]
        $region36: #{tpu_custom_call.1} parent=11 // pred_fallthru
          _
        // Predicated region
        $region37: #{tpu_custom_call.1} parent=11 // pred_check
          %p641 = pneg %p217
        $region38: #{tpu_custom_call.1} parent=11 // pred_check_branch
          %643 = sbr.rel (%p641) target = $region40
        $region39: #{tpu_custom_call.1} parent=11 // pred_region
          %s645 = ssub.s32 32768, 32768
          %646 = vsyncadd [#allocation9], %s645
          %s647 = sshll.u32 [#allocation8], 4
          %s648 = int_to_ptr.vmem [resolvable:$true] %s647
          %653 = dma.hbm_to_vmem [thread:$0]  %s7, 32768, %s648, [#allocation9], 256, 256, 16
        $region40: #{tpu_custom_call.1} parent=11 // pred_fallthru
          _
        // Predicated region
        $region41: #{tpu_custom_call.1} parent=11 // pred_check
          %p654 = pneg %p238
        $region42: #{tpu_custom_call.1} parent=11 // pred_check_branch
          %656 = sbr.rel (%p654) target = $region44
        $region43: #{tpu_custom_call.1} parent=11 // pred_region
          _
        $region44: #{tpu_custom_call.1} parent=11 // pred_fallthru
          _
        // Predicated region
        $region45: #{tpu_custom_call.1} parent=11 // pred_check
          %p657 = pneg %p259
        $region46: #{tpu_custom_call.1} parent=11 // pred_check_branch
          %659 = sbr.rel (%p657) target = $region48
        $region47: #{tpu_custom_call.1} parent=11 // pred_region
          _
        $region48: #{tpu_custom_call.1} parent=11 // pred_fallthru
          _
        // Predicated region
        $region49: #{tpu_custom_call.1} parent=11 // pred_check
          %p660 = pneg %p280
        $region50: #{tpu_custom_call.1} parent=11 // pred_check_branch
          %662 = sbr.rel (%p660) target = $region52
        $region51: #{tpu_custom_call.1} parent=11 // pred_region
          %s664 = ssub.s32 32, 32
          %665 = vsyncadd [#allocation9], %s664
          %s667 = sshll.u32 [#allocation10], 4
          %s668 = int_to_ptr.vmem [resolvable:$true] %s667
          %670 = dma.hbm_to_vmem [thread:$0]  %s10, 32, %s668, [#allocation9]
        $region52: #{tpu_custom_call.1} parent=11 // pred_fallthru
          _
        // Predicated region
        $region53: #{tpu_custom_call.1} parent=11 // pred_check
          %p671 = pneg %p301
        $region54: #{tpu_custom_call.1} parent=11 // pred_check_branch
          %673 = sbr.rel (%p671) target = $region56
        $region55: #{tpu_custom_call.1} parent=11 // pred_region
          %s675 = ssub.s32 2048, 2048
          %676 = vsyncadd [#allocation12], %s675
          %s677 = sshll.u32 [#allocation11], 4
          %s678 = int_to_ptr.vmem [resolvable:$true] %s677
          %683 = dma.hbm_to_vmem [thread:$0]  %s11, 2048, %s678, [#allocation12], 64, 64, 4
        $region56: #{tpu_custom_call.1} parent=11 // pred_fallthru
          _
        // Predicated region
        $region57: #{tpu_custom_call.1} parent=11 // pred_check
          %p684 = pneg %p322
        $region58: #{tpu_custom_call.1} parent=11 // pred_check_branch
          %686 = sbr.rel (%p684) target = $region60
        $region59: #{tpu_custom_call.1} parent=11 // pred_region
          %s688 = ssub.s32 16, 16
          %689 = vsyncadd [#allocation12], %s688
          %s691 = sshll.u32 [#allocation13], 4
          %s692 = int_to_ptr.vmem [resolvable:$true] %s691
          %694 = dma.hbm_to_vmem [thread:$0]  %s12, 16, %s692, [#allocation12]
        $region60: #{tpu_custom_call.1} parent=11 // pred_fallthru
          _
        // Predicated region
        $region61: #{tpu_custom_call.1} parent=11 // pred_check
          %p695 = pneg %p343
        $region62: #{tpu_custom_call.1} parent=11 // pred_check_branch
          %697 = sbr.rel (%p695) target = $region64
        $region63: #{tpu_custom_call.1} parent=11 // pred_region
          %s699 = ssub.s32 64, 64
          %700 = vsyncadd [#allocation15], %s699
          %s702 = sshll.u32 [#allocation14], 4
          %s703 = int_to_ptr.vmem [resolvable:$true] %s702
          %705 = dma.hbm_to_vmem [thread:$0]  %s13, 64, %s703, [#allocation15]
        $region64: #{tpu_custom_call.1} parent=11 // pred_fallthru
          _
        // Predicated region
        $region65: #{tpu_custom_call.1} parent=11 // pred_check
          %p706 = pneg %p364
        $region66: #{tpu_custom_call.1} parent=11 // pred_check_branch
          %708 = sbr.rel (%p706) target = $region68
        $region67: #{tpu_custom_call.1} parent=11 // pred_region
          %s710 = ssub.s32 16, 16
          %711 = vsyncadd [#allocation15], %s710
          %s713 = sshll.u32 [#allocation16], 4
          %s714 = int_to_ptr.vmem [resolvable:$true] %s713
          %716 = dma.hbm_to_vmem [thread:$0]  %s14, 16, %s714, [#allocation15]
        $region68: #{tpu_custom_call.1} parent=11 // pred_fallthru
          _
        // Predicated region
        $region69: #{tpu_custom_call.1} parent=11 // pred_check
          %p717 = pneg %p385
        $region70: #{tpu_custom_call.1} parent=11 // pred_check_branch
          %719 = sbr.rel (%p717) target = $region72
        $region71: #{tpu_custom_call.1} parent=11 // pred_region
          _
        $region72: #{tpu_custom_call.1} parent=11 // pred_fallthru
          _
        // Predicated region
        $region73: #{tpu_custom_call.1} parent=11 // pred_check
          %p720 = pneg %p406
        $region74: #{tpu_custom_call.1} parent=11 // pred_check_branch
          %722 = sbr.rel (%p720) target = $region76
        $region75: #{tpu_custom_call.1} parent=11 // pred_region
          _
        $region76: #{tpu_custom_call.1} parent=11 // pred_fallthru
          _
        // Predicated region
        $region77: #{tpu_custom_call.1} parent=11 // pred_check
          %p723 = pneg %p427
        $region78: #{tpu_custom_call.1} parent=11 // pred_check_branch
          %725 = sbr.rel (%p723) target = $region80
        $region79: #{tpu_custom_call.1} parent=11 // pred_region
          %s727 = ssub.s32 512, 512
          %728 = vsyncadd [#allocation18], %s727
          %s729 = sshll.u32 [#allocation17], 4
          %s730 = int_to_ptr.vmem [resolvable:$true] %s729
          %735 = dma.hbm_to_vmem [thread:$0]  %s17, 512, %s730, [#allocation18], 64, 64, 4
        $region80: #{tpu_custom_call.1} parent=11 // pred_fallthru
          _
        // Predicated region
        $region81: #{tpu_custom_call.1} parent=11 // pred_check
          %p736 = pneg %p448
        $region82: #{tpu_custom_call.1} parent=11 // pred_check_branch
          %738 = sbr.rel (%p736) target = $region84
        $region83: #{tpu_custom_call.1} parent=11 // pred_region
          _
        $region84: #{tpu_custom_call.1} parent=11 // pred_fallthru
          _
        // Predicated region
        $region85: #{tpu_custom_call.1} parent=11 // pred_check
          %p739 = pneg %p469
        $region86: #{tpu_custom_call.1} parent=11 // pred_check_branch
          %741 = sbr.rel (%p739) target = $region88
        $region87: #{tpu_custom_call.1} parent=11 // pred_region
          %s743 = ssub.s32 512, 512
          %744 = vsyncadd [#allocation18], %s743
          %s745 = sshll.u32 [#allocation19], 4
          %s746 = int_to_ptr.vmem [resolvable:$true] %s745
          %751 = dma.hbm_to_vmem [thread:$0]  %s19, 512, %s746, [#allocation18], 64, 64, 4
        $region88: #{tpu_custom_call.1} parent=11 // pred_fallthru
          _
        // Predicated region
        $region89: #{tpu_custom_call.1} parent=11 // pred_check
          %p752 = pneg %p490
        $region90: #{tpu_custom_call.1} parent=11 // pred_check_branch
          %754 = sbr.rel (%p752) target = $region92
        $region91: #{tpu_custom_call.1} parent=11 // pred_region
          _
        $region92: #{tpu_custom_call.1} parent=11 // pred_fallthru
          _
        // Predicated region
        $region93: #{tpu_custom_call.1} parent=11 // pred_check
          %p755 = pneg %p511
        $region94: #{tpu_custom_call.1} parent=11 // pred_check_branch
          %757 = sbr.rel (%p755) target = $region96
        $region95: #{tpu_custom_call.1} parent=11 // pred_region
          %s759 = ssub.s32 8192, 8192
          %760 = vsyncadd [#allocation21], %s759
          %s761 = sshll.u32 [#allocation20], 4
          %s762 = int_to_ptr.vmem [resolvable:$true] %s761
          %767 = dma.hbm_to_vmem [thread:$0]  %s21, 8192, %s762, [#allocation21], 512, 512, 32
        $region96: #{tpu_custom_call.1} parent=11 // pred_fallthru
          _
        // Predicated region
        $region97: #{tpu_custom_call.1} parent=11 // pred_check
          %p768 = pneg %p532
        $region98: #{tpu_custom_call.1} parent=11 // pred_check_branch
          %770 = sbr.rel (%p768) target = $region100
        $region99: #{tpu_custom_call.1} parent=11 // pred_region
          _
        $region100: #{tpu_custom_call.1} parent=11 // pred_fallthru
          _
      $region12: #{tpu_custom_call.1} parent=5 // pred_fallthru
        _
      %p771 = scmp.lt.s32.totalorder %s44, 2
      // Predicated region
      $region101: #{tpu_custom_call.1} parent=5 // pred_check
        %p772 = pneg %p771
      $region102: #{tpu_custom_call.1} parent=5 // pred_check_branch
        %774 = sbr.rel (%p772) target = $region104
      $region103: #{tpu_custom_call.1} parent=5 // pred_region
        // Predicated region
        $region105: #{tpu_custom_call.1} parent=103 // pred_check
          %p775 = pneg %p64
        $region106: #{tpu_custom_call.1} parent=103 // pred_check_branch
          %777 = sbr.rel (%p775) target = $region108
        $region107: #{tpu_custom_call.1} parent=103 // pred_region
          %s778 = smul.u32 2, %s44
          %p779 = scmp.lt.s32.totalorder %s778, 3
          %s780 = scalar_select %p779, %s778, 3
          %s781 = smul.addr %s780, 32
          %s782 = smul.addr %s781, 8
          %s783 = scalar_lea.vmem %s0, %s782
          %s784 = smul.u32 2, %s44
        $region108: #{tpu_custom_call.1} parent=103 // pred_fallthru
          _
      $region104: #{tpu_custom_call.1} parent=5 // pred_fallthru
        _
      %p785 = scmp.le.s32.totalorder 1, %s44
      %p786 = scmp.lt.s32.totalorder %s44, 3
      %p787 = pnand %p785, %p786
      %p788 = pneg %p787
      // Predicated region
      $region109: #{tpu_custom_call.1} parent=5 // pred_check
        _
      $region110: #{tpu_custom_call.1} parent=5 // pred_check_branch
        %790 = sbr.rel (%p787) target = $region112
      $region111: #{tpu_custom_call.1} parent=5 // pred_region
        %s791 = ssub.s32 %s44, 1
        // Predicated region
        $region113: #{tpu_custom_call.1} parent=111 // pred_check
          %p792 = pneg %p91
        $region114: #{tpu_custom_call.1} parent=111 // pred_check_branch
          %794 = sbr.rel (%p792) target = $region116
        $region115: #{tpu_custom_call.1} parent=111 // pred_region
          %795 = dma.done [#allocation3], 64
        $region116: #{tpu_custom_call.1} parent=111 // pred_fallthru
          _
        // Predicated region
        $region117: #{tpu_custom_call.1} parent=111 // pred_check
          %p796 = pneg %p154
        $region118: #{tpu_custom_call.1} parent=111 // pred_check_branch
          %798 = sbr.rel (%p796) target = $region120
        $region119: #{tpu_custom_call.1} parent=111 // pred_region
          %799 = dma.done [#allocation6], 16
        $region120: #{tpu_custom_call.1} parent=111 // pred_fallthru
          _
        // Predicated region
        $region121: #{tpu_custom_call.1} parent=111 // pred_check
          %p800 = pneg %p196
        $region122: #{tpu_custom_call.1} parent=111 // pred_check_branch
          %802 = sbr.rel (%p800) target = $region124
        $region123: #{tpu_custom_call.1} parent=111 // pred_region
          %803 = dma.done [#allocation6], 128
        $region124: #{tpu_custom_call.1} parent=111 // pred_fallthru
          _
        // Predicated region
        $region125: #{tpu_custom_call.1} parent=111 // pred_check
          %p804 = pneg %p217
        $region126: #{tpu_custom_call.1} parent=111 // pred_check_branch
          %806 = sbr.rel (%p804) target = $region128
        $region127: #{tpu_custom_call.1} parent=111 // pred_region
          %807 = dma.done [#allocation9], 32768
        $region128: #{tpu_custom_call.1} parent=111 // pred_fallthru
          _
        // Predicated region
        $region129: #{tpu_custom_call.1} parent=111 // pred_check
          %p808 = pneg %p280
        $region130: #{tpu_custom_call.1} parent=111 // pred_check_branch
          %810 = sbr.rel (%p808) target = $region132
        $region131: #{tpu_custom_call.1} parent=111 // pred_region
          %811 = dma.done [#allocation9], 32
        $region132: #{tpu_custom_call.1} parent=111 // pred_fallthru
          _
        // Predicated region
        $region133: #{tpu_custom_call.1} parent=111 // pred_check
          %p812 = pneg %p301
        $region134: #{tpu_custom_call.1} parent=111 // pred_check_branch
          %814 = sbr.rel (%p812) target = $region136
        $region135: #{tpu_custom_call.1} parent=111 // pred_region
          %815 = dma.done [#allocation12], 2048
        $region136: #{tpu_custom_call.1} parent=111 // pred_fallthru
          _
        // Predicated region
        $region137: #{tpu_custom_call.1} parent=111 // pred_check
          %p816 = pneg %p322
        $region138: #{tpu_custom_call.1} parent=111 // pred_check_branch
          %818 = sbr.rel (%p816) target = $region140
        $region139: #{tpu_custom_call.1} parent=111 // pred_region
          %819 = dma.done [#allocation12], 16
        $region140: #{tpu_custom_call.1} parent=111 // pred_fallthru
          _
        // Predicated region
        $region141: #{tpu_custom_call.1} parent=111 // pred_check
          %p820 = pneg %p343
        $region142: #{tpu_custom_call.1} parent=111 // pred_check_branch
          %822 = sbr.rel (%p820) target = $region144
        $region143: #{tpu_custom_call.1} parent=111 // pred_region
          %823 = dma.done [#allocation15], 64
        $region144: #{tpu_custom_call.1} parent=111 // pred_fallthru
          _
        // Predicated region
        $region145: #{tpu_custom_call.1} parent=111 // pred_check
          %p824 = pneg %p364
        $region146: #{tpu_custom_call.1} parent=111 // pred_check_branch
          %826 = sbr.rel (%p824) target = $region148
        $region147: #{tpu_custom_call.1} parent=111 // pred_region
          %827 = dma.done [#allocation15], 16
        $region148: #{tpu_custom_call.1} parent=111 // pred_fallthru
          _
        // Predicated region
        $region149: #{tpu_custom_call.1} parent=111 // pred_check
          %p828 = pneg %p427
        $region150: #{tpu_custom_call.1} parent=111 // pred_check_branch
          %830 = sbr.rel (%p828) target = $region152
        $region151: #{tpu_custom_call.1} parent=111 // pred_region
          %831 = dma.done [#allocation18], 512
        $region152: #{tpu_custom_call.1} parent=111 // pred_fallthru
          _
        // Predicated region
        $region153: #{tpu_custom_call.1} parent=111 // pred_check
          %p832 = pneg %p469
        $region154: #{tpu_custom_call.1} parent=111 // pred_check_branch
          %834 = sbr.rel (%p832) target = $region156
        $region155: #{tpu_custom_call.1} parent=111 // pred_region
          %835 = dma.done [#allocation18], 512
        $region156: #{tpu_custom_call.1} parent=111 // pred_fallthru
          _
        // Predicated region
        $region157: #{tpu_custom_call.1} parent=111 // pred_check
          %p836 = pneg %p511
        $region158: #{tpu_custom_call.1} parent=111 // pred_check_branch
          %838 = sbr.rel (%p836) target = $region160
        $region159: #{tpu_custom_call.1} parent=111 // pred_region
          %839 = dma.done [#allocation21], 8192
        $region160: #{tpu_custom_call.1} parent=111 // pred_fallthru
          _
        %s840 = smul.u32 2, %s49
        %p841 = scmp.lt.s32.totalorder %s840, 3
        %s842 = scalar_select %p841, %s840, 3
        %s843 = smul.addr %s842, 32
        %s844 = smul.addr %s843, 8
        %s845 = scalar_lea.vmem %s0, %s844
        %p846 = pneg %p70
        %p847 = pneg %p67
        %p848 = pneg %p91
        %p849 = pneg %p88
        %p850 = pneg %p112
        %p851 = pneg %p109
        %p852 = pneg %p133
        %p853 = pneg %p130
        %p854 = pneg %p154
        %p855 = pneg %p151
        %p856 = pneg %p175
        %p857 = pneg %p172
        %p858 = pneg %p196
        %p859 = pneg %p193
        %p860 = pneg %p217
        %p861 = pneg %p214
        %p862 = pneg %p238
        %p863 = pneg %p235
        %p864 = pneg %p259
        %p865 = pneg %p256
        %p866 = pneg %p280
        %p867 = pneg %p277
        %p868 = pneg %p301
        %p869 = pneg %p298
        %p870 = pneg %p322
        %p871 = pneg %p319
        %p872 = pneg %p343
        %p873 = pneg %p340
        %p874 = pneg %p364
        %p875 = pneg %p361
        %p876 = pneg %p385
        %p877 = pneg %p382
        %p878 = pneg %p406
        %p879 = pneg %p403
        %p880 = pneg %p427
        %p881 = pneg %p424
        %p882 = pneg %p448
        %p883 = pneg %p445
        %p884 = pneg %p469
        %p885 = pneg %p466
        %p886 = pneg %p490
        %p887 = pneg %p487
        %p888 = pneg %p511
        %p889 = pneg %p508
        %p890 = pneg %p532
        %p891 = pneg %p529
        %p892 = pneg %p558
        %p893 = pneg %p555
        %s894 = sand.u32 %s545, 1
        %s895 = scalar_lea.sflag [#allocation4], %s894
        %s896 = sand.u32 %s545, 1
        %s897 = smul.addr %s896, 16
        %s898 = scalar_lea.vmem [#allocation22], %s897
        %p899 = pneg %p584
        %p900 = pneg %p581
        %s901 = sand.u32 %s571, 1
        %s902 = scalar_lea.sflag [#allocation24], %s901
        %s903 = sand.u32 %s571, 1
        %s904 = smul.addr %s903, 2
        %s905 = scalar_lea.vmem [#allocation23], %s904
        %s906 = smul.u32 2, %s49
        %p907 = scmp.lt.s32.totalorder %s906, 3
        %s908 = scalar_select %p907, %s906, 3
        %s909 = smul.addr %s908, 32
        %s910 = smul.addr %s909, 8
        %s911 = scalar_lea.vmem %s0, %s910
        %s912 = smul.u32 2, %s49
        %v914 = vld [vmem:[#allocation2] sm:$0x1]
        %v915 = vld [vmem:[#allocation2 + $0x1] sm:$0x1]
        %v916 = vld [vmem:[#allocation2 + $0x2] sm:$0x1]
        loop: start=0, step=1, limit=2
        $region161: #{tpu_custom_call.1} parent=111 // loop_pre_header
          _
        $region162: #{tpu_custom_call.1} parent=111 // loop_header
          %s918 = sphi 0, %s922
          %p919 = scmp.ge.s32.totalorder %s918, 2
          %v923 = vphi -inf, %v3738
          %v924 = vphi -inf, %v3739
          %v925 = vphi -inf, %v3740
          %v926 = vphi -inf, %v3741
          %v927 = vphi -inf, %v3742
          %v928 = vphi -inf, %v3743
          %v929 = vphi -inf, %v3744
          %v930 = vphi -inf, %v3745
        $region163: #{tpu_custom_call.1} parent=111 // loop_header_branch
          %921 = sbr.rel (%p919) target = $region167
        $region164: #{tpu_custom_call.1} parent=111 // loop_body
          %s931 = smul.u32 %s918, 128
          %s932 = scalar_lea.vmem %s911, %s931
          %v933 = vld [vmem:[%s932] sm:$0xff]
          %v934 = vld [vmem:[%s932 + $0x8] sm:$0xff]
          %v935 = vld [vmem:[%s932 + $0x10] sm:$0xff]
          %v936 = vld [vmem:[%s932 + $0x18] sm:$0xff]
          %v937 = vld [vmem:[%s932 + $0x20] sm:$0xff]
          %v938 = vld [vmem:[%s932 + $0x28] sm:$0xff]
          %v939 = vld [vmem:[%s932 + $0x30] sm:$0xff]
          %v940 = vld [vmem:[%s932 + $0x38] sm:$0xff]
          %v941 = vld [vmem:[%s932 + $0x40] sm:$0xff]
          %v942 = vld [vmem:[%s932 + $0x48] sm:$0xff]
          %v943 = vld [vmem:[%s932 + $0x50] sm:$0xff]
          %v944 = vld [vmem:[%s932 + $0x58] sm:$0xff]
          %v945 = vld [vmem:[%s932 + $0x60] sm:$0xff]
          %v946 = vld [vmem:[%s932 + $0x68] sm:$0xff]
          %v947 = vld [vmem:[%s932 + $0x70] sm:$0xff]
          %v948 = vld [vmem:[%s932 + $0x78] sm:$0xff]
          %950 = vset.pattern.permute.xlu0 0
          %951 = vperm.xlu0 %950, %v933
          %v952 = vpop.permute.xlu0 %951
          %955 = vset.pattern.permute.xlu0 0
          %956 = vperm.xlu0 %955, %v934
          %v957 = vpop.permute.xlu0 %956
          %960 = vset.pattern.permute.xlu0 0
          %961 = vperm.xlu0 %960, %v935
          %v962 = vpop.permute.xlu0 %961
          %965 = vset.pattern.permute.xlu0 0
          %966 = vperm.xlu0 %965, %v936
          %v967 = vpop.permute.xlu0 %966
          %970 = vset.pattern.permute.xlu0 0
          %971 = vperm.xlu0 %970, %v937
          %v972 = vpop.permute.xlu0 %971
          %975 = vset.pattern.permute.xlu0 0
          %976 = vperm.xlu0 %975, %v938
          %v977 = vpop.permute.xlu0 %976
          %980 = vset.pattern.permute.xlu0 0
          %981 = vperm.xlu0 %980, %v939
          %v982 = vpop.permute.xlu0 %981
          %985 = vset.pattern.permute.xlu0 0
          %986 = vperm.xlu0 %985, %v940
          %v987 = vpop.permute.xlu0 %986
          %990 = vset.pattern.permute.xlu0 0
          %991 = vperm.xlu0 %990, %v941
          %v992 = vpop.permute.xlu0 %991
          %995 = vset.pattern.permute.xlu0 0
          %996 = vperm.xlu0 %995, %v942
          %v997 = vpop.permute.xlu0 %996
          %1000 = vset.pattern.permute.xlu0 0
          %1001 = vperm.xlu0 %1000, %v943
          %v1002 = vpop.permute.xlu0 %1001
          %1005 = vset.pattern.permute.xlu0 0
          %1006 = vperm.xlu0 %1005, %v944
          %v1007 = vpop.permute.xlu0 %1006
          %1010 = vset.pattern.permute.xlu0 0
          %1011 = vperm.xlu0 %1010, %v945
          %v1012 = vpop.permute.xlu0 %1011
          %1015 = vset.pattern.permute.xlu0 0
          %1016 = vperm.xlu0 %1015, %v946
          %v1017 = vpop.permute.xlu0 %1016
          %1020 = vset.pattern.permute.xlu0 0
          %1021 = vperm.xlu0 %1020, %v947
          %v1022 = vpop.permute.xlu0 %1021
          %1025 = vset.pattern.permute.xlu0 0
          %1026 = vperm.xlu0 %1025, %v948
          %v1027 = vpop.permute.xlu0 %1026
          %v1029 = vlaneseq
          %v1030 = vshrl.u32 %v1029, 7
          %v1031 = vsub.s32 0, %v1030
          %v1032 = vrot.slane %v914, %v1031
          %v1033 = vmul.f32 %v952, %v1032
          %v1034 = vmul.f32 %v957, %v1032
          %v1035 = vmul.f32 %v962, %v1032
          %v1036 = vmul.f32 %v967, %v1032
          %v1037 = vmul.f32 %v972, %v1032
          %v1038 = vmul.f32 %v977, %v1032
          %v1039 = vmul.f32 %v982, %v1032
          %v1040 = vmul.f32 %v987, %v1032
          %v1041 = vmul.f32 %v992, %v1032
          %v1042 = vmul.f32 %v997, %v1032
          %v1043 = vmul.f32 %v1002, %v1032
          %v1044 = vmul.f32 %v1007, %v1032
          %v1045 = vmul.f32 %v1012, %v1032
          %v1046 = vmul.f32 %v1017, %v1032
          %v1047 = vmul.f32 %v1022, %v1032
          %v1048 = vmul.f32 %v1027, %v1032
          %1049 = vset.pattern.permute.xlu0 1
          %1050 = vperm.xlu0 %1049, %v933
          %v1051 = vpop.permute.xlu0 %1050
          %1053 = vset.pattern.permute.xlu0 1
          %1054 = vperm.xlu0 %1053, %v934
          %v1055 = vpop.permute.xlu0 %1054
          %1057 = vset.pattern.permute.xlu0 1
          %1058 = vperm.xlu0 %1057, %v935
          %v1059 = vpop.permute.xlu0 %1058
          %1061 = vset.pattern.permute.xlu0 1
          %1062 = vperm.xlu0 %1061, %v936
          %v1063 = vpop.permute.xlu0 %1062
          %1065 = vset.pattern.permute.xlu0 1
          %1066 = vperm.xlu0 %1065, %v937
          %v1067 = vpop.permute.xlu0 %1066
          %1069 = vset.pattern.permute.xlu0 1
          %1070 = vperm.xlu0 %1069, %v938
          %v1071 = vpop.permute.xlu0 %1070
          %1073 = vset.pattern.permute.xlu0 1
          %1074 = vperm.xlu0 %1073, %v939
          %v1075 = vpop.permute.xlu0 %1074
          %1077 = vset.pattern.permute.xlu0 1
          %1078 = vperm.xlu0 %1077, %v940
          %v1079 = vpop.permute.xlu0 %1078
          %1081 = vset.pattern.permute.xlu0 1
          %1082 = vperm.xlu0 %1081, %v941
          %v1083 = vpop.permute.xlu0 %1082
          %1085 = vset.pattern.permute.xlu0 1
          %1086 = vperm.xlu0 %1085, %v942
          %v1087 = vpop.permute.xlu0 %1086
          %1089 = vset.pattern.permute.xlu0 1
          %1090 = vperm.xlu0 %1089, %v943
          %v1091 = vpop.permute.xlu0 %1090
          %1093 = vset.pattern.permute.xlu0 1
          %1094 = vperm.xlu0 %1093, %v944
          %v1095 = vpop.permute.xlu0 %1094
          %1097 = vset.pattern.permute.xlu0 1
          %1098 = vperm.xlu0 %1097, %v945
          %v1099 = vpop.permute.xlu0 %1098
          %1101 = vset.pattern.permute.xlu0 1
          %1102 = vperm.xlu0 %1101, %v946
          %v1103 = vpop.permute.xlu0 %1102
          %1105 = vset.pattern.permute.xlu0 1
          %1106 = vperm.xlu0 %1105, %v947
          %v1107 = vpop.permute.xlu0 %1106
          %1109 = vset.pattern.permute.xlu0 1
          %1110 = vperm.xlu0 %1109, %v948
          %v1111 = vpop.permute.xlu0 %1110
          %v1113 = vlaneseq
          %v1114 = vshrl.u32 %v1113, 7
          %v1115 = vsub.s32 0, %v1114
          %v1116 = vrot.slane %v915, %v1115
          %v1117 = vmul.f32 %v1051, %v1116
          %v1118 = vmul.f32 %v1055, %v1116
          %v1119 = vmul.f32 %v1059, %v1116
          %v1120 = vmul.f32 %v1063, %v1116
          %v1121 = vmul.f32 %v1067, %v1116
          %v1122 = vmul.f32 %v1071, %v1116
          %v1123 = vmul.f32 %v1075, %v1116
          %v1124 = vmul.f32 %v1079, %v1116
          %v1125 = vmul.f32 %v1083, %v1116
          %v1126 = vmul.f32 %v1087, %v1116
          %v1127 = vmul.f32 %v1091, %v1116
          %v1128 = vmul.f32 %v1095, %v1116
          %v1129 = vmul.f32 %v1099, %v1116
          %v1130 = vmul.f32 %v1103, %v1116
          %v1131 = vmul.f32 %v1107, %v1116
          %v1132 = vmul.f32 %v1111, %v1116
          %v1133 = vadd.f32 %v1033, %v1117
          %v1134 = vadd.f32 %v1034, %v1118
          %v1135 = vadd.f32 %v1035, %v1119
          %v1136 = vadd.f32 %v1036, %v1120
          %v1137 = vadd.f32 %v1037, %v1121
          %v1138 = vadd.f32 %v1038, %v1122
          %v1139 = vadd.f32 %v1039, %v1123
          %v1140 = vadd.f32 %v1040, %v1124
          %v1141 = vadd.f32 %v1041, %v1125
          %v1142 = vadd.f32 %v1042, %v1126
          %v1143 = vadd.f32 %v1043, %v1127
          %v1144 = vadd.f32 %v1044, %v1128
          %v1145 = vadd.f32 %v1045, %v1129
          %v1146 = vadd.f32 %v1046, %v1130
          %v1147 = vadd.f32 %v1047, %v1131
          %v1148 = vadd.f32 %v1048, %v1132
          %1149 = vset.pattern.permute.xlu0 2
          %1150 = vperm.xlu0 %1149, %v933
          %v1151 = vpop.permute.xlu0 %1150
          %1153 = vset.pattern.permute.xlu0 2
          %1154 = vperm.xlu0 %1153, %v934
          %v1155 = vpop.permute.xlu0 %1154
          %1157 = vset.pattern.permute.xlu0 2
          %1158 = vperm.xlu0 %1157, %v935
          %v1159 = vpop.permute.xlu0 %1158
          %1161 = vset.pattern.permute.xlu0 2
          %1162 = vperm.xlu0 %1161, %v936
          %v1163 = vpop.permute.xlu0 %1162
          %1165 = vset.pattern.permute.xlu0 2
          %1166 = vperm.xlu0 %1165, %v937
          %v1167 = vpop.permute.xlu0 %1166
          %1169 = vset.pattern.permute.xlu0 2
          %1170 = vperm.xlu0 %1169, %v938
          %v1171 = vpop.permute.xlu0 %1170
          %1173 = vset.pattern.permute.xlu0 2
          %1174 = vperm.xlu0 %1173, %v939
          %v1175 = vpop.permute.xlu0 %1174
          %1177 = vset.pattern.permute.xlu0 2
          %1178 = vperm.xlu0 %1177, %v940
          %v1179 = vpop.permute.xlu0 %1178
          %1181 = vset.pattern.permute.xlu0 2
          %1182 = vperm.xlu0 %1181, %v941
          %v1183 = vpop.permute.xlu0 %1182
          %1185 = vset.pattern.permute.xlu0 2
          %1186 = vperm.xlu0 %1185, %v942
          %v1187 = vpop.permute.xlu0 %1186
          %1189 = vset.pattern.permute.xlu0 2
          %1190 = vperm.xlu0 %1189, %v943
          %v1191 = vpop.permute.xlu0 %1190
          %1193 = vset.pattern.permute.xlu0 2
          %1194 = vperm.xlu0 %1193, %v944
          %v1195 = vpop.permute.xlu0 %1194
          %1197 = vset.pattern.permute.xlu0 2
          %1198 = vperm.xlu0 %1197, %v945
          %v1199 = vpop.permute.xlu0 %1198
          %1201 = vset.pattern.permute.xlu0 2
          %1202 = vperm.xlu0 %1201, %v946
          %v1203 = vpop.permute.xlu0 %1202
          %1205 = vset.pattern.permute.xlu0 2
          %1206 = vperm.xlu0 %1205, %v947
          %v1207 = vpop.permute.xlu0 %1206
          %1209 = vset.pattern.permute.xlu0 2
          %1210 = vperm.xlu0 %1209, %v948
          %v1211 = vpop.permute.xlu0 %1210
          %v1213 = vlaneseq
          %v1214 = vshrl.u32 %v1213, 7
          %v1215 = vsub.s32 0, %v1214
          %v1216 = vrot.slane %v916, %v1215
          %v1217 = vmul.f32 %v1151, %v1216
          %v1218 = vmul.f32 %v1155, %v1216
          %v1219 = vmul.f32 %v1159, %v1216
          %v1220 = vmul.f32 %v1163, %v1216
          %v1221 = vmul.f32 %v1167, %v1216
          %v1222 = vmul.f32 %v1171, %v1216
          %v1223 = vmul.f32 %v1175, %v1216
          %v1224 = vmul.f32 %v1179, %v1216
          %v1225 = vmul.f32 %v1183, %v1216
          %v1226 = vmul.f32 %v1187, %v1216
          %v1227 = vmul.f32 %v1191, %v1216
          %v1228 = vmul.f32 %v1195, %v1216
          %v1229 = vmul.f32 %v1199, %v1216
          %v1230 = vmul.f32 %v1203, %v1216
          %v1231 = vmul.f32 %v1207, %v1216
          %v1232 = vmul.f32 %v1211, %v1216
          %v1233 = vadd.f32 %v1133, %v1217
          %v1234 = vadd.f32 %v1134, %v1218
          %v1235 = vadd.f32 %v1135, %v1219
          %v1236 = vadd.f32 %v1136, %v1220
          %v1237 = vadd.f32 %v1137, %v1221
          %v1238 = vadd.f32 %v1138, %v1222
          %v1239 = vadd.f32 %v1139, %v1223
          %v1240 = vadd.f32 %v1140, %v1224
          %v1241 = vadd.f32 %v1141, %v1225
          %v1242 = vadd.f32 %v1142, %v1226
          %v1243 = vadd.f32 %v1143, %v1227
          %v1244 = vadd.f32 %v1144, %v1228
          %v1245 = vadd.f32 %v1145, %v1229
          %v1246 = vadd.f32 %v1146, %v1230
          %v1247 = vadd.f32 %v1147, %v1231
          %v1248 = vadd.f32 %v1148, %v1232
          %s1249 = sadd.s32 %s931, 256
          %s1250 = scalar_lea.vmem %s911, %s1249
          %v1251 = vld [vmem:[%s1250] sm:$0xff]
          %v1252 = vld [vmem:[%s1250 + $0x8] sm:$0xff]
          %v1253 = vld [vmem:[%s1250 + $0x10] sm:$0xff]
          %v1254 = vld [vmem:[%s1250 + $0x18] sm:$0xff]
          %v1255 = vld [vmem:[%s1250 + $0x20] sm:$0xff]
          %v1256 = vld [vmem:[%s1250 + $0x28] sm:$0xff]
          %v1257 = vld [vmem:[%s1250 + $0x30] sm:$0xff]
          %v1258 = vld [vmem:[%s1250 + $0x38] sm:$0xff]
          %v1259 = vld [vmem:[%s1250 + $0x40] sm:$0xff]
          %v1260 = vld [vmem:[%s1250 + $0x48] sm:$0xff]
          %v1261 = vld [vmem:[%s1250 + $0x50] sm:$0xff]
          %v1262 = vld [vmem:[%s1250 + $0x58] sm:$0xff]
          %v1263 = vld [vmem:[%s1250 + $0x60] sm:$0xff]
          %v1264 = vld [vmem:[%s1250 + $0x68] sm:$0xff]
          %v1265 = vld [vmem:[%s1250 + $0x70] sm:$0xff]
          %v1266 = vld [vmem:[%s1250 + $0x78] sm:$0xff]
          %1268 = vset.pattern.permute.xlu0 0
          %1269 = vperm.xlu0 %1268, %v1251
          %v1270 = vpop.permute.xlu0 %1269
          %1273 = vset.pattern.permute.xlu0 0
          %1274 = vperm.xlu0 %1273, %v1252
          %v1275 = vpop.permute.xlu0 %1274
          %1278 = vset.pattern.permute.xlu0 0
          %1279 = vperm.xlu0 %1278, %v1253
          %v1280 = vpop.permute.xlu0 %1279
          %1283 = vset.pattern.permute.xlu0 0
          %1284 = vperm.xlu0 %1283, %v1254
          %v1285 = vpop.permute.xlu0 %1284
          %1288 = vset.pattern.permute.xlu0 0
          %1289 = vperm.xlu0 %1288, %v1255
          %v1290 = vpop.permute.xlu0 %1289
          %1293 = vset.pattern.permute.xlu0 0
          %1294 = vperm.xlu0 %1293, %v1256
          %v1295 = vpop.permute.xlu0 %1294
          %1298 = vset.pattern.permute.xlu0 0
          %1299 = vperm.xlu0 %1298, %v1257
          %v1300 = vpop.permute.xlu0 %1299
          %1303 = vset.pattern.permute.xlu0 0
          %1304 = vperm.xlu0 %1303, %v1258
          %v1305 = vpop.permute.xlu0 %1304
          %1308 = vset.pattern.permute.xlu0 0
          %1309 = vperm.xlu0 %1308, %v1259
          %v1310 = vpop.permute.xlu0 %1309
          %1313 = vset.pattern.permute.xlu0 0
          %1314 = vperm.xlu0 %1313, %v1260
          %v1315 = vpop.permute.xlu0 %1314
          %1318 = vset.pattern.permute.xlu0 0
          %1319 = vperm.xlu0 %1318, %v1261
          %v1320 = vpop.permute.xlu0 %1319
          %1323 = vset.pattern.permute.xlu0 0
          %1324 = vperm.xlu0 %1323, %v1262
          %v1325 = vpop.permute.xlu0 %1324
          %1328 = vset.pattern.permute.xlu0 0
          %1329 = vperm.xlu0 %1328, %v1263
          %v1330 = vpop.permute.xlu0 %1329
          %1333 = vset.pattern.permute.xlu0 0
          %1334 = vperm.xlu0 %1333, %v1264
          %v1335 = vpop.permute.xlu0 %1334
          %1338 = vset.pattern.permute.xlu0 0
          %1339 = vperm.xlu0 %1338, %v1265
          %v1340 = vpop.permute.xlu0 %1339
          %1343 = vset.pattern.permute.xlu0 0
          %1344 = vperm.xlu0 %1343, %v1266
          %v1345 = vpop.permute.xlu0 %1344
          %v1347 = vmul.f32 %v1270, %v1032
          %v1348 = vmul.f32 %v1275, %v1032
          %v1349 = vmul.f32 %v1280, %v1032
          %v1350 = vmul.f32 %v1285, %v1032
          %v1351 = vmul.f32 %v1290, %v1032
          %v1352 = vmul.f32 %v1295, %v1032
          %v1353 = vmul.f32 %v1300, %v1032
          %v1354 = vmul.f32 %v1305, %v1032
          %v1355 = vmul.f32 %v1310, %v1032
          %v1356 = vmul.f32 %v1315, %v1032
          %v1357 = vmul.f32 %v1320, %v1032
          %v1358 = vmul.f32 %v1325, %v1032
          %v1359 = vmul.f32 %v1330, %v1032
          %v1360 = vmul.f32 %v1335, %v1032
          %v1361 = vmul.f32 %v1340, %v1032
          %v1362 = vmul.f32 %v1345, %v1032
          %1363 = vset.pattern.permute.xlu0 1
          %1364 = vperm.xlu0 %1363, %v1251
          %v1365 = vpop.permute.xlu0 %1364
          %1367 = vset.pattern.permute.xlu0 1
          %1368 = vperm.xlu0 %1367, %v1252
          %v1369 = vpop.permute.xlu0 %1368
          %1371 = vset.pattern.permute.xlu0 1
          %1372 = vperm.xlu0 %1371, %v1253
          %v1373 = vpop.permute.xlu0 %1372
          %1375 = vset.pattern.permute.xlu0 1
          %1376 = vperm.xlu0 %1375, %v1254
          %v1377 = vpop.permute.xlu0 %1376
          %1379 = vset.pattern.permute.xlu0 1
          %1380 = vperm.xlu0 %1379, %v1255
          %v1381 = vpop.permute.xlu0 %1380
          %1383 = vset.pattern.permute.xlu0 1
          %1384 = vperm.xlu0 %1383, %v1256
          %v1385 = vpop.permute.xlu0 %1384
          %1387 = vset.pattern.permute.xlu0 1
          %1388 = vperm.xlu0 %1387, %v1257
          %v1389 = vpop.permute.xlu0 %1388
          %1391 = vset.pattern.permute.xlu0 1
          %1392 = vperm.xlu0 %1391, %v1258
          %v1393 = vpop.permute.xlu0 %1392
          %1395 = vset.pattern.permute.xlu0 1
          %1396 = vperm.xlu0 %1395, %v1259
          %v1397 = vpop.permute.xlu0 %1396
          %1399 = vset.pattern.permute.xlu0 1
          %1400 = vperm.xlu0 %1399, %v1260
          %v1401 = vpop.permute.xlu0 %1400
          %1403 = vset.pattern.permute.xlu0 1
          %1404 = vperm.xlu0 %1403, %v1261
          %v1405 = vpop.permute.xlu0 %1404
          %1407 = vset.pattern.permute.xlu0 1
          %1408 = vperm.xlu0 %1407, %v1262
          %v1409 = vpop.permute.xlu0 %1408
          %1411 = vset.pattern.permute.xlu0 1
          %1412 = vperm.xlu0 %1411, %v1263
          %v1413 = vpop.permute.xlu0 %1412
          %1415 = vset.pattern.permute.xlu0 1
          %1416 = vperm.xlu0 %1415, %v1264
          %v1417 = vpop.permute.xlu0 %1416
          %1419 = vset.pattern.permute.xlu0 1
          %1420 = vperm.xlu0 %1419, %v1265
          %v1421 = vpop.permute.xlu0 %1420
          %1423 = vset.pattern.permute.xlu0 1
          %1424 = vperm.xlu0 %1423, %v1266
          %v1425 = vpop.permute.xlu0 %1424
          %v1427 = vmul.f32 %v1365, %v1116
          %v1428 = vmul.f32 %v1369, %v1116
          %v1429 = vmul.f32 %v1373, %v1116
          %v1430 = vmul.f32 %v1377, %v1116
          %v1431 = vmul.f32 %v1381, %v1116
          %v1432 = vmul.f32 %v1385, %v1116
          %v1433 = vmul.f32 %v1389, %v1116
          %v1434 = vmul.f32 %v1393, %v1116
          %v1435 = vmul.f32 %v1397, %v1116
          %v1436 = vmul.f32 %v1401, %v1116
          %v1437 = vmul.f32 %v1405, %v1116
          %v1438 = vmul.f32 %v1409, %v1116
          %v1439 = vmul.f32 %v1413, %v1116
          %v1440 = vmul.f32 %v1417, %v1116
          %v1441 = vmul.f32 %v1421, %v1116
          %v1442 = vmul.f32 %v1425, %v1116
          %v1443 = vadd.f32 %v1347, %v1427
          %v1444 = vadd.f32 %v1348, %v1428
          %v1445 = vadd.f32 %v1349, %v1429
          %v1446 = vadd.f32 %v1350, %v1430
          %v1447 = vadd.f32 %v1351, %v1431
          %v1448 = vadd.f32 %v1352, %v1432
          %v1449 = vadd.f32 %v1353, %v1433
          %v1450 = vadd.f32 %v1354, %v1434
          %v1451 = vadd.f32 %v1355, %v1435
          %v1452 = vadd.f32 %v1356, %v1436
          %v1453 = vadd.f32 %v1357, %v1437
          %v1454 = vadd.f32 %v1358, %v1438
          %v1455 = vadd.f32 %v1359, %v1439
          %v1456 = vadd.f32 %v1360, %v1440
          %v1457 = vadd.f32 %v1361, %v1441
          %v1458 = vadd.f32 %v1362, %v1442
          %1459 = vset.pattern.permute.xlu0 2
          %1460 = vperm.xlu0 %1459, %v1251
          %v1461 = vpop.permute.xlu0 %1460
          %1463 = vset.pattern.permute.xlu0 2
          %1464 = vperm.xlu0 %1463, %v1252
          %v1465 = vpop.permute.xlu0 %1464
          %1467 = vset.pattern.permute.xlu0 2
          %1468 = vperm.xlu0 %1467, %v1253
          %v1469 = vpop.permute.xlu0 %1468
          %1471 = vset.pattern.permute.xlu0 2
          %1472 = vperm.xlu0 %1471, %v1254
          %v1473 = vpop.permute.xlu0 %1472
          %1475 = vset.pattern.permute.xlu0 2
          %1476 = vperm.xlu0 %1475, %v1255
          %v1477 = vpop.permute.xlu0 %1476
          %1479 = vset.pattern.permute.xlu0 2
          %1480 = vperm.xlu0 %1479, %v1256
          %v1481 = vpop.permute.xlu0 %1480
          %1483 = vset.pattern.permute.xlu0 2
          %1484 = vperm.xlu0 %1483, %v1257
          %v1485 = vpop.permute.xlu0 %1484
          %1487 = vset.pattern.permute.xlu0 2
          %1488 = vperm.xlu0 %1487, %v1258
          %v1489 = vpop.permute.xlu0 %1488
          %1491 = vset.pattern.permute.xlu0 2
          %1492 = vperm.xlu0 %1491, %v1259
          %v1493 = vpop.permute.xlu0 %1492
          %1495 = vset.pattern.permute.xlu0 2
          %1496 = vperm.xlu0 %1495, %v1260
          %v1497 = vpop.permute.xlu0 %1496
          %1499 = vset.pattern.permute.xlu0 2
          %1500 = vperm.xlu0 %1499, %v1261
          %v1501 = vpop.permute.xlu0 %1500
          %1503 = vset.pattern.permute.xlu0 2
          %1504 = vperm.xlu0 %1503, %v1262
          %v1505 = vpop.permute.xlu0 %1504
          %1507 = vset.pattern.permute.xlu0 2
          %1508 = vperm.xlu0 %1507, %v1263
          %v1509 = vpop.permute.xlu0 %1508
          %1511 = vset.pattern.permute.xlu0 2
          %1512 = vperm.xlu0 %1511, %v1264
          %v1513 = vpop.permute.xlu0 %1512
          %1515 = vset.pattern.permute.xlu0 2
          %1516 = vperm.xlu0 %1515, %v1265
          %v1517 = vpop.permute.xlu0 %1516
          %1519 = vset.pattern.permute.xlu0 2
          %1520 = vperm.xlu0 %1519, %v1266
          %v1521 = vpop.permute.xlu0 %1520
          %v1523 = vmul.f32 %v1461, %v1216
          %v1524 = vmul.f32 %v1465, %v1216
          %v1525 = vmul.f32 %v1469, %v1216
          %v1526 = vmul.f32 %v1473, %v1216
          %v1527 = vmul.f32 %v1477, %v1216
          %v1528 = vmul.f32 %v1481, %v1216
          %v1529 = vmul.f32 %v1485, %v1216
          %v1530 = vmul.f32 %v1489, %v1216
          %v1531 = vmul.f32 %v1493, %v1216
          %v1532 = vmul.f32 %v1497, %v1216
          %v1533 = vmul.f32 %v1501, %v1216
          %v1534 = vmul.f32 %v1505, %v1216
          %v1535 = vmul.f32 %v1509, %v1216
          %v1536 = vmul.f32 %v1513, %v1216
          %v1537 = vmul.f32 %v1517, %v1216
          %v1538 = vmul.f32 %v1521, %v1216
          %v1539 = vadd.f32 %v1443, %v1523
          %v1540 = vadd.f32 %v1444, %v1524
          %v1541 = vadd.f32 %v1445, %v1525
          %v1542 = vadd.f32 %v1446, %v1526
          %v1543 = vadd.f32 %v1447, %v1527
          %v1544 = vadd.f32 %v1448, %v1528
          %v1545 = vadd.f32 %v1449, %v1529
          %v1546 = vadd.f32 %v1450, %v1530
          %v1547 = vadd.f32 %v1451, %v1531
          %v1548 = vadd.f32 %v1452, %v1532
          %v1549 = vadd.f32 %v1453, %v1533
          %v1550 = vadd.f32 %v1454, %v1534
          %v1551 = vadd.f32 %v1455, %v1535
          %v1552 = vadd.f32 %v1456, %v1536
          %v1553 = vadd.f32 %v1457, %v1537
          %v1554 = vadd.f32 %v1458, %v1538
          %v1555 = vld [vmem:[%s2] sm:$0x1]
          %v1557 = vlaneseq
          %v1558 = vshrl.u32 %v1557, 7
          %v1559 = vsub.s32 0, %v1558
          %v1560 = vrot.slane %v1555, %v1559
          %v1562 = vadd.f32 %v1233, %v1560
          %v1563 = vadd.f32 %v1234, %v1560
          %v1564 = vadd.f32 %v1235, %v1560
          %v1565 = vadd.f32 %v1236, %v1560
          %v1566 = vadd.f32 %v1237, %v1560
          %v1567 = vadd.f32 %v1238, %v1560
          %v1568 = vadd.f32 %v1239, %v1560
          %v1569 = vadd.f32 %v1240, %v1560
          %v1570 = vadd.f32 %v1241, %v1560
          %v1571 = vadd.f32 %v1242, %v1560
          %v1572 = vadd.f32 %v1243, %v1560
          %v1573 = vadd.f32 %v1244, %v1560
          %v1574 = vadd.f32 %v1245, %v1560
          %v1575 = vadd.f32 %v1246, %v1560
          %v1576 = vadd.f32 %v1247, %v1560
          %v1577 = vadd.f32 %v1248, %v1560
          %v1578 = vadd.f32 %v1539, %v1560
          %v1579 = vadd.f32 %v1540, %v1560
          %v1580 = vadd.f32 %v1541, %v1560
          %v1581 = vadd.f32 %v1542, %v1560
          %v1582 = vadd.f32 %v1543, %v1560
          %v1583 = vadd.f32 %v1544, %v1560
          %v1584 = vadd.f32 %v1545, %v1560
          %v1585 = vadd.f32 %v1546, %v1560
          %v1586 = vadd.f32 %v1547, %v1560
          %v1587 = vadd.f32 %v1548, %v1560
          %v1588 = vadd.f32 %v1549, %v1560
          %v1589 = vadd.f32 %v1550, %v1560
          %v1590 = vadd.f32 %v1551, %v1560
          %v1591 = vadd.f32 %v1552, %v1560
          %v1592 = vadd.f32 %v1553, %v1560
          %v1593 = vadd.f32 %v1554, %v1560
          %v1594 = vmax.f32 %v1562, 0.0
          %v1595 = vmax.f32 %v1563, 0.0
          %v1596 = vmax.f32 %v1564, 0.0
          %v1597 = vmax.f32 %v1565, 0.0
          %v1598 = vmax.f32 %v1566, 0.0
          %v1599 = vmax.f32 %v1567, 0.0
          %v1600 = vmax.f32 %v1568, 0.0
          %v1601 = vmax.f32 %v1569, 0.0
          %v1602 = vmax.f32 %v1570, 0.0
          %v1603 = vmax.f32 %v1571, 0.0
          %v1604 = vmax.f32 %v1572, 0.0
          %v1605 = vmax.f32 %v1573, 0.0
          %v1606 = vmax.f32 %v1574, 0.0
          %v1607 = vmax.f32 %v1575, 0.0
          %v1608 = vmax.f32 %v1576, 0.0
          %v1609 = vmax.f32 %v1577, 0.0
          %v1610 = vmax.f32 %v1578, 0.0
          %v1611 = vmax.f32 %v1579, 0.0
          %v1612 = vmax.f32 %v1580, 0.0
          %v1613 = vmax.f32 %v1581, 0.0
          %v1614 = vmax.f32 %v1582, 0.0
          %v1615 = vmax.f32 %v1583, 0.0
          %v1616 = vmax.f32 %v1584, 0.0
          %v1617 = vmax.f32 %v1585, 0.0
          %v1618 = vmax.f32 %v1586, 0.0
          %v1619 = vmax.f32 %v1587, 0.0
          %v1620 = vmax.f32 %v1588, 0.0
          %v1621 = vmax.f32 %v1589, 0.0
          %v1622 = vmax.f32 %v1590, 0.0
          %v1623 = vmax.f32 %v1591, 0.0
          %v1624 = vmax.f32 %v1592, 0.0
          %v1625 = vmax.f32 %v1593, 0.0
          %v1626 = vpack.c.bf16 %v1595, %v1594
          %v1627 = vpack.c.bf16 %v1597, %v1596
          %v1628 = vpack.c.bf16 %v1599, %v1598
          %v1629 = vpack.c.bf16 %v1601, %v1600
          %v1630 = vpack.c.bf16 %v1603, %v1602
          %v1631 = vpack.c.bf16 %v1605, %v1604
          %v1632 = vpack.c.bf16 %v1607, %v1606
          %v1633 = vpack.c.bf16 %v1609, %v1608
          %v1634 = vpack.c.bf16 %v1611, %v1610
          %v1635 = vpack.c.bf16 %v1613, %v1612
          %v1636 = vpack.c.bf16 %v1615, %v1614
          %v1637 = vpack.c.bf16 %v1617, %v1616
          %v1638 = vpack.c.bf16 %v1619, %v1618
          %v1639 = vpack.c.bf16 %v1621, %v1620
          %v1640 = vpack.c.bf16 %v1623, %v1622
          %v1641 = vpack.c.bf16 %v1625, %v1624
          %v1642 = vld [vmem:[%s3] sm:$0xf]
          %v1643 = vld [vmem:[%s3 + $0x4] sm:$0xf]
          %v1644 = vld [vmem:[%s3 + $0x8] sm:$0xf]
          %v1645 = vld [vmem:[%s3 + $0xc] sm:$0xf]
          %v1646 = vld [vmem:[%s3 + $0x10] sm:$0xf]
          %v1647 = vld [vmem:[%s3 + $0x14] sm:$0xf]
          %v1648 = vld [vmem:[%s3 + $0x18] sm:$0xf]
          %v1649 = vld [vmem:[%s3 + $0x1c] sm:$0xf]
          %v1650 = vld [vmem:[#allocation5] sm:$0x1]
          %v1652 = vlaneseq
          %v1653 = vshrl.u32 %v1652, 7
          %v1654 = vsub.s32 0, %v1653
          %v1655 = vrot.slane %v1650, %v1654
          %v1665 = vunpack.c.l.b16 %v1642
          %v1666 = vunpack.c.l.b16 %v1643
          %v1667 = vunpack.c.l.b16 %v1644
          %v1668 = vunpack.c.l.b16 %v1645
          %v1669 = vunpack.c.l.b16 %v1646
          %v1670 = vunpack.c.l.b16 %v1647
          %v1671 = vunpack.c.l.b16 %v1648
          %v1672 = vunpack.c.l.b16 %v1649
          %v1673 = vpack.c.b16 %v1666, %v1665
          %v1674 = vpack.c.b16 %v1668, %v1667
          %v1675 = vpack.c.b16 %v1670, %v1669
          %v1676 = vpack.c.b16 %v1672, %v1671
          %vm1681 = vcmask 523264
          %v1683 = vsel %vm1681, %v1626, 0
          %v1686 = vsel %vm1681, %v1627, 0
          %v1689 = vsel %vm1681, %v1628, 0
          %v1692 = vsel %vm1681, %v1629, 0
          %v1695 = vsel %vm1681, %v1630, 0
          %v1698 = vsel %vm1681, %v1631, 0
          %v1701 = vsel %vm1681, %v1632, 0
          %v1704 = vsel %vm1681, %v1633, 0
          %v1707 = vsel %vm1681, %v1634, 0
          %v1710 = vsel %vm1681, %v1635, 0
          %v1713 = vsel %vm1681, %v1636, 0
          %v1716 = vsel %vm1681, %v1637, 0
          %v1719 = vsel %vm1681, %v1638, 0
          %v1722 = vsel %vm1681, %v1639, 0
          %v1725 = vsel %vm1681, %v1640, 0
          %v1728 = vsel %vm1681, %v1641, 0
          %1730 = vmatprep.subr.bf16.mxu0 0
          %1731 = vmatpush1.bf16.msra.mxu0 %v1673
          %1732 = vmatprep.subr.bf16.mxu0 0
          %1733 = vmatpush1.bf16.msra.mxu0 %v1674
          %1734 = vmatprep.subr.bf16.mxu0 0
          %1735 = vmatpush1.bf16.msra.mxu0 %v1675
          %1736 = vmatprep.subr.bf16.mxu0 0
          %1737 = vmatpush1.bf16.msra.mxu0 %v1676
          %1738 = vmatprep.subr.bf16.mxu0 0
          %1739 = vmatpush1.bf16.msra.mxu0 0
          %1740 = vmatprep.subr.bf16.mxu0 0
          %1741 = vmatpush1.bf16.msra.mxu0 0
          %1742 = vmatprep.subr.bf16.mxu0 0
          %1743 = vmatpush1.bf16.msra.mxu0 0
          %1744 = vmatprep.subr.bf16.mxu0 0
          %1745 = vmatpush1.bf16.msra.mxu0 0
          %1746 = vmatprep.subr.bf16.mxu0 0
          %1747 = vmatpush1.bf16.msra.mxu0 0
          %1748 = vmatprep.subr.bf16.mxu0 0
          %1749 = vmatpush1.bf16.msra.mxu0 0
          %1750 = vmatprep.subr.bf16.mxu0 0
          %1751 = vmatpush1.bf16.msra.mxu0 0
          %1752 = vmatprep.subr.bf16.mxu0 0
          %1753 = vmatpush1.bf16.msra.mxu0 0
          %1754 = vmatprep.subr.bf16.mxu0 0
          %1755 = vmatpush1.bf16.msra.mxu0 0
          %1756 = vmatprep.subr.bf16.mxu0 0
          %1757 = vmatpush1.bf16.msra.mxu0 0
          %1758 = vmatprep.subr.bf16.mxu0 0
          %1759 = vmatpush1.bf16.msra.mxu0 0
          %1760 = vmatprep.subr.bf16.mxu0 0
          %1761 = vmatpush1.bf16.msra.mxu0 0
          %1762 = vmatprep.mubr.bf16.mxu0 0
          %1763 = vmatmul.mubr.bf16.gmra.mrb[0].mxu0 %v1683
          %v1764 = vpop.f32.mrb[0].mxu0
          %v1765 = vadd.f32 %v1655, %v1764
          %v1766 = vpop.f32.mrb[0].mxu0
          %v1767 = vpop.f32.mrb[0].mxu0
          %v1768 = vadd.f32 %v1655, %v1767
          %v1769 = vpop.f32.mrb[0].mxu0
          %1770 = vmatprep.mubr.bf16.mxu0 0
          %1771 = vmatmul.mubr.bf16.gmra.mrb[0].mxu0 %v1686
          %v1772 = vpop.f32.mrb[0].mxu0
          %v1773 = vadd.f32 %v1655, %v1772
          %v1774 = vpop.f32.mrb[0].mxu0
          %v1775 = vpop.f32.mrb[0].mxu0
          %v1776 = vadd.f32 %v1655, %v1775
          %v1777 = vpop.f32.mrb[0].mxu0
          %1778 = vmatprep.mubr.bf16.mxu0 0
          %1779 = vmatmul.mubr.bf16.gmra.mrb[0].mxu0 %v1689
          %v1780 = vpop.f32.mrb[0].mxu0
          %v1781 = vadd.f32 %v1655, %v1780
          %v1782 = vpop.f32.mrb[0].mxu0
          %v1783 = vpop.f32.mrb[0].mxu0
          %v1784 = vadd.f32 %v1655, %v1783
          %v1785 = vpop.f32.mrb[0].mxu0
          %1786 = vmatprep.mubr.bf16.mxu0 0
          %1787 = vmatmul.mubr.bf16.gmra.mrb[0].mxu0 %v1692
          %v1788 = vpop.f32.mrb[0].mxu0
          %v1789 = vadd.f32 %v1655, %v1788
          %v1790 = vpop.f32.mrb[0].mxu0
          %v1791 = vpop.f32.mrb[0].mxu0
          %v1792 = vadd.f32 %v1655, %v1791
          %v1793 = vpop.f32.mrb[0].mxu0
          %1794 = vmatprep.mubr.bf16.mxu0 0
          %1795 = vmatmul.mubr.bf16.gmra.mrb[0].mxu0 %v1695
          %v1796 = vpop.f32.mrb[0].mxu0
          %v1797 = vadd.f32 %v1655, %v1796
          %v1798 = vpop.f32.mrb[0].mxu0
          %v1799 = vpop.f32.mrb[0].mxu0
          %v1800 = vadd.f32 %v1655, %v1799
          %v1801 = vpop.f32.mrb[0].mxu0
          %1802 = vmatprep.mubr.bf16.mxu0 0
          %1803 = vmatmul.mubr.bf16.gmra.mrb[0].mxu0 %v1698
          %v1804 = vpop.f32.mrb[0].mxu0
          %v1805 = vadd.f32 %v1655, %v1804
          %v1806 = vpop.f32.mrb[0].mxu0
          %v1807 = vpop.f32.mrb[0].mxu0
          %v1808 = vadd.f32 %v1655, %v1807
          %v1809 = vpop.f32.mrb[0].mxu0
          %1810 = vmatprep.mubr.bf16.mxu0 0
          %1811 = vmatmul.mubr.bf16.gmra.mrb[0].mxu0 %v1701
          %v1812 = vpop.f32.mrb[0].mxu0
          %v1813 = vadd.f32 %v1655, %v1812
          %v1814 = vpop.f32.mrb[0].mxu0
          %v1815 = vpop.f32.mrb[0].mxu0
          %v1816 = vadd.f32 %v1655, %v1815
          %v1817 = vpop.f32.mrb[0].mxu0
          %1818 = vmatprep.mubr.bf16.mxu0 0
          %1819 = vmatmul.mubr.bf16.gmra.mrb[0].mxu0 %v1704
          %v1820 = vpop.f32.mrb[0].mxu0
          %v1821 = vadd.f32 %v1655, %v1820
          %v1822 = vpop.f32.mrb[0].mxu0
          %v1823 = vpop.f32.mrb[0].mxu0
          %v1824 = vadd.f32 %v1655, %v1823
          %v1825 = vpop.f32.mrb[0].mxu0
          %1826 = vmatprep.mubr.bf16.mxu0 0
          %1827 = vmatmul.mubr.bf16.gmra.mrb[0].mxu0 %v1707
          %v1828 = vpop.f32.mrb[0].mxu0
          %v1829 = vadd.f32 %v1655, %v1828
          %v1830 = vpop.f32.mrb[0].mxu0
          %v1831 = vpop.f32.mrb[0].mxu0
          %v1832 = vadd.f32 %v1655, %v1831
          %v1833 = vpop.f32.mrb[0].mxu0
          %1834 = vmatprep.mubr.bf16.mxu0 0
          %1835 = vmatmul.mubr.bf16.gmra.mrb[0].mxu0 %v1710
          %v1836 = vpop.f32.mrb[0].mxu0
          %v1837 = vadd.f32 %v1655, %v1836
          %v1838 = vpop.f32.mrb[0].mxu0
          %v1839 = vpop.f32.mrb[0].mxu0
          %v1840 = vadd.f32 %v1655, %v1839
          %v1841 = vpop.f32.mrb[0].mxu0
          %1842 = vmatprep.mubr.bf16.mxu0 0
          %1843 = vmatmul.mubr.bf16.gmra.mrb[0].mxu0 %v1713
          %v1844 = vpop.f32.mrb[0].mxu0
          %v1845 = vadd.f32 %v1655, %v1844
          %v1846 = vpop.f32.mrb[0].mxu0
          %v1847 = vpop.f32.mrb[0].mxu0
          %v1848 = vadd.f32 %v1655, %v1847
          %v1849 = vpop.f32.mrb[0].mxu0
          %1850 = vmatprep.mubr.bf16.mxu0 0
          %1851 = vmatmul.mubr.bf16.gmra.mrb[0].mxu0 %v1716
          %v1852 = vpop.f32.mrb[0].mxu0
          %v1853 = vadd.f32 %v1655, %v1852
          %v1854 = vpop.f32.mrb[0].mxu0
          %v1855 = vpop.f32.mrb[0].mxu0
          %v1856 = vadd.f32 %v1655, %v1855
          %v1857 = vpop.f32.mrb[0].mxu0
          %1858 = vmatprep.mubr.bf16.mxu0 0
          %1859 = vmatmul.mubr.bf16.gmra.mrb[0].mxu0 %v1719
          %v1860 = vpop.f32.mrb[0].mxu0
          %v1861 = vadd.f32 %v1655, %v1860
          %v1862 = vpop.f32.mrb[0].mxu0
          %v1863 = vpop.f32.mrb[0].mxu0
          %v1864 = vadd.f32 %v1655, %v1863
          %v1865 = vpop.f32.mrb[0].mxu0
          %1866 = vmatprep.mubr.bf16.mxu0 0
          %1867 = vmatmul.mubr.bf16.gmra.mrb[0].mxu0 %v1722
          %v1868 = vpop.f32.mrb[0].mxu0
          %v1869 = vadd.f32 %v1655, %v1868
          %v1870 = vpop.f32.mrb[0].mxu0
          %v1871 = vpop.f32.mrb[0].mxu0
          %v1872 = vadd.f32 %v1655, %v1871
          %v1873 = vpop.f32.mrb[0].mxu0
          %1874 = vmatprep.mubr.bf16.mxu0 0
          %1875 = vmatmul.mubr.bf16.gmra.mrb[0].mxu0 %v1725
          %v1876 = vpop.f32.mrb[0].mxu0
          %v1877 = vadd.f32 %v1655, %v1876
          %v1878 = vpop.f32.mrb[0].mxu0
          %v1879 = vpop.f32.mrb[0].mxu0
          %v1880 = vadd.f32 %v1655, %v1879
          %v1881 = vpop.f32.mrb[0].mxu0
          %1882 = vmatprep.mubr.bf16.mxu0 0
          %1883 = vmatmul.mubr.bf16.gmra.mrb[0].mxu0 %v1728
          %v1884 = vpop.f32.mrb[0].mxu0
          %v1885 = vadd.f32 %v1655, %v1884
          %v1886 = vpop.f32.mrb[0].mxu0
          %v1887 = vpop.f32.mrb[0].mxu0
          %v1888 = vadd.f32 %v1655, %v1887
          %v1889 = vpop.f32.mrb[0].mxu0
          %1890 = vdwg.mxu0
          %v1891 = vmax.f32 %v1765, 0.0
          %v1892 = vmax.f32 %v1768, 0.0
          %v1893 = vmax.f32 %v1773, 0.0
          %v1894 = vmax.f32 %v1776, 0.0
          %v1895 = vmax.f32 %v1781, 0.0
          %v1896 = vmax.f32 %v1784, 0.0
          %v1897 = vmax.f32 %v1789, 0.0
          %v1898 = vmax.f32 %v1792, 0.0
          %v1899 = vmax.f32 %v1797, 0.0
          %v1900 = vmax.f32 %v1800, 0.0
          %v1901 = vmax.f32 %v1805, 0.0
          %v1902 = vmax.f32 %v1808, 0.0
          %v1903 = vmax.f32 %v1813, 0.0
          %v1904 = vmax.f32 %v1816, 0.0
          %v1905 = vmax.f32 %v1821, 0.0
          %v1906 = vmax.f32 %v1824, 0.0
          %v1907 = vmax.f32 %v1829, 0.0
          %v1908 = vmax.f32 %v1832, 0.0
          %v1909 = vmax.f32 %v1837, 0.0
          %v1910 = vmax.f32 %v1840, 0.0
          %v1911 = vmax.f32 %v1845, 0.0
          %v1912 = vmax.f32 %v1848, 0.0
          %v1913 = vmax.f32 %v1853, 0.0
          %v1914 = vmax.f32 %v1856, 0.0
          %v1915 = vmax.f32 %v1861, 0.0
          %v1916 = vmax.f32 %v1864, 0.0
          %v1917 = vmax.f32 %v1869, 0.0
          %v1918 = vmax.f32 %v1872, 0.0
          %v1919 = vmax.f32 %v1877, 0.0
          %v1920 = vmax.f32 %v1880, 0.0
          %v1921 = vmax.f32 %v1885, 0.0
          %v1922 = vmax.f32 %v1888, 0.0
          %v1923 = vpack.c.bf16 %v1892, %v1891
          %v1924 = vpack.c.bf16 %v1894, %v1893
          %v1925 = vpack.c.bf16 %v1896, %v1895
          %v1926 = vpack.c.bf16 %v1898, %v1897
          %v1927 = vpack.c.bf16 %v1900, %v1899
          %v1928 = vpack.c.bf16 %v1902, %v1901
          %v1929 = vpack.c.bf16 %v1904, %v1903
          %v1930 = vpack.c.bf16 %v1906, %v1905
          %v1931 = vpack.c.bf16 %v1908, %v1907
          %v1932 = vpack.c.bf16 %v1910, %v1909
          %v1933 = vpack.c.bf16 %v1912, %v1911
          %v1934 = vpack.c.bf16 %v1914, %v1913
          %v1935 = vpack.c.bf16 %v1916, %v1915
          %v1936 = vpack.c.bf16 %v1918, %v1917
          %v1937 = vpack.c.bf16 %v1920, %v1919
          %v1938 = vpack.c.bf16 %v1922, %v1921
          %v1939 = vld [vmem:[%s5] sm:$0xff]
          %v1940 = vld [vmem:[%s5 + $0x8] sm:$0xff]
          %v1941 = vld [vmem:[%s5 + $0x10] sm:$0xff]
          %v1942 = vld [vmem:[%s5 + $0x18] sm:$0xff]
          %v1943 = vld [vmem:[%s5 + $0x20] sm:$0xff]
          %v1944 = vld [vmem:[%s5 + $0x28] sm:$0xff]
          %v1945 = vld [vmem:[%s5 + $0x30] sm:$0xff]
          %v1946 = vld [vmem:[%s5 + $0x38] sm:$0xff]
          %v1947 = vld [vmem:[%s5 + $0x40] sm:$0xff]
          %v1948 = vld [vmem:[%s5 + $0x48] sm:$0xff]
          %v1949 = vld [vmem:[%s5 + $0x50] sm:$0xff]
          %v1950 = vld [vmem:[%s5 + $0x58] sm:$0xff]
          %v1951 = vld [vmem:[%s5 + $0x60] sm:$0xff]
          %v1952 = vld [vmem:[%s5 + $0x68] sm:$0xff]
          %v1953 = vld [vmem:[%s5 + $0x70] sm:$0xff]
          %v1954 = vld [vmem:[%s5 + $0x78] sm:$0xff]
          %v1955 = vld [vmem:[%s5 + $0x80] sm:$0xff]
          %v1956 = vld [vmem:[%s5 + $0x88] sm:$0xff]
          %v1957 = vld [vmem:[%s5 + $0x90] sm:$0xff]
          %v1958 = vld [vmem:[%s5 + $0x98] sm:$0xff]
          %v1959 = vld [vmem:[%s5 + $0xa0] sm:$0xff]
          %v1960 = vld [vmem:[%s5 + $0xa8] sm:$0xff]
          %v1961 = vld [vmem:[%s5 + $0xb0] sm:$0xff]
          %v1962 = vld [vmem:[%s5 + $0xb8] sm:$0xff]
          %v1963 = vld [vmem:[%s5 + $0xc0] sm:$0xff]
          %v1964 = vld [vmem:[%s5 + $0xc8] sm:$0xff]
          %v1965 = vld [vmem:[%s5 + $0xd0] sm:$0xff]
          %v1966 = vld [vmem:[%s5 + $0xd8] sm:$0xff]
          %v1967 = vld [vmem:[%s5 + $0xe0] sm:$0xff]
          %v1968 = vld [vmem:[%s5 + $0xe8] sm:$0xff]
          %v1969 = vld [vmem:[%s5 + $0xf0] sm:$0xff]
          %v1970 = vld [vmem:[%s5 + $0xf8] sm:$0xff]
          %v1971 = vld [vmem:[%s5 + $0x100] sm:$0xff]
          %v1972 = vld [vmem:[%s5 + $0x108] sm:$0xff]
          %v1973 = vld [vmem:[%s5 + $0x110] sm:$0xff]
          %v1974 = vld [vmem:[%s5 + $0x118] sm:$0xff]
          %v1975 = vld [vmem:[%s5 + $0x120] sm:$0xff]
          %v1976 = vld [vmem:[%s5 + $0x128] sm:$0xff]
          %v1977 = vld [vmem:[%s5 + $0x130] sm:$0xff]
          %v1978 = vld [vmem:[%s5 + $0x138] sm:$0xff]
          %v1979 = vld [vmem:[%s5 + $0x140] sm:$0xff]
          %v1980 = vld [vmem:[%s5 + $0x148] sm:$0xff]
          %v1981 = vld [vmem:[%s5 + $0x150] sm:$0xff]
          %v1982 = vld [vmem:[%s5 + $0x158] sm:$0xff]
          %v1983 = vld [vmem:[%s5 + $0x160] sm:$0xff]
          %v1984 = vld [vmem:[%s5 + $0x168] sm:$0xff]
          %v1985 = vld [vmem:[%s5 + $0x170] sm:$0xff]
          %v1986 = vld [vmem:[%s5 + $0x178] sm:$0xff]
          %v1987 = vld [vmem:[%s5 + $0x180] sm:$0xff]
          %v1988 = vld [vmem:[%s5 + $0x188] sm:$0xff]
          %v1989 = vld [vmem:[%s5 + $0x190] sm:$0xff]
          %v1990 = vld [vmem:[%s5 + $0x198] sm:$0xff]
          %v1991 = vld [vmem:[%s5 + $0x1a0] sm:$0xff]
          %v1992 = vld [vmem:[%s5 + $0x1a8] sm:$0xff]
          %v1993 = vld [vmem:[%s5 + $0x1b0] sm:$0xff]
          %v1994 = vld [vmem:[%s5 + $0x1b8] sm:$0xff]
          %v1995 = vld [vmem:[%s5 + $0x1c0] sm:$0xff]
          %v1996 = vld [vmem:[%s5 + $0x1c8] sm:$0xff]
          %v1997 = vld [vmem:[%s5 + $0x1d0] sm:$0xff]
          %v1998 = vld [vmem:[%s5 + $0x1d8] sm:$0xff]
          %v1999 = vld [vmem:[%s5 + $0x1e0] sm:$0xff]
          %v2000 = vld [vmem:[%s5 + $0x1e8] sm:$0xff]
          %v2001 = vld [vmem:[%s5 + $0x1f0] sm:$0xff]
          %v2002 = vld [vmem:[%s5 + $0x1f8] sm:$0xff]
          %v2003 = vld [vmem:[#allocation7] sm:$0xff]
          %v2005 = vlaneseq
          %v2006 = vshrl.u32 %v2005, 7
          %v2007 = vsub.s32 0, %v2006
          %v2008 = vrot.slane %v2003, %v2007
          %v2009 = vlaneseq
          %v2010 = vshrl.u32 %v2009, 7
          %v2011 = vsub.s32 1, %v2010
          %v2012 = vrot.slane %v2003, %v2011
          %v2013 = vlaneseq
          %v2014 = vshrl.u32 %v2013, 7
          %v2015 = vsub.s32 2, %v2014
          %v2016 = vrot.slane %v2003, %v2015
          %v2017 = vlaneseq
          %v2018 = vshrl.u32 %v2017, 7
          %v2019 = vsub.s32 3, %v2018
          %v2020 = vrot.slane %v2003, %v2019
          %v2021 = vlaneseq
          %v2022 = vshrl.u32 %v2021, 7
          %v2023 = vsub.s32 4, %v2022
          %v2024 = vrot.slane %v2003, %v2023
          %v2025 = vlaneseq
          %v2026 = vshrl.u32 %v2025, 7
          %v2027 = vsub.s32 5, %v2026
          %v2028 = vrot.slane %v2003, %v2027
          %v2029 = vlaneseq
          %v2030 = vshrl.u32 %v2029, 7
          %v2031 = vsub.s32 6, %v2030
          %v2032 = vrot.slane %v2003, %v2031
          %v2033 = vlaneseq
          %v2034 = vshrl.u32 %v2033, 7
          %v2035 = vsub.s32 7, %v2034
          %v2036 = vrot.slane %v2003, %v2035
          %v2109 = vunpack.c.l.b16 %v1939
          %v2110 = vunpack.c.h.b16 %v1939
          %v2111 = vunpack.c.l.b16 %v1940
          %v2112 = vunpack.c.h.b16 %v1940
          %v2113 = vunpack.c.l.b16 %v1941
          %v2114 = vunpack.c.h.b16 %v1941
          %v2115 = vunpack.c.l.b16 %v1942
          %v2116 = vunpack.c.h.b16 %v1942
          %v2117 = vunpack.c.l.b16 %v1943
          %v2118 = vunpack.c.h.b16 %v1943
          %v2119 = vunpack.c.l.b16 %v1944
          %v2120 = vunpack.c.h.b16 %v1944
          %v2121 = vunpack.c.l.b16 %v1945
          %v2122 = vunpack.c.h.b16 %v1945
          %v2123 = vunpack.c.l.b16 %v1946
          %v2124 = vunpack.c.h.b16 %v1946
          %v2125 = vunpack.c.l.b16 %v1947
          %v2126 = vunpack.c.h.b16 %v1947
          %v2127 = vunpack.c.l.b16 %v1948
          %v2128 = vunpack.c.h.b16 %v1948
          %v2129 = vunpack.c.l.b16 %v1949
          %v2130 = vunpack.c.h.b16 %v1949
          %v2131 = vunpack.c.l.b16 %v1950
          %v2132 = vunpack.c.h.b16 %v1950
          %v2133 = vunpack.c.l.b16 %v1951
          %v2134 = vunpack.c.h.b16 %v1951
          %v2135 = vunpack.c.l.b16 %v1952
          %v2136 = vunpack.c.h.b16 %v1952
          %v2137 = vunpack.c.l.b16 %v1953
          %v2138 = vunpack.c.h.b16 %v1953
          %v2139 = vunpack.c.l.b16 %v1954
          %v2140 = vunpack.c.h.b16 %v1954
          %v2141 = vunpack.c.l.b16 %v1955
          %v2142 = vunpack.c.h.b16 %v1955
          %v2143 = vunpack.c.l.b16 %v1956
          %v2144 = vunpack.c.h.b16 %v1956
          %v2145 = vunpack.c.l.b16 %v1957
          %v2146 = vunpack.c.h.b16 %v1957
          %v2147 = vunpack.c.l.b16 %v1958
          %v2148 = vunpack.c.h.b16 %v1958
          %v2149 = vunpack.c.l.b16 %v1959
          %v2150 = vunpack.c.h.b16 %v1959
          %v2151 = vunpack.c.l.b16 %v1960
          %v2152 = vunpack.c.h.b16 %v1960
          %v2153 = vunpack.c.l.b16 %v1961
          %v2154 = vunpack.c.h.b16 %v1961
          %v2155 = vunpack.c.l.b16 %v1962
          %v2156 = vunpack.c.h.b16 %v1962
          %v2157 = vunpack.c.l.b16 %v1963
          %v2158 = vunpack.c.h.b16 %v1963
          %v2159 = vunpack.c.l.b16 %v1964
          %v2160 = vunpack.c.h.b16 %v1964
          %v2161 = vunpack.c.l.b16 %v1965
          %v2162 = vunpack.c.h.b16 %v1965
          %v2163 = vunpack.c.l.b16 %v1966
          %v2164 = vunpack.c.h.b16 %v1966
          %v2165 = vunpack.c.l.b16 %v1967
          %v2166 = vunpack.c.h.b16 %v1967
          %v2167 = vunpack.c.l.b16 %v1968
          %v2168 = vunpack.c.h.b16 %v1968
          %v2169 = vunpack.c.l.b16 %v1969
          %v2170 = vunpack.c.h.b16 %v1969
          %v2171 = vunpack.c.l.b16 %v1970
          %v2172 = vunpack.c.h.b16 %v1970
          %v2173 = vunpack.c.l.b16 %v1971
          %v2174 = vunpack.c.h.b16 %v1971
          %v2175 = vunpack.c.l.b16 %v1972
          %v2176 = vunpack.c.h.b16 %v1972
          %v2177 = vunpack.c.l.b16 %v1973
          %v2178 = vunpack.c.h.b16 %v1973
          %v2179 = vunpack.c.l.b16 %v1974
          %v2180 = vunpack.c.h.b16 %v1974
          %v2181 = vunpack.c.l.b16 %v1975
          %v2182 = vunpack.c.h.b16 %v1975
          %v2183 = vunpack.c.l.b16 %v1976
          %v2184 = vunpack.c.h.b16 %v1976
          %v2185 = vunpack.c.l.b16 %v1977
          %v2186 = vunpack.c.h.b16 %v1977
          %v2187 = vunpack.c.l.b16 %v1978
          %v2188 = vunpack.c.h.b16 %v1978
          %v2189 = vunpack.c.l.b16 %v1979
          %v2190 = vunpack.c.h.b16 %v1979
          %v2191 = vunpack.c.l.b16 %v1980
          %v2192 = vunpack.c.h.b16 %v1980
          %v2193 = vunpack.c.l.b16 %v1981
          %v2194 = vunpack.c.h.b16 %v1981
          %v2195 = vunpack.c.l.b16 %v1982
          %v2196 = vunpack.c.h.b16 %v1982
          %v2197 = vunpack.c.l.b16 %v1983
          %v2198 = vunpack.c.h.b16 %v1983
          %v2199 = vunpack.c.l.b16 %v1984
          %v2200 = vunpack.c.h.b16 %v1984
          %v2201 = vunpack.c.l.b16 %v1985
          %v2202 = vunpack.c.h.b16 %v1985
          %v2203 = vunpack.c.l.b16 %v1986
          %v2204 = vunpack.c.h.b16 %v1986
          %v2205 = vunpack.c.l.b16 %v1987
          %v2206 = vunpack.c.h.b16 %v1987
          %v2207 = vunpack.c.l.b16 %v1988
          %v2208 = vunpack.c.h.b16 %v1988
          %v2209 = vunpack.c.l.b16 %v1989
          %v2210 = vunpack.c.h.b16 %v1989
          %v2211 = vunpack.c.l.b16 %v1990
          %v2212 = vunpack.c.h.b16 %v1990
          %v2213 = vunpack.c.l.b16 %v1991
          %v2214 = vunpack.c.h.b16 %v1991
          %v2215 = vunpack.c.l.b16 %v1992
          %v2216 = vunpack.c.h.b16 %v1992
          %v2217 = vunpack.c.l.b16 %v1993
          %v2218 = vunpack.c.h.b16 %v1993
          %v2219 = vunpack.c.l.b16 %v1994
          %v2220 = vunpack.c.h.b16 %v1994
          %v2221 = vunpack.c.l.b16 %v1995
          %v2222 = vunpack.c.h.b16 %v1995
          %v2223 = vunpack.c.l.b16 %v1996
          %v2224 = vunpack.c.h.b16 %v1996
          %v2225 = vunpack.c.l.b16 %v1997
          %v2226 = vunpack.c.h.b16 %v1997
          %v2227 = vunpack.c.l.b16 %v1998
          %v2228 = vunpack.c.h.b16 %v1998
          %v2229 = vunpack.c.l.b16 %v1999
          %v2230 = vunpack.c.h.b16 %v1999
          %v2231 = vunpack.c.l.b16 %v2000
          %v2232 = vunpack.c.h.b16 %v2000
          %v2233 = vunpack.c.l.b16 %v2001
          %v2234 = vunpack.c.h.b16 %v2001
          %v2235 = vunpack.c.l.b16 %v2002
          %v2236 = vunpack.c.h.b16 %v2002
          %v2237 = vpack.c.b16 %v2117, %v2109
          %v2238 = vpack.c.b16 %v2118, %v2110
          %v2239 = vpack.c.b16 %v2119, %v2111
          %v2240 = vpack.c.b16 %v2120, %v2112
          %v2241 = vpack.c.b16 %v2121, %v2113
          %v2242 = vpack.c.b16 %v2122, %v2114
          %v2243 = vpack.c.b16 %v2123, %v2115
          %v2244 = vpack.c.b16 %v2124, %v2116
          %v2245 = vpack.c.b16 %v2133, %v2125
          %v2246 = vpack.c.b16 %v2134, %v2126
          %v2247 = vpack.c.b16 %v2135, %v2127
          %v2248 = vpack.c.b16 %v2136, %v2128
          %v2249 = vpack.c.b16 %v2137, %v2129
          %v2250 = vpack.c.b16 %v2138, %v2130
          %v2251 = vpack.c.b16 %v2139, %v2131
          %v2252 = vpack.c.b16 %v2140, %v2132
          %v2253 = vpack.c.b16 %v2149, %v2141
          %v2254 = vpack.c.b16 %v2150, %v2142
          %v2255 = vpack.c.b16 %v2151, %v2143
          %v2256 = vpack.c.b16 %v2152, %v2144
          %v2257 = vpack.c.b16 %v2153, %v2145
          %v2258 = vpack.c.b16 %v2154, %v2146
          %v2259 = vpack.c.b16 %v2155, %v2147
          %v2260 = vpack.c.b16 %v2156, %v2148
          %v2261 = vpack.c.b16 %v2165, %v2157
          %v2262 = vpack.c.b16 %v2166, %v2158
          %v2263 = vpack.c.b16 %v2167, %v2159
          %v2264 = vpack.c.b16 %v2168, %v2160
          %v2265 = vpack.c.b16 %v2169, %v2161
          %v2266 = vpack.c.b16 %v2170, %v2162
          %v2267 = vpack.c.b16 %v2171, %v2163
          %v2268 = vpack.c.b16 %v2172, %v2164
          %v2269 = vpack.c.b16 %v2181, %v2173
          %v2270 = vpack.c.b16 %v2182, %v2174
          %v2271 = vpack.c.b16 %v2183, %v2175
          %v2272 = vpack.c.b16 %v2184, %v2176
          %v2273 = vpack.c.b16 %v2185, %v2177
          %v2274 = vpack.c.b16 %v2186, %v2178
          %v2275 = vpack.c.b16 %v2187, %v2179
          %v2276 = vpack.c.b16 %v2188, %v2180
          %v2277 = vpack.c.b16 %v2197, %v2189
          %v2278 = vpack.c.b16 %v2198, %v2190
          %v2279 = vpack.c.b16 %v2199, %v2191
          %v2280 = vpack.c.b16 %v2200, %v2192
          %v2281 = vpack.c.b16 %v2201, %v2193
          %v2282 = vpack.c.b16 %v2202, %v2194
          %v2283 = vpack.c.b16 %v2203, %v2195
          %v2284 = vpack.c.b16 %v2204, %v2196
          %v2285 = vpack.c.b16 %v2213, %v2205
          %v2286 = vpack.c.b16 %v2214, %v2206
          %v2287 = vpack.c.b16 %v2215, %v2207
          %v2288 = vpack.c.b16 %v2216, %v2208
          %v2289 = vpack.c.b16 %v2217, %v2209
          %v2290 = vpack.c.b16 %v2218, %v2210
          %v2291 = vpack.c.b16 %v2219, %v2211
          %v2292 = vpack.c.b16 %v2220, %v2212
          %v2293 = vpack.c.b16 %v2229, %v2221
          %v2294 = vpack.c.b16 %v2230, %v2222
          %v2295 = vpack.c.b16 %v2231, %v2223
          %v2296 = vpack.c.b16 %v2232, %v2224
          %v2297 = vpack.c.b16 %v2233, %v2225
          %v2298 = vpack.c.b16 %v2234, %v2226
          %v2299 = vpack.c.b16 %v2235, %v2227
          %v2300 = vpack.c.b16 %v2236, %v2228
          %2365 = vmatprep.subr.bf16.mxu0 %v2238
          %2366 = vmatpush1.bf16.msra.mxu0 %v2237
          %2367 = vmatprep.subr.bf16.mxu0 %v2246
          %2368 = vmatpush1.bf16.msra.mxu0 %v2245
          %2369 = vmatprep.subr.bf16.mxu0 %v2254
          %2370 = vmatpush1.bf16.msra.mxu0 %v2253
          %2371 = vmatprep.subr.bf16.mxu0 %v2262
          %2372 = vmatpush1.bf16.msra.mxu0 %v2261
          %2373 = vmatprep.subr.bf16.mxu0 %v2270
          %2374 = vmatpush1.bf16.msra.mxu0 %v2269
          %2375 = vmatprep.subr.bf16.mxu0 %v2278
          %2376 = vmatpush1.bf16.msra.mxu0 %v2277
          %2377 = vmatprep.subr.bf16.mxu0 %v2286
          %2378 = vmatpush1.bf16.msra.mxu0 %v2285
          %2379 = vmatprep.subr.bf16.mxu0 %v2294
          %2380 = vmatpush1.bf16.msra.mxu0 %v2293
          %2381 = vmatprep.subr.bf16.mxu0 0
          %2382 = vmatpush1.bf16.msra.mxu0 0
          %2383 = vmatprep.subr.bf16.mxu0 0
          %2384 = vmatpush1.bf16.msra.mxu0 0
          %2385 = vmatprep.subr.bf16.mxu0 0
          %2386 = vmatpush1.bf16.msra.mxu0 0
          %2387 = vmatprep.subr.bf16.mxu0 0
          %2388 = vmatpush1.bf16.msra.mxu0 0
          %2389 = vmatprep.subr.bf16.mxu0 0
          %2390 = vmatpush1.bf16.msra.mxu0 0
          %2391 = vmatprep.subr.bf16.mxu0 0
          %2392 = vmatpush1.bf16.msra.mxu0 0
          %2393 = vmatprep.subr.bf16.mxu0 0
          %2394 = vmatpush1.bf16.msra.mxu0 0
          %2395 = vmatprep.subr.bf16.mxu0 0
          %2396 = vmatpush1.bf16.msra.mxu0 0
          %2397 = vmatprep.mubr.bf16.mxu0 0
          %2398 = vmatmul.mubr.bf16.gmra.mrb[0].mxu0 %v1923
          %v2399 = vpop.f32.mrb[0].mxu0
          %v2400 = vadd.f32 %v2008, %v2399
          %v2401 = vpop.f32.mrb[0].mxu0
          %v2402 = vadd.f32 %v2012, %v2401
          %v2403 = vpop.f32.mrb[0].mxu0
          %v2404 = vadd.f32 %v2008, %v2403
          %v2405 = vpop.f32.mrb[0].mxu0
          %v2406 = vadd.f32 %v2012, %v2405
          %2407 = vmatprep.mubr.bf16.mxu0 0
          %2408 = vmatmul.mubr.bf16.gmra.mrb[0].mxu0 %v1924
          %v2409 = vpop.f32.mrb[0].mxu0
          %v2410 = vadd.f32 %v2008, %v2409
          %v2411 = vpop.f32.mrb[0].mxu0
          %v2412 = vadd.f32 %v2012, %v2411
          %v2413 = vpop.f32.mrb[0].mxu0
          %v2414 = vadd.f32 %v2008, %v2413
          %v2415 = vpop.f32.mrb[0].mxu0
          %v2416 = vadd.f32 %v2012, %v2415
          %2417 = vmatprep.mubr.bf16.mxu0 0
          %2418 = vmatmul.mubr.bf16.gmra.mrb[0].mxu0 %v1925
          %v2419 = vpop.f32.mrb[0].mxu0
          %v2420 = vadd.f32 %v2008, %v2419
          %v2421 = vpop.f32.mrb[0].mxu0
          %v2422 = vadd.f32 %v2012, %v2421
          %v2423 = vpop.f32.mrb[0].mxu0
          %v2424 = vadd.f32 %v2008, %v2423
          %v2425 = vpop.f32.mrb[0].mxu0
          %v2426 = vadd.f32 %v2012, %v2425
          %2427 = vmatprep.mubr.bf16.mxu0 0
          %2428 = vmatmul.mubr.bf16.gmra.mrb[0].mxu0 %v1926
          %v2429 = vpop.f32.mrb[0].mxu0
          %v2430 = vadd.f32 %v2008, %v2429
          %v2431 = vpop.f32.mrb[0].mxu0
          %v2432 = vadd.f32 %v2012, %v2431
          %v2433 = vpop.f32.mrb[0].mxu0
          %v2434 = vadd.f32 %v2008, %v2433
          %v2435 = vpop.f32.mrb[0].mxu0
          %v2436 = vadd.f32 %v2012, %v2435
          %2437 = vmatprep.mubr.bf16.mxu0 0
          %2438 = vmatmul.mubr.bf16.gmra.mrb[0].mxu0 %v1927
          %v2439 = vpop.f32.mrb[0].mxu0
          %v2440 = vadd.f32 %v2008, %v2439
          %v2441 = vpop.f32.mrb[0].mxu0
          %v2442 = vadd.f32 %v2012, %v2441
          %v2443 = vpop.f32.mrb[0].mxu0
          %v2444 = vadd.f32 %v2008, %v2443
          %v2445 = vpop.f32.mrb[0].mxu0
          %v2446 = vadd.f32 %v2012, %v2445
          %2447 = vmatprep.mubr.bf16.mxu0 0
          %2448 = vmatmul.mubr.bf16.gmra.mrb[0].mxu0 %v1928
          %v2449 = vpop.f32.mrb[0].mxu0
          %v2450 = vadd.f32 %v2008, %v2449
          %v2451 = vpop.f32.mrb[0].mxu0
          %v2452 = vadd.f32 %v2012, %v2451
          %v2453 = vpop.f32.mrb[0].mxu0
          %v2454 = vadd.f32 %v2008, %v2453
          %v2455 = vpop.f32.mrb[0].mxu0
          %v2456 = vadd.f32 %v2012, %v2455
          %2457 = vmatprep.mubr.bf16.mxu0 0
          %2458 = vmatmul.mubr.bf16.gmra.mrb[0].mxu0 %v1929
          %v2459 = vpop.f32.mrb[0].mxu0
          %v2460 = vadd.f32 %v2008, %v2459
          %v2461 = vpop.f32.mrb[0].mxu0
          %v2462 = vadd.f32 %v2012, %v2461
          %v2463 = vpop.f32.mrb[0].mxu0
          %v2464 = vadd.f32 %v2008, %v2463
          %v2465 = vpop.f32.mrb[0].mxu0
          %v2466 = vadd.f32 %v2012, %v2465
          %2467 = vmatprep.mubr.bf16.mxu0 0
          %2468 = vmatmul.mubr.bf16.gmra.mrb[0].mxu0 %v1930
          %v2469 = vpop.f32.mrb[0].mxu0
          %v2470 = vadd.f32 %v2008, %v2469
          %v2471 = vpop.f32.mrb[0].mxu0
          %v2472 = vadd.f32 %v2012, %v2471
          %v2473 = vpop.f32.mrb[0].mxu0
          %v2474 = vadd.f32 %v2008, %v2473
          %v2475 = vpop.f32.mrb[0].mxu0
          %v2476 = vadd.f32 %v2012, %v2475
          %2477 = vmatprep.mubr.bf16.mxu0 0
          %2478 = vmatmul.mubr.bf16.gmra.mrb[0].mxu0 %v1931
          %v2479 = vpop.f32.mrb[0].mxu0
          %v2480 = vadd.f32 %v2008, %v2479
          %v2481 = vpop.f32.mrb[0].mxu0
          %v2482 = vadd.f32 %v2012, %v2481
          %v2483 = vpop.f32.mrb[0].mxu0
          %v2484 = vadd.f32 %v2008, %v2483
          %v2485 = vpop.f32.mrb[0].mxu0
          %v2486 = vadd.f32 %v2012, %v2485
          %2487 = vmatprep.mubr.bf16.mxu0 0
          %2488 = vmatmul.mubr.bf16.gmra.mrb[0].mxu0 %v1932
          %v2489 = vpop.f32.mrb[0].mxu0
          %v2490 = vadd.f32 %v2008, %v2489
          %v2491 = vpop.f32.mrb[0].mxu0
          %v2492 = vadd.f32 %v2012, %v2491
          %v2493 = vpop.f32.mrb[0].mxu0
          %v2494 = vadd.f32 %v2008, %v2493
          %v2495 = vpop.f32.mrb[0].mxu0
          %v2496 = vadd.f32 %v2012, %v2495
          %2497 = vmatprep.mubr.bf16.mxu0 0
          %2498 = vmatmul.mubr.bf16.gmra.mrb[0].mxu0 %v1933
          %v2499 = vpop.f32.mrb[0].mxu0
          %v2500 = vadd.f32 %v2008, %v2499
          %v2501 = vpop.f32.mrb[0].mxu0
          %v2502 = vadd.f32 %v2012, %v2501
          %v2503 = vpop.f32.mrb[0].mxu0
          %v2504 = vadd.f32 %v2008, %v2503
          %v2505 = vpop.f32.mrb[0].mxu0
          %v2506 = vadd.f32 %v2012, %v2505
          %2507 = vmatprep.mubr.bf16.mxu0 0
          %2508 = vmatmul.mubr.bf16.gmra.mrb[0].mxu0 %v1934
          %v2509 = vpop.f32.mrb[0].mxu0
          %v2510 = vadd.f32 %v2008, %v2509
          %v2511 = vpop.f32.mrb[0].mxu0
          %v2512 = vadd.f32 %v2012, %v2511
          %v2513 = vpop.f32.mrb[0].mxu0
          %v2514 = vadd.f32 %v2008, %v2513
          %v2515 = vpop.f32.mrb[0].mxu0
          %v2516 = vadd.f32 %v2012, %v2515
          %2517 = vmatprep.mubr.bf16.mxu0 0
          %2518 = vmatmul.mubr.bf16.gmra.mrb[0].mxu0 %v1935
          %v2519 = vpop.f32.mrb[0].mxu0
          %v2520 = vadd.f32 %v2008, %v2519
          %v2521 = vpop.f32.mrb[0].mxu0
          %v2522 = vadd.f32 %v2012, %v2521
          %v2523 = vpop.f32.mrb[0].mxu0
          %v2524 = vadd.f32 %v2008, %v2523
          %v2525 = vpop.f32.mrb[0].mxu0
          %v2526 = vadd.f32 %v2012, %v2525
          %2527 = vmatprep.mubr.bf16.mxu0 0
          %2528 = vmatmul.mubr.bf16.gmra.mrb[0].mxu0 %v1936
          %v2529 = vpop.f32.mrb[0].mxu0
          %v2530 = vadd.f32 %v2008, %v2529
          %v2531 = vpop.f32.mrb[0].mxu0
          %v2532 = vadd.f32 %v2012, %v2531
          %v2533 = vpop.f32.mrb[0].mxu0
          %v2534 = vadd.f32 %v2008, %v2533
          %v2535 = vpop.f32.mrb[0].mxu0
          %v2536 = vadd.f32 %v2012, %v2535
          %2537 = vmatprep.mubr.bf16.mxu0 0
          %2538 = vmatmul.mubr.bf16.gmra.mrb[0].mxu0 %v1937
          %v2539 = vpop.f32.mrb[0].mxu0
          %v2540 = vadd.f32 %v2008, %v2539
          %v2541 = vpop.f32.mrb[0].mxu0
          %v2542 = vadd.f32 %v2012, %v2541
          %v2543 = vpop.f32.mrb[0].mxu0
          %v2544 = vadd.f32 %v2008, %v2543
          %v2545 = vpop.f32.mrb[0].mxu0
          %v2546 = vadd.f32 %v2012, %v2545
          %2547 = vmatprep.mubr.bf16.mxu0 0
          %2548 = vmatmul.mubr.bf16.gmra.mrb[0].mxu0 %v1938
          %v2549 = vpop.f32.mrb[0].mxu0
          %v2550 = vadd.f32 %v2008, %v2549
          %v2551 = vpop.f32.mrb[0].mxu0
          %v2552 = vadd.f32 %v2012, %v2551
          %v2553 = vpop.f32.mrb[0].mxu0
          %v2554 = vadd.f32 %v2008, %v2553
          %v2555 = vpop.f32.mrb[0].mxu0
          %v2556 = vadd.f32 %v2012, %v2555
          %2557 = vdwg.mxu0
          %2558 = vmatprep.subr.bf16.mxu0 %v2240
          %2559 = vmatpush1.bf16.msra.mxu0 %v2239
          %2560 = vmatprep.subr.bf16.mxu0 %v2248
          %2561 = vmatpush1.bf16.msra.mxu0 %v2247
          %2562 = vmatprep.subr.bf16.mxu0 %v2256
          %2563 = vmatpush1.bf16.msra.mxu0 %v2255
          %2564 = vmatprep.subr.bf16.mxu0 %v2264
          %2565 = vmatpush1.bf16.msra.mxu0 %v2263
          %2566 = vmatprep.subr.bf16.mxu0 %v2272
          %2567 = vmatpush1.bf16.msra.mxu0 %v2271
          %2568 = vmatprep.subr.bf16.mxu0 %v2280
          %2569 = vmatpush1.bf16.msra.mxu0 %v2279
          %2570 = vmatprep.subr.bf16.mxu0 %v2288
          %2571 = vmatpush1.bf16.msra.mxu0 %v2287
          %2572 = vmatprep.subr.bf16.mxu0 %v2296
          %2573 = vmatpush1.bf16.msra.mxu0 %v2295
          %2574 = vmatprep.subr.bf16.mxu0 0
          %2575 = vmatpush1.bf16.msra.mxu0 0
          %2576 = vmatprep.subr.bf16.mxu0 0
          %2577 = vmatpush1.bf16.msra.mxu0 0
          %2578 = vmatprep.subr.bf16.mxu0 0
          %2579 = vmatpush1.bf16.msra.mxu0 0
          %2580 = vmatprep.subr.bf16.mxu0 0
          %2581 = vmatpush1.bf16.msra.mxu0 0
          %2582 = vmatprep.subr.bf16.mxu0 0
          %2583 = vmatpush1.bf16.msra.mxu0 0
          %2584 = vmatprep.subr.bf16.mxu0 0
          %2585 = vmatpush1.bf16.msra.mxu0 0
          %2586 = vmatprep.subr.bf16.mxu0 0
          %2587 = vmatpush1.bf16.msra.mxu0 0
          %2588 = vmatprep.subr.bf16.mxu0 0
          %2589 = vmatpush1.bf16.msra.mxu0 0
          %2590 = vmatprep.mubr.bf16.mxu0 0
          %2591 = vmatmul.mubr.bf16.gmra.mrb[0].mxu0 %v1923
          %v2592 = vpop.f32.mrb[0].mxu0
          %v2593 = vadd.f32 %v2016, %v2592
          %v2594 = vpop.f32.mrb[0].mxu0
          %v2595 = vadd.f32 %v2020, %v2594
          %v2596 = vpop.f32.mrb[0].mxu0
          %v2597 = vadd.f32 %v2016, %v2596
          %v2598 = vpop.f32.mrb[0].mxu0
          %v2599 = vadd.f32 %v2020, %v2598
          %2600 = vmatprep.mubr.bf16.mxu0 0
          %2601 = vmatmul.mubr.bf16.gmra.mrb[0].mxu0 %v1924
          %v2602 = vpop.f32.mrb[0].mxu0
          %v2603 = vadd.f32 %v2016, %v2602
          %v2604 = vpop.f32.mrb[0].mxu0
          %v2605 = vadd.f32 %v2020, %v2604
          %v2606 = vpop.f32.mrb[0].mxu0
          %v2607 = vadd.f32 %v2016, %v2606
          %v2608 = vpop.f32.mrb[0].mxu0
          %v2609 = vadd.f32 %v2020, %v2608
          %2610 = vmatprep.mubr.bf16.mxu0 0
          %2611 = vmatmul.mubr.bf16.gmra.mrb[0].mxu0 %v1925
          %v2612 = vpop.f32.mrb[0].mxu0
          %v2613 = vadd.f32 %v2016, %v2612
          %v2614 = vpop.f32.mrb[0].mxu0
          %v2615 = vadd.f32 %v2020, %v2614
          %v2616 = vpop.f32.mrb[0].mxu0
          %v2617 = vadd.f32 %v2016, %v2616
          %v2618 = vpop.f32.mrb[0].mxu0
          %v2619 = vadd.f32 %v2020, %v2618
          %2620 = vmatprep.mubr.bf16.mxu0 0
          %2621 = vmatmul.mubr.bf16.gmra.mrb[0].mxu0 %v1926
          %v2622 = vpop.f32.mrb[0].mxu0
          %v2623 = vadd.f32 %v2016, %v2622
          %v2624 = vpop.f32.mrb[0].mxu0
          %v2625 = vadd.f32 %v2020, %v2624
          %v2626 = vpop.f32.mrb[0].mxu0
          %v2627 = vadd.f32 %v2016, %v2626
          %v2628 = vpop.f32.mrb[0].mxu0
          %v2629 = vadd.f32 %v2020, %v2628
          %2630 = vmatprep.mubr.bf16.mxu0 0
          %2631 = vmatmul.mubr.bf16.gmra.mrb[0].mxu0 %v1927
          %v2632 = vpop.f32.mrb[0].mxu0
          %v2633 = vadd.f32 %v2016, %v2632
          %v2634 = vpop.f32.mrb[0].mxu0
          %v2635 = vadd.f32 %v2020, %v2634
          %v2636 = vpop.f32.mrb[0].mxu0
          %v2637 = vadd.f32 %v2016, %v2636
          %v2638 = vpop.f32.mrb[0].mxu0
          %v2639 = vadd.f32 %v2020, %v2638
          %2640 = vmatprep.mubr.bf16.mxu0 0
          %2641 = vmatmul.mubr.bf16.gmra.mrb[0].mxu0 %v1928
          %v2642 = vpop.f32.mrb[0].mxu0
          %v2643 = vadd.f32 %v2016, %v2642
          %v2644 = vpop.f32.mrb[0].mxu0
          %v2645 = vadd.f32 %v2020, %v2644
          %v2646 = vpop.f32.mrb[0].mxu0
          %v2647 = vadd.f32 %v2016, %v2646
          %v2648 = vpop.f32.mrb[0].mxu0
          %v2649 = vadd.f32 %v2020, %v2648
          %2650 = vmatprep.mubr.bf16.mxu0 0
          %2651 = vmatmul.mubr.bf16.gmra.mrb[0].mxu0 %v1929
          %v2652 = vpop.f32.mrb[0].mxu0
          %v2653 = vadd.f32 %v2016, %v2652
          %v2654 = vpop.f32.mrb[0].mxu0
          %v2655 = vadd.f32 %v2020, %v2654
          %v2656 = vpop.f32.mrb[0].mxu0
          %v2657 = vadd.f32 %v2016, %v2656
          %v2658 = vpop.f32.mrb[0].mxu0
          %v2659 = vadd.f32 %v2020, %v2658
          %2660 = vmatprep.mubr.bf16.mxu0 0
          %2661 = vmatmul.mubr.bf16.gmra.mrb[0].mxu0 %v1930
          %v2662 = vpop.f32.mrb[0].mxu0
          %v2663 = vadd.f32 %v2016, %v2662
          %v2664 = vpop.f32.mrb[0].mxu0
          %v2665 = vadd.f32 %v2020, %v2664
          %v2666 = vpop.f32.mrb[0].mxu0
          %v2667 = vadd.f32 %v2016, %v2666
          %v2668 = vpop.f32.mrb[0].mxu0
          %v2669 = vadd.f32 %v2020, %v2668
          %2670 = vmatprep.mubr.bf16.mxu0 0
          %2671 = vmatmul.mubr.bf16.gmra.mrb[0].mxu0 %v1931
          %v2672 = vpop.f32.mrb[0].mxu0
          %v2673 = vadd.f32 %v2016, %v2672
          %v2674 = vpop.f32.mrb[0].mxu0
          %v2675 = vadd.f32 %v2020, %v2674
          %v2676 = vpop.f32.mrb[0].mxu0
          %v2677 = vadd.f32 %v2016, %v2676
          %v2678 = vpop.f32.mrb[0].mxu0
          %v2679 = vadd.f32 %v2020, %v2678
          %2680 = vmatprep.mubr.bf16.mxu0 0
          %2681 = vmatmul.mubr.bf16.gmra.mrb[0].mxu0 %v1932
          %v2682 = vpop.f32.mrb[0].mxu0
          %v2683 = vadd.f32 %v2016, %v2682
          %v2684 = vpop.f32.mrb[0].mxu0
          %v2685 = vadd.f32 %v2020, %v2684
          %v2686 = vpop.f32.mrb[0].mxu0
          %v2687 = vadd.f32 %v2016, %v2686
          %v2688 = vpop.f32.mrb[0].mxu0
          %v2689 = vadd.f32 %v2020, %v2688
          %2690 = vmatprep.mubr.bf16.mxu0 0
          %2691 = vmatmul.mubr.bf16.gmra.mrb[0].mxu0 %v1933
          %v2692 = vpop.f32.mrb[0].mxu0
          %v2693 = vadd.f32 %v2016, %v2692
          %v2694 = vpop.f32.mrb[0].mxu0
          %v2695 = vadd.f32 %v2020, %v2694
          %v2696 = vpop.f32.mrb[0].mxu0
          %v2697 = vadd.f32 %v2016, %v2696
          %v2698 = vpop.f32.mrb[0].mxu0
          %v2699 = vadd.f32 %v2020, %v2698
          %2700 = vmatprep.mubr.bf16.mxu0 0
          %2701 = vmatmul.mubr.bf16.gmra.mrb[0].mxu0 %v1934
          %v2702 = vpop.f32.mrb[0].mxu0
          %v2703 = vadd.f32 %v2016, %v2702
          %v2704 = vpop.f32.mrb[0].mxu0
          %v2705 = vadd.f32 %v2020, %v2704
          %v2706 = vpop.f32.mrb[0].mxu0
          %v2707 = vadd.f32 %v2016, %v2706
          %v2708 = vpop.f32.mrb[0].mxu0
          %v2709 = vadd.f32 %v2020, %v2708
          %2710 = vmatprep.mubr.bf16.mxu0 0
          %2711 = vmatmul.mubr.bf16.gmra.mrb[0].mxu0 %v1935
          %v2712 = vpop.f32.mrb[0].mxu0
          %v2713 = vadd.f32 %v2016, %v2712
          %v2714 = vpop.f32.mrb[0].mxu0
          %v2715 = vadd.f32 %v2020, %v2714
          %v2716 = vpop.f32.mrb[0].mxu0
          %v2717 = vadd.f32 %v2016, %v2716
          %v2718 = vpop.f32.mrb[0].mxu0
          %v2719 = vadd.f32 %v2020, %v2718
          %2720 = vmatprep.mubr.bf16.mxu0 0
          %2721 = vmatmul.mubr.bf16.gmra.mrb[0].mxu0 %v1936
          %v2722 = vpop.f32.mrb[0].mxu0
          %v2723 = vadd.f32 %v2016, %v2722
          %v2724 = vpop.f32.mrb[0].mxu0
          %v2725 = vadd.f32 %v2020, %v2724
          %v2726 = vpop.f32.mrb[0].mxu0
          %v2727 = vadd.f32 %v2016, %v2726
          %v2728 = vpop.f32.mrb[0].mxu0
          %v2729 = vadd.f32 %v2020, %v2728
          %2730 = vmatprep.mubr.bf16.mxu0 0
          %2731 = vmatmul.mubr.bf16.gmra.mrb[0].mxu0 %v1937
          %v2732 = vpop.f32.mrb[0].mxu0
          %v2733 = vadd.f32 %v2016, %v2732
          %v2734 = vpop.f32.mrb[0].mxu0
          %v2735 = vadd.f32 %v2020, %v2734
          %v2736 = vpop.f32.mrb[0].mxu0
          %v2737 = vadd.f32 %v2016, %v2736
          %v2738 = vpop.f32.mrb[0].mxu0
          %v2739 = vadd.f32 %v2020, %v2738
          %2740 = vmatprep.mubr.bf16.mxu0 0
          %2741 = vmatmul.mubr.bf16.gmra.mrb[0].mxu0 %v1938
          %v2742 = vpop.f32.mrb[0].mxu0
          %v2743 = vadd.f32 %v2016, %v2742
          %v2744 = vpop.f32.mrb[0].mxu0
          %v2745 = vadd.f32 %v2020, %v2744
          %v2746 = vpop.f32.mrb[0].mxu0
          %v2747 = vadd.f32 %v2016, %v2746
          %v2748 = vpop.f32.mrb[0].mxu0
          %v2749 = vadd.f32 %v2020, %v2748
          %2750 = vdwg.mxu0
          %2751 = vmatprep.subr.bf16.mxu0 %v2242
          %2752 = vmatpush1.bf16.msra.mxu0 %v2241
          %2753 = vmatprep.subr.bf16.mxu0 %v2250
          %2754 = vmatpush1.bf16.msra.mxu0 %v2249
          %2755 = vmatprep.subr.bf16.mxu0 %v2258
          %2756 = vmatpush1.bf16.msra.mxu0 %v2257
          %2757 = vmatprep.subr.bf16.mxu0 %v2266
          %2758 = vmatpush1.bf16.msra.mxu0 %v2265
          %2759 = vmatprep.subr.bf16.mxu0 %v2274
          %2760 = vmatpush1.bf16.msra.mxu0 %v2273
          %2761 = vmatprep.subr.bf16.mxu0 %v2282
          %2762 = vmatpush1.bf16.msra.mxu0 %v2281
          %2763 = vmatprep.subr.bf16.mxu0 %v2290
          %2764 = vmatpush1.bf16.msra.mxu0 %v2289
          %2765 = vmatprep.subr.bf16.mxu0 %v2298
          %2766 = vmatpush1.bf16.msra.mxu0 %v2297
          %2767 = vmatprep.subr.bf16.mxu0 0
          %2768 = vmatpush1.bf16.msra.mxu0 0
          %2769 = vmatprep.subr.bf16.mxu0 0
          %2770 = vmatpush1.bf16.msra.mxu0 0
          %2771 = vmatprep.subr.bf16.mxu0 0
          %2772 = vmatpush1.bf16.msra.mxu0 0
          %2773 = vmatprep.subr.bf16.mxu0 0
          %2774 = vmatpush1.bf16.msra.mxu0 0
          %2775 = vmatprep.subr.bf16.mxu0 0
          %2776 = vmatpush1.bf16.msra.mxu0 0
          %2777 = vmatprep.subr.bf16.mxu0 0
          %2778 = vmatpush1.bf16.msra.mxu0 0
          %2779 = vmatprep.subr.bf16.mxu0 0
          %2780 = vmatpush1.bf16.msra.mxu0 0
          %2781 = vmatprep.subr.bf16.mxu0 0
          %2782 = vmatpush1.bf16.msra.mxu0 0
          %2783 = vmatprep.mubr.bf16.mxu0 0
          %2784 = vmatmul.mubr.bf16.gmra.mrb[0].mxu0 %v1923
          %v2785 = vpop.f32.mrb[0].mxu0
          %v2786 = vadd.f32 %v2024, %v2785
          %v2787 = vpop.f32.mrb[0].mxu0
          %v2788 = vadd.f32 %v2028, %v2787
          %v2789 = vpop.f32.mrb[0].mxu0
          %v2790 = vadd.f32 %v2024, %v2789
          %v2791 = vpop.f32.mrb[0].mxu0
          %v2792 = vadd.f32 %v2028, %v2791
          %2793 = vmatprep.mubr.bf16.mxu0 0
          %2794 = vmatmul.mubr.bf16.gmra.mrb[0].mxu0 %v1924
          %v2795 = vpop.f32.mrb[0].mxu0
          %v2796 = vadd.f32 %v2024, %v2795
          %v2797 = vpop.f32.mrb[0].mxu0
          %v2798 = vadd.f32 %v2028, %v2797
          %v2799 = vpop.f32.mrb[0].mxu0
          %v2800 = vadd.f32 %v2024, %v2799
          %v2801 = vpop.f32.mrb[0].mxu0
          %v2802 = vadd.f32 %v2028, %v2801
          %2803 = vmatprep.mubr.bf16.mxu0 0
          %2804 = vmatmul.mubr.bf16.gmra.mrb[0].mxu0 %v1925
          %v2805 = vpop.f32.mrb[0].mxu0
          %v2806 = vadd.f32 %v2024, %v2805
          %v2807 = vpop.f32.mrb[0].mxu0
          %v2808 = vadd.f32 %v2028, %v2807
          %v2809 = vpop.f32.mrb[0].mxu0
          %v2810 = vadd.f32 %v2024, %v2809
          %v2811 = vpop.f32.mrb[0].mxu0
          %v2812 = vadd.f32 %v2028, %v2811
          %2813 = vmatprep.mubr.bf16.mxu0 0
          %2814 = vmatmul.mubr.bf16.gmra.mrb[0].mxu0 %v1926
          %v2815 = vpop.f32.mrb[0].mxu0
          %v2816 = vadd.f32 %v2024, %v2815
          %v2817 = vpop.f32.mrb[0].mxu0
          %v2818 = vadd.f32 %v2028, %v2817
          %v2819 = vpop.f32.mrb[0].mxu0
          %v2820 = vadd.f32 %v2024, %v2819
          %v2821 = vpop.f32.mrb[0].mxu0
          %v2822 = vadd.f32 %v2028, %v2821
          %2823 = vmatprep.mubr.bf16.mxu0 0
          %2824 = vmatmul.mubr.bf16.gmra.mrb[0].mxu0 %v1927
          %v2825 = vpop.f32.mrb[0].mxu0
          %v2826 = vadd.f32 %v2024, %v2825
          %v2827 = vpop.f32.mrb[0].mxu0
          %v2828 = vadd.f32 %v2028, %v2827
          %v2829 = vpop.f32.mrb[0].mxu0
          %v2830 = vadd.f32 %v2024, %v2829
          %v2831 = vpop.f32.mrb[0].mxu0
          %v2832 = vadd.f32 %v2028, %v2831
          %2833 = vmatprep.mubr.bf16.mxu0 0
          %2834 = vmatmul.mubr.bf16.gmra.mrb[0].mxu0 %v1928
          %v2835 = vpop.f32.mrb[0].mxu0
          %v2836 = vadd.f32 %v2024, %v2835
          %v2837 = vpop.f32.mrb[0].mxu0
          %v2838 = vadd.f32 %v2028, %v2837
          %v2839 = vpop.f32.mrb[0].mxu0
          %v2840 = vadd.f32 %v2024, %v2839
          %v2841 = vpop.f32.mrb[0].mxu0
          %v2842 = vadd.f32 %v2028, %v2841
          %2843 = vmatprep.mubr.bf16.mxu0 0
          %2844 = vmatmul.mubr.bf16.gmra.mrb[0].mxu0 %v1929
          %v2845 = vpop.f32.mrb[0].mxu0
          %v2846 = vadd.f32 %v2024, %v2845
          %v2847 = vpop.f32.mrb[0].mxu0
          %v2848 = vadd.f32 %v2028, %v2847
          %v2849 = vpop.f32.mrb[0].mxu0
          %v2850 = vadd.f32 %v2024, %v2849
          %v2851 = vpop.f32.mrb[0].mxu0
          %v2852 = vadd.f32 %v2028, %v2851
          %2853 = vmatprep.mubr.bf16.mxu0 0
          %2854 = vmatmul.mubr.bf16.gmra.mrb[0].mxu0 %v1930
          %v2855 = vpop.f32.mrb[0].mxu0
          %v2856 = vadd.f32 %v2024, %v2855
          %v2857 = vpop.f32.mrb[0].mxu0
          %v2858 = vadd.f32 %v2028, %v2857
          %v2859 = vpop.f32.mrb[0].mxu0
          %v2860 = vadd.f32 %v2024, %v2859
          %v2861 = vpop.f32.mrb[0].mxu0
          %v2862 = vadd.f32 %v2028, %v2861
          %2863 = vmatprep.mubr.bf16.mxu0 0
          %2864 = vmatmul.mubr.bf16.gmra.mrb[0].mxu0 %v1931
          %v2865 = vpop.f32.mrb[0].mxu0
          %v2866 = vadd.f32 %v2024, %v2865
          %v2867 = vpop.f32.mrb[0].mxu0
          %v2868 = vadd.f32 %v2028, %v2867
          %v2869 = vpop.f32.mrb[0].mxu0
          %v2870 = vadd.f32 %v2024, %v2869
          %v2871 = vpop.f32.mrb[0].mxu0
          %v2872 = vadd.f32 %v2028, %v2871
          %2873 = vmatprep.mubr.bf16.mxu0 0
          %2874 = vmatmul.mubr.bf16.gmra.mrb[0].mxu0 %v1932
          %v2875 = vpop.f32.mrb[0].mxu0
          %v2876 = vadd.f32 %v2024, %v2875
          %v2877 = vpop.f32.mrb[0].mxu0
          %v2878 = vadd.f32 %v2028, %v2877
          %v2879 = vpop.f32.mrb[0].mxu0
          %v2880 = vadd.f32 %v2024, %v2879
          %v2881 = vpop.f32.mrb[0].mxu0
          %v2882 = vadd.f32 %v2028, %v2881
          %2883 = vmatprep.mubr.bf16.mxu0 0
          %2884 = vmatmul.mubr.bf16.gmra.mrb[0].mxu0 %v1933
          %v2885 = vpop.f32.mrb[0].mxu0
          %v2886 = vadd.f32 %v2024, %v2885
          %v2887 = vpop.f32.mrb[0].mxu0
          %v2888 = vadd.f32 %v2028, %v2887
          %v2889 = vpop.f32.mrb[0].mxu0
          %v2890 = vadd.f32 %v2024, %v2889
          %v2891 = vpop.f32.mrb[0].mxu0
          %v2892 = vadd.f32 %v2028, %v2891
          %2893 = vmatprep.mubr.bf16.mxu0 0
          %2894 = vmatmul.mubr.bf16.gmra.mrb[0].mxu0 %v1934
          %v2895 = vpop.f32.mrb[0].mxu0
          %v2896 = vadd.f32 %v2024, %v2895
          %v2897 = vpop.f32.mrb[0].mxu0
          %v2898 = vadd.f32 %v2028, %v2897
          %v2899 = vpop.f32.mrb[0].mxu0
          %v2900 = vadd.f32 %v2024, %v2899
          %v2901 = vpop.f32.mrb[0].mxu0
          %v2902 = vadd.f32 %v2028, %v2901
          %2903 = vmatprep.mubr.bf16.mxu0 0
          %2904 = vmatmul.mubr.bf16.gmra.mrb[0].mxu0 %v1935
          %v2905 = vpop.f32.mrb[0].mxu0
          %v2906 = vadd.f32 %v2024, %v2905
          %v2907 = vpop.f32.mrb[0].mxu0
          %v2908 = vadd.f32 %v2028, %v2907
          %v2909 = vpop.f32.mrb[0].mxu0
          %v2910 = vadd.f32 %v2024, %v2909
          %v2911 = vpop.f32.mrb[0].mxu0
          %v2912 = vadd.f32 %v2028, %v2911
          %2913 = vmatprep.mubr.bf16.mxu0 0
          %2914 = vmatmul.mubr.bf16.gmra.mrb[0].mxu0 %v1936
          %v2915 = vpop.f32.mrb[0].mxu0
          %v2916 = vadd.f32 %v2024, %v2915
          %v2917 = vpop.f32.mrb[0].mxu0
          %v2918 = vadd.f32 %v2028, %v2917
          %v2919 = vpop.f32.mrb[0].mxu0
          %v2920 = vadd.f32 %v2024, %v2919
          %v2921 = vpop.f32.mrb[0].mxu0
          %v2922 = vadd.f32 %v2028, %v2921
          %2923 = vmatprep.mubr.bf16.mxu0 0
          %2924 = vmatmul.mubr.bf16.gmra.mrb[0].mxu0 %v1937
          %v2925 = vpop.f32.mrb[0].mxu0
          %v2926 = vadd.f32 %v2024, %v2925
          %v2927 = vpop.f32.mrb[0].mxu0
          %v2928 = vadd.f32 %v2028, %v2927
          %v2929 = vpop.f32.mrb[0].mxu0
          %v2930 = vadd.f32 %v2024, %v2929
          %v2931 = vpop.f32.mrb[0].mxu0
          %v2932 = vadd.f32 %v2028, %v2931
          %2933 = vmatprep.mubr.bf16.mxu0 0
          %2934 = vmatmul.mubr.bf16.gmra.mrb[0].mxu0 %v1938
          %v2935 = vpop.f32.mrb[0].mxu0
          %v2936 = vadd.f32 %v2024, %v2935
          %v2937 = vpop.f32.mrb[0].mxu0
          %v2938 = vadd.f32 %v2028, %v2937
          %v2939 = vpop.f32.mrb[0].mxu0
          %v2940 = vadd.f32 %v2024, %v2939
          %v2941 = vpop.f32.mrb[0].mxu0
          %v2942 = vadd.f32 %v2028, %v2941
          %2943 = vdwg.mxu0
          %2944 = vmatprep.subr.bf16.mxu0 %v2244
          %2945 = vmatpush1.bf16.msra.mxu0 %v2243
          %2946 = vmatprep.subr.bf16.mxu0 %v2252
          %2947 = vmatpush1.bf16.msra.mxu0 %v2251
          %2948 = vmatprep.subr.bf16.mxu0 %v2260
          %2949 = vmatpush1.bf16.msra.mxu0 %v2259
          %2950 = vmatprep.subr.bf16.mxu0 %v2268
          %2951 = vmatpush1.bf16.msra.mxu0 %v2267
          %2952 = vmatprep.subr.bf16.mxu0 %v2276
          %2953 = vmatpush1.bf16.msra.mxu0 %v2275
          %2954 = vmatprep.subr.bf16.mxu0 %v2284
          %2955 = vmatpush1.bf16.msra.mxu0 %v2283
          %2956 = vmatprep.subr.bf16.mxu0 %v2292
          %2957 = vmatpush1.bf16.msra.mxu0 %v2291
          %2958 = vmatprep.subr.bf16.mxu0 %v2300
          %2959 = vmatpush1.bf16.msra.mxu0 %v2299
          %2960 = vmatprep.subr.bf16.mxu0 0
          %2961 = vmatpush1.bf16.msra.mxu0 0
          %2962 = vmatprep.subr.bf16.mxu0 0
          %2963 = vmatpush1.bf16.msra.mxu0 0
          %2964 = vmatprep.subr.bf16.mxu0 0
          %2965 = vmatpush1.bf16.msra.mxu0 0
          %2966 = vmatprep.subr.bf16.mxu0 0
          %2967 = vmatpush1.bf16.msra.mxu0 0
          %2968 = vmatprep.subr.bf16.mxu0 0
          %2969 = vmatpush1.bf16.msra.mxu0 0
          %2970 = vmatprep.subr.bf16.mxu0 0
          %2971 = vmatpush1.bf16.msra.mxu0 0
          %2972 = vmatprep.subr.bf16.mxu0 0
          %2973 = vmatpush1.bf16.msra.mxu0 0
          %2974 = vmatprep.subr.bf16.mxu0 0
          %2975 = vmatpush1.bf16.msra.mxu0 0
          %2976 = vmatprep.mubr.bf16.mxu0 0
          %2977 = vmatmul.mubr.bf16.gmra.mrb[0].mxu0 %v1923
          %v2978 = vpop.f32.mrb[0].mxu0
          %v2979 = vadd.f32 %v2032, %v2978
          %v2980 = vpop.f32.mrb[0].mxu0
          %v2981 = vadd.f32 %v2036, %v2980
          %v2982 = vpop.f32.mrb[0].mxu0
          %v2983 = vadd.f32 %v2032, %v2982
          %v2984 = vpop.f32.mrb[0].mxu0
          %v2985 = vadd.f32 %v2036, %v2984
          %2986 = vmatprep.mubr.bf16.mxu0 0
          %2987 = vmatmul.mubr.bf16.gmra.mrb[0].mxu0 %v1924
          %v2988 = vpop.f32.mrb[0].mxu0
          %v2989 = vadd.f32 %v2032, %v2988
          %v2990 = vpop.f32.mrb[0].mxu0
          %v2991 = vadd.f32 %v2036, %v2990
          %v2992 = vpop.f32.mrb[0].mxu0
          %v2993 = vadd.f32 %v2032, %v2992
          %v2994 = vpop.f32.mrb[0].mxu0
          %v2995 = vadd.f32 %v2036, %v2994
          %2996 = vmatprep.mubr.bf16.mxu0 0
          %2997 = vmatmul.mubr.bf16.gmra.mrb[0].mxu0 %v1925
          %v2998 = vpop.f32.mrb[0].mxu0
          %v2999 = vadd.f32 %v2032, %v2998
          %v3000 = vpop.f32.mrb[0].mxu0
          %v3001 = vadd.f32 %v2036, %v3000
          %v3002 = vpop.f32.mrb[0].mxu0
          %v3003 = vadd.f32 %v2032, %v3002
          %v3004 = vpop.f32.mrb[0].mxu0
          %v3005 = vadd.f32 %v2036, %v3004
          %3006 = vmatprep.mubr.bf16.mxu0 0
          %3007 = vmatmul.mubr.bf16.gmra.mrb[0].mxu0 %v1926
          %v3008 = vpop.f32.mrb[0].mxu0
          %v3009 = vadd.f32 %v2032, %v3008
          %v3010 = vpop.f32.mrb[0].mxu0
          %v3011 = vadd.f32 %v2036, %v3010
          %v3012 = vpop.f32.mrb[0].mxu0
          %v3013 = vadd.f32 %v2032, %v3012
          %v3014 = vpop.f32.mrb[0].mxu0
          %v3015 = vadd.f32 %v2036, %v3014
          %3016 = vmatprep.mubr.bf16.mxu0 0
          %3017 = vmatmul.mubr.bf16.gmra.mrb[0].mxu0 %v1927
          %v3018 = vpop.f32.mrb[0].mxu0
          %v3019 = vadd.f32 %v2032, %v3018
          %v3020 = vpop.f32.mrb[0].mxu0
          %v3021 = vadd.f32 %v2036, %v3020
          %v3022 = vpop.f32.mrb[0].mxu0
          %v3023 = vadd.f32 %v2032, %v3022
          %v3024 = vpop.f32.mrb[0].mxu0
          %v3025 = vadd.f32 %v2036, %v3024
          %3026 = vmatprep.mubr.bf16.mxu0 0
          %3027 = vmatmul.mubr.bf16.gmra.mrb[0].mxu0 %v1928
          %v3028 = vpop.f32.mrb[0].mxu0
          %v3029 = vadd.f32 %v2032, %v3028
          %v3030 = vpop.f32.mrb[0].mxu0
          %v3031 = vadd.f32 %v2036, %v3030
          %v3032 = vpop.f32.mrb[0].mxu0
          %v3033 = vadd.f32 %v2032, %v3032
          %v3034 = vpop.f32.mrb[0].mxu0
          %v3035 = vadd.f32 %v2036, %v3034
          %3036 = vmatprep.mubr.bf16.mxu0 0
          %3037 = vmatmul.mubr.bf16.gmra.mrb[0].mxu0 %v1929
          %v3038 = vpop.f32.mrb[0].mxu0
          %v3039 = vadd.f32 %v2032, %v3038
          %v3040 = vpop.f32.mrb[0].mxu0
          %v3041 = vadd.f32 %v2036, %v3040
          %v3042 = vpop.f32.mrb[0].mxu0
          %v3043 = vadd.f32 %v2032, %v3042
          %v3044 = vpop.f32.mrb[0].mxu0
          %v3045 = vadd.f32 %v2036, %v3044
          %3046 = vmatprep.mubr.bf16.mxu0 0
          %3047 = vmatmul.mubr.bf16.gmra.mrb[0].mxu0 %v1930
          %v3048 = vpop.f32.mrb[0].mxu0
          %v3049 = vadd.f32 %v2032, %v3048
          %v3050 = vpop.f32.mrb[0].mxu0
          %v3051 = vadd.f32 %v2036, %v3050
          %v3052 = vpop.f32.mrb[0].mxu0
          %v3053 = vadd.f32 %v2032, %v3052
          %v3054 = vpop.f32.mrb[0].mxu0
          %v3055 = vadd.f32 %v2036, %v3054
          %3056 = vmatprep.mubr.bf16.mxu0 0
          %3057 = vmatmul.mubr.bf16.gmra.mrb[0].mxu0 %v1931
          %v3058 = vpop.f32.mrb[0].mxu0
          %v3059 = vadd.f32 %v2032, %v3058
          %v3060 = vpop.f32.mrb[0].mxu0
          %v3061 = vadd.f32 %v2036, %v3060
          %v3062 = vpop.f32.mrb[0].mxu0
          %v3063 = vadd.f32 %v2032, %v3062
          %v3064 = vpop.f32.mrb[0].mxu0
          %v3065 = vadd.f32 %v2036, %v3064
          %3066 = vmatprep.mubr.bf16.mxu0 0
          %3067 = vmatmul.mubr.bf16.gmra.mrb[0].mxu0 %v1932
          %v3068 = vpop.f32.mrb[0].mxu0
          %v3069 = vadd.f32 %v2032, %v3068
          %v3070 = vpop.f32.mrb[0].mxu0
          %v3071 = vadd.f32 %v2036, %v3070
          %v3072 = vpop.f32.mrb[0].mxu0
          %v3073 = vadd.f32 %v2032, %v3072
          %v3074 = vpop.f32.mrb[0].mxu0
          %v3075 = vadd.f32 %v2036, %v3074
          %3076 = vmatprep.mubr.bf16.mxu0 0
          %3077 = vmatmul.mubr.bf16.gmra.mrb[0].mxu0 %v1933
          %v3078 = vpop.f32.mrb[0].mxu0
          %v3079 = vadd.f32 %v2032, %v3078
          %v3080 = vpop.f32.mrb[0].mxu0
          %v3081 = vadd.f32 %v2036, %v3080
          %v3082 = vpop.f32.mrb[0].mxu0
          %v3083 = vadd.f32 %v2032, %v3082
          %v3084 = vpop.f32.mrb[0].mxu0
          %v3085 = vadd.f32 %v2036, %v3084
          %3086 = vmatprep.mubr.bf16.mxu0 0
          %3087 = vmatmul.mubr.bf16.gmra.mrb[0].mxu0 %v1934
          %v3088 = vpop.f32.mrb[0].mxu0
          %v3089 = vadd.f32 %v2032, %v3088
          %v3090 = vpop.f32.mrb[0].mxu0
          %v3091 = vadd.f32 %v2036, %v3090
          %v3092 = vpop.f32.mrb[0].mxu0
          %v3093 = vadd.f32 %v2032, %v3092
          %v3094 = vpop.f32.mrb[0].mxu0
          %v3095 = vadd.f32 %v2036, %v3094
          %3096 = vmatprep.mubr.bf16.mxu0 0
          %3097 = vmatmul.mubr.bf16.gmra.mrb[0].mxu0 %v1935
          %v3098 = vpop.f32.mrb[0].mxu0
          %v3099 = vadd.f32 %v2032, %v3098
          %v3100 = vpop.f32.mrb[0].mxu0
          %v3101 = vadd.f32 %v2036, %v3100
          %v3102 = vpop.f32.mrb[0].mxu0
          %v3103 = vadd.f32 %v2032, %v3102
          %v3104 = vpop.f32.mrb[0].mxu0
          %v3105 = vadd.f32 %v2036, %v3104
          %3106 = vmatprep.mubr.bf16.mxu0 0
          %3107 = vmatmul.mubr.bf16.gmra.mrb[0].mxu0 %v1936
          %v3108 = vpop.f32.mrb[0].mxu0
          %v3109 = vadd.f32 %v2032, %v3108
          %v3110 = vpop.f32.mrb[0].mxu0
          %v3111 = vadd.f32 %v2036, %v3110
          %v3112 = vpop.f32.mrb[0].mxu0
          %v3113 = vadd.f32 %v2032, %v3112
          %v3114 = vpop.f32.mrb[0].mxu0
          %v3115 = vadd.f32 %v2036, %v3114
          %3116 = vmatprep.mubr.bf16.mxu0 0
          %3117 = vmatmul.mubr.bf16.gmra.mrb[0].mxu0 %v1937
          %v3118 = vpop.f32.mrb[0].mxu0
          %v3119 = vadd.f32 %v2032, %v3118
          %v3120 = vpop.f32.mrb[0].mxu0
          %v3121 = vadd.f32 %v2036, %v3120
          %v3122 = vpop.f32.mrb[0].mxu0
          %v3123 = vadd.f32 %v2032, %v3122
          %v3124 = vpop.f32.mrb[0].mxu0
          %v3125 = vadd.f32 %v2036, %v3124
          %3126 = vmatprep.mubr.bf16.mxu0 0
          %3127 = vmatmul.mubr.bf16.gmra.mrb[0].mxu0 %v1938
          %v3128 = vpop.f32.mrb[0].mxu0
          %v3129 = vadd.f32 %v2032, %v3128
          %v3130 = vpop.f32.mrb[0].mxu0
          %v3131 = vadd.f32 %v2036, %v3130
          %v3132 = vpop.f32.mrb[0].mxu0
          %v3133 = vadd.f32 %v2032, %v3132
          %v3134 = vpop.f32.mrb[0].mxu0
          %v3135 = vadd.f32 %v2036, %v3134
          %3136 = vdwg.mxu0
          %v3137 = vmax.f32 %v2400, 0.0
          %v3138 = vmax.f32 %v2402, 0.0
          %v3139 = vmax.f32 %v2593, 0.0
          %v3140 = vmax.f32 %v2595, 0.0
          %v3141 = vmax.f32 %v2786, 0.0
          %v3142 = vmax.f32 %v2788, 0.0
          %v3143 = vmax.f32 %v2979, 0.0
          %v3144 = vmax.f32 %v2981, 0.0
          %v3145 = vmax.f32 %v2404, 0.0
          %v3146 = vmax.f32 %v2406, 0.0
          %v3147 = vmax.f32 %v2597, 0.0
          %v3148 = vmax.f32 %v2599, 0.0
          %v3149 = vmax.f32 %v2790, 0.0
          %v3150 = vmax.f32 %v2792, 0.0
          %v3151 = vmax.f32 %v2983, 0.0
          %v3152 = vmax.f32 %v2985, 0.0
          %v3153 = vmax.f32 %v2410, 0.0
          %v3154 = vmax.f32 %v2412, 0.0
          %v3155 = vmax.f32 %v2603, 0.0
          %v3156 = vmax.f32 %v2605, 0.0
          %v3157 = vmax.f32 %v2796, 0.0
          %v3158 = vmax.f32 %v2798, 0.0
          %v3159 = vmax.f32 %v2989, 0.0
          %v3160 = vmax.f32 %v2991, 0.0
          %v3161 = vmax.f32 %v2414, 0.0
          %v3162 = vmax.f32 %v2416, 0.0
          %v3163 = vmax.f32 %v2607, 0.0
          %v3164 = vmax.f32 %v2609, 0.0
          %v3165 = vmax.f32 %v2800, 0.0
          %v3166 = vmax.f32 %v2802, 0.0
          %v3167 = vmax.f32 %v2993, 0.0
          %v3168 = vmax.f32 %v2995, 0.0
          %v3169 = vmax.f32 %v2420, 0.0
          %v3170 = vmax.f32 %v2422, 0.0
          %v3171 = vmax.f32 %v2613, 0.0
          %v3172 = vmax.f32 %v2615, 0.0
          %v3173 = vmax.f32 %v2806, 0.0
          %v3174 = vmax.f32 %v2808, 0.0
          %v3175 = vmax.f32 %v2999, 0.0
          %v3176 = vmax.f32 %v3001, 0.0
          %v3177 = vmax.f32 %v2424, 0.0
          %v3178 = vmax.f32 %v2426, 0.0
          %v3179 = vmax.f32 %v2617, 0.0
          %v3180 = vmax.f32 %v2619, 0.0
          %v3181 = vmax.f32 %v2810, 0.0
          %v3182 = vmax.f32 %v2812, 0.0
          %v3183 = vmax.f32 %v3003, 0.0
          %v3184 = vmax.f32 %v3005, 0.0
          %v3185 = vmax.f32 %v2430, 0.0
          %v3186 = vmax.f32 %v2432, 0.0
          %v3187 = vmax.f32 %v2623, 0.0
          %v3188 = vmax.f32 %v2625, 0.0
          %v3189 = vmax.f32 %v2816, 0.0
          %v3190 = vmax.f32 %v2818, 0.0
          %v3191 = vmax.f32 %v3009, 0.0
          %v3192 = vmax.f32 %v3011, 0.0
          %v3193 = vmax.f32 %v2434, 0.0
          %v3194 = vmax.f32 %v2436, 0.0
          %v3195 = vmax.f32 %v2627, 0.0
          %v3196 = vmax.f32 %v2629, 0.0
          %v3197 = vmax.f32 %v2820, 0.0
          %v3198 = vmax.f32 %v2822, 0.0
          %v3199 = vmax.f32 %v3013, 0.0
          %v3200 = vmax.f32 %v3015, 0.0
          %v3201 = vmax.f32 %v2440, 0.0
          %v3202 = vmax.f32 %v2442, 0.0
          %v3203 = vmax.f32 %v2633, 0.0
          %v3204 = vmax.f32 %v2635, 0.0
          %v3205 = vmax.f32 %v2826, 0.0
          %v3206 = vmax.f32 %v2828, 0.0
          %v3207 = vmax.f32 %v3019, 0.0
          %v3208 = vmax.f32 %v3021, 0.0
          %v3209 = vmax.f32 %v2444, 0.0
          %v3210 = vmax.f32 %v2446, 0.0
          %v3211 = vmax.f32 %v2637, 0.0
          %v3212 = vmax.f32 %v2639, 0.0
          %v3213 = vmax.f32 %v2830, 0.0
          %v3214 = vmax.f32 %v2832, 0.0
          %v3215 = vmax.f32 %v3023, 0.0
          %v3216 = vmax.f32 %v3025, 0.0
          %v3217 = vmax.f32 %v2450, 0.0
          %v3218 = vmax.f32 %v2452, 0.0
          %v3219 = vmax.f32 %v2643, 0.0
          %v3220 = vmax.f32 %v2645, 0.0
          %v3221 = vmax.f32 %v2836, 0.0
          %v3222 = vmax.f32 %v2838, 0.0
          %v3223 = vmax.f32 %v3029, 0.0
          %v3224 = vmax.f32 %v3031, 0.0
          %v3225 = vmax.f32 %v2454, 0.0
          %v3226 = vmax.f32 %v2456, 0.0
          %v3227 = vmax.f32 %v2647, 0.0
          %v3228 = vmax.f32 %v2649, 0.0
          %v3229 = vmax.f32 %v2840, 0.0
          %v3230 = vmax.f32 %v2842, 0.0
          %v3231 = vmax.f32 %v3033, 0.0
          %v3232 = vmax.f32 %v3035, 0.0
          %v3233 = vmax.f32 %v2460, 0.0
          %v3234 = vmax.f32 %v2462, 0.0
          %v3235 = vmax.f32 %v2653, 0.0
          %v3236 = vmax.f32 %v2655, 0.0
          %v3237 = vmax.f32 %v2846, 0.0
          %v3238 = vmax.f32 %v2848, 0.0
          %v3239 = vmax.f32 %v3039, 0.0
          %v3240 = vmax.f32 %v3041, 0.0
          %v3241 = vmax.f32 %v2464, 0.0
          %v3242 = vmax.f32 %v2466, 0.0
          %v3243 = vmax.f32 %v2657, 0.0
          %v3244 = vmax.f32 %v2659, 0.0
          %v3245 = vmax.f32 %v2850, 0.0
          %v3246 = vmax.f32 %v2852, 0.0
          %v3247 = vmax.f32 %v3043, 0.0
          %v3248 = vmax.f32 %v3045, 0.0
          %v3249 = vmax.f32 %v2470, 0.0
          %v3250 = vmax.f32 %v2472, 0.0
          %v3251 = vmax.f32 %v2663, 0.0
          %v3252 = vmax.f32 %v2665, 0.0
          %v3253 = vmax.f32 %v2856, 0.0
          %v3254 = vmax.f32 %v2858, 0.0
          %v3255 = vmax.f32 %v3049, 0.0
          %v3256 = vmax.f32 %v3051, 0.0
          %v3257 = vmax.f32 %v2474, 0.0
          %v3258 = vmax.f32 %v2476, 0.0
          %v3259 = vmax.f32 %v2667, 0.0
          %v3260 = vmax.f32 %v2669, 0.0
          %v3261 = vmax.f32 %v2860, 0.0
          %v3262 = vmax.f32 %v2862, 0.0
          %v3263 = vmax.f32 %v3053, 0.0
          %v3264 = vmax.f32 %v3055, 0.0
          %v3265 = vmax.f32 %v2480, 0.0
          %v3266 = vmax.f32 %v2482, 0.0
          %v3267 = vmax.f32 %v2673, 0.0
          %v3268 = vmax.f32 %v2675, 0.0
          %v3269 = vmax.f32 %v2866, 0.0
          %v3270 = vmax.f32 %v2868, 0.0
          %v3271 = vmax.f32 %v3059, 0.0
          %v3272 = vmax.f32 %v3061, 0.0
          %v3273 = vmax.f32 %v2484, 0.0
          %v3274 = vmax.f32 %v2486, 0.0
          %v3275 = vmax.f32 %v2677, 0.0
          %v3276 = vmax.f32 %v2679, 0.0
          %v3277 = vmax.f32 %v2870, 0.0
          %v3278 = vmax.f32 %v2872, 0.0
          %v3279 = vmax.f32 %v3063, 0.0
          %v3280 = vmax.f32 %v3065, 0.0
          %v3281 = vmax.f32 %v2490, 0.0
          %v3282 = vmax.f32 %v2492, 0.0
          %v3283 = vmax.f32 %v2683, 0.0
          %v3284 = vmax.f32 %v2685, 0.0
          %v3285 = vmax.f32 %v2876, 0.0
          %v3286 = vmax.f32 %v2878, 0.0
          %v3287 = vmax.f32 %v3069, 0.0
          %v3288 = vmax.f32 %v3071, 0.0
          %v3289 = vmax.f32 %v2494, 0.0
          %v3290 = vmax.f32 %v2496, 0.0
          %v3291 = vmax.f32 %v2687, 0.0
          %v3292 = vmax.f32 %v2689, 0.0
          %v3293 = vmax.f32 %v2880, 0.0
          %v3294 = vmax.f32 %v2882, 0.0
          %v3295 = vmax.f32 %v3073, 0.0
          %v3296 = vmax.f32 %v3075, 0.0
          %v3297 = vmax.f32 %v2500, 0.0
          %v3298 = vmax.f32 %v2502, 0.0
          %v3299 = vmax.f32 %v2693, 0.0
          %v3300 = vmax.f32 %v2695, 0.0
          %v3301 = vmax.f32 %v2886, 0.0
          %v3302 = vmax.f32 %v2888, 0.0
          %v3303 = vmax.f32 %v3079, 0.0
          %v3304 = vmax.f32 %v3081, 0.0
          %v3305 = vmax.f32 %v2504, 0.0
          %v3306 = vmax.f32 %v2506, 0.0
          %v3307 = vmax.f32 %v2697, 0.0
          %v3308 = vmax.f32 %v2699, 0.0
          %v3309 = vmax.f32 %v2890, 0.0
          %v3310 = vmax.f32 %v2892, 0.0
          %v3311 = vmax.f32 %v3083, 0.0
          %v3312 = vmax.f32 %v3085, 0.0
          %v3313 = vmax.f32 %v2510, 0.0
          %v3314 = vmax.f32 %v2512, 0.0
          %v3315 = vmax.f32 %v2703, 0.0
          %v3316 = vmax.f32 %v2705, 0.0
          %v3317 = vmax.f32 %v2896, 0.0
          %v3318 = vmax.f32 %v2898, 0.0
          %v3319 = vmax.f32 %v3089, 0.0
          %v3320 = vmax.f32 %v3091, 0.0
          %v3321 = vmax.f32 %v2514, 0.0
          %v3322 = vmax.f32 %v2516, 0.0
          %v3323 = vmax.f32 %v2707, 0.0
          %v3324 = vmax.f32 %v2709, 0.0
          %v3325 = vmax.f32 %v2900, 0.0
          %v3326 = vmax.f32 %v2902, 0.0
          %v3327 = vmax.f32 %v3093, 0.0
          %v3328 = vmax.f32 %v3095, 0.0
          %v3329 = vmax.f32 %v2520, 0.0
          %v3330 = vmax.f32 %v2522, 0.0
          %v3331 = vmax.f32 %v2713, 0.0
          %v3332 = vmax.f32 %v2715, 0.0
          %v3333 = vmax.f32 %v2906, 0.0
          %v3334 = vmax.f32 %v2908, 0.0
          %v3335 = vmax.f32 %v3099, 0.0
          %v3336 = vmax.f32 %v3101, 0.0
          %v3337 = vmax.f32 %v2524, 0.0
          %v3338 = vmax.f32 %v2526, 0.0
          %v3339 = vmax.f32 %v2717, 0.0
          %v3340 = vmax.f32 %v2719, 0.0
          %v3341 = vmax.f32 %v2910, 0.0
          %v3342 = vmax.f32 %v2912, 0.0
          %v3343 = vmax.f32 %v3103, 0.0
          %v3344 = vmax.f32 %v3105, 0.0
          %v3345 = vmax.f32 %v2530, 0.0
          %v3346 = vmax.f32 %v2532, 0.0
          %v3347 = vmax.f32 %v2723, 0.0
          %v3348 = vmax.f32 %v2725, 0.0
          %v3349 = vmax.f32 %v2916, 0.0
          %v3350 = vmax.f32 %v2918, 0.0
          %v3351 = vmax.f32 %v3109, 0.0
          %v3352 = vmax.f32 %v3111, 0.0
          %v3353 = vmax.f32 %v2534, 0.0
          %v3354 = vmax.f32 %v2536, 0.0
          %v3355 = vmax.f32 %v2727, 0.0
          %v3356 = vmax.f32 %v2729, 0.0
          %v3357 = vmax.f32 %v2920, 0.0
          %v3358 = vmax.f32 %v2922, 0.0
          %v3359 = vmax.f32 %v3113, 0.0
          %v3360 = vmax.f32 %v3115, 0.0
          %v3361 = vmax.f32 %v2540, 0.0
          %v3362 = vmax.f32 %v2542, 0.0
          %v3363 = vmax.f32 %v2733, 0.0
          %v3364 = vmax.f32 %v2735, 0.0
          %v3365 = vmax.f32 %v2926, 0.0
          %v3366 = vmax.f32 %v2928, 0.0
          %v3367 = vmax.f32 %v3119, 0.0
          %v3368 = vmax.f32 %v3121, 0.0
          %v3369 = vmax.f32 %v2544, 0.0
          %v3370 = vmax.f32 %v2546, 0.0
          %v3371 = vmax.f32 %v2737, 0.0
          %v3372 = vmax.f32 %v2739, 0.0
          %v3373 = vmax.f32 %v2930, 0.0
          %v3374 = vmax.f32 %v2932, 0.0
          %v3375 = vmax.f32 %v3123, 0.0
          %v3376 = vmax.f32 %v3125, 0.0
          %v3377 = vmax.f32 %v2550, 0.0
          %v3378 = vmax.f32 %v2552, 0.0
          %v3379 = vmax.f32 %v2743, 0.0
          %v3380 = vmax.f32 %v2745, 0.0
          %v3381 = vmax.f32 %v2936, 0.0
          %v3382 = vmax.f32 %v2938, 0.0
          %v3383 = vmax.f32 %v3129, 0.0
          %v3384 = vmax.f32 %v3131, 0.0
          %v3385 = vmax.f32 %v2554, 0.0
          %v3386 = vmax.f32 %v2556, 0.0
          %v3387 = vmax.f32 %v2747, 0.0
          %v3388 = vmax.f32 %v2749, 0.0
          %v3389 = vmax.f32 %v2940, 0.0
          %v3390 = vmax.f32 %v2942, 0.0
          %v3391 = vmax.f32 %v3133, 0.0
          %v3392 = vmax.f32 %v3135, 0.0
          %v3393 = vmax.f32 %v3137, %v3145
          %v3394 = vmax.f32 %v3393, %v3153
          %v3395 = vmax.f32 %v3394, %v3161
          %v3396 = vmax.f32 %v3395, %v3169
          %v3397 = vmax.f32 %v3396, %v3177
          %v3398 = vmax.f32 %v3397, %v3185
          %v3399 = vmax.f32 %v3398, %v3193
          %v3400 = vmax.f32 %v3399, %v3201
          %v3401 = vmax.f32 %v3400, %v3209
          %v3402 = vmax.f32 %v3401, %v3217
          %v3403 = vmax.f32 %v3402, %v3225
          %v3404 = vmax.f32 %v3403, %v3233
          %v3405 = vmax.f32 %v3404, %v3241
          %v3406 = vmax.f32 %v3405, %v3249
          %v3407 = vmax.f32 %v3406, %v3257
          %v3408 = vrot.slane %v3407, 4
          %v3409 = vmax.f32 %v3407, %v3408
          %v3410 = vrot.slane %v3409, 2
          %v3411 = vmax.f32 %v3409, %v3410
          %v3412 = vrot.slane %v3411, 1
          %v3413 = vmax.f32 %v3411, %v3412
          %v3414 = vmax.f32 %v3138, %v3146
          %v3415 = vmax.f32 %v3414, %v3154
          %v3416 = vmax.f32 %v3415, %v3162
          %v3417 = vmax.f32 %v3416, %v3170
          %v3418 = vmax.f32 %v3417, %v3178
          %v3419 = vmax.f32 %v3418, %v3186
          %v3420 = vmax.f32 %v3419, %v3194
          %v3421 = vmax.f32 %v3420, %v3202
          %v3422 = vmax.f32 %v3421, %v3210
          %v3423 = vmax.f32 %v3422, %v3218
          %v3424 = vmax.f32 %v3423, %v3226
          %v3425 = vmax.f32 %v3424, %v3234
          %v3426 = vmax.f32 %v3425, %v3242
          %v3427 = vmax.f32 %v3426, %v3250
          %v3428 = vmax.f32 %v3427, %v3258
          %v3429 = vrot.slane %v3428, 4
          %v3430 = vmax.f32 %v3428, %v3429
          %v3431 = vrot.slane %v3430, 2
          %v3432 = vmax.f32 %v3430, %v3431
          %v3433 = vrot.slane %v3432, 1
          %v3434 = vmax.f32 %v3432, %v3433
          %v3435 = vmax.f32 %v3139, %v3147
          %v3436 = vmax.f32 %v3435, %v3155
          %v3437 = vmax.f32 %v3436, %v3163
          %v3438 = vmax.f32 %v3437, %v3171
          %v3439 = vmax.f32 %v3438, %v3179
          %v3440 = vmax.f32 %v3439, %v3187
          %v3441 = vmax.f32 %v3440, %v3195
          %v3442 = vmax.f32 %v3441, %v3203
          %v3443 = vmax.f32 %v3442, %v3211
          %v3444 = vmax.f32 %v3443, %v3219
          %v3445 = vmax.f32 %v3444, %v3227
          %v3446 = vmax.f32 %v3445, %v3235
          %v3447 = vmax.f32 %v3446, %v3243
          %v3448 = vmax.f32 %v3447, %v3251
          %v3449 = vmax.f32 %v3448, %v3259
          %v3450 = vrot.slane %v3449, 4
          %v3451 = vmax.f32 %v3449, %v3450
          %v3452 = vrot.slane %v3451, 2
          %v3453 = vmax.f32 %v3451, %v3452
          %v3454 = vrot.slane %v3453, 1
          %v3455 = vmax.f32 %v3453, %v3454
          %v3456 = vmax.f32 %v3140, %v3148
          %v3457 = vmax.f32 %v3456, %v3156
          %v3458 = vmax.f32 %v3457, %v3164
          %v3459 = vmax.f32 %v3458, %v3172
          %v3460 = vmax.f32 %v3459, %v3180
          %v3461 = vmax.f32 %v3460, %v3188
          %v3462 = vmax.f32 %v3461, %v3196
          %v3463 = vmax.f32 %v3462, %v3204
          %v3464 = vmax.f32 %v3463, %v3212
          %v3465 = vmax.f32 %v3464, %v3220
          %v3466 = vmax.f32 %v3465, %v3228
          %v3467 = vmax.f32 %v3466, %v3236
          %v3468 = vmax.f32 %v3467, %v3244
          %v3469 = vmax.f32 %v3468, %v3252
          %v3470 = vmax.f32 %v3469, %v3260
          %v3471 = vrot.slane %v3470, 4
          %v3472 = vmax.f32 %v3470, %v3471
          %v3473 = vrot.slane %v3472, 2
          %v3474 = vmax.f32 %v3472, %v3473
          %v3475 = vrot.slane %v3474, 1
          %v3476 = vmax.f32 %v3474, %v3475
          %v3477 = vmax.f32 %v3141, %v3149
          %v3478 = vmax.f32 %v3477, %v3157
          %v3479 = vmax.f32 %v3478, %v3165
          %v3480 = vmax.f32 %v3479, %v3173
          %v3481 = vmax.f32 %v3480, %v3181
          %v3482 = vmax.f32 %v3481, %v3189
          %v3483 = vmax.f32 %v3482, %v3197
          %v3484 = vmax.f32 %v3483, %v3205
          %v3485 = vmax.f32 %v3484, %v3213
          %v3486 = vmax.f32 %v3485, %v3221
          %v3487 = vmax.f32 %v3486, %v3229
          %v3488 = vmax.f32 %v3487, %v3237
          %v3489 = vmax.f32 %v3488, %v3245
          %v3490 = vmax.f32 %v3489, %v3253
          %v3491 = vmax.f32 %v3490, %v3261
          %v3492 = vrot.slane %v3491, 4
          %v3493 = vmax.f32 %v3491, %v3492
          %v3494 = vrot.slane %v3493, 2
          %v3495 = vmax.f32 %v3493, %v3494
          %v3496 = vrot.slane %v3495, 1
          %v3497 = vmax.f32 %v3495, %v3496
          %v3498 = vmax.f32 %v3142, %v3150
          %v3499 = vmax.f32 %v3498, %v3158
          %v3500 = vmax.f32 %v3499, %v3166
          %v3501 = vmax.f32 %v3500, %v3174
          %v3502 = vmax.f32 %v3501, %v3182
          %v3503 = vmax.f32 %v3502, %v3190
          %v3504 = vmax.f32 %v3503, %v3198
          %v3505 = vmax.f32 %v3504, %v3206
          %v3506 = vmax.f32 %v3505, %v3214
          %v3507 = vmax.f32 %v3506, %v3222
          %v3508 = vmax.f32 %v3507, %v3230
          %v3509 = vmax.f32 %v3508, %v3238
          %v3510 = vmax.f32 %v3509, %v3246
          %v3511 = vmax.f32 %v3510, %v3254
          %v3512 = vmax.f32 %v3511, %v3262
          %v3513 = vrot.slane %v3512, 4
          %v3514 = vmax.f32 %v3512, %v3513
          %v3515 = vrot.slane %v3514, 2
          %v3516 = vmax.f32 %v3514, %v3515
          %v3517 = vrot.slane %v3516, 1
          %v3518 = vmax.f32 %v3516, %v3517
          %v3519 = vmax.f32 %v3143, %v3151
          %v3520 = vmax.f32 %v3519, %v3159
          %v3521 = vmax.f32 %v3520, %v3167
          %v3522 = vmax.f32 %v3521, %v3175
          %v3523 = vmax.f32 %v3522, %v3183
          %v3524 = vmax.f32 %v3523, %v3191
          %v3525 = vmax.f32 %v3524, %v3199
          %v3526 = vmax.f32 %v3525, %v3207
          %v3527 = vmax.f32 %v3526, %v3215
          %v3528 = vmax.f32 %v3527, %v3223
          %v3529 = vmax.f32 %v3528, %v3231
          %v3530 = vmax.f32 %v3529, %v3239
          %v3531 = vmax.f32 %v3530, %v3247
          %v3532 = vmax.f32 %v3531, %v3255
          %v3533 = vmax.f32 %v3532, %v3263
          %v3534 = vrot.slane %v3533, 4
          %v3535 = vmax.f32 %v3533, %v3534
          %v3536 = vrot.slane %v3535, 2
          %v3537 = vmax.f32 %v3535, %v3536
          %v3538 = vrot.slane %v3537, 1
          %v3539 = vmax.f32 %v3537, %v3538
          %v3540 = vmax.f32 %v3144, %v3152
          %v3541 = vmax.f32 %v3540, %v3160
          %v3542 = vmax.f32 %v3541, %v3168
          %v3543 = vmax.f32 %v3542, %v3176
          %v3544 = vmax.f32 %v3543, %v3184
          %v3545 = vmax.f32 %v3544, %v3192
          %v3546 = vmax.f32 %v3545, %v3200
          %v3547 = vmax.f32 %v3546, %v3208
          %v3548 = vmax.f32 %v3547, %v3216
          %v3549 = vmax.f32 %v3548, %v3224
          %v3550 = vmax.f32 %v3549, %v3232
          %v3551 = vmax.f32 %v3550, %v3240
          %v3552 = vmax.f32 %v3551, %v3248
          %v3553 = vmax.f32 %v3552, %v3256
          %v3554 = vmax.f32 %v3553, %v3264
          %v3555 = vrot.slane %v3554, 4
          %v3556 = vmax.f32 %v3554, %v3555
          %v3557 = vrot.slane %v3556, 2
          %v3558 = vmax.f32 %v3556, %v3557
          %v3559 = vrot.slane %v3558, 1
          %v3560 = vmax.f32 %v3558, %v3559
          %v3561 = vmax.f32 %v3265, %v3273
          %v3562 = vmax.f32 %v3561, %v3281
          %v3563 = vmax.f32 %v3562, %v3289
          %v3564 = vmax.f32 %v3563, %v3297
          %v3565 = vmax.f32 %v3564, %v3305
          %v3566 = vmax.f32 %v3565, %v3313
          %v3567 = vmax.f32 %v3566, %v3321
          %v3568 = vmax.f32 %v3567, %v3329
          %v3569 = vmax.f32 %v3568, %v3337
          %v3570 = vmax.f32 %v3569, %v3345
          %v3571 = vmax.f32 %v3570, %v3353
          %v3572 = vmax.f32 %v3571, %v3361
          %v3573 = vmax.f32 %v3572, %v3369
          %v3574 = vmax.f32 %v3573, %v3377
          %v3575 = vmax.f32 %v3574, %v3385
          %v3576 = vrot.slane %v3575, 4
          %v3577 = vmax.f32 %v3575, %v3576
          %v3578 = vrot.slane %v3577, 2
          %v3579 = vmax.f32 %v3577, %v3578
          %v3580 = vrot.slane %v3579, 1
          %v3581 = vmax.f32 %v3579, %v3580
          %v3582 = vmax.f32 %v3266, %v3274
          %v3583 = vmax.f32 %v3582, %v3282
          %v3584 = vmax.f32 %v3583, %v3290
          %v3585 = vmax.f32 %v3584, %v3298
          %v3586 = vmax.f32 %v3585, %v3306
          %v3587 = vmax.f32 %v3586, %v3314
          %v3588 = vmax.f32 %v3587, %v3322
          %v3589 = vmax.f32 %v3588, %v3330
          %v3590 = vmax.f32 %v3589, %v3338
          %v3591 = vmax.f32 %v3590, %v3346
          %v3592 = vmax.f32 %v3591, %v3354
          %v3593 = vmax.f32 %v3592, %v3362
          %v3594 = vmax.f32 %v3593, %v3370
          %v3595 = vmax.f32 %v3594, %v3378
          %v3596 = vmax.f32 %v3595, %v3386
          %v3597 = vrot.slane %v3596, 4
          %v3598 = vmax.f32 %v3596, %v3597
          %v3599 = vrot.slane %v3598, 2
          %v3600 = vmax.f32 %v3598, %v3599
          %v3601 = vrot.slane %v3600, 1
          %v3602 = vmax.f32 %v3600, %v3601
          %v3603 = vmax.f32 %v3267, %v3275
          %v3604 = vmax.f32 %v3603, %v3283
          %v3605 = vmax.f32 %v3604, %v3291
          %v3606 = vmax.f32 %v3605, %v3299
          %v3607 = vmax.f32 %v3606, %v3307
          %v3608 = vmax.f32 %v3607, %v3315
          %v3609 = vmax.f32 %v3608, %v3323
          %v3610 = vmax.f32 %v3609, %v3331
          %v3611 = vmax.f32 %v3610, %v3339
          %v3612 = vmax.f32 %v3611, %v3347
          %v3613 = vmax.f32 %v3612, %v3355
          %v3614 = vmax.f32 %v3613, %v3363
          %v3615 = vmax.f32 %v3614, %v3371
          %v3616 = vmax.f32 %v3615, %v3379
          %v3617 = vmax.f32 %v3616, %v3387
          %v3618 = vrot.slane %v3617, 4
          %v3619 = vmax.f32 %v3617, %v3618
          %v3620 = vrot.slane %v3619, 2
          %v3621 = vmax.f32 %v3619, %v3620
          %v3622 = vrot.slane %v3621, 1
          %v3623 = vmax.f32 %v3621, %v3622
          %v3624 = vmax.f32 %v3268, %v3276
          %v3625 = vmax.f32 %v3624, %v3284
          %v3626 = vmax.f32 %v3625, %v3292
          %v3627 = vmax.f32 %v3626, %v3300
          %v3628 = vmax.f32 %v3627, %v3308
          %v3629 = vmax.f32 %v3628, %v3316
          %v3630 = vmax.f32 %v3629, %v3324
          %v3631 = vmax.f32 %v3630, %v3332
          %v3632 = vmax.f32 %v3631, %v3340
          %v3633 = vmax.f32 %v3632, %v3348
          %v3634 = vmax.f32 %v3633, %v3356
          %v3635 = vmax.f32 %v3634, %v3364
          %v3636 = vmax.f32 %v3635, %v3372
          %v3637 = vmax.f32 %v3636, %v3380
          %v3638 = vmax.f32 %v3637, %v3388
          %v3639 = vrot.slane %v3638, 4
          %v3640 = vmax.f32 %v3638, %v3639
          %v3641 = vrot.slane %v3640, 2
          %v3642 = vmax.f32 %v3640, %v3641
          %v3643 = vrot.slane %v3642, 1
          %v3644 = vmax.f32 %v3642, %v3643
          %v3645 = vmax.f32 %v3269, %v3277
          %v3646 = vmax.f32 %v3645, %v3285
          %v3647 = vmax.f32 %v3646, %v3293
          %v3648 = vmax.f32 %v3647, %v3301
          %v3649 = vmax.f32 %v3648, %v3309
          %v3650 = vmax.f32 %v3649, %v3317
          %v3651 = vmax.f32 %v3650, %v3325
          %v3652 = vmax.f32 %v3651, %v3333
          %v3653 = vmax.f32 %v3652, %v3341
          %v3654 = vmax.f32 %v3653, %v3349
          %v3655 = vmax.f32 %v3654, %v3357
          %v3656 = vmax.f32 %v3655, %v3365
          %v3657 = vmax.f32 %v3656, %v3373
          %v3658 = vmax.f32 %v3657, %v3381
          %v3659 = vmax.f32 %v3658, %v3389
          %v3660 = vrot.slane %v3659, 4
          %v3661 = vmax.f32 %v3659, %v3660
          %v3662 = vrot.slane %v3661, 2
          %v3663 = vmax.f32 %v3661, %v3662
          %v3664 = vrot.slane %v3663, 1
          %v3665 = vmax.f32 %v3663, %v3664
          %v3666 = vmax.f32 %v3270, %v3278
          %v3667 = vmax.f32 %v3666, %v3286
          %v3668 = vmax.f32 %v3667, %v3294
          %v3669 = vmax.f32 %v3668, %v3302
          %v3670 = vmax.f32 %v3669, %v3310
          %v3671 = vmax.f32 %v3670, %v3318
          %v3672 = vmax.f32 %v3671, %v3326
          %v3673 = vmax.f32 %v3672, %v3334
          %v3674 = vmax.f32 %v3673, %v3342
          %v3675 = vmax.f32 %v3674, %v3350
          %v3676 = vmax.f32 %v3675, %v3358
          %v3677 = vmax.f32 %v3676, %v3366
          %v3678 = vmax.f32 %v3677, %v3374
          %v3679 = vmax.f32 %v3678, %v3382
          %v3680 = vmax.f32 %v3679, %v3390
          %v3681 = vrot.slane %v3680, 4
          %v3682 = vmax.f32 %v3680, %v3681
          %v3683 = vrot.slane %v3682, 2
          %v3684 = vmax.f32 %v3682, %v3683
          %v3685 = vrot.slane %v3684, 1
          %v3686 = vmax.f32 %v3684, %v3685
          %v3687 = vmax.f32 %v3271, %v3279
          %v3688 = vmax.f32 %v3687, %v3287
          %v3689 = vmax.f32 %v3688, %v3295
          %v3690 = vmax.f32 %v3689, %v3303
          %v3691 = vmax.f32 %v3690, %v3311
          %v3692 = vmax.f32 %v3691, %v3319
          %v3693 = vmax.f32 %v3692, %v3327
          %v3694 = vmax.f32 %v3693, %v3335
          %v3695 = vmax.f32 %v3694, %v3343
          %v3696 = vmax.f32 %v3695, %v3351
          %v3697 = vmax.f32 %v3696, %v3359
          %v3698 = vmax.f32 %v3697, %v3367
          %v3699 = vmax.f32 %v3698, %v3375
          %v3700 = vmax.f32 %v3699, %v3383
          %v3701 = vmax.f32 %v3700, %v3391
          %v3702 = vrot.slane %v3701, 4
          %v3703 = vmax.f32 %v3701, %v3702
          %v3704 = vrot.slane %v3703, 2
          %v3705 = vmax.f32 %v3703, %v3704
          %v3706 = vrot.slane %v3705, 1
          %v3707 = vmax.f32 %v3705, %v3706
          %v3708 = vmax.f32 %v3272, %v3280
          %v3709 = vmax.f32 %v3708, %v3288
          %v3710 = vmax.f32 %v3709, %v3296
          %v3711 = vmax.f32 %v3710, %v3304
          %v3712 = vmax.f32 %v3711, %v3312
          %v3713 = vmax.f32 %v3712, %v3320
          %v3714 = vmax.f32 %v3713, %v3328
          %v3715 = vmax.f32 %v3714, %v3336
          %v3716 = vmax.f32 %v3715, %v3344
          %v3717 = vmax.f32 %v3716, %v3352
          %v3718 = vmax.f32 %v3717, %v3360
          %v3719 = vmax.f32 %v3718, %v3368
          %v3720 = vmax.f32 %v3719, %v3376
          %v3721 = vmax.f32 %v3720, %v3384
          %v3722 = vmax.f32 %v3721, %v3392
          %v3723 = vrot.slane %v3722, 4
          %v3724 = vmax.f32 %v3722, %v3723
          %v3725 = vrot.slane %v3724, 2
          %v3726 = vmax.f32 %v3724, %v3725
          %v3727 = vrot.slane %v3726, 1
          %v3728 = vmax.f32 %v3726, %v3727
          %vm3729 = vcmask 1040384
          %v3730 = vsel %vm3729, %v3413, %v3581
          %v3731 = vsel %vm3729, %v3434, %v3602
          %v3732 = vsel %vm3729, %v3455, %v3623
          %v3733 = vsel %vm3729, %v3476, %v3644
          %v3734 = vsel %vm3729, %v3497, %v3665
          %v3735 = vsel %vm3729, %v3518, %v3686
          %v3736 = vsel %vm3729, %v3539, %v3707
          %v3737 = vsel %vm3729, %v3560, %v3728
          %v3738 = vmax.f32 %v923, %v3730
          %v3739 = vmax.f32 %v924, %v3731
          %v3740 = vmax.f32 %v925, %v3732
          %v3741 = vmax.f32 %v926, %v3733
          %v3742 = vmax.f32 %v927, %v3734
          %v3743 = vmax.f32 %v928, %v3735
          %v3744 = vmax.f32 %v929, %v3736
          %v3745 = vmax.f32 %v930, %v3737
        $region165: #{tpu_custom_call.1} parent=111 // loop_footer
          %s922 = sadd.s32 1, %s918
        $region166: #{tpu_custom_call.1} parent=111 // loop_footer_branch
          %917 = sbr.rel target = $region162
        $region167: #{tpu_custom_call.1} parent=111 // loop_exit
          _
        %v3746 = vpack.c.bf16 %v923, %v923
        %v3747 = vpack.c.bf16 %v924, %v924
        %v3748 = vpack.c.bf16 %v925, %v925
        %v3749 = vpack.c.bf16 %v926, %v926
        %v3750 = vpack.c.bf16 %v927, %v927
        %v3751 = vpack.c.bf16 %v928, %v928
        %v3752 = vpack.c.bf16 %v929, %v929
        %v3753 = vpack.c.bf16 %v930, %v930
        %v3754 = vld [vmem:[#allocation8] sm:$0xff]
        %v3755 = vld [vmem:[#allocation8 + $0x8] sm:$0xff]
        %v3756 = vld [vmem:[#allocation8 + $0x10] sm:$0xff]
        %v3757 = vld [vmem:[#allocation8 + $0x18] sm:$0xff]
        %v3758 = vld [vmem:[#allocation8 + $0x20] sm:$0xff]
        %v3759 = vld [vmem:[#allocation8 + $0x28] sm:$0xff]
        %v3760 = vld [vmem:[#allocation8 + $0x30] sm:$0xff]
        %v3761 = vld [vmem:[#allocation8 + $0x38] sm:$0xff]
        %v3762 = vld [vmem:[#allocation8 + $0x40] sm:$0xff]
        %v3763 = vld [vmem:[#allocation8 + $0x48] sm:$0xff]
        %v3764 = vld [vmem:[#allocation8 + $0x50] sm:$0xff]
        %v3765 = vld [vmem:[#allocation8 + $0x58] sm:$0xff]
        %v3766 = vld [vmem:[#allocation8 + $0x60] sm:$0xff]
        %v3767 = vld [vmem:[#allocation8 + $0x68] sm:$0xff]
        %v3768 = vld [vmem:[#allocation8 + $0x70] sm:$0xff]
        %v3769 = vld [vmem:[#allocation8 + $0x78] sm:$0xff]
        %v3770 = vld [vmem:[#allocation8 + $0x80] sm:$0xff]
        %v3771 = vld [vmem:[#allocation8 + $0x88] sm:$0xff]
        %v3772 = vld [vmem:[#allocation8 + $0x90] sm:$0xff]
        %v3773 = vld [vmem:[#allocation8 + $0x98] sm:$0xff]
        %v3774 = vld [vmem:[#allocation8 + $0xa0] sm:$0xff]
        %v3775 = vld [vmem:[#allocation8 + $0xa8] sm:$0xff]
        %v3776 = vld [vmem:[#allocation8 + $0xb0] sm:$0xff]
        %v3777 = vld [vmem:[#allocation8 + $0xb8] sm:$0xff]
        %v3778 = vld [vmem:[#allocation8 + $0xc0] sm:$0xff]
        %v3779 = vld [vmem:[#allocation8 + $0xc8] sm:$0xff]
        %v3780 = vld [vmem:[#allocation8 + $0xd0] sm:$0xff]
        %v3781 = vld [vmem:[#allocation8 + $0xd8] sm:$0xff]
        %v3782 = vld [vmem:[#allocation8 + $0xe0] sm:$0xff]
        %v3783 = vld [vmem:[#allocation8 + $0xe8] sm:$0xff]
        %v3784 = vld [vmem:[#allocation8 + $0xf0] sm:$0xff]
        %v3785 = vld [vmem:[#allocation8 + $0xf8] sm:$0xff]
        %v3786 = vld [vmem:[#allocation8 + $0x100] sm:$0xff]
        %v3787 = vld [vmem:[#allocation8 + $0x108] sm:$0xff]
        %v3788 = vld [vmem:[#allocation8 + $0x110] sm:$0xff]
        %v3789 = vld [vmem:[#allocation8 + $0x118] sm:$0xff]
        %v3790 = vld [vmem:[#allocation8 + $0x120] sm:$0xff]
        %v3791 = vld [vmem:[#allocation8 + $0x128] sm:$0xff]
        %v3792 = vld [vmem:[#allocation8 + $0x130] sm:$0xff]
        %v3793 = vld [vmem:[#allocation8 + $0x138] sm:$0xff]
        %v3794 = vld [vmem:[#allocation8 + $0x140] sm:$0xff]
        %v3795 = vld [vmem:[#allocation8 + $0x148] sm:$0xff]
        %v3796 = vld [vmem:[#allocation8 + $0x150] sm:$0xff]
        %v3797 = vld [vmem:[#allocation8 + $0x158] sm:$0xff]
        %v3798 = vld [vmem:[#allocation8 + $0x160] sm:$0xff]
        %v3799 = vld [vmem:[#allocation8 + $0x168] sm:$0xff]
        %v3800 = vld [vmem:[#allocation8 + $0x170] sm:$0xff]
        %v3801 = vld [vmem:[#allocation8 + $0x178] sm:$0xff]
        %v3802 = vld [vmem:[#allocation8 + $0x180] sm:$0xff]
        %v3803 = vld [vmem:[#allocation8 + $0x188] sm:$0xff]
        %v3804 = vld [vmem:[#allocation8 + $0x190] sm:$0xff]
        %v3805 = vld [vmem:[#allocation8 + $0x198] sm:$0xff]
        %v3806 = vld [vmem:[#allocation8 + $0x1a0] sm:$0xff]
        %v3807 = vld [vmem:[#allocation8 + $0x1a8] sm:$0xff]
        %v3808 = vld [vmem:[#allocation8 + $0x1b0] sm:$0xff]
        %v3809 = vld [vmem:[#allocation8 + $0x1b8] sm:$0xff]
        %v3810 = vld [vmem:[#allocation8 + $0x1c0] sm:$0xff]
        %v3811 = vld [vmem:[#allocation8 + $0x1c8] sm:$0xff]
        %v3812 = vld [vmem:[#allocation8 + $0x1d0] sm:$0xff]
        %v3813 = vld [vmem:[#allocation8 + $0x1d8] sm:$0xff]
        %v3814 = vld [vmem:[#allocation8 + $0x1e0] sm:$0xff]
        %v3815 = vld [vmem:[#allocation8 + $0x1e8] sm:$0xff]
        %v3816 = vld [vmem:[#allocation8 + $0x1f0] sm:$0xff]
        %v3817 = vld [vmem:[#allocation8 + $0x1f8] sm:$0xff]
        %v3818 = vld [vmem:[#allocation8 + $0x200] sm:$0xff]
        %v3819 = vld [vmem:[#allocation8 + $0x208] sm:$0xff]
        %v3820 = vld [vmem:[#allocation8 + $0x210] sm:$0xff]
        %v3821 = vld [vmem:[#allocation8 + $0x218] sm:$0xff]
        %v3822 = vld [vmem:[#allocation8 + $0x220] sm:$0xff]
        %v3823 = vld [vmem:[#allocation8 + $0x228] sm:$0xff]
        %v3824 = vld [vmem:[#allocation8 + $0x230] sm:$0xff]
        %v3825 = vld [vmem:[#allocation8 + $0x238] sm:$0xff]
        %v3826 = vld [vmem:[#allocation8 + $0x240] sm:$0xff]
        %v3827 = vld [vmem:[#allocation8 + $0x248] sm:$0xff]
        %v3828 = vld [vmem:[#allocation8 + $0x250] sm:$0xff]
        %v3829 = vld [vmem:[#allocation8 + $0x258] sm:$0xff]
        %v3830 = vld [vmem:[#allocation8 + $0x260] sm:$0xff]
        %v3831 = vld [vmem:[#allocation8 + $0x268] sm:$0xff]
        %v3832 = vld [vmem:[#allocation8 + $0x270] sm:$0xff]
        %v3833 = vld [vmem:[#allocation8 + $0x278] sm:$0xff]
        %v3834 = vld [vmem:[#allocation8 + $0x280] sm:$0xff]
        %v3835 = vld [vmem:[#allocation8 + $0x288] sm:$0xff]
        %v3836 = vld [vmem:[#allocation8 + $0x290] sm:$0xff]
        %v3837 = vld [vmem:[#allocation8 + $0x298] sm:$0xff]
        %v3838 = vld [vmem:[#allocation8 + $0x2a0] sm:$0xff]
        %v3839 = vld [vmem:[#allocation8 + $0x2a8] sm:$0xff]
        %v3840 = vld [vmem:[#allocation8 + $0x2b0] sm:$0xff]
        %v3841 = vld [vmem:[#allocation8 + $0x2b8] sm:$0xff]
        %v3842 = vld [vmem:[#allocation8 + $0x2c0] sm:$0xff]
        %v3843 = vld [vmem:[#allocation8 + $0x2c8] sm:$0xff]
        %v3844 = vld [vmem:[#allocation8 + $0x2d0] sm:$0xff]
        %v3845 = vld [vmem:[#allocation8 + $0x2d8] sm:$0xff]
        %v3846 = vld [vmem:[#allocation8 + $0x2e0] sm:$0xff]
        %v3847 = vld [vmem:[#allocation8 + $0x2e8] sm:$0xff]
        %v3848 = vld [vmem:[#allocation8 + $0x2f0] sm:$0xff]
        %v3849 = vld [vmem:[#allocation8 + $0x2f8] sm:$0xff]
        %v3850 = vld [vmem:[#allocation8 + $0x300] sm:$0xff]
        %v3851 = vld [vmem:[#allocation8 + $0x308] sm:$0xff]
        %v3852 = vld [vmem:[#allocation8 + $0x310] sm:$0xff]
        %v3853 = vld [vmem:[#allocation8 + $0x318] sm:$0xff]
        %v3854 = vld [vmem:[#allocation8 + $0x320] sm:$0xff]
        %v3855 = vld [vmem:[#allocation8 + $0x328] sm:$0xff]
        %v3856 = vld [vmem:[#allocation8 + $0x330] sm:$0xff]
        %v3857 = vld [vmem:[#allocation8 + $0x338] sm:$0xff]
        %v3858 = vld [vmem:[#allocation8 + $0x340] sm:$0xff]
        %v3859 = vld [vmem:[#allocation8 + $0x348] sm:$0xff]
        %v3860 = vld [vmem:[#allocation8 + $0x350] sm:$0xff]
        %v3861 = vld [vmem:[#allocation8 + $0x358] sm:$0xff]
        %v3862 = vld [vmem:[#allocation8 + $0x360] sm:$0xff]
        %v3863 = vld [vmem:[#allocation8 + $0x368] sm:$0xff]
        %v3864 = vld [vmem:[#allocation8 + $0x370] sm:$0xff]
        %v3865 = vld [vmem:[#allocation8 + $0x378] sm:$0xff]
        %v3866 = vld [vmem:[#allocation8 + $0x380] sm:$0xff]
        %v3867 = vld [vmem:[#allocation8 + $0x388] sm:$0xff]
        %v3868 = vld [vmem:[#allocation8 + $0x390] sm:$0xff]
        %v3869 = vld [vmem:[#allocation8 + $0x398] sm:$0xff]
        %v3870 = vld [vmem:[#allocation8 + $0x3a0] sm:$0xff]
        %v3871 = vld [vmem:[#allocation8 + $0x3a8] sm:$0xff]
        %v3872 = vld [vmem:[#allocation8 + $0x3b0] sm:$0xff]
        %v3873 = vld [vmem:[#allocation8 + $0x3b8] sm:$0xff]
        %v3874 = vld [vmem:[#allocation8 + $0x3c0] sm:$0xff]
        %v3875 = vld [vmem:[#allocation8 + $0x3c8] sm:$0xff]
        %v3876 = vld [vmem:[#allocation8 + $0x3d0] sm:$0xff]
        %v3877 = vld [vmem:[#allocation8 + $0x3d8] sm:$0xff]
        %v3878 = vld [vmem:[#allocation8 + $0x3e0] sm:$0xff]
        %v3879 = vld [vmem:[#allocation8 + $0x3e8] sm:$0xff]
        %v3880 = vld [vmem:[#allocation8 + $0x3f0] sm:$0xff]
        %v3881 = vld [vmem:[#allocation8 + $0x3f8] sm:$0xff]
        %v3882 = vld [vmem:[#allocation8 + $0x400] sm:$0xff]
        %v3883 = vld [vmem:[#allocation8 + $0x408] sm:$0xff]
        %v3884 = vld [vmem:[#allocation8 + $0x410] sm:$0xff]
        %v3885 = vld [vmem:[#allocation8 + $0x418] sm:$0xff]
        %v3886 = vld [vmem:[#allocation8 + $0x420] sm:$0xff]
        %v3887 = vld [vmem:[#allocation8 + $0x428] sm:$0xff]
        %v3888 = vld [vmem:[#allocation8 + $0x430] sm:$0xff]
        %v3889 = vld [vmem:[#allocation8 + $0x438] sm:$0xff]
        %v3890 = vld [vmem:[#allocation8 + $0x440] sm:$0xff]
        %v3891 = vld [vmem:[#allocation8 + $0x448] sm:$0xff]
        %v3892 = vld [vmem:[#allocation8 + $0x450] sm:$0xff]
        %v3893 = vld [vmem:[#allocation8 + $0x458] sm:$0xff]
        %v3894 = vld [vmem:[#allocation8 + $0x460] sm:$0xff]
        %v3895 = vld [vmem:[#allocation8 + $0x468] sm:$0xff]
        %v3896 = vld [vmem:[#allocation8 + $0x470] sm:$0xff]
        %v3897 = vld [vmem:[#allocation8 + $0x478] sm:$0xff]
        %v3898 = vld [vmem:[#allocation8 + $0x480] sm:$0xff]
        %v3899 = vld [vmem:[#allocation8 + $0x488] sm:$0xff]
        %v3900 = vld [vmem:[#allocation8 + $0x490] sm:$0xff]
        %v3901 = vld [vmem:[#allocation8 + $0x498] sm:$0xff]
        %v3902 = vld [vmem:[#allocation8 + $0x4a0] sm:$0xff]
        %v3903 = vld [vmem:[#allocation8 + $0x4a8] sm:$0xff]
        %v3904 = vld [vmem:[#allocation8 + $0x4b0] sm:$0xff]
        %v3905 = vld [vmem:[#allocation8 + $0x4b8] sm:$0xff]
        %v3906 = vld [vmem:[#allocation8 + $0x4c0] sm:$0xff]
        %v3907 = vld [vmem:[#allocation8 + $0x4c8] sm:$0xff]
        %v3908 = vld [vmem:[#allocation8 + $0x4d0] sm:$0xff]
        %v3909 = vld [vmem:[#allocation8 + $0x4d8] sm:$0xff]
        %v3910 = vld [vmem:[#allocation8 + $0x4e0] sm:$0xff]
        %v3911 = vld [vmem:[#allocation8 + $0x4e8] sm:$0xff]
        %v3912 = vld [vmem:[#allocation8 + $0x4f0] sm:$0xff]
        %v3913 = vld [vmem:[#allocation8 + $0x4f8] sm:$0xff]
        %v3914 = vld [vmem:[#allocation8 + $0x500] sm:$0xff]
        %v3915 = vld [vmem:[#allocation8 + $0x508] sm:$0xff]
        %v3916 = vld [vmem:[#allocation8 + $0x510] sm:$0xff]
        %v3917 = vld [vmem:[#allocation8 + $0x518] sm:$0xff]
        %v3918 = vld [vmem:[#allocation8 + $0x520] sm:$0xff]
        %v3919 = vld [vmem:[#allocation8 + $0x528] sm:$0xff]
        %v3920 = vld [vmem:[#allocation8 + $0x530] sm:$0xff]
        %v3921 = vld [vmem:[#allocation8 + $0x538] sm:$0xff]
        %v3922 = vld [vmem:[#allocation8 + $0x540] sm:$0xff]
        %v3923 = vld [vmem:[#allocation8 + $0x548] sm:$0xff]
        %v3924 = vld [vmem:[#allocation8 + $0x550] sm:$0xff]
        %v3925 = vld [vmem:[#allocation8 + $0x558] sm:$0xff]
        %v3926 = vld [vmem:[#allocation8 + $0x560] sm:$0xff]
        %v3927 = vld [vmem:[#allocation8 + $0x568] sm:$0xff]
        %v3928 = vld [vmem:[#allocation8 + $0x570] sm:$0xff]
        %v3929 = vld [vmem:[#allocation8 + $0x578] sm:$0xff]
        %v3930 = vld [vmem:[#allocation8 + $0x580] sm:$0xff]
        %v3931 = vld [vmem:[#allocation8 + $0x588] sm:$0xff]
        %v3932 = vld [vmem:[#allocation8 + $0x590] sm:$0xff]
        %v3933 = vld [vmem:[#allocation8 + $0x598] sm:$0xff]
        %v3934 = vld [vmem:[#allocation8 + $0x5a0] sm:$0xff]
        %v3935 = vld [vmem:[#allocation8 + $0x5a8] sm:$0xff]
        %v3936 = vld [vmem:[#allocation8 + $0x5b0] sm:$0xff]
        %v3937 = vld [vmem:[#allocation8 + $0x5b8] sm:$0xff]
        %v3938 = vld [vmem:[#allocation8 + $0x5c0] sm:$0xff]
        %v3939 = vld [vmem:[#allocation8 + $0x5c8] sm:$0xff]
        %v3940 = vld [vmem:[#allocation8 + $0x5d0] sm:$0xff]
        %v3941 = vld [vmem:[#allocation8 + $0x5d8] sm:$0xff]
        %v3942 = vld [vmem:[#allocation8 + $0x5e0] sm:$0xff]
        %v3943 = vld [vmem:[#allocation8 + $0x5e8] sm:$0xff]
        %v3944 = vld [vmem:[#allocation8 + $0x5f0] sm:$0xff]
        %v3945 = vld [vmem:[#allocation8 + $0x5f8] sm:$0xff]
        %v3946 = vld [vmem:[#allocation8 + $0x600] sm:$0xff]
        %v3947 = vld [vmem:[#allocation8 + $0x608] sm:$0xff]
        %v3948 = vld [vmem:[#allocation8 + $0x610] sm:$0xff]
        %v3949 = vld [vmem:[#allocation8 + $0x618] sm:$0xff]
        %v3950 = vld [vmem:[#allocation8 + $0x620] sm:$0xff]
        %v3951 = vld [vmem:[#allocation8 + $0x628] sm:$0xff]
        %v3952 = vld [vmem:[#allocation8 + $0x630] sm:$0xff]
        %v3953 = vld [vmem:[#allocation8 + $0x638] sm:$0xff]
        %v3954 = vld [vmem:[#allocation8 + $0x640] sm:$0xff]
        %v3955 = vld [vmem:[#allocation8 + $0x648] sm:$0xff]
        %v3956 = vld [vmem:[#allocation8 + $0x650] sm:$0xff]
        %v3957 = vld [vmem:[#allocation8 + $0x658] sm:$0xff]
        %v3958 = vld [vmem:[#allocation8 + $0x660] sm:$0xff]
        %v3959 = vld [vmem:[#allocation8 + $0x668] sm:$0xff]
        %v3960 = vld [vmem:[#allocation8 + $0x670] sm:$0xff]
        %v3961 = vld [vmem:[#allocation8 + $0x678] sm:$0xff]
        %v3962 = vld [vmem:[#allocation8 + $0x680] sm:$0xff]
        %v3963 = vld [vmem:[#allocation8 + $0x688] sm:$0xff]
        %v3964 = vld [vmem:[#allocation8 + $0x690] sm:$0xff]
        %v3965 = vld [vmem:[#allocation8 + $0x698] sm:$0xff]
        %v3966 = vld [vmem:[#allocation8 + $0x6a0] sm:$0xff]
        %v3967 = vld [vmem:[#allocation8 + $0x6a8] sm:$0xff]
        %v3968 = vld [vmem:[#allocation8 + $0x6b0] sm:$0xff]
        %v3969 = vld [vmem:[#allocation8 + $0x6b8] sm:$0xff]
        %v3970 = vld [vmem:[#allocation8 + $0x6c0] sm:$0xff]
        %v3971 = vld [vmem:[#allocation8 + $0x6c8] sm:$0xff]
        %v3972 = vld [vmem:[#allocation8 + $0x6d0] sm:$0xff]
        %v3973 = vld [vmem:[#allocation8 + $0x6d8] sm:$0xff]
        %v3974 = vld [vmem:[#allocation8 + $0x6e0] sm:$0xff]
        %v3975 = vld [vmem:[#allocation8 + $0x6e8] sm:$0xff]
        %v3976 = vld [vmem:[#allocation8 + $0x6f0] sm:$0xff]
        %v3977 = vld [vmem:[#allocation8 + $0x6f8] sm:$0xff]
        %v3978 = vld [vmem:[#allocation8 + $0x700] sm:$0xff]
        %v3979 = vld [vmem:[#allocation8 + $0x708] sm:$0xff]
        %v3980 = vld [vmem:[#allocation8 + $0x710] sm:$0xff]
        %v3981 = vld [vmem:[#allocation8 + $0x718] sm:$0xff]
        %v3982 = vld [vmem:[#allocation8 + $0x720] sm:$0xff]
        %v3983 = vld [vmem:[#allocation8 + $0x728] sm:$0xff]
        %v3984 = vld [vmem:[#allocation8 + $0x730] sm:$0xff]
        %v3985 = vld [vmem:[#allocation8 + $0x738] sm:$0xff]
        %v3986 = vld [vmem:[#allocation8 + $0x740] sm:$0xff]
        %v3987 = vld [vmem:[#allocation8 + $0x748] sm:$0xff]
        %v3988 = vld [vmem:[#allocation8 + $0x750] sm:$0xff]
        %v3989 = vld [vmem:[#allocation8 + $0x758] sm:$0xff]
        %v3990 = vld [vmem:[#allocation8 + $0x760] sm:$0xff]
        %v3991 = vld [vmem:[#allocation8 + $0x768] sm:$0xff]
        %v3992 = vld [vmem:[#allocation8 + $0x770] sm:$0xff]
        %v3993 = vld [vmem:[#allocation8 + $0x778] sm:$0xff]
        %v3994 = vld [vmem:[#allocation8 + $0x780] sm:$0xff]
        %v3995 = vld [vmem:[#allocation8 + $0x788] sm:$0xff]
        %v3996 = vld [vmem:[#allocation8 + $0x790] sm:$0xff]
        %v3997 = vld [vmem:[#allocation8 + $0x798] sm:$0xff]
        %v3998 = vld [vmem:[#allocation8 + $0x7a0] sm:$0xff]
        %v3999 = vld [vmem:[#allocation8 + $0x7a8] sm:$0xff]
        %v4000 = vld [vmem:[#allocation8 + $0x7b0] sm:$0xff]
        %v4001 = vld [vmem:[#allocation8 + $0x7b8] sm:$0xff]
        %v4002 = vld [vmem:[#allocation8 + $0x7c0] sm:$0xff]
        %v4003 = vld [vmem:[#allocation8 + $0x7c8] sm:$0xff]
        %v4004 = vld [vmem:[#allocation8 + $0x7d0] sm:$0xff]
        %v4005 = vld [vmem:[#allocation8 + $0x7d8] sm:$0xff]
        %v4006 = vld [vmem:[#allocation8 + $0x7e0] sm:$0xff]
        %v4007 = vld [vmem:[#allocation8 + $0x7e8] sm:$0xff]
        %v4008 = vld [vmem:[#allocation8 + $0x7f0] sm:$0xff]
        %v4009 = vld [vmem:[#allocation8 + $0x7f8] sm:$0xff]
        %v4010 = vld [vmem:[%s8] sm:$0xf]
        %v4012 = vlaneseq
        %v4013 = vshrl.u32 %v4012, 7
        %v4014 = vsub.s32 0, %v4013
        %v4015 = vrot.slane %v4010, %v4014
        %v4016 = vlaneseq
        %v4017 = vshrl.u32 %v4016, 7
        %v4018 = vsub.s32 1, %v4017
        %v4019 = vrot.slane %v4010, %v4018
        %v4020 = vlaneseq
        %v4021 = vshrl.u32 %v4020, 7
        %v4022 = vsub.s32 2, %v4021
        %v4023 = vrot.slane %v4010, %v4022
        %v4024 = vlaneseq
        %v4025 = vshrl.u32 %v4024, 7
        %v4026 = vsub.s32 3, %v4025
        %v4027 = vrot.slane %v4010, %v4026
        %v4288 = vunpack.c.l.b16 %v3754
        %v4289 = vunpack.c.h.b16 %v3754
        %v4290 = vunpack.c.l.b16 %v3755
        %v4291 = vunpack.c.h.b16 %v3755
        %v4292 = vunpack.c.l.b16 %v3756
        %v4293 = vunpack.c.h.b16 %v3756
        %v4294 = vunpack.c.l.b16 %v3757
        %v4295 = vunpack.c.h.b16 %v3757
        %v4296 = vunpack.c.l.b16 %v3758
        %v4297 = vunpack.c.h.b16 %v3758
        %v4298 = vunpack.c.l.b16 %v3759
        %v4299 = vunpack.c.h.b16 %v3759
        %v4300 = vunpack.c.l.b16 %v3760
        %v4301 = vunpack.c.h.b16 %v3760
        %v4302 = vunpack.c.l.b16 %v3761
        %v4303 = vunpack.c.h.b16 %v3761
        %v4304 = vunpack.c.l.b16 %v3762
        %v4305 = vunpack.c.h.b16 %v3762
        %v4306 = vunpack.c.l.b16 %v3763
        %v4307 = vunpack.c.h.b16 %v3763
        %v4308 = vunpack.c.l.b16 %v3764
        %v4309 = vunpack.c.h.b16 %v3764
        %v4310 = vunpack.c.l.b16 %v3765
        %v4311 = vunpack.c.h.b16 %v3765
        %v4312 = vunpack.c.l.b16 %v3766
        %v4313 = vunpack.c.h.b16 %v3766
        %v4314 = vunpack.c.l.b16 %v3767
        %v4315 = vunpack.c.h.b16 %v3767
        %v4316 = vunpack.c.l.b16 %v3768
        %v4317 = vunpack.c.h.b16 %v3768
        %v4318 = vunpack.c.l.b16 %v3769
        %v4319 = vunpack.c.h.b16 %v3769
        %v4320 = vunpack.c.l.b16 %v3770
        %v4321 = vunpack.c.h.b16 %v3770
        %v4322 = vunpack.c.l.b16 %v3771
        %v4323 = vunpack.c.h.b16 %v3771
        %v4324 = vunpack.c.l.b16 %v3772
        %v4325 = vunpack.c.h.b16 %v3772
        %v4326 = vunpack.c.l.b16 %v3773
        %v4327 = vunpack.c.h.b16 %v3773
        %v4328 = vunpack.c.l.b16 %v3774
        %v4329 = vunpack.c.h.b16 %v3774
        %v4330 = vunpack.c.l.b16 %v3775
        %v4331 = vunpack.c.h.b16 %v3775
        %v4332 = vunpack.c.l.b16 %v3776
        %v4333 = vunpack.c.h.b16 %v3776
        %v4334 = vunpack.c.l.b16 %v3777
        %v4335 = vunpack.c.h.b16 %v3777
        %v4336 = vunpack.c.l.b16 %v3778
        %v4337 = vunpack.c.h.b16 %v3778
        %v4338 = vunpack.c.l.b16 %v3779
        %v4339 = vunpack.c.h.b16 %v3779
        %v4340 = vunpack.c.l.b16 %v3780
        %v4341 = vunpack.c.h.b16 %v3780
        %v4342 = vunpack.c.l.b16 %v3781
        %v4343 = vunpack.c.h.b16 %v3781
        %v4344 = vunpack.c.l.b16 %v3782
        %v4345 = vunpack.c.h.b16 %v3782
        %v4346 = vunpack.c.l.b16 %v3783
        %v4347 = vunpack.c.h.b16 %v3783
        %v4348 = vunpack.c.l.b16 %v3784
        %v4349 = vunpack.c.h.b16 %v3784
        %v4350 = vunpack.c.l.b16 %v3785
        %v4351 = vunpack.c.h.b16 %v3785
        %v4352 = vunpack.c.l.b16 %v3786
        %v4353 = vunpack.c.h.b16 %v3786
        %v4354 = vunpack.c.l.b16 %v3787
        %v4355 = vunpack.c.h.b16 %v3787
        %v4356 = vunpack.c.l.b16 %v3788
        %v4357 = vunpack.c.h.b16 %v3788
        %v4358 = vunpack.c.l.b16 %v3789
        %v4359 = vunpack.c.h.b16 %v3789
        %v4360 = vunpack.c.l.b16 %v3790
        %v4361 = vunpack.c.h.b16 %v3790
        %v4362 = vunpack.c.l.b16 %v3791
        %v4363 = vunpack.c.h.b16 %v3791
        %v4364 = vunpack.c.l.b16 %v3792
        %v4365 = vunpack.c.h.b16 %v3792
        %v4366 = vunpack.c.l.b16 %v3793
        %v4367 = vunpack.c.h.b16 %v3793
        %v4368 = vunpack.c.l.b16 %v3794
        %v4369 = vunpack.c.h.b16 %v3794
        %v4370 = vunpack.c.l.b16 %v3795
        %v4371 = vunpack.c.h.b16 %v3795
        %v4372 = vunpack.c.l.b16 %v3796
        %v4373 = vunpack.c.h.b16 %v3796
        %v4374 = vunpack.c.l.b16 %v3797
        %v4375 = vunpack.c.h.b16 %v3797
        %v4376 = vunpack.c.l.b16 %v3798
        %v4377 = vunpack.c.h.b16 %v3798
        %v4378 = vunpack.c.l.b16 %v3799
        %v4379 = vunpack.c.h.b16 %v3799
        %v4380 = vunpack.c.l.b16 %v3800
        %v4381 = vunpack.c.h.b16 %v3800
        %v4382 = vunpack.c.l.b16 %v3801
        %v4383 = vunpack.c.h.b16 %v3801
        %v4384 = vunpack.c.l.b16 %v3802
        %v4385 = vunpack.c.h.b16 %v3802
        %v4386 = vunpack.c.l.b16 %v3803
        %v4387 = vunpack.c.h.b16 %v3803
        %v4388 = vunpack.c.l.b16 %v3804
        %v4389 = vunpack.c.h.b16 %v3804
        %v4390 = vunpack.c.l.b16 %v3805
        %v4391 = vunpack.c.h.b16 %v3805
        %v4392 = vunpack.c.l.b16 %v3806
        %v4393 = vunpack.c.h.b16 %v3806
        %v4394 = vunpack.c.l.b16 %v3807
        %v4395 = vunpack.c.h.b16 %v3807
        %v4396 = vunpack.c.l.b16 %v3808
        %v4397 = vunpack.c.h.b16 %v3808
        %v4398 = vunpack.c.l.b16 %v3809
        %v4399 = vunpack.c.h.b16 %v3809
        %v4400 = vunpack.c.l.b16 %v3810
        %v4401 = vunpack.c.h.b16 %v3810
        %v4402 = vunpack.c.l.b16 %v3811
        %v4403 = vunpack.c.h.b16 %v3811
        %v4404 = vunpack.c.l.b16 %v3812
        %v4405 = vunpack.c.h.b16 %v3812
        %v4406 = vunpack.c.l.b16 %v3813
        %v4407 = vunpack.c.h.b16 %v3813
        %v4408 = vunpack.c.l.b16 %v3814
        %v4409 = vunpack.c.h.b16 %v3814
        %v4410 = vunpack.c.l.b16 %v3815
        %v4411 = vunpack.c.h.b16 %v3815
        %v4412 = vunpack.c.l.b16 %v3816
        %v4413 = vunpack.c.h.b16 %v3816
        %v4414 = vunpack.c.l.b16 %v3817
        %v4415 = vunpack.c.h.b16 %v3817
        %v4416 = vunpack.c.l.b16 %v3818
        %v4417 = vunpack.c.h.b16 %v3818
        %v4418 = vunpack.c.l.b16 %v3819
        %v4419 = vunpack.c.h.b16 %v3819
        %v4420 = vunpack.c.l.b16 %v3820
        %v4421 = vunpack.c.h.b16 %v3820
        %v4422 = vunpack.c.l.b16 %v3821
        %v4423 = vunpack.c.h.b16 %v3821
        %v4424 = vunpack.c.l.b16 %v3822
        %v4425 = vunpack.c.h.b16 %v3822
        %v4426 = vunpack.c.l.b16 %v3823
        %v4427 = vunpack.c.h.b16 %v3823
        %v4428 = vunpack.c.l.b16 %v3824
        %v4429 = vunpack.c.h.b16 %v3824
        %v4430 = vunpack.c.l.b16 %v3825
        %v4431 = vunpack.c.h.b16 %v3825
        %v4432 = vunpack.c.l.b16 %v3826
        %v4433 = vunpack.c.h.b16 %v3826
        %v4434 = vunpack.c.l.b16 %v3827
        %v4435 = vunpack.c.h.b16 %v3827
        %v4436 = vunpack.c.l.b16 %v3828
        %v4437 = vunpack.c.h.b16 %v3828
        %v4438 = vunpack.c.l.b16 %v3829
        %v4439 = vunpack.c.h.b16 %v3829
        %v4440 = vunpack.c.l.b16 %v3830
        %v4441 = vunpack.c.h.b16 %v3830
        %v4442 = vunpack.c.l.b16 %v3831
        %v4443 = vunpack.c.h.b16 %v3831
        %v4444 = vunpack.c.l.b16 %v3832
        %v4445 = vunpack.c.h.b16 %v3832
        %v4446 = vunpack.c.l.b16 %v3833
        %v4447 = vunpack.c.h.b16 %v3833
        %v4448 = vunpack.c.l.b16 %v3834
        %v4449 = vunpack.c.h.b16 %v3834
        %v4450 = vunpack.c.l.b16 %v3835
        %v4451 = vunpack.c.h.b16 %v3835
        %v4452 = vunpack.c.l.b16 %v3836
        %v4453 = vunpack.c.h.b16 %v3836
        %v4454 = vunpack.c.l.b16 %v3837
        %v4455 = vunpack.c.h.b16 %v3837
        %v4456 = vunpack.c.l.b16 %v3838
        %v4457 = vunpack.c.h.b16 %v3838
        %v4458 = vunpack.c.l.b16 %v3839
        %v4459 = vunpack.c.h.b16 %v3839
        %v4460 = vunpack.c.l.b16 %v3840
        %v4461 = vunpack.c.h.b16 %v3840
        %v4462 = vunpack.c.l.b16 %v3841
        %v4463 = vunpack.c.h.b16 %v3841
        %v4464 = vunpack.c.l.b16 %v3842
        %v4465 = vunpack.c.h.b16 %v3842
        %v4466 = vunpack.c.l.b16 %v3843
        %v4467 = vunpack.c.h.b16 %v3843
        %v4468 = vunpack.c.l.b16 %v3844
        %v4469 = vunpack.c.h.b16 %v3844
        %v4470 = vunpack.c.l.b16 %v3845
        %v4471 = vunpack.c.h.b16 %v3845
        %v4472 = vunpack.c.l.b16 %v3846
        %v4473 = vunpack.c.h.b16 %v3846
        %v4474 = vunpack.c.l.b16 %v3847
        %v4475 = vunpack.c.h.b16 %v3847
        %v4476 = vunpack.c.l.b16 %v3848
        %v4477 = vunpack.c.h.b16 %v3848
        %v4478 = vunpack.c.l.b16 %v3849
        %v4479 = vunpack.c.h.b16 %v3849
        %v4480 = vunpack.c.l.b16 %v3850
        %v4481 = vunpack.c.h.b16 %v3850
        %v4482 = vunpack.c.l.b16 %v3851
        %v4483 = vunpack.c.h.b16 %v3851
        %v4484 = vunpack.c.l.b16 %v3852
        %v4485 = vunpack.c.h.b16 %v3852
        %v4486 = vunpack.c.l.b16 %v3853
        %v4487 = vunpack.c.h.b16 %v3853
        %v4488 = vunpack.c.l.b16 %v3854
        %v4489 = vunpack.c.h.b16 %v3854
        %v4490 = vunpack.c.l.b16 %v3855
        %v4491 = vunpack.c.h.b16 %v3855
        %v4492 = vunpack.c.l.b16 %v3856
        %v4493 = vunpack.c.h.b16 %v3856
        %v4494 = vunpack.c.l.b16 %v3857
        %v4495 = vunpack.c.h.b16 %v3857
        %v4496 = vunpack.c.l.b16 %v3858
        %v4497 = vunpack.c.h.b16 %v3858
        %v4498 = vunpack.c.l.b16 %v3859
        %v4499 = vunpack.c.h.b16 %v3859
        %v4500 = vunpack.c.l.b16 %v3860
        %v4501 = vunpack.c.h.b16 %v3860
        %v4502 = vunpack.c.l.b16 %v3861
        %v4503 = vunpack.c.h.b16 %v3861
        %v4504 = vunpack.c.l.b16 %v3862
        %v4505 = vunpack.c.h.b16 %v3862
        %v4506 = vunpack.c.l.b16 %v3863
        %v4507 = vunpack.c.h.b16 %v3863
        %v4508 = vunpack.c.l.b16 %v3864
        %v4509 = vunpack.c.h.b16 %v3864
        %v4510 = vunpack.c.l.b16 %v3865
        %v4511 = vunpack.c.h.b16 %v3865
        %v4512 = vunpack.c.l.b16 %v3866
        %v4513 = vunpack.c.h.b16 %v3866
        %v4514 = vunpack.c.l.b16 %v3867
        %v4515 = vunpack.c.h.b16 %v3867
        %v4516 = vunpack.c.l.b16 %v3868
        %v4517 = vunpack.c.h.b16 %v3868
        %v4518 = vunpack.c.l.b16 %v3869
        %v4519 = vunpack.c.h.b16 %v3869
        %v4520 = vunpack.c.l.b16 %v3870
        %v4521 = vunpack.c.h.b16 %v3870
        %v4522 = vunpack.c.l.b16 %v3871
        %v4523 = vunpack.c.h.b16 %v3871
        %v4524 = vunpack.c.l.b16 %v3872
        %v4525 = vunpack.c.h.b16 %v3872
        %v4526 = vunpack.c.l.b16 %v3873
        %v4527 = vunpack.c.h.b16 %v3873
        %v4528 = vunpack.c.l.b16 %v3874
        %v4529 = vunpack.c.h.b16 %v3874
        %v4530 = vunpack.c.l.b16 %v3875
        %v4531 = vunpack.c.h.b16 %v3875
        %v4532 = vunpack.c.l.b16 %v3876
        %v4533 = vunpack.c.h.b16 %v3876
        %v4534 = vunpack.c.l.b16 %v3877
        %v4535 = vunpack.c.h.b16 %v3877
        %v4536 = vunpack.c.l.b16 %v3878
        %v4537 = vunpack.c.h.b16 %v3878
        %v4538 = vunpack.c.l.b16 %v3879
        %v4539 = vunpack.c.h.b16 %v3879
        %v4540 = vunpack.c.l.b16 %v3880
        %v4541 = vunpack.c.h.b16 %v3880
        %v4542 = vunpack.c.l.b16 %v3881
        %v4543 = vunpack.c.h.b16 %v3881
        %v4544 = vunpack.c.l.b16 %v3882
        %v4545 = vunpack.c.h.b16 %v3882
        %v4546 = vunpack.c.l.b16 %v3883
        %v4547 = vunpack.c.h.b16 %v3883
        %v4548 = vunpack.c.l.b16 %v3884
        %v4549 = vunpack.c.h.b16 %v3884
        %v4550 = vunpack.c.l.b16 %v3885
        %v4551 = vunpack.c.h.b16 %v3885
        %v4552 = vunpack.c.l.b16 %v3886
        %v4553 = vunpack.c.h.b16 %v3886
        %v4554 = vunpack.c.l.b16 %v3887
        %v4555 = vunpack.c.h.b16 %v3887
        %v4556 = vunpack.c.l.b16 %v3888
        %v4557 = vunpack.c.h.b16 %v3888
        %v4558 = vunpack.c.l.b16 %v3889
        %v4559 = vunpack.c.h.b16 %v3889
        %v4560 = vunpack.c.l.b16 %v3890
        %v4561 = vunpack.c.h.b16 %v3890
        %v4562 = vunpack.c.l.b16 %v3891
        %v4563 = vunpack.c.h.b16 %v3891
        %v4564 = vunpack.c.l.b16 %v3892
        %v4565 = vunpack.c.h.b16 %v3892
        %v4566 = vunpack.c.l.b16 %v3893
        %v4567 = vunpack.c.h.b16 %v3893
        %v4568 = vunpack.c.l.b16 %v3894
        %v4569 = vunpack.c.h.b16 %v3894
        %v4570 = vunpack.c.l.b16 %v3895
        %v4571 = vunpack.c.h.b16 %v3895
        %v4572 = vunpack.c.l.b16 %v3896
        %v4573 = vunpack.c.h.b16 %v3896
        %v4574 = vunpack.c.l.b16 %v3897
        %v4575 = vunpack.c.h.b16 %v3897
        %v4576 = vunpack.c.l.b16 %v3898
        %v4577 = vunpack.c.h.b16 %v3898
        %v4578 = vunpack.c.l.b16 %v3899
        %v4579 = vunpack.c.h.b16 %v3899
        %v4580 = vunpack.c.l.b16 %v3900
        %v4581 = vunpack.c.h.b16 %v3900
        %v4582 = vunpack.c.l.b16 %v3901
        %v4583 = vunpack.c.h.b16 %v3901
        %v4584 = vunpack.c.l.b16 %v3902
        %v4585 = vunpack.c.h.b16 %v3902
        %v4586 = vunpack.c.l.b16 %v3903
        %v4587 = vunpack.c.h.b16 %v3903
        %v4588 = vunpack.c.l.b16 %v3904
        %v4589 = vunpack.c.h.b16 %v3904
        %v4590 = vunpack.c.l.b16 %v3905
        %v4591 = vunpack.c.h.b16 %v3905
        %v4592 = vunpack.c.l.b16 %v3906
        %v4593 = vunpack.c.h.b16 %v3906
        %v4594 = vunpack.c.l.b16 %v3907
        %v4595 = vunpack.c.h.b16 %v3907
        %v4596 = vunpack.c.l.b16 %v3908
        %v4597 = vunpack.c.h.b16 %v3908
        %v4598 = vunpack.c.l.b16 %v3909
        %v4599 = vunpack.c.h.b16 %v3909
        %v4600 = vunpack.c.l.b16 %v3910
        %v4601 = vunpack.c.h.b16 %v3910
        %v4602 = vunpack.c.l.b16 %v3911
        %v4603 = vunpack.c.h.b16 %v3911
        %v4604 = vunpack.c.l.b16 %v3912
        %v4605 = vunpack.c.h.b16 %v3912
        %v4606 = vunpack.c.l.b16 %v3913
        %v4607 = vunpack.c.h.b16 %v3913
        %v4608 = vunpack.c.l.b16 %v3914
        %v4609 = vunpack.c.h.b16 %v3914
        %v4610 = vunpack.c.l.b16 %v3915
        %v4611 = vunpack.c.h.b16 %v3915
        %v4612 = vunpack.c.l.b16 %v3916
        %v4613 = vunpack.c.h.b16 %v3916
        %v4614 = vunpack.c.l.b16 %v3917
        %v4615 = vunpack.c.h.b16 %v3917
        %v4616 = vunpack.c.l.b16 %v3918
        %v4617 = vunpack.c.h.b16 %v3918
        %v4618 = vunpack.c.l.b16 %v3919
        %v4619 = vunpack.c.h.b16 %v3919
        %v4620 = vunpack.c.l.b16 %v3920
        %v4621 = vunpack.c.h.b16 %v3920
        %v4622 = vunpack.c.l.b16 %v3921
        %v4623 = vunpack.c.h.b16 %v3921
        %v4624 = vunpack.c.l.b16 %v3922
        %v4625 = vunpack.c.h.b16 %v3922
        %v4626 = vunpack.c.l.b16 %v3923
        %v4627 = vunpack.c.h.b16 %v3923
        %v4628 = vunpack.c.l.b16 %v3924
        %v4629 = vunpack.c.h.b16 %v3924
        %v4630 = vunpack.c.l.b16 %v3925
        %v4631 = vunpack.c.h.b16 %v3925
        %v4632 = vunpack.c.l.b16 %v3926
        %v4633 = vunpack.c.h.b16 %v3926
        %v4634 = vunpack.c.l.b16 %v3927
        %v4635 = vunpack.c.h.b16 %v3927
        %v4636 = vunpack.c.l.b16 %v3928
        %v4637 = vunpack.c.h.b16 %v3928
        %v4638 = vunpack.c.l.b16 %v3929
        %v4639 = vunpack.c.h.b16 %v3929
        %v4640 = vunpack.c.l.b16 %v3930
        %v4641 = vunpack.c.h.b16 %v3930
        %v4642 = vunpack.c.l.b16 %v3931
        %v4643 = vunpack.c.h.b16 %v3931
        %v4644 = vunpack.c.l.b16 %v3932
        %v4645 = vunpack.c.h.b16 %v3932
        %v4646 = vunpack.c.l.b16 %v3933
        %v4647 = vunpack.c.h.b16 %v3933
        %v4648 = vunpack.c.l.b16 %v3934
        %v4649 = vunpack.c.h.b16 %v3934
        %v4650 = vunpack.c.l.b16 %v3935
        %v4651 = vunpack.c.h.b16 %v3935
        %v4652 = vunpack.c.l.b16 %v3936
        %v4653 = vunpack.c.h.b16 %v3936
        %v4654 = vunpack.c.l.b16 %v3937
        %v4655 = vunpack.c.h.b16 %v3937
        %v4656 = vunpack.c.l.b16 %v3938
        %v4657 = vunpack.c.h.b16 %v3938
        %v4658 = vunpack.c.l.b16 %v3939
        %v4659 = vunpack.c.h.b16 %v3939
        %v4660 = vunpack.c.l.b16 %v3940
        %v4661 = vunpack.c.h.b16 %v3940
        %v4662 = vunpack.c.l.b16 %v3941
        %v4663 = vunpack.c.h.b16 %v3941
        %v4664 = vunpack.c.l.b16 %v3942
        %v4665 = vunpack.c.h.b16 %v3942
        %v4666 = vunpack.c.l.b16 %v3943
        %v4667 = vunpack.c.h.b16 %v3943
        %v4668 = vunpack.c.l.b16 %v3944
        %v4669 = vunpack.c.h.b16 %v3944
        %v4670 = vunpack.c.l.b16 %v3945
        %v4671 = vunpack.c.h.b16 %v3945
        %v4672 = vunpack.c.l.b16 %v3946
        %v4673 = vunpack.c.h.b16 %v3946
        %v4674 = vunpack.c.l.b16 %v3947
        %v4675 = vunpack.c.h.b16 %v3947
        %v4676 = vunpack.c.l.b16 %v3948
        %v4677 = vunpack.c.h.b16 %v3948
        %v4678 = vunpack.c.l.b16 %v3949
        %v4679 = vunpack.c.h.b16 %v3949
        %v4680 = vunpack.c.l.b16 %v3950
        %v4681 = vunpack.c.h.b16 %v3950
        %v4682 = vunpack.c.l.b16 %v3951
        %v4683 = vunpack.c.h.b16 %v3951
        %v4684 = vunpack.c.l.b16 %v3952
        %v4685 = vunpack.c.h.b16 %v3952
        %v4686 = vunpack.c.l.b16 %v3953
        %v4687 = vunpack.c.h.b16 %v3953
        %v4688 = vunpack.c.l.b16 %v3954
        %v4689 = vunpack.c.h.b16 %v3954
        %v4690 = vunpack.c.l.b16 %v3955
        %v4691 = vunpack.c.h.b16 %v3955
        %v4692 = vunpack.c.l.b16 %v3956
        %v4693 = vunpack.c.h.b16 %v3956
        %v4694 = vunpack.c.l.b16 %v3957
        %v4695 = vunpack.c.h.b16 %v3957
        %v4696 = vunpack.c.l.b16 %v3958
        %v4697 = vunpack.c.h.b16 %v3958
        %v4698 = vunpack.c.l.b16 %v3959
        %v4699 = vunpack.c.h.b16 %v3959
        %v4700 = vunpack.c.l.b16 %v3960
        %v4701 = vunpack.c.h.b16 %v3960
        %v4702 = vunpack.c.l.b16 %v3961
        %v4703 = vunpack.c.h.b16 %v3961
        %v4704 = vunpack.c.l.b16 %v3962
        %v4705 = vunpack.c.h.b16 %v3962
        %v4706 = vunpack.c.l.b16 %v3963
        %v4707 = vunpack.c.h.b16 %v3963
        %v4708 = vunpack.c.l.b16 %v3964
        %v4709 = vunpack.c.h.b16 %v3964
        %v4710 = vunpack.c.l.b16 %v3965
        %v4711 = vunpack.c.h.b16 %v3965
        %v4712 = vunpack.c.l.b16 %v3966
        %v4713 = vunpack.c.h.b16 %v3966
        %v4714 = vunpack.c.l.b16 %v3967
        %v4715 = vunpack.c.h.b16 %v3967
        %v4716 = vunpack.c.l.b16 %v3968
        %v4717 = vunpack.c.h.b16 %v3968
        %v4718 = vunpack.c.l.b16 %v3969
        %v4719 = vunpack.c.h.b16 %v3969
        %v4720 = vunpack.c.l.b16 %v3970
        %v4721 = vunpack.c.h.b16 %v3970
        %v4722 = vunpack.c.l.b16 %v3971
        %v4723 = vunpack.c.h.b16 %v3971
        %v4724 = vunpack.c.l.b16 %v3972
        %v4725 = vunpack.c.h.b16 %v3972
        %v4726 = vunpack.c.l.b16 %v3973
        %v4727 = vunpack.c.h.b16 %v3973
        %v4728 = vunpack.c.l.b16 %v3974
        %v4729 = vunpack.c.h.b16 %v3974
        %v4730 = vunpack.c.l.b16 %v3975
        %v4731 = vunpack.c.h.b16 %v3975
        %v4732 = vunpack.c.l.b16 %v3976
        %v4733 = vunpack.c.h.b16 %v3976
        %v4734 = vunpack.c.l.b16 %v3977
        %v4735 = vunpack.c.h.b16 %v3977
        %v4736 = vunpack.c.l.b16 %v3978
        %v4737 = vunpack.c.h.b16 %v3978
        %v4738 = vunpack.c.l.b16 %v3979
        %v4739 = vunpack.c.h.b16 %v3979
        %v4740 = vunpack.c.l.b16 %v3980
        %v4741 = vunpack.c.h.b16 %v3980
        %v4742 = vunpack.c.l.b16 %v3981
        %v4743 = vunpack.c.h.b16 %v3981
        %v4744 = vunpack.c.l.b16 %v3982
        %v4745 = vunpack.c.h.b16 %v3982
        %v4746 = vunpack.c.l.b16 %v3983
        %v4747 = vunpack.c.h.b16 %v3983
        %v4748 = vunpack.c.l.b16 %v3984
        %v4749 = vunpack.c.h.b16 %v3984
        %v4750 = vunpack.c.l.b16 %v3985
        %v4751 = vunpack.c.h.b16 %v3985
        %v4752 = vunpack.c.l.b16 %v3986
        %v4753 = vunpack.c.h.b16 %v3986
        %v4754 = vunpack.c.l.b16 %v3987
        %v4755 = vunpack.c.h.b16 %v3987
        %v4756 = vunpack.c.l.b16 %v3988
        %v4757 = vunpack.c.h.b16 %v3988
        %v4758 = vunpack.c.l.b16 %v3989
        %v4759 = vunpack.c.h.b16 %v3989
        %v4760 = vunpack.c.l.b16 %v3990
        %v4761 = vunpack.c.h.b16 %v3990
        %v4762 = vunpack.c.l.b16 %v3991
        %v4763 = vunpack.c.h.b16 %v3991
        %v4764 = vunpack.c.l.b16 %v3992
        %v4765 = vunpack.c.h.b16 %v3992
        %v4766 = vunpack.c.l.b16 %v3993
        %v4767 = vunpack.c.h.b16 %v3993
        %v4768 = vunpack.c.l.b16 %v3994
        %v4769 = vunpack.c.h.b16 %v3994
        %v4770 = vunpack.c.l.b16 %v3995
        %v4771 = vunpack.c.h.b16 %v3995
        %v4772 = vunpack.c.l.b16 %v3996
        %v4773 = vunpack.c.h.b16 %v3996
        %v4774 = vunpack.c.l.b16 %v3997
        %v4775 = vunpack.c.h.b16 %v3997
        %v4776 = vunpack.c.l.b16 %v3998
        %v4777 = vunpack.c.h.b16 %v3998
        %v4778 = vunpack.c.l.b16 %v3999
        %v4779 = vunpack.c.h.b16 %v3999
        %v4780 = vunpack.c.l.b16 %v4000
        %v4781 = vunpack.c.h.b16 %v4000
        %v4782 = vunpack.c.l.b16 %v4001
        %v4783 = vunpack.c.h.b16 %v4001
        %v4784 = vunpack.c.l.b16 %v4002
        %v4785 = vunpack.c.h.b16 %v4002
        %v4786 = vunpack.c.l.b16 %v4003
        %v4787 = vunpack.c.h.b16 %v4003
        %v4788 = vunpack.c.l.b16 %v4004
        %v4789 = vunpack.c.h.b16 %v4004
        %v4790 = vunpack.c.l.b16 %v4005
        %v4791 = vunpack.c.h.b16 %v4005
        %v4792 = vunpack.c.l.b16 %v4006
        %v4793 = vunpack.c.h.b16 %v4006
        %v4794 = vunpack.c.l.b16 %v4007
        %v4795 = vunpack.c.h.b16 %v4007
        %v4796 = vunpack.c.l.b16 %v4008
        %v4797 = vunpack.c.h.b16 %v4008
        %v4798 = vunpack.c.l.b16 %v4009
        %v4799 = vunpack.c.h.b16 %v4009
        %v4800 = vpack.c.b16 %v4292, %v4288
        %v4801 = vpack.c.b16 %v4293, %v4289
        %v4802 = vpack.c.b16 %v4294, %v4290
        %v4803 = vpack.c.b16 %v4295, %v4291
        %v4804 = vpack.c.b16 %v4300, %v4296
        %v4805 = vpack.c.b16 %v4301, %v4297
        %v4806 = vpack.c.b16 %v4302, %v4298
        %v4807 = vpack.c.b16 %v4303, %v4299
        %v4808 = vpack.c.b16 %v4308, %v4304
        %v4809 = vpack.c.b16 %v4309, %v4305
        %v4810 = vpack.c.b16 %v4310, %v4306
        %v4811 = vpack.c.b16 %v4311, %v4307
        %v4812 = vpack.c.b16 %v4316, %v4312
        %v4813 = vpack.c.b16 %v4317, %v4313
        %v4814 = vpack.c.b16 %v4318, %v4314
        %v4815 = vpack.c.b16 %v4319, %v4315
        %v4816 = vpack.c.b16 %v4324, %v4320
        %v4817 = vpack.c.b16 %v4325, %v4321
        %v4818 = vpack.c.b16 %v4326, %v4322
        %v4819 = vpack.c.b16 %v4327, %v4323
        %v4820 = vpack.c.b16 %v4332, %v4328
        %v4821 = vpack.c.b16 %v4333, %v4329
        %v4822 = vpack.c.b16 %v4334, %v4330
        %v4823 = vpack.c.b16 %v4335, %v4331
        %v4824 = vpack.c.b16 %v4340, %v4336
        %v4825 = vpack.c.b16 %v4341, %v4337
        %v4826 = vpack.c.b16 %v4342, %v4338
        %v4827 = vpack.c.b16 %v4343, %v4339
        %v4828 = vpack.c.b16 %v4348, %v4344
        %v4829 = vpack.c.b16 %v4349, %v4345
        %v4830 = vpack.c.b16 %v4350, %v4346
        %v4831 = vpack.c.b16 %v4351, %v4347
        %v4832 = vpack.c.b16 %v4356, %v4352
        %v4833 = vpack.c.b16 %v4357, %v4353
        %v4834 = vpack.c.b16 %v4358, %v4354
        %v4835 = vpack.c.b16 %v4359, %v4355
        %v4836 = vpack.c.b16 %v4364, %v4360
        %v4837 = vpack.c.b16 %v4365, %v4361
        %v4838 = vpack.c.b16 %v4366, %v4362
        %v4839 = vpack.c.b16 %v4367, %v4363
        %v4840 = vpack.c.b16 %v4372, %v4368
        %v4841 = vpack.c.b16 %v4373, %v4369
        %v4842 = vpack.c.b16 %v4374, %v4370
        %v4843 = vpack.c.b16 %v4375, %v4371
        %v4844 = vpack.c.b16 %v4380, %v4376
        %v4845 = vpack.c.b16 %v4381, %v4377
        %v4846 = vpack.c.b16 %v4382, %v4378
        %v4847 = vpack.c.b16 %v4383, %v4379
        %v4848 = vpack.c.b16 %v4388, %v4384
        %v4849 = vpack.c.b16 %v4389, %v4385
        %v4850 = vpack.c.b16 %v4390, %v4386
        %v4851 = vpack.c.b16 %v4391, %v4387
        %v4852 = vpack.c.b16 %v4396, %v4392
        %v4853 = vpack.c.b16 %v4397, %v4393
        %v4854 = vpack.c.b16 %v4398, %v4394
        %v4855 = vpack.c.b16 %v4399, %v4395
        %v4856 = vpack.c.b16 %v4404, %v4400
        %v4857 = vpack.c.b16 %v4405, %v4401
        %v4858 = vpack.c.b16 %v4406, %v4402
        %v4859 = vpack.c.b16 %v4407, %v4403
        %v4860 = vpack.c.b16 %v4412, %v4408
        %v4861 = vpack.c.b16 %v4413, %v4409
        %v4862 = vpack.c.b16 %v4414, %v4410
        %v4863 = vpack.c.b16 %v4415, %v4411
        %v4864 = vpack.c.b16 %v4420, %v4416
        %v4865 = vpack.c.b16 %v4421, %v4417
        %v4866 = vpack.c.b16 %v4422, %v4418
        %v4867 = vpack.c.b16 %v4423, %v4419
        %v4868 = vpack.c.b16 %v4428, %v4424
        %v4869 = vpack.c.b16 %v4429, %v4425
        %v4870 = vpack.c.b16 %v4430, %v4426
        %v4871 = vpack.c.b16 %v4431, %v4427
        %v4872 = vpack.c.b16 %v4436, %v4432
        %v4873 = vpack.c.b16 %v4437, %v4433
        %v4874 = vpack.c.b16 %v4438, %v4434
        %v4875 = vpack.c.b16 %v4439, %v4435
        %v4876 = vpack.c.b16 %v4444, %v4440
        %v4877 = vpack.c.b16 %v4445, %v4441
        %v4878 = vpack.c.b16 %v4446, %v4442
        %v4879 = vpack.c.b16 %v4447, %v4443
        %v4880 = vpack.c.b16 %v4452, %v4448
        %v4881 = vpack.c.b16 %v4453, %v4449
        %v4882 = vpack.c.b16 %v4454, %v4450
        %v4883 = vpack.c.b16 %v4455, %v4451
        %v4884 = vpack.c.b16 %v4460, %v4456
        %v4885 = vpack.c.b16 %v4461, %v4457
        %v4886 = vpack.c.b16 %v4462, %v4458
        %v4887 = vpack.c.b16 %v4463, %v4459
        %v4888 = vpack.c.b16 %v4468, %v4464
        %v4889 = vpack.c.b16 %v4469, %v4465
        %v4890 = vpack.c.b16 %v4470, %v4466
        %v4891 = vpack.c.b16 %v4471, %v4467
        %v4892 = vpack.c.b16 %v4476, %v4472
        %v4893 = vpack.c.b16 %v4477, %v4473
        %v4894 = vpack.c.b16 %v4478, %v4474
        %v4895 = vpack.c.b16 %v4479, %v4475
        %v4896 = vpack.c.b16 %v4484, %v4480
        %v4897 = vpack.c.b16 %v4485, %v4481
        %v4898 = vpack.c.b16 %v4486, %v4482
        %v4899 = vpack.c.b16 %v4487, %v4483
        %v4900 = vpack.c.b16 %v4492, %v4488
        %v4901 = vpack.c.b16 %v4493, %v4489
        %v4902 = vpack.c.b16 %v4494, %v4490
        %v4903 = vpack.c.b16 %v4495, %v4491
        %v4904 = vpack.c.b16 %v4500, %v4496
        %v4905 = vpack.c.b16 %v4501, %v4497
        %v4906 = vpack.c.b16 %v4502, %v4498
        %v4907 = vpack.c.b16 %v4503, %v4499
        %v4908 = vpack.c.b16 %v4508, %v4504
        %v4909 = vpack.c.b16 %v4509, %v4505
        %v4910 = vpack.c.b16 %v4510, %v4506
        %v4911 = vpack.c.b16 %v4511, %v4507
        %v4912 = vpack.c.b16 %v4516, %v4512
        %v4913 = vpack.c.b16 %v4517, %v4513
        %v4914 = vpack.c.b16 %v4518, %v4514
        %v4915 = vpack.c.b16 %v4519, %v4515
        %v4916 = vpack.c.b16 %v4524, %v4520
        %v4917 = vpack.c.b16 %v4525, %v4521
        %v4918 = vpack.c.b16 %v4526, %v4522
        %v4919 = vpack.c.b16 %v4527, %v4523
        %v4920 = vpack.c.b16 %v4532, %v4528
        %v4921 = vpack.c.b16 %v4533, %v4529
        %v4922 = vpack.c.b16 %v4534, %v4530
        %v4923 = vpack.c.b16 %v4535, %v4531
        %v4924 = vpack.c.b16 %v4540, %v4536
        %v4925 = vpack.c.b16 %v4541, %v4537
        %v4926 = vpack.c.b16 %v4542, %v4538
        %v4927 = vpack.c.b16 %v4543, %v4539
        %v4928 = vpack.c.b16 %v4548, %v4544
        %v4929 = vpack.c.b16 %v4549, %v4545
        %v4930 = vpack.c.b16 %v4550, %v4546
        %v4931 = vpack.c.b16 %v4551, %v4547
        %v4932 = vpack.c.b16 %v4556, %v4552
        %v4933 = vpack.c.b16 %v4557, %v4553
        %v4934 = vpack.c.b16 %v4558, %v4554
        %v4935 = vpack.c.b16 %v4559, %v4555
        %v4936 = vpack.c.b16 %v4564, %v4560
        %v4937 = vpack.c.b16 %v4565, %v4561
        %v4938 = vpack.c.b16 %v4566, %v4562
        %v4939 = vpack.c.b16 %v4567, %v4563
        %v4940 = vpack.c.b16 %v4572, %v4568
        %v4941 = vpack.c.b16 %v4573, %v4569
        %v4942 = vpack.c.b16 %v4574, %v4570
        %v4943 = vpack.c.b16 %v4575, %v4571
        %v4944 = vpack.c.b16 %v4580, %v4576
        %v4945 = vpack.c.b16 %v4581, %v4577
        %v4946 = vpack.c.b16 %v4582, %v4578
        %v4947 = vpack.c.b16 %v4583, %v4579
        %v4948 = vpack.c.b16 %v4588, %v4584
        %v4949 = vpack.c.b16 %v4589, %v4585
        %v4950 = vpack.c.b16 %v4590, %v4586
        %v4951 = vpack.c.b16 %v4591, %v4587
        %v4952 = vpack.c.b16 %v4596, %v4592
        %v4953 = vpack.c.b16 %v4597, %v4593
        %v4954 = vpack.c.b16 %v4598, %v4594
        %v4955 = vpack.c.b16 %v4599, %v4595
        %v4956 = vpack.c.b16 %v4604, %v4600
        %v4957 = vpack.c.b16 %v4605, %v4601
        %v4958 = vpack.c.b16 %v4606, %v4602
        %v4959 = vpack.c.b16 %v4607, %v4603
        %v4960 = vpack.c.b16 %v4612, %v4608
        %v4961 = vpack.c.b16 %v4613, %v4609
        %v4962 = vpack.c.b16 %v4614, %v4610
        %v4963 = vpack.c.b16 %v4615, %v4611
        %v4964 = vpack.c.b16 %v4620, %v4616
        %v4965 = vpack.c.b16 %v4621, %v4617
        %v4966 = vpack.c.b16 %v4622, %v4618
        %v4967 = vpack.c.b16 %v4623, %v4619
        %v4968 = vpack.c.b16 %v4628, %v4624
        %v4969 = vpack.c.b16 %v4629, %v4625
        %v4970 = vpack.c.b16 %v4630, %v4626
        %v4971 = vpack.c.b16 %v4631, %v4627
        %v4972 = vpack.c.b16 %v4636, %v4632
        %v4973 = vpack.c.b16 %v4637, %v4633
        %v4974 = vpack.c.b16 %v4638, %v4634
        %v4975 = vpack.c.b16 %v4639, %v4635
        %v4976 = vpack.c.b16 %v4644, %v4640
        %v4977 = vpack.c.b16 %v4645, %v4641
        %v4978 = vpack.c.b16 %v4646, %v4642
        %v4979 = vpack.c.b16 %v4647, %v4643
        %v4980 = vpack.c.b16 %v4652, %v4648
        %v4981 = vpack.c.b16 %v4653, %v4649
        %v4982 = vpack.c.b16 %v4654, %v4650
        %v4983 = vpack.c.b16 %v4655, %v4651
        %v4984 = vpack.c.b16 %v4660, %v4656
        %v4985 = vpack.c.b16 %v4661, %v4657
        %v4986 = vpack.c.b16 %v4662, %v4658
        %v4987 = vpack.c.b16 %v4663, %v4659
        %v4988 = vpack.c.b16 %v4668, %v4664
        %v4989 = vpack.c.b16 %v4669, %v4665
        %v4990 = vpack.c.b16 %v4670, %v4666
        %v4991 = vpack.c.b16 %v4671, %v4667
        %v4992 = vpack.c.b16 %v4676, %v4672
        %v4993 = vpack.c.b16 %v4677, %v4673
        %v4994 = vpack.c.b16 %v4678, %v4674
        %v4995 = vpack.c.b16 %v4679, %v4675
        %v4996 = vpack.c.b16 %v4684, %v4680
        %v4997 = vpack.c.b16 %v4685, %v4681
        %v4998 = vpack.c.b16 %v4686, %v4682
        %v4999 = vpack.c.b16 %v4687, %v4683
        %v5000 = vpack.c.b16 %v4692, %v4688
        %v5001 = vpack.c.b16 %v4693, %v4689
        %v5002 = vpack.c.b16 %v4694, %v4690
        %v5003 = vpack.c.b16 %v4695, %v4691
        %v5004 = vpack.c.b16 %v4700, %v4696
        %v5005 = vpack.c.b16 %v4701, %v4697
        %v5006 = vpack.c.b16 %v4702, %v4698
        %v5007 = vpack.c.b16 %v4703, %v4699
        %v5008 = vpack.c.b16 %v4708, %v4704
        %v5009 = vpack.c.b16 %v4709, %v4705
        %v5010 = vpack.c.b16 %v4710, %v4706
        %v5011 = vpack.c.b16 %v4711, %v4707
        %v5012 = vpack.c.b16 %v4716, %v4712
        %v5013 = vpack.c.b16 %v4717, %v4713
        %v5014 = vpack.c.b16 %v4718, %v4714
        %v5015 = vpack.c.b16 %v4719, %v4715
        %v5016 = vpack.c.b16 %v4724, %v4720
        %v5017 = vpack.c.b16 %v4725, %v4721
        %v5018 = vpack.c.b16 %v4726, %v4722
        %v5019 = vpack.c.b16 %v4727, %v4723
        %v5020 = vpack.c.b16 %v4732, %v4728
        %v5021 = vpack.c.b16 %v4733, %v4729
        %v5022 = vpack.c.b16 %v4734, %v4730
        %v5023 = vpack.c.b16 %v4735, %v4731
        %v5024 = vpack.c.b16 %v4740, %v4736
        %v5025 = vpack.c.b16 %v4741, %v4737
        %v5026 = vpack.c.b16 %v4742, %v4738
        %v5027 = vpack.c.b16 %v4743, %v4739
        %v5028 = vpack.c.b16 %v4748, %v4744
        %v5029 = vpack.c.b16 %v4749, %v4745
        %v5030 = vpack.c.b16 %v4750, %v4746
        %v5031 = vpack.c.b16 %v4751, %v4747
        %v5032 = vpack.c.b16 %v4756, %v4752
        %v5033 = vpack.c.b16 %v4757, %v4753
        %v5034 = vpack.c.b16 %v4758, %v4754
        %v5035 = vpack.c.b16 %v4759, %v4755
        %v5036 = vpack.c.b16 %v4764, %v4760
        %v5037 = vpack.c.b16 %v4765, %v4761
        %v5038 = vpack.c.b16 %v4766, %v4762
        %v5039 = vpack.c.b16 %v4767, %v4763
        %v5040 = vpack.c.b16 %v4772, %v4768
        %v5041 = vpack.c.b16 %v4773, %v4769
        %v5042 = vpack.c.b16 %v4774, %v4770
        %v5043 = vpack.c.b16 %v4775, %v4771
        %v5044 = vpack.c.b16 %v4780, %v4776
        %v5045 = vpack.c.b16 %v4781, %v4777
        %v5046 = vpack.c.b16 %v4782, %v4778
        %v5047 = vpack.c.b16 %v4783, %v4779
        %v5048 = vpack.c.b16 %v4788, %v4784
        %v5049 = vpack.c.b16 %v4789, %v4785
        %v5050 = vpack.c.b16 %v4790, %v4786
        %v5051 = vpack.c.b16 %v4791, %v4787
        %v5052 = vpack.c.b16 %v4796, %v4792
        %v5053 = vpack.c.b16 %v4797, %v4793
        %v5054 = vpack.c.b16 %v4798, %v4794
        %v5055 = vpack.c.b16 %v4799, %v4795
        %5312 = vmatprep.subr.bf16.mxu0 %v4801
        %5313 = vmatpush1.bf16.msra.mxu0 %v4800
        %5314 = vmatprep.subr.bf16.mxu0 %v4805
        %5315 = vmatpush1.bf16.msra.mxu0 %v4804
        %5316 = vmatprep.subr.bf16.mxu0 %v4809
        %5317 = vmatpush1.bf16.msra.mxu0 %v4808
        %5318 = vmatprep.subr.bf16.mxu0 %v4813
        %5319 = vmatpush1.bf16.msra.mxu0 %v4812
        %5320 = vmatprep.subr.bf16.mxu0 %v4817
        %5321 = vmatpush1.bf16.msra.mxu0 %v4816
        %5322 = vmatprep.subr.bf16.mxu0 %v4821
        %5323 = vmatpush1.bf16.msra.mxu0 %v4820
        %5324 = vmatprep.subr.bf16.mxu0 %v4825
        %5325 = vmatpush1.bf16.msra.mxu0 %v4824
        %5326 = vmatprep.subr.bf16.mxu0 %v4829
        %5327 = vmatpush1.bf16.msra.mxu0 %v4828
        %5328 = vmatprep.subr.bf16.mxu0 %v4833
        %5329 = vmatpush1.bf16.msra.mxu0 %v4832
        %5330 = vmatprep.subr.bf16.mxu0 %v4837
        %5331 = vmatpush1.bf16.msra.mxu0 %v4836
        %5332 = vmatprep.subr.bf16.mxu0 %v4841
        %5333 = vmatpush1.bf16.msra.mxu0 %v4840
        %5334 = vmatprep.subr.bf16.mxu0 %v4845
        %5335 = vmatpush1.bf16.msra.mxu0 %v4844
        %5336 = vmatprep.subr.bf16.mxu0 %v4849
        %5337 = vmatpush1.bf16.msra.mxu0 %v4848
        %5338 = vmatprep.subr.bf16.mxu0 %v4853
        %5339 = vmatpush1.bf16.msra.mxu0 %v4852
        %5340 = vmatprep.subr.bf16.mxu0 %v4857
        %5341 = vmatpush1.bf16.msra.mxu0 %v4856
        %5342 = vmatprep.subr.bf16.mxu0 %v4861
        %5343 = vmatpush1.bf16.msra.mxu0 %v4860
        %5344 = vmatprep.mubr.bf16.mxu0 %v3747
        %5345 = vmatmul.mubr.bf16.gmra.mrb[0].mxu0 %v3746
        %v5346 = vpop.f32.mrb[0].mxu0
        %v5347 = vadd.f32 %v4015, %v5346
        %v5348 = vpop.f32.mrb[0].mxu0
        %v5349 = vadd.f32 %v4019, %v5348
        %v5350 = vpop.f32.mrb[0].mxu0
        %v5351 = vpop.f32.mrb[0].mxu0
        %5352 = vdwg.mxu0
        %5353 = vmatprep.subr.bf16.mxu0 %v4865
        %5354 = vmatpush1.bf16.msra.mxu0 %v4864
        %5355 = vmatprep.subr.bf16.mxu0 %v4869
        %5356 = vmatpush1.bf16.msra.mxu0 %v4868
        %5357 = vmatprep.subr.bf16.mxu0 %v4873
        %5358 = vmatpush1.bf16.msra.mxu0 %v4872
        %5359 = vmatprep.subr.bf16.mxu0 %v4877
        %5360 = vmatpush1.bf16.msra.mxu0 %v4876
        %5361 = vmatprep.subr.bf16.mxu0 %v4881
        %5362 = vmatpush1.bf16.msra.mxu0 %v4880
        %5363 = vmatprep.subr.bf16.mxu0 %v4885
        %5364 = vmatpush1.bf16.msra.mxu0 %v4884
        %5365 = vmatprep.subr.bf16.mxu0 %v4889
        %5366 = vmatpush1.bf16.msra.mxu0 %v4888
        %5367 = vmatprep.subr.bf16.mxu0 %v4893
        %5368 = vmatpush1.bf16.msra.mxu0 %v4892
        %5369 = vmatprep.subr.bf16.mxu0 %v4897
        %5370 = vmatpush1.bf16.msra.mxu0 %v4896
        %5371 = vmatprep.subr.bf16.mxu0 %v4901
        %5372 = vmatpush1.bf16.msra.mxu0 %v4900
        %5373 = vmatprep.subr.bf16.mxu0 %v4905
        %5374 = vmatpush1.bf16.msra.mxu0 %v4904
        %5375 = vmatprep.subr.bf16.mxu0 %v4909
        %5376 = vmatpush1.bf16.msra.mxu0 %v4908
        %5377 = vmatprep.subr.bf16.mxu0 %v4913
        %5378 = vmatpush1.bf16.msra.mxu0 %v4912
        %5379 = vmatprep.subr.bf16.mxu0 %v4917
        %5380 = vmatpush1.bf16.msra.mxu0 %v4916
        %5381 = vmatprep.subr.bf16.mxu0 %v4921
        %5382 = vmatpush1.bf16.msra.mxu0 %v4920
        %5383 = vmatprep.subr.bf16.mxu0 %v4925
        %5384 = vmatpush1.bf16.msra.mxu0 %v4924
        %5385 = vmatprep.mubr.bf16.mxu0 %v3749
        %5386 = vmatmul.mubr.bf16.gmra.mrb[0].mxu0 %v3748
        %v5387 = vpop.f32.mrb[0].mxu0
        %v5388 = vadd.f32 %v5347, %v5387
        %v5389 = vpop.f32.mrb[0].mxu0
        %v5390 = vadd.f32 %v5349, %v5389
        %v5391 = vpop.f32.mrb[0].mxu0
        %v5392 = vpop.f32.mrb[0].mxu0
        %5393 = vdwg.mxu0
        %5394 = vmatprep.subr.bf16.mxu0 %v4929
        %5395 = vmatpush1.bf16.msra.mxu0 %v4928
        %5396 = vmatprep.subr.bf16.mxu0 %v4933
        %5397 = vmatpush1.bf16.msra.mxu0 %v4932
        %5398 = vmatprep.subr.bf16.mxu0 %v4937
        %5399 = vmatpush1.bf16.msra.mxu0 %v4936
        %5400 = vmatprep.subr.bf16.mxu0 %v4941
        %5401 = vmatpush1.bf16.msra.mxu0 %v4940
        %5402 = vmatprep.subr.bf16.mxu0 %v4945
        %5403 = vmatpush1.bf16.msra.mxu0 %v4944
        %5404 = vmatprep.subr.bf16.mxu0 %v4949
        %5405 = vmatpush1.bf16.msra.mxu0 %v4948
        %5406 = vmatprep.subr.bf16.mxu0 %v4953
        %5407 = vmatpush1.bf16.msra.mxu0 %v4952
        %5408 = vmatprep.subr.bf16.mxu0 %v4957
        %5409 = vmatpush1.bf16.msra.mxu0 %v4956
        %5410 = vmatprep.subr.bf16.mxu0 %v4961
        %5411 = vmatpush1.bf16.msra.mxu0 %v4960
        %5412 = vmatprep.subr.bf16.mxu0 %v4965
        %5413 = vmatpush1.bf16.msra.mxu0 %v4964
        %5414 = vmatprep.subr.bf16.mxu0 %v4969
        %5415 = vmatpush1.bf16.msra.mxu0 %v4968
        %5416 = vmatprep.subr.bf16.mxu0 %v4973
        %5417 = vmatpush1.bf16.msra.mxu0 %v4972
        %5418 = vmatprep.subr.bf16.mxu0 %v4977
        %5419 = vmatpush1.bf16.msra.mxu0 %v4976
        %5420 = vmatprep.subr.bf16.mxu0 %v4981
        %5421 = vmatpush1.bf16.msra.mxu0 %v4980
        %5422 = vmatprep.subr.bf16.mxu0 %v4985
        %5423 = vmatpush1.bf16.msra.mxu0 %v4984
        %5424 = vmatprep.subr.bf16.mxu0 %v4989
        %5425 = vmatpush1.bf16.msra.mxu0 %v4988
        %5426 = vmatprep.mubr.bf16.mxu0 %v3751
        %5427 = vmatmul.mubr.bf16.gmra.mrb[0].mxu0 %v3750
        %v5428 = vpop.f32.mrb[0].mxu0
        %v5429 = vadd.f32 %v5388, %v5428
        %v5430 = vpop.f32.mrb[0].mxu0
        %v5431 = vadd.f32 %v5390, %v5430
        %v5432 = vpop.f32.mrb[0].mxu0
        %v5433 = vpop.f32.mrb[0].mxu0
        %5434 = vdwg.mxu0
        %5435 = vmatprep.subr.bf16.mxu0 %v4993
        %5436 = vmatpush1.bf16.msra.mxu0 %v4992
        %5437 = vmatprep.subr.bf16.mxu0 %v4997
        %5438 = vmatpush1.bf16.msra.mxu0 %v4996
        %5439 = vmatprep.subr.bf16.mxu0 %v5001
        %5440 = vmatpush1.bf16.msra.mxu0 %v5000
        %5441 = vmatprep.subr.bf16.mxu0 %v5005
        %5442 = vmatpush1.bf16.msra.mxu0 %v5004
        %5443 = vmatprep.subr.bf16.mxu0 %v5009
        %5444 = vmatpush1.bf16.msra.mxu0 %v5008
        %5445 = vmatprep.subr.bf16.mxu0 %v5013
        %5446 = vmatpush1.bf16.msra.mxu0 %v5012
        %5447 = vmatprep.subr.bf16.mxu0 %v5017
        %5448 = vmatpush1.bf16.msra.mxu0 %v5016
        %5449 = vmatprep.subr.bf16.mxu0 %v5021
        %5450 = vmatpush1.bf16.msra.mxu0 %v5020
        %5451 = vmatprep.subr.bf16.mxu0 %v5025
        %5452 = vmatpush1.bf16.msra.mxu0 %v5024
        %5453 = vmatprep.subr.bf16.mxu0 %v5029
        %5454 = vmatpush1.bf16.msra.mxu0 %v5028
        %5455 = vmatprep.subr.bf16.mxu0 %v5033
        %5456 = vmatpush1.bf16.msra.mxu0 %v5032
        %5457 = vmatprep.subr.bf16.mxu0 %v5037
        %5458 = vmatpush1.bf16.msra.mxu0 %v5036
        %5459 = vmatprep.subr.bf16.mxu0 %v5041
        %5460 = vmatpush1.bf16.msra.mxu0 %v5040
        %5461 = vmatprep.subr.bf16.mxu0 %v5045
        %5462 = vmatpush1.bf16.msra.mxu0 %v5044
        %5463 = vmatprep.subr.bf16.mxu0 %v5049
        %5464 = vmatpush1.bf16.msra.mxu0 %v5048
        %5465 = vmatprep.subr.bf16.mxu0 %v5053
        %5466 = vmatpush1.bf16.msra.mxu0 %v5052
        %5467 = vmatprep.mubr.bf16.mxu0 %v3753
        %5468 = vmatmul.mubr.bf16.gmra.mrb[0].mxu0 %v3752
        %v5469 = vpop.f32.mrb[0].mxu0
        %v5470 = vadd.f32 %v5429, %v5469
        %v5471 = vpop.f32.mrb[0].mxu0
        %v5472 = vadd.f32 %v5431, %v5471
        %v5473 = vpop.f32.mrb[0].mxu0
        %v5474 = vpop.f32.mrb[0].mxu0
        %5475 = vdwg.mxu0
        %5476 = vmatprep.subr.bf16.mxu0 %v4803
        %5477 = vmatpush1.bf16.msra.mxu0 %v4802
        %5478 = vmatprep.subr.bf16.mxu0 %v4807
        %5479 = vmatpush1.bf16.msra.mxu0 %v4806
        %5480 = vmatprep.subr.bf16.mxu0 %v4811
        %5481 = vmatpush1.bf16.msra.mxu0 %v4810
        %5482 = vmatprep.subr.bf16.mxu0 %v4815
        %5483 = vmatpush1.bf16.msra.mxu0 %v4814
        %5484 = vmatprep.subr.bf16.mxu0 %v4819
        %5485 = vmatpush1.bf16.msra.mxu0 %v4818
        %5486 = vmatprep.subr.bf16.mxu0 %v4823
        %5487 = vmatpush1.bf16.msra.mxu0 %v4822
        %5488 = vmatprep.subr.bf16.mxu0 %v4827
        %5489 = vmatpush1.bf16.msra.mxu0 %v4826
        %5490 = vmatprep.subr.bf16.mxu0 %v4831
        %5491 = vmatpush1.bf16.msra.mxu0 %v4830
        %5492 = vmatprep.subr.bf16.mxu0 %v4835
        %5493 = vmatpush1.bf16.msra.mxu0 %v4834
        %5494 = vmatprep.subr.bf16.mxu0 %v4839
        %5495 = vmatpush1.bf16.msra.mxu0 %v4838
        %5496 = vmatprep.subr.bf16.mxu0 %v4843
        %5497 = vmatpush1.bf16.msra.mxu0 %v4842
        %5498 = vmatprep.subr.bf16.mxu0 %v4847
        %5499 = vmatpush1.bf16.msra.mxu0 %v4846
        %5500 = vmatprep.subr.bf16.mxu0 %v4851
        %5501 = vmatpush1.bf16.msra.mxu0 %v4850
        %5502 = vmatprep.subr.bf16.mxu0 %v4855
        %5503 = vmatpush1.bf16.msra.mxu0 %v4854
        %5504 = vmatprep.subr.bf16.mxu0 %v4859
        %5505 = vmatpush1.bf16.msra.mxu0 %v4858
        %5506 = vmatprep.subr.bf16.mxu0 %v4863
        %5507 = vmatpush1.bf16.msra.mxu0 %v4862
        %5508 = vmatprep.mubr.bf16.mxu0 %v3747
        %5509 = vmatmul.mubr.bf16.gmra.mrb[0].mxu0 %v3746
        %v5510 = vpop.f32.mrb[0].mxu0
        %v5511 = vadd.f32 %v4023, %v5510
        %v5512 = vpop.f32.mrb[0].mxu0
        %v5513 = vadd.f32 %v4027, %v5512
        %v5514 = vpop.f32.mrb[0].mxu0
        %v5515 = vpop.f32.mrb[0].mxu0
        %5516 = vdwg.mxu0
        %5517 = vmatprep.subr.bf16.mxu0 %v4867
        %5518 = vmatpush1.bf16.msra.mxu0 %v4866
        %5519 = vmatprep.subr.bf16.mxu0 %v4871
        %5520 = vmatpush1.bf16.msra.mxu0 %v4870
        %5521 = vmatprep.subr.bf16.mxu0 %v4875
        %5522 = vmatpush1.bf16.msra.mxu0 %v4874
        %5523 = vmatprep.subr.bf16.mxu0 %v4879
        %5524 = vmatpush1.bf16.msra.mxu0 %v4878
        %5525 = vmatprep.subr.bf16.mxu0 %v4883
        %5526 = vmatpush1.bf16.msra.mxu0 %v4882
        %5527 = vmatprep.subr.bf16.mxu0 %v4887
        %5528 = vmatpush1.bf16.msra.mxu0 %v4886
        %5529 = vmatprep.subr.bf16.mxu0 %v4891
        %5530 = vmatpush1.bf16.msra.mxu0 %v4890
        %5531 = vmatprep.subr.bf16.mxu0 %v4895
        %5532 = vmatpush1.bf16.msra.mxu0 %v4894
        %5533 = vmatprep.subr.bf16.mxu0 %v4899
        %5534 = vmatpush1.bf16.msra.mxu0 %v4898
        %5535 = vmatprep.subr.bf16.mxu0 %v4903
        %5536 = vmatpush1.bf16.msra.mxu0 %v4902
        %5537 = vmatprep.subr.bf16.mxu0 %v4907
        %5538 = vmatpush1.bf16.msra.mxu0 %v4906
        %5539 = vmatprep.subr.bf16.mxu0 %v4911
        %5540 = vmatpush1.bf16.msra.mxu0 %v4910
        %5541 = vmatprep.subr.bf16.mxu0 %v4915
        %5542 = vmatpush1.bf16.msra.mxu0 %v4914
        %5543 = vmatprep.subr.bf16.mxu0 %v4919
        %5544 = vmatpush1.bf16.msra.mxu0 %v4918
        %5545 = vmatprep.subr.bf16.mxu0 %v4923
        %5546 = vmatpush1.bf16.msra.mxu0 %v4922
        %5547 = vmatprep.subr.bf16.mxu0 %v4927
        %5548 = vmatpush1.bf16.msra.mxu0 %v4926
        %5549 = vmatprep.mubr.bf16.mxu0 %v3749
        %5550 = vmatmul.mubr.bf16.gmra.mrb[0].mxu0 %v3748
        %v5551 = vpop.f32.mrb[0].mxu0
        %v5552 = vadd.f32 %v5511, %v5551
        %v5553 = vpop.f32.mrb[0].mxu0
        %v5554 = vadd.f32 %v5513, %v5553
        %v5555 = vpop.f32.mrb[0].mxu0
        %v5556 = vpop.f32.mrb[0].mxu0
        %5557 = vdwg.mxu0
        %5558 = vmatprep.subr.bf16.mxu0 %v4931
        %5559 = vmatpush1.bf16.msra.mxu0 %v4930
        %5560 = vmatprep.subr.bf16.mxu0 %v4935
        %5561 = vmatpush1.bf16.msra.mxu0 %v4934
        %5562 = vmatprep.subr.bf16.mxu0 %v4939
        %5563 = vmatpush1.bf16.msra.mxu0 %v4938
        %5564 = vmatprep.subr.bf16.mxu0 %v4943
        %5565 = vmatpush1.bf16.msra.mxu0 %v4942
        %5566 = vmatprep.subr.bf16.mxu0 %v4947
        %5567 = vmatpush1.bf16.msra.mxu0 %v4946
        %5568 = vmatprep.subr.bf16.mxu0 %v4951
        %5569 = vmatpush1.bf16.msra.mxu0 %v4950
        %5570 = vmatprep.subr.bf16.mxu0 %v4955
        %5571 = vmatpush1.bf16.msra.mxu0 %v4954
        %5572 = vmatprep.subr.bf16.mxu0 %v4959
        %5573 = vmatpush1.bf16.msra.mxu0 %v4958
        %5574 = vmatprep.subr.bf16.mxu0 %v4963
        %5575 = vmatpush1.bf16.msra.mxu0 %v4962
        %5576 = vmatprep.subr.bf16.mxu0 %v4967
        %5577 = vmatpush1.bf16.msra.mxu0 %v4966
        %5578 = vmatprep.subr.bf16.mxu0 %v4971
        %5579 = vmatpush1.bf16.msra.mxu0 %v4970
        %5580 = vmatprep.subr.bf16.mxu0 %v4975
        %5581 = vmatpush1.bf16.msra.mxu0 %v4974
        %5582 = vmatprep.subr.bf16.mxu0 %v4979
        %5583 = vmatpush1.bf16.msra.mxu0 %v4978
        %5584 = vmatprep.subr.bf16.mxu0 %v4983
        %5585 = vmatpush1.bf16.msra.mxu0 %v4982
        %5586 = vmatprep.subr.bf16.mxu0 %v4987
        %5587 = vmatpush1.bf16.msra.mxu0 %v4986
        %5588 = vmatprep.subr.bf16.mxu0 %v4991
        %5589 = vmatpush1.bf16.msra.mxu0 %v4990
        %5590 = vmatprep.mubr.bf16.mxu0 %v3751
        %5591 = vmatmul.mubr.bf16.gmra.mrb[0].mxu0 %v3750
        %v5592 = vpop.f32.mrb[0].mxu0
        %v5593 = vadd.f32 %v5552, %v5592
        %v5594 = vpop.f32.mrb[0].mxu0
        %v5595 = vadd.f32 %v5554, %v5594
        %v5596 = vpop.f32.mrb[0].mxu0
        %v5597 = vpop.f32.mrb[0].mxu0
        %5598 = vdwg.mxu0
        %5599 = vmatprep.subr.bf16.mxu0 %v4995
        %5600 = vmatpush1.bf16.msra.mxu0 %v4994
        %5601 = vmatprep.subr.bf16.mxu0 %v4999
        %5602 = vmatpush1.bf16.msra.mxu0 %v4998
        %5603 = vmatprep.subr.bf16.mxu0 %v5003
        %5604 = vmatpush1.bf16.msra.mxu0 %v5002
        %5605 = vmatprep.subr.bf16.mxu0 %v5007
        %5606 = vmatpush1.bf16.msra.mxu0 %v5006
        %5607 = vmatprep.subr.bf16.mxu0 %v5011
        %5608 = vmatpush1.bf16.msra.mxu0 %v5010
        %5609 = vmatprep.subr.bf16.mxu0 %v5015
        %5610 = vmatpush1.bf16.msra.mxu0 %v5014
        %5611 = vmatprep.subr.bf16.mxu0 %v5019
        %5612 = vmatpush1.bf16.msra.mxu0 %v5018
        %5613 = vmatprep.subr.bf16.mxu0 %v5023
        %5614 = vmatpush1.bf16.msra.mxu0 %v5022
        %5615 = vmatprep.subr.bf16.mxu0 %v5027
        %5616 = vmatpush1.bf16.msra.mxu0 %v5026
        %5617 = vmatprep.subr.bf16.mxu0 %v5031
        %5618 = vmatpush1.bf16.msra.mxu0 %v5030
        %5619 = vmatprep.subr.bf16.mxu0 %v5035
        %5620 = vmatpush1.bf16.msra.mxu0 %v5034
        %5621 = vmatprep.subr.bf16.mxu0 %v5039
        %5622 = vmatpush1.bf16.msra.mxu0 %v5038
        %5623 = vmatprep.subr.bf16.mxu0 %v5043
        %5624 = vmatpush1.bf16.msra.mxu0 %v5042
        %5625 = vmatprep.subr.bf16.mxu0 %v5047
        %5626 = vmatpush1.bf16.msra.mxu0 %v5046
        %5627 = vmatprep.subr.bf16.mxu0 %v5051
        %5628 = vmatpush1.bf16.msra.mxu0 %v5050
        %5629 = vmatprep.subr.bf16.mxu0 %v5055
        %5630 = vmatpush1.bf16.msra.mxu0 %v5054
        %5631 = vmatprep.mubr.bf16.mxu0 %v3753
        %5632 = vmatmul.mubr.bf16.gmra.mrb[0].mxu0 %v3752
        %v5633 = vpop.f32.mrb[0].mxu0
        %v5634 = vadd.f32 %v5593, %v5633
        %v5635 = vpop.f32.mrb[0].mxu0
        %v5636 = vadd.f32 %v5595, %v5635
        %v5637 = vpop.f32.mrb[0].mxu0
        %v5638 = vpop.f32.mrb[0].mxu0
        %5639 = vdwg.mxu0
        %v5640 = vmax.f32 %v5470, 0.0
        %v5641 = vmax.f32 %v5472, 0.0
        %v5642 = vmax.f32 %v5634, 0.0
        %v5643 = vmax.f32 %v5636, 0.0
        %v5644 = vpack.c.bf16 %v5640, %v5640
        %v5645 = vpack.c.bf16 %v5641, %v5641
        %v5646 = vpack.c.bf16 %v5642, %v5642
        %v5647 = vpack.c.bf16 %v5643, %v5643
        %v5648 = vld [vmem:[%s9] sm:$0xff]
        %v5649 = vld [vmem:[%s9 + $0x8] sm:$0xff]
        %v5650 = vld [vmem:[%s9 + $0x10] sm:$0xff]
        %v5651 = vld [vmem:[%s9 + $0x18] sm:$0xff]
        %v5652 = vld [vmem:[%s9 + $0x20] sm:$0xff]
        %v5653 = vld [vmem:[%s9 + $0x28] sm:$0xff]
        %v5654 = vld [vmem:[%s9 + $0x30] sm:$0xff]
        %v5655 = vld [vmem:[%s9 + $0x38] sm:$0xff]
        %v5656 = vld [vmem:[%s9 + $0x40] sm:$0xff]
        %v5657 = vld [vmem:[%s9 + $0x48] sm:$0xff]
        %v5658 = vld [vmem:[%s9 + $0x50] sm:$0xff]
        %v5659 = vld [vmem:[%s9 + $0x58] sm:$0xff]
        %v5660 = vld [vmem:[%s9 + $0x60] sm:$0xff]
        %v5661 = vld [vmem:[%s9 + $0x68] sm:$0xff]
        %v5662 = vld [vmem:[%s9 + $0x70] sm:$0xff]
        %v5663 = vld [vmem:[%s9 + $0x78] sm:$0xff]
        %v5664 = vld [vmem:[%s9 + $0x80] sm:$0xff]
        %v5665 = vld [vmem:[%s9 + $0x88] sm:$0xff]
        %v5666 = vld [vmem:[%s9 + $0x90] sm:$0xff]
        %v5667 = vld [vmem:[%s9 + $0x98] sm:$0xff]
        %v5668 = vld [vmem:[%s9 + $0xa0] sm:$0xff]
        %v5669 = vld [vmem:[%s9 + $0xa8] sm:$0xff]
        %v5670 = vld [vmem:[%s9 + $0xb0] sm:$0xff]
        %v5671 = vld [vmem:[%s9 + $0xb8] sm:$0xff]
        %v5672 = vld [vmem:[%s9 + $0xc0] sm:$0xff]
        %v5673 = vld [vmem:[%s9 + $0xc8] sm:$0xff]
        %v5674 = vld [vmem:[%s9 + $0xd0] sm:$0xff]
        %v5675 = vld [vmem:[%s9 + $0xd8] sm:$0xff]
        %v5676 = vld [vmem:[%s9 + $0xe0] sm:$0xff]
        %v5677 = vld [vmem:[%s9 + $0xe8] sm:$0xff]
        %v5678 = vld [vmem:[%s9 + $0xf0] sm:$0xff]
        %v5679 = vld [vmem:[%s9 + $0xf8] sm:$0xff]
        %v5680 = vld [vmem:[%s9 + $0x100] sm:$0xff]
        %v5681 = vld [vmem:[%s9 + $0x108] sm:$0xff]
        %v5682 = vld [vmem:[%s9 + $0x110] sm:$0xff]
        %v5683 = vld [vmem:[%s9 + $0x118] sm:$0xff]
        %v5684 = vld [vmem:[%s9 + $0x120] sm:$0xff]
        %v5685 = vld [vmem:[%s9 + $0x128] sm:$0xff]
        %v5686 = vld [vmem:[%s9 + $0x130] sm:$0xff]
        %v5687 = vld [vmem:[%s9 + $0x138] sm:$0xff]
        %v5688 = vld [vmem:[%s9 + $0x140] sm:$0xff]
        %v5689 = vld [vmem:[%s9 + $0x148] sm:$0xff]
        %v5690 = vld [vmem:[%s9 + $0x150] sm:$0xff]
        %v5691 = vld [vmem:[%s9 + $0x158] sm:$0xff]
        %v5692 = vld [vmem:[%s9 + $0x160] sm:$0xff]
        %v5693 = vld [vmem:[%s9 + $0x168] sm:$0xff]
        %v5694 = vld [vmem:[%s9 + $0x170] sm:$0xff]
        %v5695 = vld [vmem:[%s9 + $0x178] sm:$0xff]
        %v5696 = vld [vmem:[%s9 + $0x180] sm:$0xff]
        %v5697 = vld [vmem:[%s9 + $0x188] sm:$0xff]
        %v5698 = vld [vmem:[%s9 + $0x190] sm:$0xff]
        %v5699 = vld [vmem:[%s9 + $0x198] sm:$0xff]
        %v5700 = vld [vmem:[%s9 + $0x1a0] sm:$0xff]
        %v5701 = vld [vmem:[%s9 + $0x1a8] sm:$0xff]
        %v5702 = vld [vmem:[%s9 + $0x1b0] sm:$0xff]
        %v5703 = vld [vmem:[%s9 + $0x1b8] sm:$0xff]
        %v5704 = vld [vmem:[%s9 + $0x1c0] sm:$0xff]
        %v5705 = vld [vmem:[%s9 + $0x1c8] sm:$0xff]
        %v5706 = vld [vmem:[%s9 + $0x1d0] sm:$0xff]
        %v5707 = vld [vmem:[%s9 + $0x1d8] sm:$0xff]
        %v5708 = vld [vmem:[%s9 + $0x1e0] sm:$0xff]
        %v5709 = vld [vmem:[%s9 + $0x1e8] sm:$0xff]
        %v5710 = vld [vmem:[%s9 + $0x1f0] sm:$0xff]
        %v5711 = vld [vmem:[%s9 + $0x1f8] sm:$0xff]
        %v5712 = vld [vmem:[#allocation10] sm:$0x3]
        %v5714 = vlaneseq
        %v5715 = vshrl.u32 %v5714, 7
        %v5716 = vsub.s32 0, %v5715
        %v5717 = vrot.slane %v5712, %v5716
        %v5718 = vlaneseq
        %v5719 = vshrl.u32 %v5718, 7
        %v5720 = vsub.s32 1, %v5719
        %v5721 = vrot.slane %v5712, %v5720
        %v5788 = vunpack.c.l.b16 %v5648
        %v5789 = vunpack.c.h.b16 %v5648
        %v5790 = vunpack.c.l.b16 %v5649
        %v5791 = vunpack.c.h.b16 %v5649
        %v5792 = vunpack.c.l.b16 %v5650
        %v5793 = vunpack.c.h.b16 %v5650
        %v5794 = vunpack.c.l.b16 %v5651
        %v5795 = vunpack.c.h.b16 %v5651
        %v5796 = vunpack.c.l.b16 %v5652
        %v5797 = vunpack.c.h.b16 %v5652
        %v5798 = vunpack.c.l.b16 %v5653
        %v5799 = vunpack.c.h.b16 %v5653
        %v5800 = vunpack.c.l.b16 %v5654
        %v5801 = vunpack.c.h.b16 %v5654
        %v5802 = vunpack.c.l.b16 %v5655
        %v5803 = vunpack.c.h.b16 %v5655
        %v5804 = vunpack.c.l.b16 %v5656
        %v5805 = vunpack.c.h.b16 %v5656
        %v5806 = vunpack.c.l.b16 %v5657
        %v5807 = vunpack.c.h.b16 %v5657
        %v5808 = vunpack.c.l.b16 %v5658
        %v5809 = vunpack.c.h.b16 %v5658
        %v5810 = vunpack.c.l.b16 %v5659
        %v5811 = vunpack.c.h.b16 %v5659
        %v5812 = vunpack.c.l.b16 %v5660
        %v5813 = vunpack.c.h.b16 %v5660
        %v5814 = vunpack.c.l.b16 %v5661
        %v5815 = vunpack.c.h.b16 %v5661
        %v5816 = vunpack.c.l.b16 %v5662
        %v5817 = vunpack.c.h.b16 %v5662
        %v5818 = vunpack.c.l.b16 %v5663
        %v5819 = vunpack.c.h.b16 %v5663
        %v5820 = vunpack.c.l.b16 %v5664
        %v5821 = vunpack.c.h.b16 %v5664
        %v5822 = vunpack.c.l.b16 %v5665
        %v5823 = vunpack.c.h.b16 %v5665
        %v5824 = vunpack.c.l.b16 %v5666
        %v5825 = vunpack.c.h.b16 %v5666
        %v5826 = vunpack.c.l.b16 %v5667
        %v5827 = vunpack.c.h.b16 %v5667
        %v5828 = vunpack.c.l.b16 %v5668
        %v5829 = vunpack.c.h.b16 %v5668
        %v5830 = vunpack.c.l.b16 %v5669
        %v5831 = vunpack.c.h.b16 %v5669
        %v5832 = vunpack.c.l.b16 %v5670
        %v5833 = vunpack.c.h.b16 %v5670
        %v5834 = vunpack.c.l.b16 %v5671
        %v5835 = vunpack.c.h.b16 %v5671
        %v5836 = vunpack.c.l.b16 %v5672
        %v5837 = vunpack.c.h.b16 %v5672
        %v5838 = vunpack.c.l.b16 %v5673
        %v5839 = vunpack.c.h.b16 %v5673
        %v5840 = vunpack.c.l.b16 %v5674
        %v5841 = vunpack.c.h.b16 %v5674
        %v5842 = vunpack.c.l.b16 %v5675
        %v5843 = vunpack.c.h.b16 %v5675
        %v5844 = vunpack.c.l.b16 %v5676
        %v5845 = vunpack.c.h.b16 %v5676
        %v5846 = vunpack.c.l.b16 %v5677
        %v5847 = vunpack.c.h.b16 %v5677
        %v5848 = vunpack.c.l.b16 %v5678
        %v5849 = vunpack.c.h.b16 %v5678
        %v5850 = vunpack.c.l.b16 %v5679
        %v5851 = vunpack.c.h.b16 %v5679
        %v5852 = vunpack.c.l.b16 %v5680
        %v5853 = vunpack.c.h.b16 %v5680
        %v5854 = vunpack.c.l.b16 %v5681
        %v5855 = vunpack.c.h.b16 %v5681
        %v5856 = vunpack.c.l.b16 %v5682
        %v5857 = vunpack.c.h.b16 %v5682
        %v5858 = vunpack.c.l.b16 %v5683
        %v5859 = vunpack.c.h.b16 %v5683
        %v5860 = vunpack.c.l.b16 %v5684
        %v5861 = vunpack.c.h.b16 %v5684
        %v5862 = vunpack.c.l.b16 %v5685
        %v5863 = vunpack.c.h.b16 %v5685
        %v5864 = vunpack.c.l.b16 %v5686
        %v5865 = vunpack.c.h.b16 %v5686
        %v5866 = vunpack.c.l.b16 %v5687
        %v5867 = vunpack.c.h.b16 %v5687
        %v5868 = vunpack.c.l.b16 %v5688
        %v5869 = vunpack.c.h.b16 %v5688
        %v5870 = vunpack.c.l.b16 %v5689
        %v5871 = vunpack.c.h.b16 %v5689
        %v5872 = vunpack.c.l.b16 %v5690
        %v5873 = vunpack.c.h.b16 %v5690
        %v5874 = vunpack.c.l.b16 %v5691
        %v5875 = vunpack.c.h.b16 %v5691
        %v5876 = vunpack.c.l.b16 %v5692
        %v5877 = vunpack.c.h.b16 %v5692
        %v5878 = vunpack.c.l.b16 %v5693
        %v5879 = vunpack.c.h.b16 %v5693
        %v5880 = vunpack.c.l.b16 %v5694
        %v5881 = vunpack.c.h.b16 %v5694
        %v5882 = vunpack.c.l.b16 %v5695
        %v5883 = vunpack.c.h.b16 %v5695
        %v5884 = vunpack.c.l.b16 %v5696
        %v5885 = vunpack.c.h.b16 %v5696
        %v5886 = vunpack.c.l.b16 %v5697
        %v5887 = vunpack.c.h.b16 %v5697
        %v5888 = vunpack.c.l.b16 %v5698
        %v5889 = vunpack.c.h.b16 %v5698
        %v5890 = vunpack.c.l.b16 %v5699
        %v5891 = vunpack.c.h.b16 %v5699
        %v5892 = vunpack.c.l.b16 %v5700
        %v5893 = vunpack.c.h.b16 %v5700
        %v5894 = vunpack.c.l.b16 %v5701
        %v5895 = vunpack.c.h.b16 %v5701
        %v5896 = vunpack.c.l.b16 %v5702
        %v5897 = vunpack.c.h.b16 %v5702
        %v5898 = vunpack.c.l.b16 %v5703
        %v5899 = vunpack.c.h.b16 %v5703
        %v5900 = vunpack.c.l.b16 %v5704
        %v5901 = vunpack.c.h.b16 %v5704
        %v5902 = vunpack.c.l.b16 %v5705
        %v5903 = vunpack.c.h.b16 %v5705
        %v5904 = vunpack.c.l.b16 %v5706
        %v5905 = vunpack.c.h.b16 %v5706
        %v5906 = vunpack.c.l.b16 %v5707
        %v5907 = vunpack.c.h.b16 %v5707
        %v5908 = vunpack.c.l.b16 %v5708
        %v5909 = vunpack.c.h.b16 %v5708
        %v5910 = vunpack.c.l.b16 %v5709
        %v5911 = vunpack.c.h.b16 %v5709
        %v5912 = vunpack.c.l.b16 %v5710
        %v5913 = vunpack.c.h.b16 %v5710
        %v5914 = vunpack.c.l.b16 %v5711
        %v5915 = vunpack.c.h.b16 %v5711
        %v5916 = vpack.c.b16 %v5790, %v5788
        %v5917 = vpack.c.b16 %v5791, %v5789
        %v5918 = vpack.c.b16 %v5794, %v5792
        %v5919 = vpack.c.b16 %v5795, %v5793
        %v5920 = vpack.c.b16 %v5798, %v5796
        %v5921 = vpack.c.b16 %v5799, %v5797
        %v5922 = vpack.c.b16 %v5802, %v5800
        %v5923 = vpack.c.b16 %v5803, %v5801
        %v5924 = vpack.c.b16 %v5806, %v5804
        %v5925 = vpack.c.b16 %v5807, %v5805
        %v5926 = vpack.c.b16 %v5810, %v5808
        %v5927 = vpack.c.b16 %v5811, %v5809
        %v5928 = vpack.c.b16 %v5814, %v5812
        %v5929 = vpack.c.b16 %v5815, %v5813
        %v5930 = vpack.c.b16 %v5818, %v5816
        %v5931 = vpack.c.b16 %v5819, %v5817
        %v5932 = vpack.c.b16 %v5822, %v5820
        %v5933 = vpack.c.b16 %v5823, %v5821
        %v5934 = vpack.c.b16 %v5826, %v5824
        %v5935 = vpack.c.b16 %v5827, %v5825
        %v5936 = vpack.c.b16 %v5830, %v5828
        %v5937 = vpack.c.b16 %v5831, %v5829
        %v5938 = vpack.c.b16 %v5834, %v5832
        %v5939 = vpack.c.b16 %v5835, %v5833
        %v5940 = vpack.c.b16 %v5838, %v5836
        %v5941 = vpack.c.b16 %v5839, %v5837
        %v5942 = vpack.c.b16 %v5842, %v5840
        %v5943 = vpack.c.b16 %v5843, %v5841
        %v5944 = vpack.c.b16 %v5846, %v5844
        %v5945 = vpack.c.b16 %v5847, %v5845
        %v5946 = vpack.c.b16 %v5850, %v5848
        %v5947 = vpack.c.b16 %v5851, %v5849
        %v5948 = vpack.c.b16 %v5854, %v5852
        %v5949 = vpack.c.b16 %v5855, %v5853
        %v5950 = vpack.c.b16 %v5858, %v5856
        %v5951 = vpack.c.b16 %v5859, %v5857
        %v5952 = vpack.c.b16 %v5862, %v5860
        %v5953 = vpack.c.b16 %v5863, %v5861
        %v5954 = vpack.c.b16 %v5866, %v5864
        %v5955 = vpack.c.b16 %v5867, %v5865
        %v5956 = vpack.c.b16 %v5870, %v5868
        %v5957 = vpack.c.b16 %v5871, %v5869
        %v5958 = vpack.c.b16 %v5874, %v5872
        %v5959 = vpack.c.b16 %v5875, %v5873
        %v5960 = vpack.c.b16 %v5878, %v5876
        %v5961 = vpack.c.b16 %v5879, %v5877
        %v5962 = vpack.c.b16 %v5882, %v5880
        %v5963 = vpack.c.b16 %v5883, %v5881
        %v5964 = vpack.c.b16 %v5886, %v5884
        %v5965 = vpack.c.b16 %v5887, %v5885
        %v5966 = vpack.c.b16 %v5890, %v5888
        %v5967 = vpack.c.b16 %v5891, %v5889
        %v5968 = vpack.c.b16 %v5894, %v5892
        %v5969 = vpack.c.b16 %v5895, %v5893
        %v5970 = vpack.c.b16 %v5898, %v5896
        %v5971 = vpack.c.b16 %v5899, %v5897
        %v5972 = vpack.c.b16 %v5902, %v5900
        %v5973 = vpack.c.b16 %v5903, %v5901
        %v5974 = vpack.c.b16 %v5906, %v5904
        %v5975 = vpack.c.b16 %v5907, %v5905
        %v5976 = vpack.c.b16 %v5910, %v5908
        %v5977 = vpack.c.b16 %v5911, %v5909
        %v5978 = vpack.c.b16 %v5914, %v5912
        %v5979 = vpack.c.b16 %v5915, %v5913
        %6044 = vmatprep.subr.bf16.mxu0 %v5917
        %6045 = vmatpush1.bf16.msra.mxu0 %v5916
        %6046 = vmatprep.subr.bf16.mxu0 %v5919
        %6047 = vmatpush1.bf16.msra.mxu0 %v5918
        %6048 = vmatprep.subr.bf16.mxu0 %v5921
        %6049 = vmatpush1.bf16.msra.mxu0 %v5920
        %6050 = vmatprep.subr.bf16.mxu0 %v5923
        %6051 = vmatpush1.bf16.msra.mxu0 %v5922
        %6052 = vmatprep.subr.bf16.mxu0 %v5925
        %6053 = vmatpush1.bf16.msra.mxu0 %v5924
        %6054 = vmatprep.subr.bf16.mxu0 %v5927
        %6055 = vmatpush1.bf16.msra.mxu0 %v5926
        %6056 = vmatprep.subr.bf16.mxu0 %v5929
        %6057 = vmatpush1.bf16.msra.mxu0 %v5928
        %6058 = vmatprep.subr.bf16.mxu0 %v5931
        %6059 = vmatpush1.bf16.msra.mxu0 %v5930
        %6060 = vmatprep.subr.bf16.mxu0 %v5933
        %6061 = vmatpush1.bf16.msra.mxu0 %v5932
        %6062 = vmatprep.subr.bf16.mxu0 %v5935
        %6063 = vmatpush1.bf16.msra.mxu0 %v5934
        %6064 = vmatprep.subr.bf16.mxu0 %v5937
        %6065 = vmatpush1.bf16.msra.mxu0 %v5936
        %6066 = vmatprep.subr.bf16.mxu0 %v5939
        %6067 = vmatpush1.bf16.msra.mxu0 %v5938
        %6068 = vmatprep.subr.bf16.mxu0 %v5941
        %6069 = vmatpush1.bf16.msra.mxu0 %v5940
        %6070 = vmatprep.subr.bf16.mxu0 %v5943
        %6071 = vmatpush1.bf16.msra.mxu0 %v5942
        %6072 = vmatprep.subr.bf16.mxu0 %v5945
        %6073 = vmatpush1.bf16.msra.mxu0 %v5944
        %6074 = vmatprep.subr.bf16.mxu0 %v5947
        %6075 = vmatpush1.bf16.msra.mxu0 %v5946
        %6076 = vmatprep.mubr.bf16.mxu0 %v5645
        %6077 = vmatmul.mubr.bf16.gmra.mrb[0].mxu0 %v5644
        %v6078 = vpop.f32.mrb[0].mxu0
        %v6079 = vadd.f32 %v5717, %v6078
        %v6080 = vpop.f32.mrb[0].mxu0
        %v6081 = vadd.f32 %v5721, %v6080
        %v6082 = vpop.f32.mrb[0].mxu0
        %v6083 = vpop.f32.mrb[0].mxu0
        %6084 = vdwg.mxu0
        %6085 = vmatprep.subr.bf16.mxu0 %v5949
        %6086 = vmatpush1.bf16.msra.mxu0 %v5948
        %6087 = vmatprep.subr.bf16.mxu0 %v5951
        %6088 = vmatpush1.bf16.msra.mxu0 %v5950
        %6089 = vmatprep.subr.bf16.mxu0 %v5953
        %6090 = vmatpush1.bf16.msra.mxu0 %v5952
        %6091 = vmatprep.subr.bf16.mxu0 %v5955
        %6092 = vmatpush1.bf16.msra.mxu0 %v5954
        %6093 = vmatprep.subr.bf16.mxu0 %v5957
        %6094 = vmatpush1.bf16.msra.mxu0 %v5956
        %6095 = vmatprep.subr.bf16.mxu0 %v5959
        %6096 = vmatpush1.bf16.msra.mxu0 %v5958
        %6097 = vmatprep.subr.bf16.mxu0 %v5961
        %6098 = vmatpush1.bf16.msra.mxu0 %v5960
        %6099 = vmatprep.subr.bf16.mxu0 %v5963
        %6100 = vmatpush1.bf16.msra.mxu0 %v5962
        %6101 = vmatprep.subr.bf16.mxu0 %v5965
        %6102 = vmatpush1.bf16.msra.mxu0 %v5964
        %6103 = vmatprep.subr.bf16.mxu0 %v5967
        %6104 = vmatpush1.bf16.msra.mxu0 %v5966
        %6105 = vmatprep.subr.bf16.mxu0 %v5969
        %6106 = vmatpush1.bf16.msra.mxu0 %v5968
        %6107 = vmatprep.subr.bf16.mxu0 %v5971
        %6108 = vmatpush1.bf16.msra.mxu0 %v5970
        %6109 = vmatprep.subr.bf16.mxu0 %v5973
        %6110 = vmatpush1.bf16.msra.mxu0 %v5972
        %6111 = vmatprep.subr.bf16.mxu0 %v5975
        %6112 = vmatpush1.bf16.msra.mxu0 %v5974
        %6113 = vmatprep.subr.bf16.mxu0 %v5977
        %6114 = vmatpush1.bf16.msra.mxu0 %v5976
        %6115 = vmatprep.subr.bf16.mxu0 %v5979
        %6116 = vmatpush1.bf16.msra.mxu0 %v5978
        %6117 = vmatprep.mubr.bf16.mxu0 %v5647
        %6118 = vmatmul.mubr.bf16.gmra.mrb[0].mxu0 %v5646
        %v6119 = vpop.f32.mrb[0].mxu0
        %v6120 = vadd.f32 %v6079, %v6119
        %v6121 = vpop.f32.mrb[0].mxu0
        %v6122 = vadd.f32 %v6081, %v6121
        %v6123 = vpop.f32.mrb[0].mxu0
        %v6124 = vpop.f32.mrb[0].mxu0
        %6125 = vdwg.mxu0
        %v6126 = vmax.f32 %v6120, 0.0
        %v6127 = vmax.f32 %v6122, 0.0
        %v6128 = vpack.c.bf16 %v6126, %v6126
        %v6129 = vpack.c.bf16 %v6127, %v6127
        %v6130 = vld [vmem:[#allocation11] sm:$0xf]
        %v6131 = vld [vmem:[#allocation11 + $0x4] sm:$0xf]
        %v6132 = vld [vmem:[#allocation11 + $0x8] sm:$0xf]
        %v6133 = vld [vmem:[#allocation11 + $0xc] sm:$0xf]
        %v6134 = vld [vmem:[#allocation11 + $0x10] sm:$0xf]
        %v6135 = vld [vmem:[#allocation11 + $0x14] sm:$0xf]
        %v6136 = vld [vmem:[#allocation11 + $0x18] sm:$0xf]
        %v6137 = vld [vmem:[#allocation11 + $0x1c] sm:$0xf]
        %v6138 = vld [vmem:[#allocation11 + $0x20] sm:$0xf]
        %v6139 = vld [vmem:[#allocation11 + $0x24] sm:$0xf]
        %v6140 = vld [vmem:[#allocation11 + $0x28] sm:$0xf]
        %v6141 = vld [vmem:[#allocation11 + $0x2c] sm:$0xf]
        %v6142 = vld [vmem:[#allocation11 + $0x30] sm:$0xf]
        %v6143 = vld [vmem:[#allocation11 + $0x34] sm:$0xf]
        %v6144 = vld [vmem:[#allocation11 + $0x38] sm:$0xf]
        %v6145 = vld [vmem:[#allocation11 + $0x3c] sm:$0xf]
        %v6146 = vld [vmem:[#allocation11 + $0x40] sm:$0xf]
        %v6147 = vld [vmem:[#allocation11 + $0x44] sm:$0xf]
        %v6148 = vld [vmem:[#allocation11 + $0x48] sm:$0xf]
        %v6149 = vld [vmem:[#allocation11 + $0x4c] sm:$0xf]
        %v6150 = vld [vmem:[#allocation11 + $0x50] sm:$0xf]
        %v6151 = vld [vmem:[#allocation11 + $0x54] sm:$0xf]
        %v6152 = vld [vmem:[#allocation11 + $0x58] sm:$0xf]
        %v6153 = vld [vmem:[#allocation11 + $0x5c] sm:$0xf]
        %v6154 = vld [vmem:[#allocation11 + $0x60] sm:$0xf]
        %v6155 = vld [vmem:[#allocation11 + $0x64] sm:$0xf]
        %v6156 = vld [vmem:[#allocation11 + $0x68] sm:$0xf]
        %v6157 = vld [vmem:[#allocation11 + $0x6c] sm:$0xf]
        %v6158 = vld [vmem:[#allocation11 + $0x70] sm:$0xf]
        %v6159 = vld [vmem:[#allocation11 + $0x74] sm:$0xf]
        %v6160 = vld [vmem:[#allocation11 + $0x78] sm:$0xf]
        %v6161 = vld [vmem:[#allocation11 + $0x7c] sm:$0xf]
        %v6162 = vld [vmem:[#allocation13] sm:$0x1]
        %v6164 = vlaneseq
        %v6165 = vshrl.u32 %v6164, 7
        %v6166 = vsub.s32 0, %v6165
        %v6167 = vrot.slane %v6162, %v6166
        %v6201 = vunpack.c.l.b16 %v6130
        %v6202 = vunpack.c.l.b16 %v6131
        %v6203 = vunpack.c.l.b16 %v6132
        %v6204 = vunpack.c.l.b16 %v6133
        %v6205 = vunpack.c.l.b16 %v6134
        %v6206 = vunpack.c.l.b16 %v6135
        %v6207 = vunpack.c.l.b16 %v6136
        %v6208 = vunpack.c.l.b16 %v6137
        %v6209 = vunpack.c.l.b16 %v6138
        %v6210 = vunpack.c.l.b16 %v6139
        %v6211 = vunpack.c.l.b16 %v6140
        %v6212 = vunpack.c.l.b16 %v6141
        %v6213 = vunpack.c.l.b16 %v6142
        %v6214 = vunpack.c.l.b16 %v6143
        %v6215 = vunpack.c.l.b16 %v6144
        %v6216 = vunpack.c.l.b16 %v6145
        %v6217 = vunpack.c.l.b16 %v6146
        %v6218 = vunpack.c.l.b16 %v6147
        %v6219 = vunpack.c.l.b16 %v6148
        %v6220 = vunpack.c.l.b16 %v6149
        %v6221 = vunpack.c.l.b16 %v6150
        %v6222 = vunpack.c.l.b16 %v6151
        %v6223 = vunpack.c.l.b16 %v6152
        %v6224 = vunpack.c.l.b16 %v6153
        %v6225 = vunpack.c.l.b16 %v6154
        %v6226 = vunpack.c.l.b16 %v6155
        %v6227 = vunpack.c.l.b16 %v6156
        %v6228 = vunpack.c.l.b16 %v6157
        %v6229 = vunpack.c.l.b16 %v6158
        %v6230 = vunpack.c.l.b16 %v6159
        %v6231 = vunpack.c.l.b16 %v6160
        %v6232 = vunpack.c.l.b16 %v6161
        %v6233 = vpack.c.b16 %v6202, %v6201
        %v6234 = vpack.c.b16 %v6204, %v6203
        %v6235 = vpack.c.b16 %v6206, %v6205
        %v6236 = vpack.c.b16 %v6208, %v6207
        %v6237 = vpack.c.b16 %v6210, %v6209
        %v6238 = vpack.c.b16 %v6212, %v6211
        %v6239 = vpack.c.b16 %v6214, %v6213
        %v6240 = vpack.c.b16 %v6216, %v6215
        %v6241 = vpack.c.b16 %v6218, %v6217
        %v6242 = vpack.c.b16 %v6220, %v6219
        %v6243 = vpack.c.b16 %v6222, %v6221
        %v6244 = vpack.c.b16 %v6224, %v6223
        %v6245 = vpack.c.b16 %v6226, %v6225
        %v6246 = vpack.c.b16 %v6228, %v6227
        %v6247 = vpack.c.b16 %v6230, %v6229
        %v6248 = vpack.c.b16 %v6232, %v6231
        %6265 = vmatprep.subr.bf16.mxu0 0
        %6266 = vmatpush1.bf16.msra.mxu0 %v6233
        %6267 = vmatprep.subr.bf16.mxu0 0
        %6268 = vmatpush1.bf16.msra.mxu0 %v6234
        %6269 = vmatprep.subr.bf16.mxu0 0
        %6270 = vmatpush1.bf16.msra.mxu0 %v6235
        %6271 = vmatprep.subr.bf16.mxu0 0
        %6272 = vmatpush1.bf16.msra.mxu0 %v6236
        %6273 = vmatprep.subr.bf16.mxu0 0
        %6274 = vmatpush1.bf16.msra.mxu0 %v6237
        %6275 = vmatprep.subr.bf16.mxu0 0
        %6276 = vmatpush1.bf16.msra.mxu0 %v6238
        %6277 = vmatprep.subr.bf16.mxu0 0
        %6278 = vmatpush1.bf16.msra.mxu0 %v6239
        %6279 = vmatprep.subr.bf16.mxu0 0
        %6280 = vmatpush1.bf16.msra.mxu0 %v6240
        %6281 = vmatprep.subr.bf16.mxu0 0
        %6282 = vmatpush1.bf16.msra.mxu0 %v6241
        %6283 = vmatprep.subr.bf16.mxu0 0
        %6284 = vmatpush1.bf16.msra.mxu0 %v6242
        %6285 = vmatprep.subr.bf16.mxu0 0
        %6286 = vmatpush1.bf16.msra.mxu0 %v6243
        %6287 = vmatprep.subr.bf16.mxu0 0
        %6288 = vmatpush1.bf16.msra.mxu0 %v6244
        %6289 = vmatprep.subr.bf16.mxu0 0
        %6290 = vmatpush1.bf16.msra.mxu0 %v6245
        %6291 = vmatprep.subr.bf16.mxu0 0
        %6292 = vmatpush1.bf16.msra.mxu0 %v6246
        %6293 = vmatprep.subr.bf16.mxu0 0
        %6294 = vmatpush1.bf16.msra.mxu0 %v6247
        %6295 = vmatprep.subr.bf16.mxu0 0
        %6296 = vmatpush1.bf16.msra.mxu0 %v6248
        %6297 = vmatprep.mubr.bf16.mxu0 %v6129
        %6298 = vmatmul.mubr.bf16.gmra.mrb[0].mxu0 %v6128
        %v6299 = vpop.f32.mrb[0].mxu0
        %v6300 = vadd.f32 %v6167, %v6299
        %v6301 = vpop.f32.mrb[0].mxu0
        %v6302 = vpop.f32.mrb[0].mxu0
        %v6303 = vpop.f32.mrb[0].mxu0
        %6304 = vdwg.mxu0
        %6305 = vst [vmem:[%s905] sm:$0x3] %v6300
        %v6306 = vld [vmem:[#allocation14] sm:$0x1]
        %6308 = vset.pattern.permute.xlu0 0
        %6309 = vperm.xlu0 %6308, %v6300
        %v6310 = vpop.permute.xlu0 %6309
        %v6312 = vlaneseq
        %v6313 = vshrl.u32 %v6312, 7
        %v6314 = vsub.s32 0, %v6313
        %v6315 = vrot.slane %v6306, %v6314
        %v6316 = vmul.f32 %v6310, %v6315
        %v6317 = vld [vmem:[#allocation14 + $0x1] sm:$0x1]
        %6318 = vset.pattern.permute.xlu0 1
        %6319 = vperm.xlu0 %6318, %v6300
        %v6320 = vpop.permute.xlu0 %6319
        %v6322 = vlaneseq
        %v6323 = vshrl.u32 %v6322, 7
        %v6324 = vsub.s32 0, %v6323
        %v6325 = vrot.slane %v6317, %v6324
        %v6326 = vmul.f32 %v6320, %v6325
        %v6327 = vadd.f32 %v6316, %v6326
        %v6328 = vld [vmem:[#allocation14 + $0x2] sm:$0x1]
        %6329 = vset.pattern.permute.xlu0 2
        %6330 = vperm.xlu0 %6329, %v6300
        %v6331 = vpop.permute.xlu0 %6330
        %v6333 = vlaneseq
        %v6334 = vshrl.u32 %v6333, 7
        %v6335 = vsub.s32 0, %v6334
        %v6336 = vrot.slane %v6328, %v6335
        %v6337 = vmul.f32 %v6331, %v6336
        %v6338 = vadd.f32 %v6327, %v6337
        %6339 = vset.pattern.permute.xlu0 3
        %6340 = vperm.xlu0 %6339, %v6300
        %v6341 = vpop.permute.xlu0 %6340
        %v6343 = vmul.f32 %v6341, %v6315
        %6344 = vset.pattern.permute.xlu0 4
        %6345 = vperm.xlu0 %6344, %v6300
        %v6346 = vpop.permute.xlu0 %6345
        %v6348 = vmul.f32 %v6346, %v6325
        %v6349 = vadd.f32 %v6343, %v6348
        %6350 = vset.pattern.permute.xlu0 5
        %6351 = vperm.xlu0 %6350, %v6300
        %v6352 = vpop.permute.xlu0 %6351
        %v6354 = vmul.f32 %v6352, %v6336
        %v6355 = vadd.f32 %v6349, %v6354
        %6356 = vset.pattern.permute.xlu0 6
        %6357 = vperm.xlu0 %6356, %v6300
        %v6358 = vpop.permute.xlu0 %6357
        %v6360 = vmul.f32 %v6358, %v6315
        %6361 = vset.pattern.permute.xlu0 7
        %6362 = vperm.xlu0 %6361, %v6300
        %v6363 = vpop.permute.xlu0 %6362
        %v6365 = vmul.f32 %v6363, %v6325
        %v6366 = vadd.f32 %v6360, %v6365
        %6367 = vset.pattern.permute.xlu0 8
        %6368 = vperm.xlu0 %6367, %v6300
        %v6369 = vpop.permute.xlu0 %6368
        %v6371 = vmul.f32 %v6369, %v6336
        %v6372 = vadd.f32 %v6366, %v6371
        loop: start=0, step=1, limit=2
        $region168: #{tpu_custom_call.1} parent=111 // loop_pre_header
          _
        $region169: #{tpu_custom_call.1} parent=111 // loop_header
          %s6374 = sphi 0, %s6378
          %p6375 = scmp.ge.s32.totalorder %s6374, 2
          %v6379 = vphi -inf, %v9542
          %v6380 = vphi -inf, %v9543
          %v6381 = vphi -inf, %v9544
          %v6382 = vphi -inf, %v9545
          %v6383 = vphi -inf, %v9546
          %v6384 = vphi -inf, %v9547
          %v6385 = vphi -inf, %v9548
          %v6386 = vphi -inf, %v9549
        $region170: #{tpu_custom_call.1} parent=111 // loop_header_branch
          %6377 = sbr.rel (%p6375) target = $region174
        $region171: #{tpu_custom_call.1} parent=111 // loop_body
          %s6387 = smul.u32 %s6374, 128
          %s6388 = scalar_lea.vmem %s911, %s6387
          %v6389 = vld [vmem:[%s6388] sm:$0xff]
          %v6390 = vld [vmem:[%s6388 + $0x8] sm:$0xff]
          %v6391 = vld [vmem:[%s6388 + $0x10] sm:$0xff]
          %v6392 = vld [vmem:[%s6388 + $0x18] sm:$0xff]
          %v6393 = vld [vmem:[%s6388 + $0x20] sm:$0xff]
          %v6394 = vld [vmem:[%s6388 + $0x28] sm:$0xff]
          %v6395 = vld [vmem:[%s6388 + $0x30] sm:$0xff]
          %v6396 = vld [vmem:[%s6388 + $0x38] sm:$0xff]
          %v6397 = vld [vmem:[%s6388 + $0x40] sm:$0xff]
          %v6398 = vld [vmem:[%s6388 + $0x48] sm:$0xff]
          %v6399 = vld [vmem:[%s6388 + $0x50] sm:$0xff]
          %v6400 = vld [vmem:[%s6388 + $0x58] sm:$0xff]
          %v6401 = vld [vmem:[%s6388 + $0x60] sm:$0xff]
          %v6402 = vld [vmem:[%s6388 + $0x68] sm:$0xff]
          %v6403 = vld [vmem:[%s6388 + $0x70] sm:$0xff]
          %v6404 = vld [vmem:[%s6388 + $0x78] sm:$0xff]
          %6406 = vset.pattern.permute.xlu0 0
          %6407 = vperm.xlu0 %6406, %v6389
          %v6408 = vpop.permute.xlu0 %6407
          %6411 = vset.pattern.permute.xlu0 0
          %6412 = vperm.xlu0 %6411, %v6390
          %v6413 = vpop.permute.xlu0 %6412
          %6416 = vset.pattern.permute.xlu0 0
          %6417 = vperm.xlu0 %6416, %v6391
          %v6418 = vpop.permute.xlu0 %6417
          %6421 = vset.pattern.permute.xlu0 0
          %6422 = vperm.xlu0 %6421, %v6392
          %v6423 = vpop.permute.xlu0 %6422
          %6426 = vset.pattern.permute.xlu0 0
          %6427 = vperm.xlu0 %6426, %v6393
          %v6428 = vpop.permute.xlu0 %6427
          %6431 = vset.pattern.permute.xlu0 0
          %6432 = vperm.xlu0 %6431, %v6394
          %v6433 = vpop.permute.xlu0 %6432
          %6436 = vset.pattern.permute.xlu0 0
          %6437 = vperm.xlu0 %6436, %v6395
          %v6438 = vpop.permute.xlu0 %6437
          %6441 = vset.pattern.permute.xlu0 0
          %6442 = vperm.xlu0 %6441, %v6396
          %v6443 = vpop.permute.xlu0 %6442
          %6446 = vset.pattern.permute.xlu0 0
          %6447 = vperm.xlu0 %6446, %v6397
          %v6448 = vpop.permute.xlu0 %6447
          %6451 = vset.pattern.permute.xlu0 0
          %6452 = vperm.xlu0 %6451, %v6398
          %v6453 = vpop.permute.xlu0 %6452
          %6456 = vset.pattern.permute.xlu0 0
          %6457 = vperm.xlu0 %6456, %v6399
          %v6458 = vpop.permute.xlu0 %6457
          %6461 = vset.pattern.permute.xlu0 0
          %6462 = vperm.xlu0 %6461, %v6400
          %v6463 = vpop.permute.xlu0 %6462
          %6466 = vset.pattern.permute.xlu0 0
          %6467 = vperm.xlu0 %6466, %v6401
          %v6468 = vpop.permute.xlu0 %6467
          %6471 = vset.pattern.permute.xlu0 0
          %6472 = vperm.xlu0 %6471, %v6402
          %v6473 = vpop.permute.xlu0 %6472
          %6476 = vset.pattern.permute.xlu0 0
          %6477 = vperm.xlu0 %6476, %v6403
          %v6478 = vpop.permute.xlu0 %6477
          %6481 = vset.pattern.permute.xlu0 0
          %6482 = vperm.xlu0 %6481, %v6404
          %v6483 = vpop.permute.xlu0 %6482
          %v6485 = vlaneseq
          %v6486 = vshrl.u32 %v6485, 7
          %v6487 = vsub.s32 0, %v6486
          %v6488 = vrot.slane %v6338, %v6487
          %v6489 = vmul.f32 %v6408, %v6488
          %v6490 = vmul.f32 %v6413, %v6488
          %v6491 = vmul.f32 %v6418, %v6488
          %v6492 = vmul.f32 %v6423, %v6488
          %v6493 = vmul.f32 %v6428, %v6488
          %v6494 = vmul.f32 %v6433, %v6488
          %v6495 = vmul.f32 %v6438, %v6488
          %v6496 = vmul.f32 %v6443, %v6488
          %v6497 = vmul.f32 %v6448, %v6488
          %v6498 = vmul.f32 %v6453, %v6488
          %v6499 = vmul.f32 %v6458, %v6488
          %v6500 = vmul.f32 %v6463, %v6488
          %v6501 = vmul.f32 %v6468, %v6488
          %v6502 = vmul.f32 %v6473, %v6488
          %v6503 = vmul.f32 %v6478, %v6488
          %v6504 = vmul.f32 %v6483, %v6488
          %6505 = vset.pattern.permute.xlu0 1
          %6506 = vperm.xlu0 %6505, %v6389
          %v6507 = vpop.permute.xlu0 %6506
          %6509 = vset.pattern.permute.xlu0 1
          %6510 = vperm.xlu0 %6509, %v6390
          %v6511 = vpop.permute.xlu0 %6510
          %6513 = vset.pattern.permute.xlu0 1
          %6514 = vperm.xlu0 %6513, %v6391
          %v6515 = vpop.permute.xlu0 %6514
          %6517 = vset.pattern.permute.xlu0 1
          %6518 = vperm.xlu0 %6517, %v6392
          %v6519 = vpop.permute.xlu0 %6518
          %6521 = vset.pattern.permute.xlu0 1
          %6522 = vperm.xlu0 %6521, %v6393
          %v6523 = vpop.permute.xlu0 %6522
          %6525 = vset.pattern.permute.xlu0 1
          %6526 = vperm.xlu0 %6525, %v6394
          %v6527 = vpop.permute.xlu0 %6526
          %6529 = vset.pattern.permute.xlu0 1
          %6530 = vperm.xlu0 %6529, %v6395
          %v6531 = vpop.permute.xlu0 %6530
          %6533 = vset.pattern.permute.xlu0 1
          %6534 = vperm.xlu0 %6533, %v6396
          %v6535 = vpop.permute.xlu0 %6534
          %6537 = vset.pattern.permute.xlu0 1
          %6538 = vperm.xlu0 %6537, %v6397
          %v6539 = vpop.permute.xlu0 %6538
          %6541 = vset.pattern.permute.xlu0 1
          %6542 = vperm.xlu0 %6541, %v6398
          %v6543 = vpop.permute.xlu0 %6542
          %6545 = vset.pattern.permute.xlu0 1
          %6546 = vperm.xlu0 %6545, %v6399
          %v6547 = vpop.permute.xlu0 %6546
          %6549 = vset.pattern.permute.xlu0 1
          %6550 = vperm.xlu0 %6549, %v6400
          %v6551 = vpop.permute.xlu0 %6550
          %6553 = vset.pattern.permute.xlu0 1
          %6554 = vperm.xlu0 %6553, %v6401
          %v6555 = vpop.permute.xlu0 %6554
          %6557 = vset.pattern.permute.xlu0 1
          %6558 = vperm.xlu0 %6557, %v6402
          %v6559 = vpop.permute.xlu0 %6558
          %6561 = vset.pattern.permute.xlu0 1
          %6562 = vperm.xlu0 %6561, %v6403
          %v6563 = vpop.permute.xlu0 %6562
          %6565 = vset.pattern.permute.xlu0 1
          %6566 = vperm.xlu0 %6565, %v6404
          %v6567 = vpop.permute.xlu0 %6566
          %v6569 = vlaneseq
          %v6570 = vshrl.u32 %v6569, 7
          %v6571 = vsub.s32 0, %v6570
          %v6572 = vrot.slane %v6355, %v6571
          %v6573 = vmul.f32 %v6507, %v6572
          %v6574 = vmul.f32 %v6511, %v6572
          %v6575 = vmul.f32 %v6515, %v6572
          %v6576 = vmul.f32 %v6519, %v6572
          %v6577 = vmul.f32 %v6523, %v6572
          %v6578 = vmul.f32 %v6527, %v6572
          %v6579 = vmul.f32 %v6531, %v6572
          %v6580 = vmul.f32 %v6535, %v6572
          %v6581 = vmul.f32 %v6539, %v6572
          %v6582 = vmul.f32 %v6543, %v6572
          %v6583 = vmul.f32 %v6547, %v6572
          %v6584 = vmul.f32 %v6551, %v6572
          %v6585 = vmul.f32 %v6555, %v6572
          %v6586 = vmul.f32 %v6559, %v6572
          %v6587 = vmul.f32 %v6563, %v6572
          %v6588 = vmul.f32 %v6567, %v6572
          %v6589 = vadd.f32 %v6489, %v6573
          %v6590 = vadd.f32 %v6490, %v6574
          %v6591 = vadd.f32 %v6491, %v6575
          %v6592 = vadd.f32 %v6492, %v6576
          %v6593 = vadd.f32 %v6493, %v6577
          %v6594 = vadd.f32 %v6494, %v6578
          %v6595 = vadd.f32 %v6495, %v6579
          %v6596 = vadd.f32 %v6496, %v6580
          %v6597 = vadd.f32 %v6497, %v6581
          %v6598 = vadd.f32 %v6498, %v6582
          %v6599 = vadd.f32 %v6499, %v6583
          %v6600 = vadd.f32 %v6500, %v6584
          %v6601 = vadd.f32 %v6501, %v6585
          %v6602 = vadd.f32 %v6502, %v6586
          %v6603 = vadd.f32 %v6503, %v6587
          %v6604 = vadd.f32 %v6504, %v6588
          %6605 = vset.pattern.permute.xlu0 2
          %6606 = vperm.xlu0 %6605, %v6389
          %v6607 = vpop.permute.xlu0 %6606
          %6609 = vset.pattern.permute.xlu0 2
          %6610 = vperm.xlu0 %6609, %v6390
          %v6611 = vpop.permute.xlu0 %6610
          %6613 = vset.pattern.permute.xlu0 2
          %6614 = vperm.xlu0 %6613, %v6391
          %v6615 = vpop.permute.xlu0 %6614
          %6617 = vset.pattern.permute.xlu0 2
          %6618 = vperm.xlu0 %6617, %v6392
          %v6619 = vpop.permute.xlu0 %6618
          %6621 = vset.pattern.permute.xlu0 2
          %6622 = vperm.xlu0 %6621, %v6393
          %v6623 = vpop.permute.xlu0 %6622
          %6625 = vset.pattern.permute.xlu0 2
          %6626 = vperm.xlu0 %6625, %v6394
          %v6627 = vpop.permute.xlu0 %6626
          %6629 = vset.pattern.permute.xlu0 2
          %6630 = vperm.xlu0 %6629, %v6395
          %v6631 = vpop.permute.xlu0 %6630
          %6633 = vset.pattern.permute.xlu0 2
          %6634 = vperm.xlu0 %6633, %v6396
          %v6635 = vpop.permute.xlu0 %6634
          %6637 = vset.pattern.permute.xlu0 2
          %6638 = vperm.xlu0 %6637, %v6397
          %v6639 = vpop.permute.xlu0 %6638
          %6641 = vset.pattern.permute.xlu0 2
          %6642 = vperm.xlu0 %6641, %v6398
          %v6643 = vpop.permute.xlu0 %6642
          %6645 = vset.pattern.permute.xlu0 2
          %6646 = vperm.xlu0 %6645, %v6399
          %v6647 = vpop.permute.xlu0 %6646
          %6649 = vset.pattern.permute.xlu0 2
          %6650 = vperm.xlu0 %6649, %v6400
          %v6651 = vpop.permute.xlu0 %6650
          %6653 = vset.pattern.permute.xlu0 2
          %6654 = vperm.xlu0 %6653, %v6401
          %v6655 = vpop.permute.xlu0 %6654
          %6657 = vset.pattern.permute.xlu0 2
          %6658 = vperm.xlu0 %6657, %v6402
          %v6659 = vpop.permute.xlu0 %6658
          %6661 = vset.pattern.permute.xlu0 2
          %6662 = vperm.xlu0 %6661, %v6403
          %v6663 = vpop.permute.xlu0 %6662
          %6665 = vset.pattern.permute.xlu0 2
          %6666 = vperm.xlu0 %6665, %v6404
          %v6667 = vpop.permute.xlu0 %6666
          %v6669 = vlaneseq
          %v6670 = vshrl.u32 %v6669, 7
          %v6671 = vsub.s32 0, %v6670
          %v6672 = vrot.slane %v6372, %v6671
          %v6673 = vmul.f32 %v6607, %v6672
          %v6674 = vmul.f32 %v6611, %v6672
          %v6675 = vmul.f32 %v6615, %v6672
          %v6676 = vmul.f32 %v6619, %v6672
          %v6677 = vmul.f32 %v6623, %v6672
          %v6678 = vmul.f32 %v6627, %v6672
          %v6679 = vmul.f32 %v6631, %v6672
          %v6680 = vmul.f32 %v6635, %v6672
          %v6681 = vmul.f32 %v6639, %v6672
          %v6682 = vmul.f32 %v6643, %v6672
          %v6683 = vmul.f32 %v6647, %v6672
          %v6684 = vmul.f32 %v6651, %v6672
          %v6685 = vmul.f32 %v6655, %v6672
          %v6686 = vmul.f32 %v6659, %v6672
          %v6687 = vmul.f32 %v6663, %v6672
          %v6688 = vmul.f32 %v6667, %v6672
          %v6689 = vadd.f32 %v6589, %v6673
          %v6690 = vadd.f32 %v6590, %v6674
          %v6691 = vadd.f32 %v6591, %v6675
          %v6692 = vadd.f32 %v6592, %v6676
          %v6693 = vadd.f32 %v6593, %v6677
          %v6694 = vadd.f32 %v6594, %v6678
          %v6695 = vadd.f32 %v6595, %v6679
          %v6696 = vadd.f32 %v6596, %v6680
          %v6697 = vadd.f32 %v6597, %v6681
          %v6698 = vadd.f32 %v6598, %v6682
          %v6699 = vadd.f32 %v6599, %v6683
          %v6700 = vadd.f32 %v6600, %v6684
          %v6701 = vadd.f32 %v6601, %v6685
          %v6702 = vadd.f32 %v6602, %v6686
          %v6703 = vadd.f32 %v6603, %v6687
          %v6704 = vadd.f32 %v6604, %v6688
          %s6705 = sadd.s32 %s6387, 256
          %s6706 = scalar_lea.vmem %s911, %s6705
          %v6707 = vld [vmem:[%s6706] sm:$0xff]
          %v6708 = vld [vmem:[%s6706 + $0x8] sm:$0xff]
          %v6709 = vld [vmem:[%s6706 + $0x10] sm:$0xff]
          %v6710 = vld [vmem:[%s6706 + $0x18] sm:$0xff]
          %v6711 = vld [vmem:[%s6706 + $0x20] sm:$0xff]
          %v6712 = vld [vmem:[%s6706 + $0x28] sm:$0xff]
          %v6713 = vld [vmem:[%s6706 + $0x30] sm:$0xff]
          %v6714 = vld [vmem:[%s6706 + $0x38] sm:$0xff]
          %v6715 = vld [vmem:[%s6706 + $0x40] sm:$0xff]
          %v6716 = vld [vmem:[%s6706 + $0x48] sm:$0xff]
          %v6717 = vld [vmem:[%s6706 + $0x50] sm:$0xff]
          %v6718 = vld [vmem:[%s6706 + $0x58] sm:$0xff]
          %v6719 = vld [vmem:[%s6706 + $0x60] sm:$0xff]
          %v6720 = vld [vmem:[%s6706 + $0x68] sm:$0xff]
          %v6721 = vld [vmem:[%s6706 + $0x70] sm:$0xff]
          %v6722 = vld [vmem:[%s6706 + $0x78] sm:$0xff]
          %6724 = vset.pattern.permute.xlu0 0
          %6725 = vperm.xlu0 %6724, %v6707
          %v6726 = vpop.permute.xlu0 %6725
          %6729 = vset.pattern.permute.xlu0 0
          %6730 = vperm.xlu0 %6729, %v6708
          %v6731 = vpop.permute.xlu0 %6730
          %6734 = vset.pattern.permute.xlu0 0
          %6735 = vperm.xlu0 %6734, %v6709
          %v6736 = vpop.permute.xlu0 %6735
          %6739 = vset.pattern.permute.xlu0 0
          %6740 = vperm.xlu0 %6739, %v6710
          %v6741 = vpop.permute.xlu0 %6740
          %6744 = vset.pattern.permute.xlu0 0
          %6745 = vperm.xlu0 %6744, %v6711
          %v6746 = vpop.permute.xlu0 %6745
          %6749 = vset.pattern.permute.xlu0 0
          %6750 = vperm.xlu0 %6749, %v6712
          %v6751 = vpop.permute.xlu0 %6750
          %6754 = vset.pattern.permute.xlu0 0
          %6755 = vperm.xlu0 %6754, %v6713
          %v6756 = vpop.permute.xlu0 %6755
          %6759 = vset.pattern.permute.xlu0 0
          %6760 = vperm.xlu0 %6759, %v6714
          %v6761 = vpop.permute.xlu0 %6760
          %6764 = vset.pattern.permute.xlu0 0
          %6765 = vperm.xlu0 %6764, %v6715
          %v6766 = vpop.permute.xlu0 %6765
          %6769 = vset.pattern.permute.xlu0 0
          %6770 = vperm.xlu0 %6769, %v6716
          %v6771 = vpop.permute.xlu0 %6770
          %6774 = vset.pattern.permute.xlu0 0
          %6775 = vperm.xlu0 %6774, %v6717
          %v6776 = vpop.permute.xlu0 %6775
          %6779 = vset.pattern.permute.xlu0 0
          %6780 = vperm.xlu0 %6779, %v6718
          %v6781 = vpop.permute.xlu0 %6780
          %6784 = vset.pattern.permute.xlu0 0
          %6785 = vperm.xlu0 %6784, %v6719
          %v6786 = vpop.permute.xlu0 %6785
          %6789 = vset.pattern.permute.xlu0 0
          %6790 = vperm.xlu0 %6789, %v6720
          %v6791 = vpop.permute.xlu0 %6790
          %6794 = vset.pattern.permute.xlu0 0
          %6795 = vperm.xlu0 %6794, %v6721
          %v6796 = vpop.permute.xlu0 %6795
          %6799 = vset.pattern.permute.xlu0 0
          %6800 = vperm.xlu0 %6799, %v6722
          %v6801 = vpop.permute.xlu0 %6800
          %v6803 = vlaneseq
          %v6804 = vshrl.u32 %v6803, 7
          %v6805 = vsub.s32 1, %v6804
          %v6806 = vrot.slane %v6338, %v6805
          %v6807 = vmul.f32 %v6726, %v6806
          %v6808 = vmul.f32 %v6731, %v6806
          %v6809 = vmul.f32 %v6736, %v6806
          %v6810 = vmul.f32 %v6741, %v6806
          %v6811 = vmul.f32 %v6746, %v6806
          %v6812 = vmul.f32 %v6751, %v6806
          %v6813 = vmul.f32 %v6756, %v6806
          %v6814 = vmul.f32 %v6761, %v6806
          %v6815 = vmul.f32 %v6766, %v6806
          %v6816 = vmul.f32 %v6771, %v6806
          %v6817 = vmul.f32 %v6776, %v6806
          %v6818 = vmul.f32 %v6781, %v6806
          %v6819 = vmul.f32 %v6786, %v6806
          %v6820 = vmul.f32 %v6791, %v6806
          %v6821 = vmul.f32 %v6796, %v6806
          %v6822 = vmul.f32 %v6801, %v6806
          %6823 = vset.pattern.permute.xlu0 1
          %6824 = vperm.xlu0 %6823, %v6707
          %v6825 = vpop.permute.xlu0 %6824
          %6827 = vset.pattern.permute.xlu0 1
          %6828 = vperm.xlu0 %6827, %v6708
          %v6829 = vpop.permute.xlu0 %6828
          %6831 = vset.pattern.permute.xlu0 1
          %6832 = vperm.xlu0 %6831, %v6709
          %v6833 = vpop.permute.xlu0 %6832
          %6835 = vset.pattern.permute.xlu0 1
          %6836 = vperm.xlu0 %6835, %v6710
          %v6837 = vpop.permute.xlu0 %6836
          %6839 = vset.pattern.permute.xlu0 1
          %6840 = vperm.xlu0 %6839, %v6711
          %v6841 = vpop.permute.xlu0 %6840
          %6843 = vset.pattern.permute.xlu0 1
          %6844 = vperm.xlu0 %6843, %v6712
          %v6845 = vpop.permute.xlu0 %6844
          %6847 = vset.pattern.permute.xlu0 1
          %6848 = vperm.xlu0 %6847, %v6713
          %v6849 = vpop.permute.xlu0 %6848
          %6851 = vset.pattern.permute.xlu0 1
          %6852 = vperm.xlu0 %6851, %v6714
          %v6853 = vpop.permute.xlu0 %6852
          %6855 = vset.pattern.permute.xlu0 1
          %6856 = vperm.xlu0 %6855, %v6715
          %v6857 = vpop.permute.xlu0 %6856
          %6859 = vset.pattern.permute.xlu0 1
          %6860 = vperm.xlu0 %6859, %v6716
          %v6861 = vpop.permute.xlu0 %6860
          %6863 = vset.pattern.permute.xlu0 1
          %6864 = vperm.xlu0 %6863, %v6717
          %v6865 = vpop.permute.xlu0 %6864
          %6867 = vset.pattern.permute.xlu0 1
          %6868 = vperm.xlu0 %6867, %v6718
          %v6869 = vpop.permute.xlu0 %6868
          %6871 = vset.pattern.permute.xlu0 1
          %6872 = vperm.xlu0 %6871, %v6719
          %v6873 = vpop.permute.xlu0 %6872
          %6875 = vset.pattern.permute.xlu0 1
          %6876 = vperm.xlu0 %6875, %v6720
          %v6877 = vpop.permute.xlu0 %6876
          %6879 = vset.pattern.permute.xlu0 1
          %6880 = vperm.xlu0 %6879, %v6721
          %v6881 = vpop.permute.xlu0 %6880
          %6883 = vset.pattern.permute.xlu0 1
          %6884 = vperm.xlu0 %6883, %v6722
          %v6885 = vpop.permute.xlu0 %6884
          %v6887 = vlaneseq
          %v6888 = vshrl.u32 %v6887, 7
          %v6889 = vsub.s32 1, %v6888
          %v6890 = vrot.slane %v6355, %v6889
          %v6891 = vmul.f32 %v6825, %v6890
          %v6892 = vmul.f32 %v6829, %v6890
          %v6893 = vmul.f32 %v6833, %v6890
          %v6894 = vmul.f32 %v6837, %v6890
          %v6895 = vmul.f32 %v6841, %v6890
          %v6896 = vmul.f32 %v6845, %v6890
          %v6897 = vmul.f32 %v6849, %v6890
          %v6898 = vmul.f32 %v6853, %v6890
          %v6899 = vmul.f32 %v6857, %v6890
          %v6900 = vmul.f32 %v6861, %v6890
          %v6901 = vmul.f32 %v6865, %v6890
          %v6902 = vmul.f32 %v6869, %v6890
          %v6903 = vmul.f32 %v6873, %v6890
          %v6904 = vmul.f32 %v6877, %v6890
          %v6905 = vmul.f32 %v6881, %v6890
          %v6906 = vmul.f32 %v6885, %v6890
          %v6907 = vadd.f32 %v6807, %v6891
          %v6908 = vadd.f32 %v6808, %v6892
          %v6909 = vadd.f32 %v6809, %v6893
          %v6910 = vadd.f32 %v6810, %v6894
          %v6911 = vadd.f32 %v6811, %v6895
          %v6912 = vadd.f32 %v6812, %v6896
          %v6913 = vadd.f32 %v6813, %v6897
          %v6914 = vadd.f32 %v6814, %v6898
          %v6915 = vadd.f32 %v6815, %v6899
          %v6916 = vadd.f32 %v6816, %v6900
          %v6917 = vadd.f32 %v6817, %v6901
          %v6918 = vadd.f32 %v6818, %v6902
          %v6919 = vadd.f32 %v6819, %v6903
          %v6920 = vadd.f32 %v6820, %v6904
          %v6921 = vadd.f32 %v6821, %v6905
          %v6922 = vadd.f32 %v6822, %v6906
          %6923 = vset.pattern.permute.xlu0 2
          %6924 = vperm.xlu0 %6923, %v6707
          %v6925 = vpop.permute.xlu0 %6924
          %6927 = vset.pattern.permute.xlu0 2
          %6928 = vperm.xlu0 %6927, %v6708
          %v6929 = vpop.permute.xlu0 %6928
          %6931 = vset.pattern.permute.xlu0 2
          %6932 = vperm.xlu0 %6931, %v6709
          %v6933 = vpop.permute.xlu0 %6932
          %6935 = vset.pattern.permute.xlu0 2
          %6936 = vperm.xlu0 %6935, %v6710
          %v6937 = vpop.permute.xlu0 %6936
          %6939 = vset.pattern.permute.xlu0 2
          %6940 = vperm.xlu0 %6939, %v6711
          %v6941 = vpop.permute.xlu0 %6940
          %6943 = vset.pattern.permute.xlu0 2
          %6944 = vperm.xlu0 %6943, %v6712
          %v6945 = vpop.permute.xlu0 %6944
          %6947 = vset.pattern.permute.xlu0 2
          %6948 = vperm.xlu0 %6947, %v6713
          %v6949 = vpop.permute.xlu0 %6948
          %6951 = vset.pattern.permute.xlu0 2
          %6952 = vperm.xlu0 %6951, %v6714
          %v6953 = vpop.permute.xlu0 %6952
          %6955 = vset.pattern.permute.xlu0 2
          %6956 = vperm.xlu0 %6955, %v6715
          %v6957 = vpop.permute.xlu0 %6956
          %6959 = vset.pattern.permute.xlu0 2
          %6960 = vperm.xlu0 %6959, %v6716
          %v6961 = vpop.permute.xlu0 %6960
          %6963 = vset.pattern.permute.xlu0 2
          %6964 = vperm.xlu0 %6963, %v6717
          %v6965 = vpop.permute.xlu0 %6964
          %6967 = vset.pattern.permute.xlu0 2
          %6968 = vperm.xlu0 %6967, %v6718
          %v6969 = vpop.permute.xlu0 %6968
          %6971 = vset.pattern.permute.xlu0 2
          %6972 = vperm.xlu0 %6971, %v6719
          %v6973 = vpop.permute.xlu0 %6972
          %6975 = vset.pattern.permute.xlu0 2
          %6976 = vperm.xlu0 %6975, %v6720
          %v6977 = vpop.permute.xlu0 %6976
          %6979 = vset.pattern.permute.xlu0 2
          %6980 = vperm.xlu0 %6979, %v6721
          %v6981 = vpop.permute.xlu0 %6980
          %6983 = vset.pattern.permute.xlu0 2
          %6984 = vperm.xlu0 %6983, %v6722
          %v6985 = vpop.permute.xlu0 %6984
          %v6987 = vlaneseq
          %v6988 = vshrl.u32 %v6987, 7
          %v6989 = vsub.s32 1, %v6988
          %v6990 = vrot.slane %v6372, %v6989
          %v6991 = vmul.f32 %v6925, %v6990
          %v6992 = vmul.f32 %v6929, %v6990
          %v6993 = vmul.f32 %v6933, %v6990
          %v6994 = vmul.f32 %v6937, %v6990
          %v6995 = vmul.f32 %v6941, %v6990
          %v6996 = vmul.f32 %v6945, %v6990
          %v6997 = vmul.f32 %v6949, %v6990
          %v6998 = vmul.f32 %v6953, %v6990
          %v6999 = vmul.f32 %v6957, %v6990
          %v7000 = vmul.f32 %v6961, %v6990
          %v7001 = vmul.f32 %v6965, %v6990
          %v7002 = vmul.f32 %v6969, %v6990
          %v7003 = vmul.f32 %v6973, %v6990
          %v7004 = vmul.f32 %v6977, %v6990
          %v7005 = vmul.f32 %v6981, %v6990
          %v7006 = vmul.f32 %v6985, %v6990
          %v7007 = vadd.f32 %v6907, %v6991
          %v7008 = vadd.f32 %v6908, %v6992
          %v7009 = vadd.f32 %v6909, %v6993
          %v7010 = vadd.f32 %v6910, %v6994
          %v7011 = vadd.f32 %v6911, %v6995
          %v7012 = vadd.f32 %v6912, %v6996
          %v7013 = vadd.f32 %v6913, %v6997
          %v7014 = vadd.f32 %v6914, %v6998
          %v7015 = vadd.f32 %v6915, %v6999
          %v7016 = vadd.f32 %v6916, %v7000
          %v7017 = vadd.f32 %v6917, %v7001
          %v7018 = vadd.f32 %v6918, %v7002
          %v7019 = vadd.f32 %v6919, %v7003
          %v7020 = vadd.f32 %v6920, %v7004
          %v7021 = vadd.f32 %v6921, %v7005
          %v7022 = vadd.f32 %v6922, %v7006
          %v7023 = vld [vmem:[#allocation16] sm:$0x1]
          %v7025 = vlaneseq
          %v7026 = vshrl.u32 %v7025, 7
          %v7027 = vsub.s32 0, %v7026
          %v7028 = vrot.slane %v7023, %v7027
          %v7030 = vadd.f32 %v6689, %v7028
          %v7031 = vadd.f32 %v6690, %v7028
          %v7032 = vadd.f32 %v6691, %v7028
          %v7033 = vadd.f32 %v6692, %v7028
          %v7034 = vadd.f32 %v6693, %v7028
          %v7035 = vadd.f32 %v6694, %v7028
          %v7036 = vadd.f32 %v6695, %v7028
          %v7037 = vadd.f32 %v6696, %v7028
          %v7038 = vadd.f32 %v6697, %v7028
          %v7039 = vadd.f32 %v6698, %v7028
          %v7040 = vadd.f32 %v6699, %v7028
          %v7041 = vadd.f32 %v6700, %v7028
          %v7042 = vadd.f32 %v6701, %v7028
          %v7043 = vadd.f32 %v6702, %v7028
          %v7044 = vadd.f32 %v6703, %v7028
          %v7045 = vadd.f32 %v6704, %v7028
          %v7046 = vadd.f32 %v7007, %v7028
          %v7047 = vadd.f32 %v7008, %v7028
          %v7048 = vadd.f32 %v7009, %v7028
          %v7049 = vadd.f32 %v7010, %v7028
          %v7050 = vadd.f32 %v7011, %v7028
          %v7051 = vadd.f32 %v7012, %v7028
          %v7052 = vadd.f32 %v7013, %v7028
          %v7053 = vadd.f32 %v7014, %v7028
          %v7054 = vadd.f32 %v7015, %v7028
          %v7055 = vadd.f32 %v7016, %v7028
          %v7056 = vadd.f32 %v7017, %v7028
          %v7057 = vadd.f32 %v7018, %v7028
          %v7058 = vadd.f32 %v7019, %v7028
          %v7059 = vadd.f32 %v7020, %v7028
          %v7060 = vadd.f32 %v7021, %v7028
          %v7061 = vadd.f32 %v7022, %v7028
          %v7062 = vmax.f32 %v7030, 0.0
          %v7063 = vmax.f32 %v7031, 0.0
          %v7064 = vmax.f32 %v7032, 0.0
          %v7065 = vmax.f32 %v7033, 0.0
          %v7066 = vmax.f32 %v7034, 0.0
          %v7067 = vmax.f32 %v7035, 0.0
          %v7068 = vmax.f32 %v7036, 0.0
          %v7069 = vmax.f32 %v7037, 0.0
          %v7070 = vmax.f32 %v7038, 0.0
          %v7071 = vmax.f32 %v7039, 0.0
          %v7072 = vmax.f32 %v7040, 0.0
          %v7073 = vmax.f32 %v7041, 0.0
          %v7074 = vmax.f32 %v7042, 0.0
          %v7075 = vmax.f32 %v7043, 0.0
          %v7076 = vmax.f32 %v7044, 0.0
          %v7077 = vmax.f32 %v7045, 0.0
          %v7078 = vmax.f32 %v7046, 0.0
          %v7079 = vmax.f32 %v7047, 0.0
          %v7080 = vmax.f32 %v7048, 0.0
          %v7081 = vmax.f32 %v7049, 0.0
          %v7082 = vmax.f32 %v7050, 0.0
          %v7083 = vmax.f32 %v7051, 0.0
          %v7084 = vmax.f32 %v7052, 0.0
          %v7085 = vmax.f32 %v7053, 0.0
          %v7086 = vmax.f32 %v7054, 0.0
          %v7087 = vmax.f32 %v7055, 0.0
          %v7088 = vmax.f32 %v7056, 0.0
          %v7089 = vmax.f32 %v7057, 0.0
          %v7090 = vmax.f32 %v7058, 0.0
          %v7091 = vmax.f32 %v7059, 0.0
          %v7092 = vmax.f32 %v7060, 0.0
          %v7093 = vmax.f32 %v7061, 0.0
          %v7094 = vpack.c.bf16 %v7063, %v7062
          %v7095 = vpack.c.bf16 %v7065, %v7064
          %v7096 = vpack.c.bf16 %v7067, %v7066
          %v7097 = vpack.c.bf16 %v7069, %v7068
          %v7098 = vpack.c.bf16 %v7071, %v7070
          %v7099 = vpack.c.bf16 %v7073, %v7072
          %v7100 = vpack.c.bf16 %v7075, %v7074
          %v7101 = vpack.c.bf16 %v7077, %v7076
          %v7102 = vpack.c.bf16 %v7079, %v7078
          %v7103 = vpack.c.bf16 %v7081, %v7080
          %v7104 = vpack.c.bf16 %v7083, %v7082
          %v7105 = vpack.c.bf16 %v7085, %v7084
          %v7106 = vpack.c.bf16 %v7087, %v7086
          %v7107 = vpack.c.bf16 %v7089, %v7088
          %v7108 = vpack.c.bf16 %v7091, %v7090
          %v7109 = vpack.c.bf16 %v7093, %v7092
          %v7110 = vld [vmem:[%s15] sm:$0xf]
          %v7111 = vld [vmem:[%s15 + $0x4] sm:$0xf]
          %v7112 = vld [vmem:[%s15 + $0x8] sm:$0xf]
          %v7113 = vld [vmem:[%s15 + $0xc] sm:$0xf]
          %v7114 = vld [vmem:[%s15 + $0x10] sm:$0xf]
          %v7115 = vld [vmem:[%s15 + $0x14] sm:$0xf]
          %v7116 = vld [vmem:[%s15 + $0x18] sm:$0xf]
          %v7117 = vld [vmem:[%s15 + $0x1c] sm:$0xf]
          %v7118 = vld [vmem:[%s16] sm:$0x1]
          %v7120 = vlaneseq
          %v7121 = vshrl.u32 %v7120, 7
          %v7122 = vsub.s32 0, %v7121
          %v7123 = vrot.slane %v7118, %v7122
          %v7133 = vunpack.c.l.b16 %v7110
          %v7134 = vunpack.c.l.b16 %v7111
          %v7135 = vunpack.c.l.b16 %v7112
          %v7136 = vunpack.c.l.b16 %v7113
          %v7137 = vunpack.c.l.b16 %v7114
          %v7138 = vunpack.c.l.b16 %v7115
          %v7139 = vunpack.c.l.b16 %v7116
          %v7140 = vunpack.c.l.b16 %v7117
          %v7141 = vpack.c.b16 %v7134, %v7133
          %v7142 = vpack.c.b16 %v7136, %v7135
          %v7143 = vpack.c.b16 %v7138, %v7137
          %v7144 = vpack.c.b16 %v7140, %v7139
          %vm7149 = vcmask 523264
          %v7151 = vsel %vm7149, %v7094, 0
          %v7154 = vsel %vm7149, %v7095, 0
          %v7157 = vsel %vm7149, %v7096, 0
          %v7160 = vsel %vm7149, %v7097, 0
          %v7163 = vsel %vm7149, %v7098, 0
          %v7166 = vsel %vm7149, %v7099, 0
          %v7169 = vsel %vm7149, %v7100, 0
          %v7172 = vsel %vm7149, %v7101, 0
          %v7175 = vsel %vm7149, %v7102, 0
          %v7178 = vsel %vm7149, %v7103, 0
          %v7181 = vsel %vm7149, %v7104, 0
          %v7184 = vsel %vm7149, %v7105, 0
          %v7187 = vsel %vm7149, %v7106, 0
          %v7190 = vsel %vm7149, %v7107, 0
          %v7193 = vsel %vm7149, %v7108, 0
          %v7196 = vsel %vm7149, %v7109, 0
          %7198 = vmatprep.subr.bf16.mxu0 0
          %7199 = vmatpush1.bf16.msra.mxu0 %v7141
          %7200 = vmatprep.subr.bf16.mxu0 0
          %7201 = vmatpush1.bf16.msra.mxu0 %v7142
          %7202 = vmatprep.subr.bf16.mxu0 0
          %7203 = vmatpush1.bf16.msra.mxu0 %v7143
          %7204 = vmatprep.subr.bf16.mxu0 0
          %7205 = vmatpush1.bf16.msra.mxu0 %v7144
          %7206 = vmatprep.subr.bf16.mxu0 0
          %7207 = vmatpush1.bf16.msra.mxu0 0
          %7208 = vmatprep.subr.bf16.mxu0 0
          %7209 = vmatpush1.bf16.msra.mxu0 0
          %7210 = vmatprep.subr.bf16.mxu0 0
          %7211 = vmatpush1.bf16.msra.mxu0 0
          %7212 = vmatprep.subr.bf16.mxu0 0
          %7213 = vmatpush1.bf16.msra.mxu0 0
          %7214 = vmatprep.subr.bf16.mxu0 0
          %7215 = vmatpush1.bf16.msra.mxu0 0
          %7216 = vmatprep.subr.bf16.mxu0 0
          %7217 = vmatpush1.bf16.msra.mxu0 0
          %7218 = vmatprep.subr.bf16.mxu0 0
          %7219 = vmatpush1.bf16.msra.mxu0 0
          %7220 = vmatprep.subr.bf16.mxu0 0
          %7221 = vmatpush1.bf16.msra.mxu0 0
          %7222 = vmatprep.subr.bf16.mxu0 0
          %7223 = vmatpush1.bf16.msra.mxu0 0
          %7224 = vmatprep.subr.bf16.mxu0 0
          %7225 = vmatpush1.bf16.msra.mxu0 0
          %7226 = vmatprep.subr.bf16.mxu0 0
          %7227 = vmatpush1.bf16.msra.mxu0 0
          %7228 = vmatprep.subr.bf16.mxu0 0
          %7229 = vmatpush1.bf16.msra.mxu0 0
          %7230 = vmatprep.mubr.bf16.mxu0 0
          %7231 = vmatmul.mubr.bf16.gmra.mrb[0].mxu0 %v7151
          %v7232 = vpop.f32.mrb[0].mxu0
          %v7233 = vadd.f32 %v7123, %v7232
          %v7234 = vpop.f32.mrb[0].mxu0
          %v7235 = vpop.f32.mrb[0].mxu0
          %v7236 = vadd.f32 %v7123, %v7235
          %v7237 = vpop.f32.mrb[0].mxu0
          %7238 = vmatprep.mubr.bf16.mxu0 0
          %7239 = vmatmul.mubr.bf16.gmra.mrb[0].mxu0 %v7154
          %v7240 = vpop.f32.mrb[0].mxu0
          %v7241 = vadd.f32 %v7123, %v7240
          %v7242 = vpop.f32.mrb[0].mxu0
          %v7243 = vpop.f32.mrb[0].mxu0
          %v7244 = vadd.f32 %v7123, %v7243
          %v7245 = vpop.f32.mrb[0].mxu0
          %7246 = vmatprep.mubr.bf16.mxu0 0
          %7247 = vmatmul.mubr.bf16.gmra.mrb[0].mxu0 %v7157
          %v7248 = vpop.f32.mrb[0].mxu0
          %v7249 = vadd.f32 %v7123, %v7248
          %v7250 = vpop.f32.mrb[0].mxu0
          %v7251 = vpop.f32.mrb[0].mxu0
          %v7252 = vadd.f32 %v7123, %v7251
          %v7253 = vpop.f32.mrb[0].mxu0
          %7254 = vmatprep.mubr.bf16.mxu0 0
          %7255 = vmatmul.mubr.bf16.gmra.mrb[0].mxu0 %v7160
          %v7256 = vpop.f32.mrb[0].mxu0
          %v7257 = vadd.f32 %v7123, %v7256
          %v7258 = vpop.f32.mrb[0].mxu0
          %v7259 = vpop.f32.mrb[0].mxu0
          %v7260 = vadd.f32 %v7123, %v7259
          %v7261 = vpop.f32.mrb[0].mxu0
          %7262 = vmatprep.mubr.bf16.mxu0 0
          %7263 = vmatmul.mubr.bf16.gmra.mrb[0].mxu0 %v7163
          %v7264 = vpop.f32.mrb[0].mxu0
          %v7265 = vadd.f32 %v7123, %v7264
          %v7266 = vpop.f32.mrb[0].mxu0
          %v7267 = vpop.f32.mrb[0].mxu0
          %v7268 = vadd.f32 %v7123, %v7267
          %v7269 = vpop.f32.mrb[0].mxu0
          %7270 = vmatprep.mubr.bf16.mxu0 0
          %7271 = vmatmul.mubr.bf16.gmra.mrb[0].mxu0 %v7166
          %v7272 = vpop.f32.mrb[0].mxu0
          %v7273 = vadd.f32 %v7123, %v7272
          %v7274 = vpop.f32.mrb[0].mxu0
          %v7275 = vpop.f32.mrb[0].mxu0
          %v7276 = vadd.f32 %v7123, %v7275
          %v7277 = vpop.f32.mrb[0].mxu0
          %7278 = vmatprep.mubr.bf16.mxu0 0
          %7279 = vmatmul.mubr.bf16.gmra.mrb[0].mxu0 %v7169
          %v7280 = vpop.f32.mrb[0].mxu0
          %v7281 = vadd.f32 %v7123, %v7280
          %v7282 = vpop.f32.mrb[0].mxu0
          %v7283 = vpop.f32.mrb[0].mxu0
          %v7284 = vadd.f32 %v7123, %v7283
          %v7285 = vpop.f32.mrb[0].mxu0
          %7286 = vmatprep.mubr.bf16.mxu0 0
          %7287 = vmatmul.mubr.bf16.gmra.mrb[0].mxu0 %v7172
          %v7288 = vpop.f32.mrb[0].mxu0
          %v7289 = vadd.f32 %v7123, %v7288
          %v7290 = vpop.f32.mrb[0].mxu0
          %v7291 = vpop.f32.mrb[0].mxu0
          %v7292 = vadd.f32 %v7123, %v7291
          %v7293 = vpop.f32.mrb[0].mxu0
          %7294 = vmatprep.mubr.bf16.mxu0 0
          %7295 = vmatmul.mubr.bf16.gmra.mrb[0].mxu0 %v7175
          %v7296 = vpop.f32.mrb[0].mxu0
          %v7297 = vadd.f32 %v7123, %v7296
          %v7298 = vpop.f32.mrb[0].mxu0
          %v7299 = vpop.f32.mrb[0].mxu0
          %v7300 = vadd.f32 %v7123, %v7299
          %v7301 = vpop.f32.mrb[0].mxu0
          %7302 = vmatprep.mubr.bf16.mxu0 0
          %7303 = vmatmul.mubr.bf16.gmra.mrb[0].mxu0 %v7178
          %v7304 = vpop.f32.mrb[0].mxu0
          %v7305 = vadd.f32 %v7123, %v7304
          %v7306 = vpop.f32.mrb[0].mxu0
          %v7307 = vpop.f32.mrb[0].mxu0
          %v7308 = vadd.f32 %v7123, %v7307
          %v7309 = vpop.f32.mrb[0].mxu0
          %7310 = vmatprep.mubr.bf16.mxu0 0
          %7311 = vmatmul.mubr.bf16.gmra.mrb[0].mxu0 %v7181
          %v7312 = vpop.f32.mrb[0].mxu0
          %v7313 = vadd.f32 %v7123, %v7312
          %v7314 = vpop.f32.mrb[0].mxu0
          %v7315 = vpop.f32.mrb[0].mxu0
          %v7316 = vadd.f32 %v7123, %v7315
          %v7317 = vpop.f32.mrb[0].mxu0
          %7318 = vmatprep.mubr.bf16.mxu0 0
          %7319 = vmatmul.mubr.bf16.gmra.mrb[0].mxu0 %v7184
          %v7320 = vpop.f32.mrb[0].mxu0
          %v7321 = vadd.f32 %v7123, %v7320
          %v7322 = vpop.f32.mrb[0].mxu0
          %v7323 = vpop.f32.mrb[0].mxu0
          %v7324 = vadd.f32 %v7123, %v7323
          %v7325 = vpop.f32.mrb[0].mxu0
          %7326 = vmatprep.mubr.bf16.mxu0 0
          %7327 = vmatmul.mubr.bf16.gmra.mrb[0].mxu0 %v7187
          %v7328 = vpop.f32.mrb[0].mxu0
          %v7329 = vadd.f32 %v7123, %v7328
          %v7330 = vpop.f32.mrb[0].mxu0
          %v7331 = vpop.f32.mrb[0].mxu0
          %v7332 = vadd.f32 %v7123, %v7331
          %v7333 = vpop.f32.mrb[0].mxu0
          %7334 = vmatprep.mubr.bf16.mxu0 0
          %7335 = vmatmul.mubr.bf16.gmra.mrb[0].mxu0 %v7190
          %v7336 = vpop.f32.mrb[0].mxu0
          %v7337 = vadd.f32 %v7123, %v7336
          %v7338 = vpop.f32.mrb[0].mxu0
          %v7339 = vpop.f32.mrb[0].mxu0
          %v7340 = vadd.f32 %v7123, %v7339
          %v7341 = vpop.f32.mrb[0].mxu0
          %7342 = vmatprep.mubr.bf16.mxu0 0
          %7343 = vmatmul.mubr.bf16.gmra.mrb[0].mxu0 %v7193
          %v7344 = vpop.f32.mrb[0].mxu0
          %v7345 = vadd.f32 %v7123, %v7344
          %v7346 = vpop.f32.mrb[0].mxu0
          %v7347 = vpop.f32.mrb[0].mxu0
          %v7348 = vadd.f32 %v7123, %v7347
          %v7349 = vpop.f32.mrb[0].mxu0
          %7350 = vmatprep.mubr.bf16.mxu0 0
          %7351 = vmatmul.mubr.bf16.gmra.mrb[0].mxu0 %v7196
          %v7352 = vpop.f32.mrb[0].mxu0
          %v7353 = vadd.f32 %v7123, %v7352
          %v7354 = vpop.f32.mrb[0].mxu0
          %v7355 = vpop.f32.mrb[0].mxu0
          %v7356 = vadd.f32 %v7123, %v7355
          %v7357 = vpop.f32.mrb[0].mxu0
          %7358 = vdwg.mxu0
          %v7359 = vmax.f32 %v7233, 0.0
          %v7360 = vmax.f32 %v7236, 0.0
          %v7361 = vmax.f32 %v7241, 0.0
          %v7362 = vmax.f32 %v7244, 0.0
          %v7363 = vmax.f32 %v7249, 0.0
          %v7364 = vmax.f32 %v7252, 0.0
          %v7365 = vmax.f32 %v7257, 0.0
          %v7366 = vmax.f32 %v7260, 0.0
          %v7367 = vmax.f32 %v7265, 0.0
          %v7368 = vmax.f32 %v7268, 0.0
          %v7369 = vmax.f32 %v7273, 0.0
          %v7370 = vmax.f32 %v7276, 0.0
          %v7371 = vmax.f32 %v7281, 0.0
          %v7372 = vmax.f32 %v7284, 0.0
          %v7373 = vmax.f32 %v7289, 0.0
          %v7374 = vmax.f32 %v7292, 0.0
          %v7375 = vmax.f32 %v7297, 0.0
          %v7376 = vmax.f32 %v7300, 0.0
          %v7377 = vmax.f32 %v7305, 0.0
          %v7378 = vmax.f32 %v7308, 0.0
          %v7379 = vmax.f32 %v7313, 0.0
          %v7380 = vmax.f32 %v7316, 0.0
          %v7381 = vmax.f32 %v7321, 0.0
          %v7382 = vmax.f32 %v7324, 0.0
          %v7383 = vmax.f32 %v7329, 0.0
          %v7384 = vmax.f32 %v7332, 0.0
          %v7385 = vmax.f32 %v7337, 0.0
          %v7386 = vmax.f32 %v7340, 0.0
          %v7387 = vmax.f32 %v7345, 0.0
          %v7388 = vmax.f32 %v7348, 0.0
          %v7389 = vmax.f32 %v7353, 0.0
          %v7390 = vmax.f32 %v7356, 0.0
          %v7391 = vpack.c.bf16 %v7360, %v7359
          %v7392 = vpack.c.bf16 %v7362, %v7361
          %v7393 = vpack.c.bf16 %v7364, %v7363
          %v7394 = vpack.c.bf16 %v7366, %v7365
          %v7395 = vpack.c.bf16 %v7368, %v7367
          %v7396 = vpack.c.bf16 %v7370, %v7369
          %v7397 = vpack.c.bf16 %v7372, %v7371
          %v7398 = vpack.c.bf16 %v7374, %v7373
          %v7399 = vpack.c.bf16 %v7376, %v7375
          %v7400 = vpack.c.bf16 %v7378, %v7377
          %v7401 = vpack.c.bf16 %v7380, %v7379
          %v7402 = vpack.c.bf16 %v7382, %v7381
          %v7403 = vpack.c.bf16 %v7384, %v7383
          %v7404 = vpack.c.bf16 %v7386, %v7385
          %v7405 = vpack.c.bf16 %v7388, %v7387
          %v7406 = vpack.c.bf16 %v7390, %v7389
          %v7407 = vld [vmem:[#allocation17] sm:$0xf]
          %v7408 = vld [vmem:[#allocation17 + $0x4] sm:$0xf]
          %v7409 = vld [vmem:[#allocation17 + $0x8] sm:$0xf]
          %v7410 = vld [vmem:[#allocation17 + $0xc] sm:$0xf]
          %v7411 = vld [vmem:[#allocation17 + $0x10] sm:$0xf]
          %v7412 = vld [vmem:[#allocation17 + $0x14] sm:$0xf]
          %v7413 = vld [vmem:[#allocation17 + $0x18] sm:$0xf]
          %v7414 = vld [vmem:[#allocation17 + $0x1c] sm:$0xf]
          %v7415 = vld [vmem:[%s18] sm:$0x1]
          %v7417 = vlaneseq
          %v7418 = vshrl.u32 %v7417, 7
          %v7419 = vsub.s32 0, %v7418
          %v7420 = vrot.slane %v7415, %v7419
          %v7430 = vunpack.c.l.b16 %v7407
          %v7431 = vunpack.c.l.b16 %v7408
          %v7432 = vunpack.c.l.b16 %v7409
          %v7433 = vunpack.c.l.b16 %v7410
          %v7434 = vunpack.c.l.b16 %v7411
          %v7435 = vunpack.c.l.b16 %v7412
          %v7436 = vunpack.c.l.b16 %v7413
          %v7437 = vunpack.c.l.b16 %v7414
          %v7438 = vpack.c.b16 %v7431, %v7430
          %v7439 = vpack.c.b16 %v7433, %v7432
          %v7440 = vpack.c.b16 %v7435, %v7434
          %v7441 = vpack.c.b16 %v7437, %v7436
          %v7447 = vsel %vm7149, %v7391, 0
          %v7450 = vsel %vm7149, %v7392, 0
          %v7453 = vsel %vm7149, %v7393, 0
          %v7456 = vsel %vm7149, %v7394, 0
          %v7459 = vsel %vm7149, %v7395, 0
          %v7462 = vsel %vm7149, %v7396, 0
          %v7465 = vsel %vm7149, %v7397, 0
          %v7468 = vsel %vm7149, %v7398, 0
          %v7471 = vsel %vm7149, %v7399, 0
          %v7474 = vsel %vm7149, %v7400, 0
          %v7477 = vsel %vm7149, %v7401, 0
          %v7480 = vsel %vm7149, %v7402, 0
          %v7483 = vsel %vm7149, %v7403, 0
          %v7486 = vsel %vm7149, %v7404, 0
          %v7489 = vsel %vm7149, %v7405, 0
          %v7492 = vsel %vm7149, %v7406, 0
          %7494 = vmatprep.subr.bf16.mxu0 0
          %7495 = vmatpush1.bf16.msra.mxu0 %v7438
          %7496 = vmatprep.subr.bf16.mxu0 0
          %7497 = vmatpush1.bf16.msra.mxu0 %v7439
          %7498 = vmatprep.subr.bf16.mxu0 0
          %7499 = vmatpush1.bf16.msra.mxu0 %v7440
          %7500 = vmatprep.subr.bf16.mxu0 0
          %7501 = vmatpush1.bf16.msra.mxu0 %v7441
          %7502 = vmatprep.subr.bf16.mxu0 0
          %7503 = vmatpush1.bf16.msra.mxu0 0
          %7504 = vmatprep.subr.bf16.mxu0 0
          %7505 = vmatpush1.bf16.msra.mxu0 0
          %7506 = vmatprep.subr.bf16.mxu0 0
          %7507 = vmatpush1.bf16.msra.mxu0 0
          %7508 = vmatprep.subr.bf16.mxu0 0
          %7509 = vmatpush1.bf16.msra.mxu0 0
          %7510 = vmatprep.subr.bf16.mxu0 0
          %7511 = vmatpush1.bf16.msra.mxu0 0
          %7512 = vmatprep.subr.bf16.mxu0 0
          %7513 = vmatpush1.bf16.msra.mxu0 0
          %7514 = vmatprep.subr.bf16.mxu0 0
          %7515 = vmatpush1.bf16.msra.mxu0 0
          %7516 = vmatprep.subr.bf16.mxu0 0
          %7517 = vmatpush1.bf16.msra.mxu0 0
          %7518 = vmatprep.subr.bf16.mxu0 0
          %7519 = vmatpush1.bf16.msra.mxu0 0
          %7520 = vmatprep.subr.bf16.mxu0 0
          %7521 = vmatpush1.bf16.msra.mxu0 0
          %7522 = vmatprep.subr.bf16.mxu0 0
          %7523 = vmatpush1.bf16.msra.mxu0 0
          %7524 = vmatprep.subr.bf16.mxu0 0
          %7525 = vmatpush1.bf16.msra.mxu0 0
          %7526 = vmatprep.mubr.bf16.mxu0 0
          %7527 = vmatmul.mubr.bf16.gmra.mrb[0].mxu0 %v7447
          %v7528 = vpop.f32.mrb[0].mxu0
          %v7529 = vadd.f32 %v7420, %v7528
          %v7530 = vpop.f32.mrb[0].mxu0
          %v7531 = vpop.f32.mrb[0].mxu0
          %v7532 = vadd.f32 %v7420, %v7531
          %v7533 = vpop.f32.mrb[0].mxu0
          %7534 = vmatprep.mubr.bf16.mxu0 0
          %7535 = vmatmul.mubr.bf16.gmra.mrb[0].mxu0 %v7450
          %v7536 = vpop.f32.mrb[0].mxu0
          %v7537 = vadd.f32 %v7420, %v7536
          %v7538 = vpop.f32.mrb[0].mxu0
          %v7539 = vpop.f32.mrb[0].mxu0
          %v7540 = vadd.f32 %v7420, %v7539
          %v7541 = vpop.f32.mrb[0].mxu0
          %7542 = vmatprep.mubr.bf16.mxu0 0
          %7543 = vmatmul.mubr.bf16.gmra.mrb[0].mxu0 %v7453
          %v7544 = vpop.f32.mrb[0].mxu0
          %v7545 = vadd.f32 %v7420, %v7544
          %v7546 = vpop.f32.mrb[0].mxu0
          %v7547 = vpop.f32.mrb[0].mxu0
          %v7548 = vadd.f32 %v7420, %v7547
          %v7549 = vpop.f32.mrb[0].mxu0
          %7550 = vmatprep.mubr.bf16.mxu0 0
          %7551 = vmatmul.mubr.bf16.gmra.mrb[0].mxu0 %v7456
          %v7552 = vpop.f32.mrb[0].mxu0
          %v7553 = vadd.f32 %v7420, %v7552
          %v7554 = vpop.f32.mrb[0].mxu0
          %v7555 = vpop.f32.mrb[0].mxu0
          %v7556 = vadd.f32 %v7420, %v7555
          %v7557 = vpop.f32.mrb[0].mxu0
          %7558 = vmatprep.mubr.bf16.mxu0 0
          %7559 = vmatmul.mubr.bf16.gmra.mrb[0].mxu0 %v7459
          %v7560 = vpop.f32.mrb[0].mxu0
          %v7561 = vadd.f32 %v7420, %v7560
          %v7562 = vpop.f32.mrb[0].mxu0
          %v7563 = vpop.f32.mrb[0].mxu0
          %v7564 = vadd.f32 %v7420, %v7563
          %v7565 = vpop.f32.mrb[0].mxu0
          %7566 = vmatprep.mubr.bf16.mxu0 0
          %7567 = vmatmul.mubr.bf16.gmra.mrb[0].mxu0 %v7462
          %v7568 = vpop.f32.mrb[0].mxu0
          %v7569 = vadd.f32 %v7420, %v7568
          %v7570 = vpop.f32.mrb[0].mxu0
          %v7571 = vpop.f32.mrb[0].mxu0
          %v7572 = vadd.f32 %v7420, %v7571
          %v7573 = vpop.f32.mrb[0].mxu0
          %7574 = vmatprep.mubr.bf16.mxu0 0
          %7575 = vmatmul.mubr.bf16.gmra.mrb[0].mxu0 %v7465
          %v7576 = vpop.f32.mrb[0].mxu0
          %v7577 = vadd.f32 %v7420, %v7576
          %v7578 = vpop.f32.mrb[0].mxu0
          %v7579 = vpop.f32.mrb[0].mxu0
          %v7580 = vadd.f32 %v7420, %v7579
          %v7581 = vpop.f32.mrb[0].mxu0
          %7582 = vmatprep.mubr.bf16.mxu0 0
          %7583 = vmatmul.mubr.bf16.gmra.mrb[0].mxu0 %v7468
          %v7584 = vpop.f32.mrb[0].mxu0
          %v7585 = vadd.f32 %v7420, %v7584
          %v7586 = vpop.f32.mrb[0].mxu0
          %v7587 = vpop.f32.mrb[0].mxu0
          %v7588 = vadd.f32 %v7420, %v7587
          %v7589 = vpop.f32.mrb[0].mxu0
          %7590 = vmatprep.mubr.bf16.mxu0 0
          %7591 = vmatmul.mubr.bf16.gmra.mrb[0].mxu0 %v7471
          %v7592 = vpop.f32.mrb[0].mxu0
          %v7593 = vadd.f32 %v7420, %v7592
          %v7594 = vpop.f32.mrb[0].mxu0
          %v7595 = vpop.f32.mrb[0].mxu0
          %v7596 = vadd.f32 %v7420, %v7595
          %v7597 = vpop.f32.mrb[0].mxu0
          %7598 = vmatprep.mubr.bf16.mxu0 0
          %7599 = vmatmul.mubr.bf16.gmra.mrb[0].mxu0 %v7474
          %v7600 = vpop.f32.mrb[0].mxu0
          %v7601 = vadd.f32 %v7420, %v7600
          %v7602 = vpop.f32.mrb[0].mxu0
          %v7603 = vpop.f32.mrb[0].mxu0
          %v7604 = vadd.f32 %v7420, %v7603
          %v7605 = vpop.f32.mrb[0].mxu0
          %7606 = vmatprep.mubr.bf16.mxu0 0
          %7607 = vmatmul.mubr.bf16.gmra.mrb[0].mxu0 %v7477
          %v7608 = vpop.f32.mrb[0].mxu0
          %v7609 = vadd.f32 %v7420, %v7608
          %v7610 = vpop.f32.mrb[0].mxu0
          %v7611 = vpop.f32.mrb[0].mxu0
          %v7612 = vadd.f32 %v7420, %v7611
          %v7613 = vpop.f32.mrb[0].mxu0
          %7614 = vmatprep.mubr.bf16.mxu0 0
          %7615 = vmatmul.mubr.bf16.gmra.mrb[0].mxu0 %v7480
          %v7616 = vpop.f32.mrb[0].mxu0
          %v7617 = vadd.f32 %v7420, %v7616
          %v7618 = vpop.f32.mrb[0].mxu0
          %v7619 = vpop.f32.mrb[0].mxu0
          %v7620 = vadd.f32 %v7420, %v7619
          %v7621 = vpop.f32.mrb[0].mxu0
          %7622 = vmatprep.mubr.bf16.mxu0 0
          %7623 = vmatmul.mubr.bf16.gmra.mrb[0].mxu0 %v7483
          %v7624 = vpop.f32.mrb[0].mxu0
          %v7625 = vadd.f32 %v7420, %v7624
          %v7626 = vpop.f32.mrb[0].mxu0
          %v7627 = vpop.f32.mrb[0].mxu0
          %v7628 = vadd.f32 %v7420, %v7627
          %v7629 = vpop.f32.mrb[0].mxu0
          %7630 = vmatprep.mubr.bf16.mxu0 0
          %7631 = vmatmul.mubr.bf16.gmra.mrb[0].mxu0 %v7486
          %v7632 = vpop.f32.mrb[0].mxu0
          %v7633 = vadd.f32 %v7420, %v7632
          %v7634 = vpop.f32.mrb[0].mxu0
          %v7635 = vpop.f32.mrb[0].mxu0
          %v7636 = vadd.f32 %v7420, %v7635
          %v7637 = vpop.f32.mrb[0].mxu0
          %7638 = vmatprep.mubr.bf16.mxu0 0
          %7639 = vmatmul.mubr.bf16.gmra.mrb[0].mxu0 %v7489
          %v7640 = vpop.f32.mrb[0].mxu0
          %v7641 = vadd.f32 %v7420, %v7640
          %v7642 = vpop.f32.mrb[0].mxu0
          %v7643 = vpop.f32.mrb[0].mxu0
          %v7644 = vadd.f32 %v7420, %v7643
          %v7645 = vpop.f32.mrb[0].mxu0
          %7646 = vmatprep.mubr.bf16.mxu0 0
          %7647 = vmatmul.mubr.bf16.gmra.mrb[0].mxu0 %v7492
          %v7648 = vpop.f32.mrb[0].mxu0
          %v7649 = vadd.f32 %v7420, %v7648
          %v7650 = vpop.f32.mrb[0].mxu0
          %v7651 = vpop.f32.mrb[0].mxu0
          %v7652 = vadd.f32 %v7420, %v7651
          %v7653 = vpop.f32.mrb[0].mxu0
          %7654 = vdwg.mxu0
          %v7655 = vmax.f32 %v7529, 0.0
          %v7656 = vmax.f32 %v7532, 0.0
          %v7657 = vmax.f32 %v7537, 0.0
          %v7658 = vmax.f32 %v7540, 0.0
          %v7659 = vmax.f32 %v7545, 0.0
          %v7660 = vmax.f32 %v7548, 0.0
          %v7661 = vmax.f32 %v7553, 0.0
          %v7662 = vmax.f32 %v7556, 0.0
          %v7663 = vmax.f32 %v7561, 0.0
          %v7664 = vmax.f32 %v7564, 0.0
          %v7665 = vmax.f32 %v7569, 0.0
          %v7666 = vmax.f32 %v7572, 0.0
          %v7667 = vmax.f32 %v7577, 0.0
          %v7668 = vmax.f32 %v7580, 0.0
          %v7669 = vmax.f32 %v7585, 0.0
          %v7670 = vmax.f32 %v7588, 0.0
          %v7671 = vmax.f32 %v7593, 0.0
          %v7672 = vmax.f32 %v7596, 0.0
          %v7673 = vmax.f32 %v7601, 0.0
          %v7674 = vmax.f32 %v7604, 0.0
          %v7675 = vmax.f32 %v7609, 0.0
          %v7676 = vmax.f32 %v7612, 0.0
          %v7677 = vmax.f32 %v7617, 0.0
          %v7678 = vmax.f32 %v7620, 0.0
          %v7679 = vmax.f32 %v7625, 0.0
          %v7680 = vmax.f32 %v7628, 0.0
          %v7681 = vmax.f32 %v7633, 0.0
          %v7682 = vmax.f32 %v7636, 0.0
          %v7683 = vmax.f32 %v7641, 0.0
          %v7684 = vmax.f32 %v7644, 0.0
          %v7685 = vmax.f32 %v7649, 0.0
          %v7686 = vmax.f32 %v7652, 0.0
          %v7687 = vpack.c.bf16 %v7656, %v7655
          %v7688 = vpack.c.bf16 %v7658, %v7657
          %v7689 = vpack.c.bf16 %v7660, %v7659
          %v7690 = vpack.c.bf16 %v7662, %v7661
          %v7691 = vpack.c.bf16 %v7664, %v7663
          %v7692 = vpack.c.bf16 %v7666, %v7665
          %v7693 = vpack.c.bf16 %v7668, %v7667
          %v7694 = vpack.c.bf16 %v7670, %v7669
          %v7695 = vpack.c.bf16 %v7672, %v7671
          %v7696 = vpack.c.bf16 %v7674, %v7673
          %v7697 = vpack.c.bf16 %v7676, %v7675
          %v7698 = vpack.c.bf16 %v7678, %v7677
          %v7699 = vpack.c.bf16 %v7680, %v7679
          %v7700 = vpack.c.bf16 %v7682, %v7681
          %v7701 = vpack.c.bf16 %v7684, %v7683
          %v7702 = vpack.c.bf16 %v7686, %v7685
          %v7703 = vld [vmem:[#allocation19] sm:$0xf]
          %v7704 = vld [vmem:[#allocation19 + $0x4] sm:$0xf]
          %v7705 = vld [vmem:[#allocation19 + $0x8] sm:$0xf]
          %v7706 = vld [vmem:[#allocation19 + $0xc] sm:$0xf]
          %v7707 = vld [vmem:[#allocation19 + $0x10] sm:$0xf]
          %v7708 = vld [vmem:[#allocation19 + $0x14] sm:$0xf]
          %v7709 = vld [vmem:[#allocation19 + $0x18] sm:$0xf]
          %v7710 = vld [vmem:[#allocation19 + $0x1c] sm:$0xf]
          %v7711 = vld [vmem:[%s20] sm:$0x1]
          %v7713 = vlaneseq
          %v7714 = vshrl.u32 %v7713, 7
          %v7715 = vsub.s32 0, %v7714
          %v7716 = vrot.slane %v7711, %v7715
          %v7726 = vunpack.c.l.b16 %v7703
          %v7727 = vunpack.c.l.b16 %v7704
          %v7728 = vunpack.c.l.b16 %v7705
          %v7729 = vunpack.c.l.b16 %v7706
          %v7730 = vunpack.c.l.b16 %v7707
          %v7731 = vunpack.c.l.b16 %v7708
          %v7732 = vunpack.c.l.b16 %v7709
          %v7733 = vunpack.c.l.b16 %v7710
          %v7734 = vpack.c.b16 %v7727, %v7726
          %v7735 = vpack.c.b16 %v7729, %v7728
          %v7736 = vpack.c.b16 %v7731, %v7730
          %v7737 = vpack.c.b16 %v7733, %v7732
          %v7743 = vsel %vm7149, %v7687, 0
          %v7746 = vsel %vm7149, %v7688, 0
          %v7749 = vsel %vm7149, %v7689, 0
          %v7752 = vsel %vm7149, %v7690, 0
          %v7755 = vsel %vm7149, %v7691, 0
          %v7758 = vsel %vm7149, %v7692, 0
          %v7761 = vsel %vm7149, %v7693, 0
          %v7764 = vsel %vm7149, %v7694, 0
          %v7767 = vsel %vm7149, %v7695, 0
          %v7770 = vsel %vm7149, %v7696, 0
          %v7773 = vsel %vm7149, %v7697, 0
          %v7776 = vsel %vm7149, %v7698, 0
          %v7779 = vsel %vm7149, %v7699, 0
          %v7782 = vsel %vm7149, %v7700, 0
          %v7785 = vsel %vm7149, %v7701, 0
          %v7788 = vsel %vm7149, %v7702, 0
          %7790 = vmatprep.subr.bf16.mxu0 0
          %7791 = vmatpush1.bf16.msra.mxu0 %v7734
          %7792 = vmatprep.subr.bf16.mxu0 0
          %7793 = vmatpush1.bf16.msra.mxu0 %v7735
          %7794 = vmatprep.subr.bf16.mxu0 0
          %7795 = vmatpush1.bf16.msra.mxu0 %v7736
          %7796 = vmatprep.subr.bf16.mxu0 0
          %7797 = vmatpush1.bf16.msra.mxu0 %v7737
          %7798 = vmatprep.subr.bf16.mxu0 0
          %7799 = vmatpush1.bf16.msra.mxu0 0
          %7800 = vmatprep.subr.bf16.mxu0 0
          %7801 = vmatpush1.bf16.msra.mxu0 0
          %7802 = vmatprep.subr.bf16.mxu0 0
          %7803 = vmatpush1.bf16.msra.mxu0 0
          %7804 = vmatprep.subr.bf16.mxu0 0
          %7805 = vmatpush1.bf16.msra.mxu0 0
          %7806 = vmatprep.subr.bf16.mxu0 0
          %7807 = vmatpush1.bf16.msra.mxu0 0
          %7808 = vmatprep.subr.bf16.mxu0 0
          %7809 = vmatpush1.bf16.msra.mxu0 0
          %7810 = vmatprep.subr.bf16.mxu0 0
          %7811 = vmatpush1.bf16.msra.mxu0 0
          %7812 = vmatprep.subr.bf16.mxu0 0
          %7813 = vmatpush1.bf16.msra.mxu0 0
          %7814 = vmatprep.subr.bf16.mxu0 0
          %7815 = vmatpush1.bf16.msra.mxu0 0
          %7816 = vmatprep.subr.bf16.mxu0 0
          %7817 = vmatpush1.bf16.msra.mxu0 0
          %7818 = vmatprep.subr.bf16.mxu0 0
          %7819 = vmatpush1.bf16.msra.mxu0 0
          %7820 = vmatprep.subr.bf16.mxu0 0
          %7821 = vmatpush1.bf16.msra.mxu0 0
          %7822 = vmatprep.mubr.bf16.mxu0 0
          %7823 = vmatmul.mubr.bf16.gmra.mrb[0].mxu0 %v7743
          %v7824 = vpop.f32.mrb[0].mxu0
          %v7825 = vadd.f32 %v7716, %v7824
          %v7826 = vpop.f32.mrb[0].mxu0
          %v7827 = vpop.f32.mrb[0].mxu0
          %v7828 = vadd.f32 %v7716, %v7827
          %v7829 = vpop.f32.mrb[0].mxu0
          %7830 = vmatprep.mubr.bf16.mxu0 0
          %7831 = vmatmul.mubr.bf16.gmra.mrb[0].mxu0 %v7746
          %v7832 = vpop.f32.mrb[0].mxu0
          %v7833 = vadd.f32 %v7716, %v7832
          %v7834 = vpop.f32.mrb[0].mxu0
          %v7835 = vpop.f32.mrb[0].mxu0
          %v7836 = vadd.f32 %v7716, %v7835
          %v7837 = vpop.f32.mrb[0].mxu0
          %7838 = vmatprep.mubr.bf16.mxu0 0
          %7839 = vmatmul.mubr.bf16.gmra.mrb[0].mxu0 %v7749
          %v7840 = vpop.f32.mrb[0].mxu0
          %v7841 = vadd.f32 %v7716, %v7840
          %v7842 = vpop.f32.mrb[0].mxu0
          %v7843 = vpop.f32.mrb[0].mxu0
          %v7844 = vadd.f32 %v7716, %v7843
          %v7845 = vpop.f32.mrb[0].mxu0
          %7846 = vmatprep.mubr.bf16.mxu0 0
          %7847 = vmatmul.mubr.bf16.gmra.mrb[0].mxu0 %v7752
          %v7848 = vpop.f32.mrb[0].mxu0
          %v7849 = vadd.f32 %v7716, %v7848
          %v7850 = vpop.f32.mrb[0].mxu0
          %v7851 = vpop.f32.mrb[0].mxu0
          %v7852 = vadd.f32 %v7716, %v7851
          %v7853 = vpop.f32.mrb[0].mxu0
          %7854 = vmatprep.mubr.bf16.mxu0 0
          %7855 = vmatmul.mubr.bf16.gmra.mrb[0].mxu0 %v7755
          %v7856 = vpop.f32.mrb[0].mxu0
          %v7857 = vadd.f32 %v7716, %v7856
          %v7858 = vpop.f32.mrb[0].mxu0
          %v7859 = vpop.f32.mrb[0].mxu0
          %v7860 = vadd.f32 %v7716, %v7859
          %v7861 = vpop.f32.mrb[0].mxu0
          %7862 = vmatprep.mubr.bf16.mxu0 0
          %7863 = vmatmul.mubr.bf16.gmra.mrb[0].mxu0 %v7758
          %v7864 = vpop.f32.mrb[0].mxu0
          %v7865 = vadd.f32 %v7716, %v7864
          %v7866 = vpop.f32.mrb[0].mxu0
          %v7867 = vpop.f32.mrb[0].mxu0
          %v7868 = vadd.f32 %v7716, %v7867
          %v7869 = vpop.f32.mrb[0].mxu0
          %7870 = vmatprep.mubr.bf16.mxu0 0
          %7871 = vmatmul.mubr.bf16.gmra.mrb[0].mxu0 %v7761
          %v7872 = vpop.f32.mrb[0].mxu0
          %v7873 = vadd.f32 %v7716, %v7872
          %v7874 = vpop.f32.mrb[0].mxu0
          %v7875 = vpop.f32.mrb[0].mxu0
          %v7876 = vadd.f32 %v7716, %v7875
          %v7877 = vpop.f32.mrb[0].mxu0
          %7878 = vmatprep.mubr.bf16.mxu0 0
          %7879 = vmatmul.mubr.bf16.gmra.mrb[0].mxu0 %v7764
          %v7880 = vpop.f32.mrb[0].mxu0
          %v7881 = vadd.f32 %v7716, %v7880
          %v7882 = vpop.f32.mrb[0].mxu0
          %v7883 = vpop.f32.mrb[0].mxu0
          %v7884 = vadd.f32 %v7716, %v7883
          %v7885 = vpop.f32.mrb[0].mxu0
          %7886 = vmatprep.mubr.bf16.mxu0 0
          %7887 = vmatmul.mubr.bf16.gmra.mrb[0].mxu0 %v7767
          %v7888 = vpop.f32.mrb[0].mxu0
          %v7889 = vadd.f32 %v7716, %v7888
          %v7890 = vpop.f32.mrb[0].mxu0
          %v7891 = vpop.f32.mrb[0].mxu0
          %v7892 = vadd.f32 %v7716, %v7891
          %v7893 = vpop.f32.mrb[0].mxu0
          %7894 = vmatprep.mubr.bf16.mxu0 0
          %7895 = vmatmul.mubr.bf16.gmra.mrb[0].mxu0 %v7770
          %v7896 = vpop.f32.mrb[0].mxu0
          %v7897 = vadd.f32 %v7716, %v7896
          %v7898 = vpop.f32.mrb[0].mxu0
          %v7899 = vpop.f32.mrb[0].mxu0
          %v7900 = vadd.f32 %v7716, %v7899
          %v7901 = vpop.f32.mrb[0].mxu0
          %7902 = vmatprep.mubr.bf16.mxu0 0
          %7903 = vmatmul.mubr.bf16.gmra.mrb[0].mxu0 %v7773
          %v7904 = vpop.f32.mrb[0].mxu0
          %v7905 = vadd.f32 %v7716, %v7904
          %v7906 = vpop.f32.mrb[0].mxu0
          %v7907 = vpop.f32.mrb[0].mxu0
          %v7908 = vadd.f32 %v7716, %v7907
          %v7909 = vpop.f32.mrb[0].mxu0
          %7910 = vmatprep.mubr.bf16.mxu0 0
          %7911 = vmatmul.mubr.bf16.gmra.mrb[0].mxu0 %v7776
          %v7912 = vpop.f32.mrb[0].mxu0
          %v7913 = vadd.f32 %v7716, %v7912
          %v7914 = vpop.f32.mrb[0].mxu0
          %v7915 = vpop.f32.mrb[0].mxu0
          %v7916 = vadd.f32 %v7716, %v7915
          %v7917 = vpop.f32.mrb[0].mxu0
          %7918 = vmatprep.mubr.bf16.mxu0 0
          %7919 = vmatmul.mubr.bf16.gmra.mrb[0].mxu0 %v7779
          %v7920 = vpop.f32.mrb[0].mxu0
          %v7921 = vadd.f32 %v7716, %v7920
          %v7922 = vpop.f32.mrb[0].mxu0
          %v7923 = vpop.f32.mrb[0].mxu0
          %v7924 = vadd.f32 %v7716, %v7923
          %v7925 = vpop.f32.mrb[0].mxu0
          %7926 = vmatprep.mubr.bf16.mxu0 0
          %7927 = vmatmul.mubr.bf16.gmra.mrb[0].mxu0 %v7782
          %v7928 = vpop.f32.mrb[0].mxu0
          %v7929 = vadd.f32 %v7716, %v7928
          %v7930 = vpop.f32.mrb[0].mxu0
          %v7931 = vpop.f32.mrb[0].mxu0
          %v7932 = vadd.f32 %v7716, %v7931
          %v7933 = vpop.f32.mrb[0].mxu0
          %7934 = vmatprep.mubr.bf16.mxu0 0
          %7935 = vmatmul.mubr.bf16.gmra.mrb[0].mxu0 %v7785
          %v7936 = vpop.f32.mrb[0].mxu0
          %v7937 = vadd.f32 %v7716, %v7936
          %v7938 = vpop.f32.mrb[0].mxu0
          %v7939 = vpop.f32.mrb[0].mxu0
          %v7940 = vadd.f32 %v7716, %v7939
          %v7941 = vpop.f32.mrb[0].mxu0
          %7942 = vmatprep.mubr.bf16.mxu0 0
          %7943 = vmatmul.mubr.bf16.gmra.mrb[0].mxu0 %v7788
          %v7944 = vpop.f32.mrb[0].mxu0
          %v7945 = vadd.f32 %v7716, %v7944
          %v7946 = vpop.f32.mrb[0].mxu0
          %v7947 = vpop.f32.mrb[0].mxu0
          %v7948 = vadd.f32 %v7716, %v7947
          %v7949 = vpop.f32.mrb[0].mxu0
          %7950 = vdwg.mxu0
          %v7951 = vmax.f32 %v7825, 0.0
          %v7952 = vmax.f32 %v7828, 0.0
          %v7953 = vmax.f32 %v7833, 0.0
          %v7954 = vmax.f32 %v7836, 0.0
          %v7955 = vmax.f32 %v7841, 0.0
          %v7956 = vmax.f32 %v7844, 0.0
          %v7957 = vmax.f32 %v7849, 0.0
          %v7958 = vmax.f32 %v7852, 0.0
          %v7959 = vmax.f32 %v7857, 0.0
          %v7960 = vmax.f32 %v7860, 0.0
          %v7961 = vmax.f32 %v7865, 0.0
          %v7962 = vmax.f32 %v7868, 0.0
          %v7963 = vmax.f32 %v7873, 0.0
          %v7964 = vmax.f32 %v7876, 0.0
          %v7965 = vmax.f32 %v7881, 0.0
          %v7966 = vmax.f32 %v7884, 0.0
          %v7967 = vmax.f32 %v7889, 0.0
          %v7968 = vmax.f32 %v7892, 0.0
          %v7969 = vmax.f32 %v7897, 0.0
          %v7970 = vmax.f32 %v7900, 0.0
          %v7971 = vmax.f32 %v7905, 0.0
          %v7972 = vmax.f32 %v7908, 0.0
          %v7973 = vmax.f32 %v7913, 0.0
          %v7974 = vmax.f32 %v7916, 0.0
          %v7975 = vmax.f32 %v7921, 0.0
          %v7976 = vmax.f32 %v7924, 0.0
          %v7977 = vmax.f32 %v7929, 0.0
          %v7978 = vmax.f32 %v7932, 0.0
          %v7979 = vmax.f32 %v7937, 0.0
          %v7980 = vmax.f32 %v7940, 0.0
          %v7981 = vmax.f32 %v7945, 0.0
          %v7982 = vmax.f32 %v7948, 0.0
          %v7983 = vpack.c.bf16 %v7952, %v7951
          %v7984 = vpack.c.bf16 %v7954, %v7953
          %v7985 = vpack.c.bf16 %v7956, %v7955
          %v7986 = vpack.c.bf16 %v7958, %v7957
          %v7987 = vpack.c.bf16 %v7960, %v7959
          %v7988 = vpack.c.bf16 %v7962, %v7961
          %v7989 = vpack.c.bf16 %v7964, %v7963
          %v7990 = vpack.c.bf16 %v7966, %v7965
          %v7991 = vpack.c.bf16 %v7968, %v7967
          %v7992 = vpack.c.bf16 %v7970, %v7969
          %v7993 = vpack.c.bf16 %v7972, %v7971
          %v7994 = vpack.c.bf16 %v7974, %v7973
          %v7995 = vpack.c.bf16 %v7976, %v7975
          %v7996 = vpack.c.bf16 %v7978, %v7977
          %v7997 = vpack.c.bf16 %v7980, %v7979
          %v7998 = vpack.c.bf16 %v7982, %v7981
          %v7999 = vld [vmem:[#allocation20] sm:$0xff]
          %v8000 = vld [vmem:[#allocation20 + $0x8] sm:$0xff]
          %v8001 = vld [vmem:[#allocation20 + $0x10] sm:$0xff]
          %v8002 = vld [vmem:[#allocation20 + $0x18] sm:$0xff]
          %v8003 = vld [vmem:[#allocation20 + $0x20] sm:$0xff]
          %v8004 = vld [vmem:[#allocation20 + $0x28] sm:$0xff]
          %v8005 = vld [vmem:[#allocation20 + $0x30] sm:$0xff]
          %v8006 = vld [vmem:[#allocation20 + $0x38] sm:$0xff]
          %v8007 = vld [vmem:[#allocation20 + $0x40] sm:$0xff]
          %v8008 = vld [vmem:[#allocation20 + $0x48] sm:$0xff]
          %v8009 = vld [vmem:[#allocation20 + $0x50] sm:$0xff]
          %v8010 = vld [vmem:[#allocation20 + $0x58] sm:$0xff]
          %v8011 = vld [vmem:[#allocation20 + $0x60] sm:$0xff]
          %v8012 = vld [vmem:[#allocation20 + $0x68] sm:$0xff]
          %v8013 = vld [vmem:[#allocation20 + $0x70] sm:$0xff]
          %v8014 = vld [vmem:[#allocation20 + $0x78] sm:$0xff]
          %v8015 = vld [vmem:[#allocation20 + $0x80] sm:$0xff]
          %v8016 = vld [vmem:[#allocation20 + $0x88] sm:$0xff]
          %v8017 = vld [vmem:[#allocation20 + $0x90] sm:$0xff]
          %v8018 = vld [vmem:[#allocation20 + $0x98] sm:$0xff]
          %v8019 = vld [vmem:[#allocation20 + $0xa0] sm:$0xff]
          %v8020 = vld [vmem:[#allocation20 + $0xa8] sm:$0xff]
          %v8021 = vld [vmem:[#allocation20 + $0xb0] sm:$0xff]
          %v8022 = vld [vmem:[#allocation20 + $0xb8] sm:$0xff]
          %v8023 = vld [vmem:[#allocation20 + $0xc0] sm:$0xff]
          %v8024 = vld [vmem:[#allocation20 + $0xc8] sm:$0xff]
          %v8025 = vld [vmem:[#allocation20 + $0xd0] sm:$0xff]
          %v8026 = vld [vmem:[#allocation20 + $0xd8] sm:$0xff]
          %v8027 = vld [vmem:[#allocation20 + $0xe0] sm:$0xff]
          %v8028 = vld [vmem:[#allocation20 + $0xe8] sm:$0xff]
          %v8029 = vld [vmem:[#allocation20 + $0xf0] sm:$0xff]
          %v8030 = vld [vmem:[#allocation20 + $0xf8] sm:$0xff]
          %v8031 = vld [vmem:[#allocation20 + $0x100] sm:$0xff]
          %v8032 = vld [vmem:[#allocation20 + $0x108] sm:$0xff]
          %v8033 = vld [vmem:[#allocation20 + $0x110] sm:$0xff]
          %v8034 = vld [vmem:[#allocation20 + $0x118] sm:$0xff]
          %v8035 = vld [vmem:[#allocation20 + $0x120] sm:$0xff]
          %v8036 = vld [vmem:[#allocation20 + $0x128] sm:$0xff]
          %v8037 = vld [vmem:[#allocation20 + $0x130] sm:$0xff]
          %v8038 = vld [vmem:[#allocation20 + $0x138] sm:$0xff]
          %v8039 = vld [vmem:[#allocation20 + $0x140] sm:$0xff]
          %v8040 = vld [vmem:[#allocation20 + $0x148] sm:$0xff]
          %v8041 = vld [vmem:[#allocation20 + $0x150] sm:$0xff]
          %v8042 = vld [vmem:[#allocation20 + $0x158] sm:$0xff]
          %v8043 = vld [vmem:[#allocation20 + $0x160] sm:$0xff]
          %v8044 = vld [vmem:[#allocation20 + $0x168] sm:$0xff]
          %v8045 = vld [vmem:[#allocation20 + $0x170] sm:$0xff]
          %v8046 = vld [vmem:[#allocation20 + $0x178] sm:$0xff]
          %v8047 = vld [vmem:[#allocation20 + $0x180] sm:$0xff]
          %v8048 = vld [vmem:[#allocation20 + $0x188] sm:$0xff]
          %v8049 = vld [vmem:[#allocation20 + $0x190] sm:$0xff]
          %v8050 = vld [vmem:[#allocation20 + $0x198] sm:$0xff]
          %v8051 = vld [vmem:[#allocation20 + $0x1a0] sm:$0xff]
          %v8052 = vld [vmem:[#allocation20 + $0x1a8] sm:$0xff]
          %v8053 = vld [vmem:[#allocation20 + $0x1b0] sm:$0xff]
          %v8054 = vld [vmem:[#allocation20 + $0x1b8] sm:$0xff]
          %v8055 = vld [vmem:[#allocation20 + $0x1c0] sm:$0xff]
          %v8056 = vld [vmem:[#allocation20 + $0x1c8] sm:$0xff]
          %v8057 = vld [vmem:[#allocation20 + $0x1d0] sm:$0xff]
          %v8058 = vld [vmem:[#allocation20 + $0x1d8] sm:$0xff]
          %v8059 = vld [vmem:[#allocation20 + $0x1e0] sm:$0xff]
          %v8060 = vld [vmem:[#allocation20 + $0x1e8] sm:$0xff]
          %v8061 = vld [vmem:[#allocation20 + $0x1f0] sm:$0xff]
          %v8062 = vld [vmem:[#allocation20 + $0x1f8] sm:$0xff]
          %v8063 = vld [vmem:[%s22] sm:$0xff]
          %v8065 = vlaneseq
          %v8066 = vshrl.u32 %v8065, 7
          %v8067 = vsub.s32 0, %v8066
          %v8068 = vrot.slane %v8063, %v8067
          %v8069 = vlaneseq
          %v8070 = vshrl.u32 %v8069, 7
          %v8071 = vsub.s32 1, %v8070
          %v8072 = vrot.slane %v8063, %v8071
          %v8073 = vlaneseq
          %v8074 = vshrl.u32 %v8073, 7
          %v8075 = vsub.s32 2, %v8074
          %v8076 = vrot.slane %v8063, %v8075
          %v8077 = vlaneseq
          %v8078 = vshrl.u32 %v8077, 7
          %v8079 = vsub.s32 3, %v8078
          %v8080 = vrot.slane %v8063, %v8079
          %v8081 = vlaneseq
          %v8082 = vshrl.u32 %v8081, 7
          %v8083 = vsub.s32 4, %v8082
          %v8084 = vrot.slane %v8063, %v8083
          %v8085 = vlaneseq
          %v8086 = vshrl.u32 %v8085, 7
          %v8087 = vsub.s32 5, %v8086
          %v8088 = vrot.slane %v8063, %v8087
          %v8089 = vlaneseq
          %v8090 = vshrl.u32 %v8089, 7
          %v8091 = vsub.s32 6, %v8090
          %v8092 = vrot.slane %v8063, %v8091
          %v8093 = vlaneseq
          %v8094 = vshrl.u32 %v8093, 7
          %v8095 = vsub.s32 7, %v8094
          %v8096 = vrot.slane %v8063, %v8095
          %v8169 = vunpack.c.l.b16 %v7999
          %v8170 = vunpack.c.h.b16 %v7999
          %v8171 = vunpack.c.l.b16 %v8000
          %v8172 = vunpack.c.h.b16 %v8000
          %v8173 = vunpack.c.l.b16 %v8001
          %v8174 = vunpack.c.h.b16 %v8001
          %v8175 = vunpack.c.l.b16 %v8002
          %v8176 = vunpack.c.h.b16 %v8002
          %v8177 = vunpack.c.l.b16 %v8003
          %v8178 = vunpack.c.h.b16 %v8003
          %v8179 = vunpack.c.l.b16 %v8004
          %v8180 = vunpack.c.h.b16 %v8004
          %v8181 = vunpack.c.l.b16 %v8005
          %v8182 = vunpack.c.h.b16 %v8005
          %v8183 = vunpack.c.l.b16 %v8006
          %v8184 = vunpack.c.h.b16 %v8006
          %v8185 = vunpack.c.l.b16 %v8007
          %v8186 = vunpack.c.h.b16 %v8007
          %v8187 = vunpack.c.l.b16 %v8008
          %v8188 = vunpack.c.h.b16 %v8008
          %v8189 = vunpack.c.l.b16 %v8009
          %v8190 = vunpack.c.h.b16 %v8009
          %v8191 = vunpack.c.l.b16 %v8010
          %v8192 = vunpack.c.h.b16 %v8010
          %v8193 = vunpack.c.l.b16 %v8011
          %v8194 = vunpack.c.h.b16 %v8011
          %v8195 = vunpack.c.l.b16 %v8012
          %v8196 = vunpack.c.h.b16 %v8012
          %v8197 = vunpack.c.l.b16 %v8013
          %v8198 = vunpack.c.h.b16 %v8013
          %v8199 = vunpack.c.l.b16 %v8014
          %v8200 = vunpack.c.h.b16 %v8014
          %v8201 = vunpack.c.l.b16 %v8015
          %v8202 = vunpack.c.h.b16 %v8015
          %v8203 = vunpack.c.l.b16 %v8016
          %v8204 = vunpack.c.h.b16 %v8016
          %v8205 = vunpack.c.l.b16 %v8017
          %v8206 = vunpack.c.h.b16 %v8017
          %v8207 = vunpack.c.l.b16 %v8018
          %v8208 = vunpack.c.h.b16 %v8018
          %v8209 = vunpack.c.l.b16 %v8019
          %v8210 = vunpack.c.h.b16 %v8019
          %v8211 = vunpack.c.l.b16 %v8020
          %v8212 = vunpack.c.h.b16 %v8020
          %v8213 = vunpack.c.l.b16 %v8021
          %v8214 = vunpack.c.h.b16 %v8021
          %v8215 = vunpack.c.l.b16 %v8022
          %v8216 = vunpack.c.h.b16 %v8022
          %v8217 = vunpack.c.l.b16 %v8023
          %v8218 = vunpack.c.h.b16 %v8023
          %v8219 = vunpack.c.l.b16 %v8024
          %v8220 = vunpack.c.h.b16 %v8024
          %v8221 = vunpack.c.l.b16 %v8025
          %v8222 = vunpack.c.h.b16 %v8025
          %v8223 = vunpack.c.l.b16 %v8026
          %v8224 = vunpack.c.h.b16 %v8026
          %v8225 = vunpack.c.l.b16 %v8027
          %v8226 = vunpack.c.h.b16 %v8027
          %v8227 = vunpack.c.l.b16 %v8028
          %v8228 = vunpack.c.h.b16 %v8028
          %v8229 = vunpack.c.l.b16 %v8029
          %v8230 = vunpack.c.h.b16 %v8029
          %v8231 = vunpack.c.l.b16 %v8030
          %v8232 = vunpack.c.h.b16 %v8030
          %v8233 = vunpack.c.l.b16 %v8031
          %v8234 = vunpack.c.h.b16 %v8031
          %v8235 = vunpack.c.l.b16 %v8032
          %v8236 = vunpack.c.h.b16 %v8032
          %v8237 = vunpack.c.l.b16 %v8033
          %v8238 = vunpack.c.h.b16 %v8033
          %v8239 = vunpack.c.l.b16 %v8034
          %v8240 = vunpack.c.h.b16 %v8034
          %v8241 = vunpack.c.l.b16 %v8035
          %v8242 = vunpack.c.h.b16 %v8035
          %v8243 = vunpack.c.l.b16 %v8036
          %v8244 = vunpack.c.h.b16 %v8036
          %v8245 = vunpack.c.l.b16 %v8037
          %v8246 = vunpack.c.h.b16 %v8037
          %v8247 = vunpack.c.l.b16 %v8038
          %v8248 = vunpack.c.h.b16 %v8038
          %v8249 = vunpack.c.l.b16 %v8039
          %v8250 = vunpack.c.h.b16 %v8039
          %v8251 = vunpack.c.l.b16 %v8040
          %v8252 = vunpack.c.h.b16 %v8040
          %v8253 = vunpack.c.l.b16 %v8041
          %v8254 = vunpack.c.h.b16 %v8041
          %v8255 = vunpack.c.l.b16 %v8042
          %v8256 = vunpack.c.h.b16 %v8042
          %v8257 = vunpack.c.l.b16 %v8043
          %v8258 = vunpack.c.h.b16 %v8043
          %v8259 = vunpack.c.l.b16 %v8044
          %v8260 = vunpack.c.h.b16 %v8044
          %v8261 = vunpack.c.l.b16 %v8045
          %v8262 = vunpack.c.h.b16 %v8045
          %v8263 = vunpack.c.l.b16 %v8046
          %v8264 = vunpack.c.h.b16 %v8046
          %v8265 = vunpack.c.l.b16 %v8047
          %v8266 = vunpack.c.h.b16 %v8047
          %v8267 = vunpack.c.l.b16 %v8048
          %v8268 = vunpack.c.h.b16 %v8048
          %v8269 = vunpack.c.l.b16 %v8049
          %v8270 = vunpack.c.h.b16 %v8049
          %v8271 = vunpack.c.l.b16 %v8050
          %v8272 = vunpack.c.h.b16 %v8050
          %v8273 = vunpack.c.l.b16 %v8051
          %v8274 = vunpack.c.h.b16 %v8051
          %v8275 = vunpack.c.l.b16 %v8052
          %v8276 = vunpack.c.h.b16 %v8052
          %v8277 = vunpack.c.l.b16 %v8053
          %v8278 = vunpack.c.h.b16 %v8053
          %v8279 = vunpack.c.l.b16 %v8054
          %v8280 = vunpack.c.h.b16 %v8054
          %v8281 = vunpack.c.l.b16 %v8055
          %v8282 = vunpack.c.h.b16 %v8055
          %v8283 = vunpack.c.l.b16 %v8056
          %v8284 = vunpack.c.h.b16 %v8056
          %v8285 = vunpack.c.l.b16 %v8057
          %v8286 = vunpack.c.h.b16 %v8057
          %v8287 = vunpack.c.l.b16 %v8058
          %v8288 = vunpack.c.h.b16 %v8058
          %v8289 = vunpack.c.l.b16 %v8059
          %v8290 = vunpack.c.h.b16 %v8059
          %v8291 = vunpack.c.l.b16 %v8060
          %v8292 = vunpack.c.h.b16 %v8060
          %v8293 = vunpack.c.l.b16 %v8061
          %v8294 = vunpack.c.h.b16 %v8061
          %v8295 = vunpack.c.l.b16 %v8062
          %v8296 = vunpack.c.h.b16 %v8062
          %v8297 = vpack.c.b16 %v8177, %v8169
          %v8298 = vpack.c.b16 %v8178, %v8170
          %v8299 = vpack.c.b16 %v8179, %v8171
          %v8300 = vpack.c.b16 %v8180, %v8172
          %v8301 = vpack.c.b16 %v8181, %v8173
          %v8302 = vpack.c.b16 %v8182, %v8174
          %v8303 = vpack.c.b16 %v8183, %v8175
          %v8304 = vpack.c.b16 %v8184, %v8176
          %v8305 = vpack.c.b16 %v8193, %v8185
          %v8306 = vpack.c.b16 %v8194, %v8186
          %v8307 = vpack.c.b16 %v8195, %v8187
          %v8308 = vpack.c.b16 %v8196, %v8188
          %v8309 = vpack.c.b16 %v8197, %v8189
          %v8310 = vpack.c.b16 %v8198, %v8190
          %v8311 = vpack.c.b16 %v8199, %v8191
          %v8312 = vpack.c.b16 %v8200, %v8192
          %v8313 = vpack.c.b16 %v8209, %v8201
          %v8314 = vpack.c.b16 %v8210, %v8202
          %v8315 = vpack.c.b16 %v8211, %v8203
          %v8316 = vpack.c.b16 %v8212, %v8204
          %v8317 = vpack.c.b16 %v8213, %v8205
          %v8318 = vpack.c.b16 %v8214, %v8206
          %v8319 = vpack.c.b16 %v8215, %v8207
          %v8320 = vpack.c.b16 %v8216, %v8208
          %v8321 = vpack.c.b16 %v8225, %v8217
          %v8322 = vpack.c.b16 %v8226, %v8218
          %v8323 = vpack.c.b16 %v8227, %v8219
          %v8324 = vpack.c.b16 %v8228, %v8220
          %v8325 = vpack.c.b16 %v8229, %v8221
          %v8326 = vpack.c.b16 %v8230, %v8222
          %v8327 = vpack.c.b16 %v8231, %v8223
          %v8328 = vpack.c.b16 %v8232, %v8224
          %v8329 = vpack.c.b16 %v8241, %v8233
          %v8330 = vpack.c.b16 %v8242, %v8234
          %v8331 = vpack.c.b16 %v8243, %v8235
          %v8332 = vpack.c.b16 %v8244, %v8236
          %v8333 = vpack.c.b16 %v8245, %v8237
          %v8334 = vpack.c.b16 %v8246, %v8238
          %v8335 = vpack.c.b16 %v8247, %v8239
          %v8336 = vpack.c.b16 %v8248, %v8240
          %v8337 = vpack.c.b16 %v8257, %v8249
          %v8338 = vpack.c.b16 %v8258, %v8250
          %v8339 = vpack.c.b16 %v8259, %v8251
          %v8340 = vpack.c.b16 %v8260, %v8252
          %v8341 = vpack.c.b16 %v8261, %v8253
          %v8342 = vpack.c.b16 %v8262, %v8254
          %v8343 = vpack.c.b16 %v8263, %v8255
          %v8344 = vpack.c.b16 %v8264, %v8256
          %v8345 = vpack.c.b16 %v8273, %v8265
          %v8346 = vpack.c.b16 %v8274, %v8266
          %v8347 = vpack.c.b16 %v8275, %v8267
          %v8348 = vpack.c.b16 %v8276, %v8268
          %v8349 = vpack.c.b16 %v8277, %v8269
          %v8350 = vpack.c.b16 %v8278, %v8270
          %v8351 = vpack.c.b16 %v8279, %v8271
          %v8352 = vpack.c.b16 %v8280, %v8272
          %v8353 = vpack.c.b16 %v8289, %v8281
          %v8354 = vpack.c.b16 %v8290, %v8282
          %v8355 = vpack.c.b16 %v8291, %v8283
          %v8356 = vpack.c.b16 %v8292, %v8284
          %v8357 = vpack.c.b16 %v8293, %v8285
          %v8358 = vpack.c.b16 %v8294, %v8286
          %v8359 = vpack.c.b16 %v8295, %v8287
          %v8360 = vpack.c.b16 %v8296, %v8288
          %8425 = vmatprep.subr.bf16.mxu0 %v8298
          %8426 = vmatpush1.bf16.msra.mxu0 %v8297
          %8427 = vmatprep.subr.bf16.mxu0 %v8306
          %8428 = vmatpush1.bf16.msra.mxu0 %v8305
          %8429 = vmatprep.subr.bf16.mxu0 %v8314
          %8430 = vmatpush1.bf16.msra.mxu0 %v8313
          %8431 = vmatprep.subr.bf16.mxu0 %v8322
          %8432 = vmatpush1.bf16.msra.mxu0 %v8321
          %8433 = vmatprep.subr.bf16.mxu0 %v8330
          %8434 = vmatpush1.bf16.msra.mxu0 %v8329
          %8435 = vmatprep.subr.bf16.mxu0 %v8338
          %8436 = vmatpush1.bf16.msra.mxu0 %v8337
          %8437 = vmatprep.subr.bf16.mxu0 %v8346
          %8438 = vmatpush1.bf16.msra.mxu0 %v8345
          %8439 = vmatprep.subr.bf16.mxu0 %v8354
          %8440 = vmatpush1.bf16.msra.mxu0 %v8353
          %8441 = vmatprep.subr.bf16.mxu0 0
          %8442 = vmatpush1.bf16.msra.mxu0 0
          %8443 = vmatprep.subr.bf16.mxu0 0
          %8444 = vmatpush1.bf16.msra.mxu0 0
          %8445 = vmatprep.subr.bf16.mxu0 0
          %8446 = vmatpush1.bf16.msra.mxu0 0
          %8447 = vmatprep.subr.bf16.mxu0 0
          %8448 = vmatpush1.bf16.msra.mxu0 0
          %8449 = vmatprep.subr.bf16.mxu0 0
          %8450 = vmatpush1.bf16.msra.mxu0 0
          %8451 = vmatprep.subr.bf16.mxu0 0
          %8452 = vmatpush1.bf16.msra.mxu0 0
          %8453 = vmatprep.subr.bf16.mxu0 0
          %8454 = vmatpush1.bf16.msra.mxu0 0
          %8455 = vmatprep.subr.bf16.mxu0 0
          %8456 = vmatpush1.bf16.msra.mxu0 0
          %8457 = vmatprep.mubr.bf16.mxu0 0
          %8458 = vmatmul.mubr.bf16.gmra.mrb[0].mxu0 %v7983
          %v8459 = vpop.f32.mrb[0].mxu0
          %v8460 = vadd.f32 %v8068, %v8459
          %v8461 = vpop.f32.mrb[0].mxu0
          %v8462 = vadd.f32 %v8072, %v8461
          %v8463 = vpop.f32.mrb[0].mxu0
          %v8464 = vadd.f32 %v8068, %v8463
          %v8465 = vpop.f32.mrb[0].mxu0
          %v8466 = vadd.f32 %v8072, %v8465
          %8467 = vmatprep.mubr.bf16.mxu0 0
          %8468 = vmatmul.mubr.bf16.gmra.mrb[0].mxu0 %v7984
          %v8469 = vpop.f32.mrb[0].mxu0
          %v8470 = vadd.f32 %v8068, %v8469
          %v8471 = vpop.f32.mrb[0].mxu0
          %v8472 = vadd.f32 %v8072, %v8471
          %v8473 = vpop.f32.mrb[0].mxu0
          %v8474 = vadd.f32 %v8068, %v8473
          %v8475 = vpop.f32.mrb[0].mxu0
          %v8476 = vadd.f32 %v8072, %v8475
          %8477 = vmatprep.mubr.bf16.mxu0 0
          %8478 = vmatmul.mubr.bf16.gmra.mrb[0].mxu0 %v7985
          %v8479 = vpop.f32.mrb[0].mxu0
          %v8480 = vadd.f32 %v8068, %v8479
          %v8481 = vpop.f32.mrb[0].mxu0
          %v8482 = vadd.f32 %v8072, %v8481
          %v8483 = vpop.f32.mrb[0].mxu0
          %v8484 = vadd.f32 %v8068, %v8483
          %v8485 = vpop.f32.mrb[0].mxu0
          %v8486 = vadd.f32 %v8072, %v8485
          %8487 = vmatprep.mubr.bf16.mxu0 0
          %8488 = vmatmul.mubr.bf16.gmra.mrb[0].mxu0 %v7986
          %v8489 = vpop.f32.mrb[0].mxu0
          %v8490 = vadd.f32 %v8068, %v8489
          %v8491 = vpop.f32.mrb[0].mxu0
          %v8492 = vadd.f32 %v8072, %v8491
          %v8493 = vpop.f32.mrb[0].mxu0
          %v8494 = vadd.f32 %v8068, %v8493
          %v8495 = vpop.f32.mrb[0].mxu0
          %v8496 = vadd.f32 %v8072, %v8495
          %8497 = vmatprep.mubr.bf16.mxu0 0
          %8498 = vmatmul.mubr.bf16.gmra.mrb[0].mxu0 %v7987
          %v8499 = vpop.f32.mrb[0].mxu0
          %v8500 = vadd.f32 %v8068, %v8499
          %v8501 = vpop.f32.mrb[0].mxu0
          %v8502 = vadd.f32 %v8072, %v8501
          %v8503 = vpop.f32.mrb[0].mxu0
          %v8504 = vadd.f32 %v8068, %v8503
          %v8505 = vpop.f32.mrb[0].mxu0
          %v8506 = vadd.f32 %v8072, %v8505
          %8507 = vmatprep.mubr.bf16.mxu0 0
          %8508 = vmatmul.mubr.bf16.gmra.mrb[0].mxu0 %v7988
          %v8509 = vpop.f32.mrb[0].mxu0
          %v8510 = vadd.f32 %v8068, %v8509
          %v8511 = vpop.f32.mrb[0].mxu0
          %v8512 = vadd.f32 %v8072, %v8511
          %v8513 = vpop.f32.mrb[0].mxu0
          %v8514 = vadd.f32 %v8068, %v8513
          %v8515 = vpop.f32.mrb[0].mxu0
          %v8516 = vadd.f32 %v8072, %v8515
          %8517 = vmatprep.mubr.bf16.mxu0 0
          %8518 = vmatmul.mubr.bf16.gmra.mrb[0].mxu0 %v7989
          %v8519 = vpop.f32.mrb[0].mxu0
          %v8520 = vadd.f32 %v8068, %v8519
          %v8521 = vpop.f32.mrb[0].mxu0
          %v8522 = vadd.f32 %v8072, %v8521
          %v8523 = vpop.f32.mrb[0].mxu0
          %v8524 = vadd.f32 %v8068, %v8523
          %v8525 = vpop.f32.mrb[0].mxu0
          %v8526 = vadd.f32 %v8072, %v8525
          %8527 = vmatprep.mubr.bf16.mxu0 0
          %8528 = vmatmul.mubr.bf16.gmra.mrb[0].mxu0 %v7990
          %v8529 = vpop.f32.mrb[0].mxu0
          %v8530 = vadd.f32 %v8068, %v8529
          %v8531 = vpop.f32.mrb[0].mxu0
          %v8532 = vadd.f32 %v8072, %v8531
          %v8533 = vpop.f32.mrb[0].mxu0
          %v8534 = vadd.f32 %v8068, %v8533
          %v8535 = vpop.f32.mrb[0].mxu0
          %v8536 = vadd.f32 %v8072, %v8535
          %8537 = vmatprep.mubr.bf16.mxu0 0
          %8538 = vmatmul.mubr.bf16.gmra.mrb[0].mxu0 %v7991
          %v8539 = vpop.f32.mrb[0].mxu0
          %v8540 = vadd.f32 %v8068, %v8539
          %v8541 = vpop.f32.mrb[0].mxu0
          %v8542 = vadd.f32 %v8072, %v8541
          %v8543 = vpop.f32.mrb[0].mxu0
          %v8544 = vadd.f32 %v8068, %v8543
          %v8545 = vpop.f32.mrb[0].mxu0
          %v8546 = vadd.f32 %v8072, %v8545
          %8547 = vmatprep.mubr.bf16.mxu0 0
          %8548 = vmatmul.mubr.bf16.gmra.mrb[0].mxu0 %v7992
          %v8549 = vpop.f32.mrb[0].mxu0
          %v8550 = vadd.f32 %v8068, %v8549
          %v8551 = vpop.f32.mrb[0].mxu0
          %v8552 = vadd.f32 %v8072, %v8551
          %v8553 = vpop.f32.mrb[0].mxu0
          %v8554 = vadd.f32 %v8068, %v8553
          %v8555 = vpop.f32.mrb[0].mxu0
          %v8556 = vadd.f32 %v8072, %v8555
          %8557 = vmatprep.mubr.bf16.mxu0 0
          %8558 = vmatmul.mubr.bf16.gmra.mrb[0].mxu0 %v7993
          %v8559 = vpop.f32.mrb[0].mxu0
          %v8560 = vadd.f32 %v8068, %v8559
          %v8561 = vpop.f32.mrb[0].mxu0
          %v8562 = vadd.f32 %v8072, %v8561
          %v8563 = vpop.f32.mrb[0].mxu0
          %v8564 = vadd.f32 %v8068, %v8563
          %v8565 = vpop.f32.mrb[0].mxu0
          %v8566 = vadd.f32 %v8072, %v8565
          %8567 = vmatprep.mubr.bf16.mxu0 0
          %8568 = vmatmul.mubr.bf16.gmra.mrb[0].mxu0 %v7994
          %v8569 = vpop.f32.mrb[0].mxu0
          %v8570 = vadd.f32 %v8068, %v8569
          %v8571 = vpop.f32.mrb[0].mxu0
          %v8572 = vadd.f32 %v8072, %v8571
          %v8573 = vpop.f32.mrb[0].mxu0
          %v8574 = vadd.f32 %v8068, %v8573
          %v8575 = vpop.f32.mrb[0].mxu0
          %v8576 = vadd.f32 %v8072, %v8575
          %8577 = vmatprep.mubr.bf16.mxu0 0
          %8578 = vmatmul.mubr.bf16.gmra.mrb[0].mxu0 %v7995
          %v8579 = vpop.f32.mrb[0].mxu0
          %v8580 = vadd.f32 %v8068, %v8579
          %v8581 = vpop.f32.mrb[0].mxu0
          %v8582 = vadd.f32 %v8072, %v8581
          %v8583 = vpop.f32.mrb[0].mxu0
          %v8584 = vadd.f32 %v8068, %v8583
          %v8585 = vpop.f32.mrb[0].mxu0
          %v8586 = vadd.f32 %v8072, %v8585
          %8587 = vmatprep.mubr.bf16.mxu0 0
          %8588 = vmatmul.mubr.bf16.gmra.mrb[0].mxu0 %v7996
          %v8589 = vpop.f32.mrb[0].mxu0
          %v8590 = vadd.f32 %v8068, %v8589
          %v8591 = vpop.f32.mrb[0].mxu0
          %v8592 = vadd.f32 %v8072, %v8591
          %v8593 = vpop.f32.mrb[0].mxu0
          %v8594 = vadd.f32 %v8068, %v8593
          %v8595 = vpop.f32.mrb[0].mxu0
          %v8596 = vadd.f32 %v8072, %v8595
          %8597 = vmatprep.mubr.bf16.mxu0 0
          %8598 = vmatmul.mubr.bf16.gmra.mrb[0].mxu0 %v7997
          %v8599 = vpop.f32.mrb[0].mxu0
          %v8600 = vadd.f32 %v8068, %v8599
          %v8601 = vpop.f32.mrb[0].mxu0
          %v8602 = vadd.f32 %v8072, %v8601
          %v8603 = vpop.f32.mrb[0].mxu0
          %v8604 = vadd.f32 %v8068, %v8603
          %v8605 = vpop.f32.mrb[0].mxu0
          %v8606 = vadd.f32 %v8072, %v8605
          %8607 = vmatprep.mubr.bf16.mxu0 0
          %8608 = vmatmul.mubr.bf16.gmra.mrb[0].mxu0 %v7998
          %v8609 = vpop.f32.mrb[0].mxu0
          %v8610 = vadd.f32 %v8068, %v8609
          %v8611 = vpop.f32.mrb[0].mxu0
          %v8612 = vadd.f32 %v8072, %v8611
          %v8613 = vpop.f32.mrb[0].mxu0
          %v8614 = vadd.f32 %v8068, %v8613
          %v8615 = vpop.f32.mrb[0].mxu0
          %v8616 = vadd.f32 %v8072, %v8615
          %8617 = vdwg.mxu0
          %8618 = vmatprep.subr.bf16.mxu0 %v8300
          %8619 = vmatpush1.bf16.msra.mxu0 %v8299
          %8620 = vmatprep.subr.bf16.mxu0 %v8308
          %8621 = vmatpush1.bf16.msra.mxu0 %v8307
          %8622 = vmatprep.subr.bf16.mxu0 %v8316
          %8623 = vmatpush1.bf16.msra.mxu0 %v8315
          %8624 = vmatprep.subr.bf16.mxu0 %v8324
          %8625 = vmatpush1.bf16.msra.mxu0 %v8323
          %8626 = vmatprep.subr.bf16.mxu0 %v8332
          %8627 = vmatpush1.bf16.msra.mxu0 %v8331
          %8628 = vmatprep.subr.bf16.mxu0 %v8340
          %8629 = vmatpush1.bf16.msra.mxu0 %v8339
          %8630 = vmatprep.subr.bf16.mxu0 %v8348
          %8631 = vmatpush1.bf16.msra.mxu0 %v8347
          %8632 = vmatprep.subr.bf16.mxu0 %v8356
          %8633 = vmatpush1.bf16.msra.mxu0 %v8355
          %8634 = vmatprep.subr.bf16.mxu0 0
          %8635 = vmatpush1.bf16.msra.mxu0 0
          %8636 = vmatprep.subr.bf16.mxu0 0
          %8637 = vmatpush1.bf16.msra.mxu0 0
          %8638 = vmatprep.subr.bf16.mxu0 0
          %8639 = vmatpush1.bf16.msra.mxu0 0
          %8640 = vmatprep.subr.bf16.mxu0 0
          %8641 = vmatpush1.bf16.msra.mxu0 0
          %8642 = vmatprep.subr.bf16.mxu0 0
          %8643 = vmatpush1.bf16.msra.mxu0 0
          %8644 = vmatprep.subr.bf16.mxu0 0
          %8645 = vmatpush1.bf16.msra.mxu0 0
          %8646 = vmatprep.subr.bf16.mxu0 0
          %8647 = vmatpush1.bf16.msra.mxu0 0
          %8648 = vmatprep.subr.bf16.mxu0 0
          %8649 = vmatpush1.bf16.msra.mxu0 0
          %8650 = vmatprep.mubr.bf16.mxu0 0
          %8651 = vmatmul.mubr.bf16.gmra.mrb[0].mxu0 %v7983
          %v8652 = vpop.f32.mrb[0].mxu0
          %v8653 = vadd.f32 %v8076, %v8652
          %v8654 = vpop.f32.mrb[0].mxu0
          %v8655 = vadd.f32 %v8080, %v8654
          %v8656 = vpop.f32.mrb[0].mxu0
          %v8657 = vadd.f32 %v8076, %v8656
          %v8658 = vpop.f32.mrb[0].mxu0
          %v8659 = vadd.f32 %v8080, %v8658
          %8660 = vmatprep.mubr.bf16.mxu0 0
          %8661 = vmatmul.mubr.bf16.gmra.mrb[0].mxu0 %v7984
          %v8662 = vpop.f32.mrb[0].mxu0
          %v8663 = vadd.f32 %v8076, %v8662
          %v8664 = vpop.f32.mrb[0].mxu0
          %v8665 = vadd.f32 %v8080, %v8664
          %v8666 = vpop.f32.mrb[0].mxu0
          %v8667 = vadd.f32 %v8076, %v8666
          %v8668 = vpop.f32.mrb[0].mxu0
          %v8669 = vadd.f32 %v8080, %v8668
          %8670 = vmatprep.mubr.bf16.mxu0 0
          %8671 = vmatmul.mubr.bf16.gmra.mrb[0].mxu0 %v7985
          %v8672 = vpop.f32.mrb[0].mxu0
          %v8673 = vadd.f32 %v8076, %v8672
          %v8674 = vpop.f32.mrb[0].mxu0
          %v8675 = vadd.f32 %v8080, %v8674
          %v8676 = vpop.f32.mrb[0].mxu0
          %v8677 = vadd.f32 %v8076, %v8676
          %v8678 = vpop.f32.mrb[0].mxu0
          %v8679 = vadd.f32 %v8080, %v8678
          %8680 = vmatprep.mubr.bf16.mxu0 0
          %8681 = vmatmul.mubr.bf16.gmra.mrb[0].mxu0 %v7986
          %v8682 = vpop.f32.mrb[0].mxu0
          %v8683 = vadd.f32 %v8076, %v8682
          %v8684 = vpop.f32.mrb[0].mxu0
          %v8685 = vadd.f32 %v8080, %v8684
          %v8686 = vpop.f32.mrb[0].mxu0
          %v8687 = vadd.f32 %v8076, %v8686
          %v8688 = vpop.f32.mrb[0].mxu0
          %v8689 = vadd.f32 %v8080, %v8688
          %8690 = vmatprep.mubr.bf16.mxu0 0
          %8691 = vmatmul.mubr.bf16.gmra.mrb[0].mxu0 %v7987
          %v8692 = vpop.f32.mrb[0].mxu0
          %v8693 = vadd.f32 %v8076, %v8692
          %v8694 = vpop.f32.mrb[0].mxu0
          %v8695 = vadd.f32 %v8080, %v8694
          %v8696 = vpop.f32.mrb[0].mxu0
          %v8697 = vadd.f32 %v8076, %v8696
          %v8698 = vpop.f32.mrb[0].mxu0
          %v8699 = vadd.f32 %v8080, %v8698
          %8700 = vmatprep.mubr.bf16.mxu0 0
          %8701 = vmatmul.mubr.bf16.gmra.mrb[0].mxu0 %v7988
          %v8702 = vpop.f32.mrb[0].mxu0
          %v8703 = vadd.f32 %v8076, %v8702
          %v8704 = vpop.f32.mrb[0].mxu0
          %v8705 = vadd.f32 %v8080, %v8704
          %v8706 = vpop.f32.mrb[0].mxu0
          %v8707 = vadd.f32 %v8076, %v8706
          %v8708 = vpop.f32.mrb[0].mxu0
          %v8709 = vadd.f32 %v8080, %v8708
          %8710 = vmatprep.mubr.bf16.mxu0 0
          %8711 = vmatmul.mubr.bf16.gmra.mrb[0].mxu0 %v7989
          %v8712 = vpop.f32.mrb[0].mxu0
          %v8713 = vadd.f32 %v8076, %v8712
          %v8714 = vpop.f32.mrb[0].mxu0
          %v8715 = vadd.f32 %v8080, %v8714
          %v8716 = vpop.f32.mrb[0].mxu0
          %v8717 = vadd.f32 %v8076, %v8716
          %v8718 = vpop.f32.mrb[0].mxu0
          %v8719 = vadd.f32 %v8080, %v8718
          %8720 = vmatprep.mubr.bf16.mxu0 0
          %8721 = vmatmul.mubr.bf16.gmra.mrb[0].mxu0 %v7990
          %v8722 = vpop.f32.mrb[0].mxu0
          %v8723 = vadd.f32 %v8076, %v8722
          %v8724 = vpop.f32.mrb[0].mxu0
          %v8725 = vadd.f32 %v8080, %v8724
          %v8726 = vpop.f32.mrb[0].mxu0
          %v8727 = vadd.f32 %v8076, %v8726
          %v8728 = vpop.f32.mrb[0].mxu0
          %v8729 = vadd.f32 %v8080, %v8728
          %8730 = vmatprep.mubr.bf16.mxu0 0
          %8731 = vmatmul.mubr.bf16.gmra.mrb[0].mxu0 %v7991
          %v8732 = vpop.f32.mrb[0].mxu0
          %v8733 = vadd.f32 %v8076, %v8732
          %v8734 = vpop.f32.mrb[0].mxu0
          %v8735 = vadd.f32 %v8080, %v8734
          %v8736 = vpop.f32.mrb[0].mxu0
          %v8737 = vadd.f32 %v8076, %v8736
          %v8738 = vpop.f32.mrb[0].mxu0
          %v8739 = vadd.f32 %v8080, %v8738
          %8740 = vmatprep.mubr.bf16.mxu0 0
          %8741 = vmatmul.mubr.bf16.gmra.mrb[0].mxu0 %v7992
          %v8742 = vpop.f32.mrb[0].mxu0
          %v8743 = vadd.f32 %v8076, %v8742
          %v8744 = vpop.f32.mrb[0].mxu0
          %v8745 = vadd.f32 %v8080, %v8744
          %v8746 = vpop.f32.mrb[0].mxu0
          %v8747 = vadd.f32 %v8076, %v8746
          %v8748 = vpop.f32.mrb[0].mxu0
          %v8749 = vadd.f32 %v8080, %v8748
          %8750 = vmatprep.mubr.bf16.mxu0 0
          %8751 = vmatmul.mubr.bf16.gmra.mrb[0].mxu0 %v7993
          %v8752 = vpop.f32.mrb[0].mxu0
          %v8753 = vadd.f32 %v8076, %v8752
          %v8754 = vpop.f32.mrb[0].mxu0
          %v8755 = vadd.f32 %v8080, %v8754
          %v8756 = vpop.f32.mrb[0].mxu0
          %v8757 = vadd.f32 %v8076, %v8756
          %v8758 = vpop.f32.mrb[0].mxu0
          %v8759 = vadd.f32 %v8080, %v8758
          %8760 = vmatprep.mubr.bf16.mxu0 0
          %8761 = vmatmul.mubr.bf16.gmra.mrb[0].mxu0 %v7994
          %v8762 = vpop.f32.mrb[0].mxu0
          %v8763 = vadd.f32 %v8076, %v8762
          %v8764 = vpop.f32.mrb[0].mxu0
          %v8765 = vadd.f32 %v8080, %v8764
          %v8766 = vpop.f32.mrb[0].mxu0
          %v8767 = vadd.f32 %v8076, %v8766
          %v8768 = vpop.f32.mrb[0].mxu0
          %v8769 = vadd.f32 %v8080, %v8768
          %8770 = vmatprep.mubr.bf16.mxu0 0
          %8771 = vmatmul.mubr.bf16.gmra.mrb[0].mxu0 %v7995
          %v8772 = vpop.f32.mrb[0].mxu0
          %v8773 = vadd.f32 %v8076, %v8772
          %v8774 = vpop.f32.mrb[0].mxu0
          %v8775 = vadd.f32 %v8080, %v8774
          %v8776 = vpop.f32.mrb[0].mxu0
          %v8777 = vadd.f32 %v8076, %v8776
          %v8778 = vpop.f32.mrb[0].mxu0
          %v8779 = vadd.f32 %v8080, %v8778
          %8780 = vmatprep.mubr.bf16.mxu0 0
          %8781 = vmatmul.mubr.bf16.gmra.mrb[0].mxu0 %v7996
          %v8782 = vpop.f32.mrb[0].mxu0
          %v8783 = vadd.f32 %v8076, %v8782
          %v8784 = vpop.f32.mrb[0].mxu0
          %v8785 = vadd.f32 %v8080, %v8784
          %v8786 = vpop.f32.mrb[0].mxu0
          %v8787 = vadd.f32 %v8076, %v8786
          %v8788 = vpop.f32.mrb[0].mxu0
          %v8789 = vadd.f32 %v8080, %v8788
          %8790 = vmatprep.mubr.bf16.mxu0 0
          %8791 = vmatmul.mubr.bf16.gmra.mrb[0].mxu0 %v7997
          %v8792 = vpop.f32.mrb[0].mxu0
          %v8793 = vadd.f32 %v8076, %v8792
          %v8794 = vpop.f32.mrb[0].mxu0
          %v8795 = vadd.f32 %v8080, %v8794
          %v8796 = vpop.f32.mrb[0].mxu0
          %v8797 = vadd.f32 %v8076, %v8796
          %v8798 = vpop.f32.mrb[0].mxu0
          %v8799 = vadd.f32 %v8080, %v8798
          %8800 = vmatprep.mubr.bf16.mxu0 0
          %8801 = vmatmul.mubr.bf16.gmra.mrb[0].mxu0 %v7998
          %v8802 = vpop.f32.mrb[0].mxu0
          %v8803 = vadd.f32 %v8076, %v8802
          %v8804 = vpop.f32.mrb[0].mxu0
          %v8805 = vadd.f32 %v8080, %v8804
          %v8806 = vpop.f32.mrb[0].mxu0
          %v8807 = vadd.f32 %v8076, %v8806
          %v8808 = vpop.f32.mrb[0].mxu0
          %v8809 = vadd.f32 %v8080, %v8808
          %8810 = vdwg.mxu0
          %8811 = vmatprep.subr.bf16.mxu0 %v8302
          %8812 = vmatpush1.bf16.msra.mxu0 %v8301
          %8813 = vmatprep.subr.bf16.mxu0 %v8310
          %8814 = vmatpush1.bf16.msra.mxu0 %v8309
          %8815 = vmatprep.subr.bf16.mxu0 %v8318
          %8816 = vmatpush1.bf16.msra.mxu0 %v8317
          %8817 = vmatprep.subr.bf16.mxu0 %v8326
          %8818 = vmatpush1.bf16.msra.mxu0 %v8325
          %8819 = vmatprep.subr.bf16.mxu0 %v8334
          %8820 = vmatpush1.bf16.msra.mxu0 %v8333
          %8821 = vmatprep.subr.bf16.mxu0 %v8342
          %8822 = vmatpush1.bf16.msra.mxu0 %v8341
          %8823 = vmatprep.subr.bf16.mxu0 %v8350
          %8824 = vmatpush1.bf16.msra.mxu0 %v8349
          %8825 = vmatprep.subr.bf16.mxu0 %v8358
          %8826 = vmatpush1.bf16.msra.mxu0 %v8357
          %8827 = vmatprep.subr.bf16.mxu0 0
          %8828 = vmatpush1.bf16.msra.mxu0 0
          %8829 = vmatprep.subr.bf16.mxu0 0
          %8830 = vmatpush1.bf16.msra.mxu0 0
          %8831 = vmatprep.subr.bf16.mxu0 0
          %8832 = vmatpush1.bf16.msra.mxu0 0
          %8833 = vmatprep.subr.bf16.mxu0 0
          %8834 = vmatpush1.bf16.msra.mxu0 0
          %8835 = vmatprep.subr.bf16.mxu0 0
          %8836 = vmatpush1.bf16.msra.mxu0 0
          %8837 = vmatprep.subr.bf16.mxu0 0
          %8838 = vmatpush1.bf16.msra.mxu0 0
          %8839 = vmatprep.subr.bf16.mxu0 0
          %8840 = vmatpush1.bf16.msra.mxu0 0
          %8841 = vmatprep.subr.bf16.mxu0 0
          %8842 = vmatpush1.bf16.msra.mxu0 0
          %8843 = vmatprep.mubr.bf16.mxu0 0
          %8844 = vmatmul.mubr.bf16.gmra.mrb[0].mxu0 %v7983
          %v8845 = vpop.f32.mrb[0].mxu0
          %v8846 = vadd.f32 %v8084, %v8845
          %v8847 = vpop.f32.mrb[0].mxu0
          %v8848 = vadd.f32 %v8088, %v8847
          %v8849 = vpop.f32.mrb[0].mxu0
          %v8850 = vadd.f32 %v8084, %v8849
          %v8851 = vpop.f32.mrb[0].mxu0
          %v8852 = vadd.f32 %v8088, %v8851
          %8853 = vmatprep.mubr.bf16.mxu0 0
          %8854 = vmatmul.mubr.bf16.gmra.mrb[0].mxu0 %v7984
          %v8855 = vpop.f32.mrb[0].mxu0
          %v8856 = vadd.f32 %v8084, %v8855
          %v8857 = vpop.f32.mrb[0].mxu0
          %v8858 = vadd.f32 %v8088, %v8857
          %v8859 = vpop.f32.mrb[0].mxu0
          %v8860 = vadd.f32 %v8084, %v8859
          %v8861 = vpop.f32.mrb[0].mxu0
          %v8862 = vadd.f32 %v8088, %v8861
          %8863 = vmatprep.mubr.bf16.mxu0 0
          %8864 = vmatmul.mubr.bf16.gmra.mrb[0].mxu0 %v7985
          %v8865 = vpop.f32.mrb[0].mxu0
          %v8866 = vadd.f32 %v8084, %v8865
          %v8867 = vpop.f32.mrb[0].mxu0
          %v8868 = vadd.f32 %v8088, %v8867
          %v8869 = vpop.f32.mrb[0].mxu0
          %v8870 = vadd.f32 %v8084, %v8869
          %v8871 = vpop.f32.mrb[0].mxu0
          %v8872 = vadd.f32 %v8088, %v8871
          %8873 = vmatprep.mubr.bf16.mxu0 0
          %8874 = vmatmul.mubr.bf16.gmra.mrb[0].mxu0 %v7986
          %v8875 = vpop.f32.mrb[0].mxu0
          %v8876 = vadd.f32 %v8084, %v8875
          %v8877 = vpop.f32.mrb[0].mxu0
          %v8878 = vadd.f32 %v8088, %v8877
          %v8879 = vpop.f32.mrb[0].mxu0
          %v8880 = vadd.f32 %v8084, %v8879
          %v8881 = vpop.f32.mrb[0].mxu0
          %v8882 = vadd.f32 %v8088, %v8881
          %8883 = vmatprep.mubr.bf16.mxu0 0
          %8884 = vmatmul.mubr.bf16.gmra.mrb[0].mxu0 %v7987
          %v8885 = vpop.f32.mrb[0].mxu0
          %v8886 = vadd.f32 %v8084, %v8885
          %v8887 = vpop.f32.mrb[0].mxu0
          %v8888 = vadd.f32 %v8088, %v8887
          %v8889 = vpop.f32.mrb[0].mxu0
          %v8890 = vadd.f32 %v8084, %v8889
          %v8891 = vpop.f32.mrb[0].mxu0
          %v8892 = vadd.f32 %v8088, %v8891
          %8893 = vmatprep.mubr.bf16.mxu0 0
          %8894 = vmatmul.mubr.bf16.gmra.mrb[0].mxu0 %v7988
          %v8895 = vpop.f32.mrb[0].mxu0
          %v8896 = vadd.f32 %v8084, %v8895
          %v8897 = vpop.f32.mrb[0].mxu0
          %v8898 = vadd.f32 %v8088, %v8897
          %v8899 = vpop.f32.mrb[0].mxu0
          %v8900 = vadd.f32 %v8084, %v8899
          %v8901 = vpop.f32.mrb[0].mxu0
          %v8902 = vadd.f32 %v8088, %v8901
          %8903 = vmatprep.mubr.bf16.mxu0 0
          %8904 = vmatmul.mubr.bf16.gmra.mrb[0].mxu0 %v7989
          %v8905 = vpop.f32.mrb[0].mxu0
          %v8906 = vadd.f32 %v8084, %v8905
          %v8907 = vpop.f32.mrb[0].mxu0
          %v8908 = vadd.f32 %v8088, %v8907
          %v8909 = vpop.f32.mrb[0].mxu0
          %v8910 = vadd.f32 %v8084, %v8909
          %v8911 = vpop.f32.mrb[0].mxu0
          %v8912 = vadd.f32 %v8088, %v8911
          %8913 = vmatprep.mubr.bf16.mxu0 0
          %8914 = vmatmul.mubr.bf16.gmra.mrb[0].mxu0 %v7990
          %v8915 = vpop.f32.mrb[0].mxu0
          %v8916 = vadd.f32 %v8084, %v8915
          %v8917 = vpop.f32.mrb[0].mxu0
          %v8918 = vadd.f32 %v8088, %v8917
          %v8919 = vpop.f32.mrb[0].mxu0
          %v8920 = vadd.f32 %v8084, %v8919
          %v8921 = vpop.f32.mrb[0].mxu0
          %v8922 = vadd.f32 %v8088, %v8921
          %8923 = vmatprep.mubr.bf16.mxu0 0
          %8924 = vmatmul.mubr.bf16.gmra.mrb[0].mxu0 %v7991
          %v8925 = vpop.f32.mrb[0].mxu0
          %v8926 = vadd.f32 %v8084, %v8925
          %v8927 = vpop.f32.mrb[0].mxu0
          %v8928 = vadd.f32 %v8088, %v8927
          %v8929 = vpop.f32.mrb[0].mxu0
          %v8930 = vadd.f32 %v8084, %v8929
          %v8931 = vpop.f32.mrb[0].mxu0
          %v8932 = vadd.f32 %v8088, %v8931
          %8933 = vmatprep.mubr.bf16.mxu0 0
          %8934 = vmatmul.mubr.bf16.gmra.mrb[0].mxu0 %v7992
          %v8935 = vpop.f32.mrb[0].mxu0
          %v8936 = vadd.f32 %v8084, %v8935
          %v8937 = vpop.f32.mrb[0].mxu0
          %v8938 = vadd.f32 %v8088, %v8937
          %v8939 = vpop.f32.mrb[0].mxu0
          %v8940 = vadd.f32 %v8084, %v8939
          %v8941 = vpop.f32.mrb[0].mxu0
          %v8942 = vadd.f32 %v8088, %v8941
          %8943 = vmatprep.mubr.bf16.mxu0 0
          %8944 = vmatmul.mubr.bf16.gmra.mrb[0].mxu0 %v7993
          %v8945 = vpop.f32.mrb[0].mxu0
          %v8946 = vadd.f32 %v8084, %v8945
          %v8947 = vpop.f32.mrb[0].mxu0
          %v8948 = vadd.f32 %v8088, %v8947
          %v8949 = vpop.f32.mrb[0].mxu0
          %v8950 = vadd.f32 %v8084, %v8949
          %v8951 = vpop.f32.mrb[0].mxu0
          %v8952 = vadd.f32 %v8088, %v8951
          %8953 = vmatprep.mubr.bf16.mxu0 0
          %8954 = vmatmul.mubr.bf16.gmra.mrb[0].mxu0 %v7994
          %v8955 = vpop.f32.mrb[0].mxu0
          %v8956 = vadd.f32 %v8084, %v8955
          %v8957 = vpop.f32.mrb[0].mxu0
          %v8958 = vadd.f32 %v8088, %v8957
          %v8959 = vpop.f32.mrb[0].mxu0
          %v8960 = vadd.f32 %v8084, %v8959
          %v8961 = vpop.f32.mrb[0].mxu0
          %v8962 = vadd.f32 %v8088, %v8961
          %8963 = vmatprep.mubr.bf16.mxu0 0
          %8964 = vmatmul.mubr.bf16.gmra.mrb[0].mxu0 %v7995
          %v8965 = vpop.f32.mrb[0].mxu0
          %v8966 = vadd.f32 %v8084, %v8965
          %v8967 = vpop.f32.mrb[0].mxu0
          %v8968 = vadd.f32 %v8088, %v8967
          %v8969 = vpop.f32.mrb[0].mxu0
          %v8970 = vadd.f32 %v8084, %v8969
          %v8971 = vpop.f32.mrb[0].mxu0
          %v8972 = vadd.f32 %v8088, %v8971
          %8973 = vmatprep.mubr.bf16.mxu0 0
          %8974 = vmatmul.mubr.bf16.gmra.mrb[0].mxu0 %v7996
          %v8975 = vpop.f32.mrb[0].mxu0
          %v8976 = vadd.f32 %v8084, %v8975
          %v8977 = vpop.f32.mrb[0].mxu0
          %v8978 = vadd.f32 %v8088, %v8977
          %v8979 = vpop.f32.mrb[0].mxu0
          %v8980 = vadd.f32 %v8084, %v8979
          %v8981 = vpop.f32.mrb[0].mxu0
          %v8982 = vadd.f32 %v8088, %v8981
          %8983 = vmatprep.mubr.bf16.mxu0 0
          %8984 = vmatmul.mubr.bf16.gmra.mrb[0].mxu0 %v7997
          %v8985 = vpop.f32.mrb[0].mxu0
          %v8986 = vadd.f32 %v8084, %v8985
          %v8987 = vpop.f32.mrb[0].mxu0
          %v8988 = vadd.f32 %v8088, %v8987
          %v8989 = vpop.f32.mrb[0].mxu0
          %v8990 = vadd.f32 %v8084, %v8989
          %v8991 = vpop.f32.mrb[0].mxu0
          %v8992 = vadd.f32 %v8088, %v8991
          %8993 = vmatprep.mubr.bf16.mxu0 0
          %8994 = vmatmul.mubr.bf16.gmra.mrb[0].mxu0 %v7998
          %v8995 = vpop.f32.mrb[0].mxu0
          %v8996 = vadd.f32 %v8084, %v8995
          %v8997 = vpop.f32.mrb[0].mxu0
          %v8998 = vadd.f32 %v8088, %v8997
          %v8999 = vpop.f32.mrb[0].mxu0
          %v9000 = vadd.f32 %v8084, %v8999
          %v9001 = vpop.f32.mrb[0].mxu0
          %v9002 = vadd.f32 %v8088, %v9001
          %9003 = vdwg.mxu0
          %9004 = vmatprep.subr.bf16.mxu0 %v8304
          %9005 = vmatpush1.bf16.msra.mxu0 %v8303
          %9006 = vmatprep.subr.bf16.mxu0 %v8312
          %9007 = vmatpush1.bf16.msra.mxu0 %v8311
          %9008 = vmatprep.subr.bf16.mxu0 %v8320
          %9009 = vmatpush1.bf16.msra.mxu0 %v8319
          %9010 = vmatprep.subr.bf16.mxu0 %v8328
          %9011 = vmatpush1.bf16.msra.mxu0 %v8327
          %9012 = vmatprep.subr.bf16.mxu0 %v8336
          %9013 = vmatpush1.bf16.msra.mxu0 %v8335
          %9014 = vmatprep.subr.bf16.mxu0 %v8344
          %9015 = vmatpush1.bf16.msra.mxu0 %v8343
          %9016 = vmatprep.subr.bf16.mxu0 %v8352
          %9017 = vmatpush1.bf16.msra.mxu0 %v8351
          %9018 = vmatprep.subr.bf16.mxu0 %v8360
          %9019 = vmatpush1.bf16.msra.mxu0 %v8359
          %9020 = vmatprep.subr.bf16.mxu0 0
          %9021 = vmatpush1.bf16.msra.mxu0 0
          %9022 = vmatprep.subr.bf16.mxu0 0
          %9023 = vmatpush1.bf16.msra.mxu0 0
          %9024 = vmatprep.subr.bf16.mxu0 0
          %9025 = vmatpush1.bf16.msra.mxu0 0
          %9026 = vmatprep.subr.bf16.mxu0 0
          %9027 = vmatpush1.bf16.msra.mxu0 0
          %9028 = vmatprep.subr.bf16.mxu0 0
          %9029 = vmatpush1.bf16.msra.mxu0 0
          %9030 = vmatprep.subr.bf16.mxu0 0
          %9031 = vmatpush1.bf16.msra.mxu0 0
          %9032 = vmatprep.subr.bf16.mxu0 0
          %9033 = vmatpush1.bf16.msra.mxu0 0
          %9034 = vmatprep.subr.bf16.mxu0 0
          %9035 = vmatpush1.bf16.msra.mxu0 0
          %9036 = vmatprep.mubr.bf16.mxu0 0
          %9037 = vmatmul.mubr.bf16.gmra.mrb[0].mxu0 %v7983
          %v9038 = vpop.f32.mrb[0].mxu0
          %v9039 = vadd.f32 %v8092, %v9038
          %v9040 = vpop.f32.mrb[0].mxu0
          %v9041 = vadd.f32 %v8096, %v9040
          %v9042 = vpop.f32.mrb[0].mxu0
          %v9043 = vadd.f32 %v8092, %v9042
          %v9044 = vpop.f32.mrb[0].mxu0
          %v9045 = vadd.f32 %v8096, %v9044
          %9046 = vmatprep.mubr.bf16.mxu0 0
          %9047 = vmatmul.mubr.bf16.gmra.mrb[0].mxu0 %v7984
          %v9048 = vpop.f32.mrb[0].mxu0
          %v9049 = vadd.f32 %v8092, %v9048
          %v9050 = vpop.f32.mrb[0].mxu0
          %v9051 = vadd.f32 %v8096, %v9050
          %v9052 = vpop.f32.mrb[0].mxu0
          %v9053 = vadd.f32 %v8092, %v9052
          %v9054 = vpop.f32.mrb[0].mxu0
          %v9055 = vadd.f32 %v8096, %v9054
          %9056 = vmatprep.mubr.bf16.mxu0 0
          %9057 = vmatmul.mubr.bf16.gmra.mrb[0].mxu0 %v7985
          %v9058 = vpop.f32.mrb[0].mxu0
          %v9059 = vadd.f32 %v8092, %v9058
          %v9060 = vpop.f32.mrb[0].mxu0
          %v9061 = vadd.f32 %v8096, %v9060
          %v9062 = vpop.f32.mrb[0].mxu0
          %v9063 = vadd.f32 %v8092, %v9062
          %v9064 = vpop.f32.mrb[0].mxu0
          %v9065 = vadd.f32 %v8096, %v9064
          %9066 = vmatprep.mubr.bf16.mxu0 0
          %9067 = vmatmul.mubr.bf16.gmra.mrb[0].mxu0 %v7986
          %v9068 = vpop.f32.mrb[0].mxu0
          %v9069 = vadd.f32 %v8092, %v9068
          %v9070 = vpop.f32.mrb[0].mxu0
          %v9071 = vadd.f32 %v8096, %v9070
          %v9072 = vpop.f32.mrb[0].mxu0
          %v9073 = vadd.f32 %v8092, %v9072
          %v9074 = vpop.f32.mrb[0].mxu0
          %v9075 = vadd.f32 %v8096, %v9074
          %9076 = vmatprep.mubr.bf16.mxu0 0
          %9077 = vmatmul.mubr.bf16.gmra.mrb[0].mxu0 %v7987
          %v9078 = vpop.f32.mrb[0].mxu0
          %v9079 = vadd.f32 %v8092, %v9078
          %v9080 = vpop.f32.mrb[0].mxu0
          %v9081 = vadd.f32 %v8096, %v9080
          %v9082 = vpop.f32.mrb[0].mxu0
          %v9083 = vadd.f32 %v8092, %v9082
          %v9084 = vpop.f32.mrb[0].mxu0
          %v9085 = vadd.f32 %v8096, %v9084
          %9086 = vmatprep.mubr.bf16.mxu0 0
          %9087 = vmatmul.mubr.bf16.gmra.mrb[0].mxu0 %v7988
          %v9088 = vpop.f32.mrb[0].mxu0
          %v9089 = vadd.f32 %v8092, %v9088
          %v9090 = vpop.f32.mrb[0].mxu0
          %v9091 = vadd.f32 %v8096, %v9090
          %v9092 = vpop.f32.mrb[0].mxu0
          %v9093 = vadd.f32 %v8092, %v9092
          %v9094 = vpop.f32.mrb[0].mxu0
          %v9095 = vadd.f32 %v8096, %v9094
          %9096 = vmatprep.mubr.bf16.mxu0 0
          %9097 = vmatmul.mubr.bf16.gmra.mrb[0].mxu0 %v7989
          %v9098 = vpop.f32.mrb[0].mxu0
          %v9099 = vadd.f32 %v8092, %v9098
          %v9100 = vpop.f32.mrb[0].mxu0
          %v9101 = vadd.f32 %v8096, %v9100
          %v9102 = vpop.f32.mrb[0].mxu0
          %v9103 = vadd.f32 %v8092, %v9102
          %v9104 = vpop.f32.mrb[0].mxu0
          %v9105 = vadd.f32 %v8096, %v9104
          %9106 = vmatprep.mubr.bf16.mxu0 0
          %9107 = vmatmul.mubr.bf16.gmra.mrb[0].mxu0 %v7990
          %v9108 = vpop.f32.mrb[0].mxu0
          %v9109 = vadd.f32 %v8092, %v9108
          %v9110 = vpop.f32.mrb[0].mxu0
          %v9111 = vadd.f32 %v8096, %v9110
          %v9112 = vpop.f32.mrb[0].mxu0
          %v9113 = vadd.f32 %v8092, %v9112
          %v9114 = vpop.f32.mrb[0].mxu0
          %v9115 = vadd.f32 %v8096, %v9114
          %9116 = vmatprep.mubr.bf16.mxu0 0
          %9117 = vmatmul.mubr.bf16.gmra.mrb[0].mxu0 %v7991
          %v9118 = vpop.f32.mrb[0].mxu0
          %v9119 = vadd.f32 %v8092, %v9118
          %v9120 = vpop.f32.mrb[0].mxu0
          %v9121 = vadd.f32 %v8096, %v9120
          %v9122 = vpop.f32.mrb[0].mxu0
          %v9123 = vadd.f32 %v8092, %v9122
          %v9124 = vpop.f32.mrb[0].mxu0
          %v9125 = vadd.f32 %v8096, %v9124
          %9126 = vmatprep.mubr.bf16.mxu0 0
          %9127 = vmatmul.mubr.bf16.gmra.mrb[0].mxu0 %v7992
          %v9128 = vpop.f32.mrb[0].mxu0
          %v9129 = vadd.f32 %v8092, %v9128
          %v9130 = vpop.f32.mrb[0].mxu0
          %v9131 = vadd.f32 %v8096, %v9130
          %v9132 = vpop.f32.mrb[0].mxu0
          %v9133 = vadd.f32 %v8092, %v9132
          %v9134 = vpop.f32.mrb[0].mxu0
          %v9135 = vadd.f32 %v8096, %v9134
          %9136 = vmatprep.mubr.bf16.mxu0 0
          %9137 = vmatmul.mubr.bf16.gmra.mrb[0].mxu0 %v7993
          %v9138 = vpop.f32.mrb[0].mxu0
          %v9139 = vadd.f32 %v8092, %v9138
          %v9140 = vpop.f32.mrb[0].mxu0
          %v9141 = vadd.f32 %v8096, %v9140
          %v9142 = vpop.f32.mrb[0].mxu0
          %v9143 = vadd.f32 %v8092, %v9142
          %v9144 = vpop.f32.mrb[0].mxu0
          %v9145 = vadd.f32 %v8096, %v9144
          %9146 = vmatprep.mubr.bf16.mxu0 0
          %9147 = vmatmul.mubr.bf16.gmra.mrb[0].mxu0 %v7994
          %v9148 = vpop.f32.mrb[0].mxu0
          %v9149 = vadd.f32 %v8092, %v9148
          %v9150 = vpop.f32.mrb[0].mxu0
          %v9151 = vadd.f32 %v8096, %v9150
          %v9152 = vpop.f32.mrb[0].mxu0
          %v9153 = vadd.f32 %v8092, %v9152
          %v9154 = vpop.f32.mrb[0].mxu0
          %v9155 = vadd.f32 %v8096, %v9154
          %9156 = vmatprep.mubr.bf16.mxu0 0
          %9157 = vmatmul.mubr.bf16.gmra.mrb[0].mxu0 %v7995
          %v9158 = vpop.f32.mrb[0].mxu0
          %v9159 = vadd.f32 %v8092, %v9158
          %v9160 = vpop.f32.mrb[0].mxu0
          %v9161 = vadd.f32 %v8096, %v9160
          %v9162 = vpop.f32.mrb[0].mxu0
          %v9163 = vadd.f32 %v8092, %v9162
          %v9164 = vpop.f32.mrb[0].mxu0
          %v9165 = vadd.f32 %v8096, %v9164
          %9166 = vmatprep.mubr.bf16.mxu0 0
          %9167 = vmatmul.mubr.bf16.gmra.mrb[0].mxu0 %v7996
          %v9168 = vpop.f32.mrb[0].mxu0
          %v9169 = vadd.f32 %v8092, %v9168
          %v9170 = vpop.f32.mrb[0].mxu0
          %v9171 = vadd.f32 %v8096, %v9170
          %v9172 = vpop.f32.mrb[0].mxu0
          %v9173 = vadd.f32 %v8092, %v9172
          %v9174 = vpop.f32.mrb[0].mxu0
          %v9175 = vadd.f32 %v8096, %v9174
          %9176 = vmatprep.mubr.bf16.mxu0 0
          %9177 = vmatmul.mubr.bf16.gmra.mrb[0].mxu0 %v7997
          %v9178 = vpop.f32.mrb[0].mxu0
          %v9179 = vadd.f32 %v8092, %v9178
          %v9180 = vpop.f32.mrb[0].mxu0
          %v9181 = vadd.f32 %v8096, %v9180
          %v9182 = vpop.f32.mrb[0].mxu0
          %v9183 = vadd.f32 %v8092, %v9182
          %v9184 = vpop.f32.mrb[0].mxu0
          %v9185 = vadd.f32 %v8096, %v9184
          %9186 = vmatprep.mubr.bf16.mxu0 0
          %9187 = vmatmul.mubr.bf16.gmra.mrb[0].mxu0 %v7998
          %v9188 = vpop.f32.mrb[0].mxu0
          %v9189 = vadd.f32 %v8092, %v9188
          %v9190 = vpop.f32.mrb[0].mxu0
          %v9191 = vadd.f32 %v8096, %v9190
          %v9192 = vpop.f32.mrb[0].mxu0
          %v9193 = vadd.f32 %v8092, %v9192
          %v9194 = vpop.f32.mrb[0].mxu0
          %v9195 = vadd.f32 %v8096, %v9194
          %9196 = vdwg.mxu0
          %v9197 = vmax.f32 %v8460, %v8464
          %v9198 = vmax.f32 %v9197, %v8470
          %v9199 = vmax.f32 %v9198, %v8474
          %v9200 = vmax.f32 %v9199, %v8480
          %v9201 = vmax.f32 %v9200, %v8484
          %v9202 = vmax.f32 %v9201, %v8490
          %v9203 = vmax.f32 %v9202, %v8494
          %v9204 = vmax.f32 %v9203, %v8500
          %v9205 = vmax.f32 %v9204, %v8504
          %v9206 = vmax.f32 %v9205, %v8510
          %v9207 = vmax.f32 %v9206, %v8514
          %v9208 = vmax.f32 %v9207, %v8520
          %v9209 = vmax.f32 %v9208, %v8524
          %v9210 = vmax.f32 %v9209, %v8530
          %v9211 = vmax.f32 %v9210, %v8534
          %v9212 = vrot.slane %v9211, 4
          %v9213 = vmax.f32 %v9211, %v9212
          %v9214 = vrot.slane %v9213, 2
          %v9215 = vmax.f32 %v9213, %v9214
          %v9216 = vrot.slane %v9215, 1
          %v9217 = vmax.f32 %v9215, %v9216
          %v9218 = vmax.f32 %v8462, %v8466
          %v9219 = vmax.f32 %v9218, %v8472
          %v9220 = vmax.f32 %v9219, %v8476
          %v9221 = vmax.f32 %v9220, %v8482
          %v9222 = vmax.f32 %v9221, %v8486
          %v9223 = vmax.f32 %v9222, %v8492
          %v9224 = vmax.f32 %v9223, %v8496
          %v9225 = vmax.f32 %v9224, %v8502
          %v9226 = vmax.f32 %v9225, %v8506
          %v9227 = vmax.f32 %v9226, %v8512
          %v9228 = vmax.f32 %v9227, %v8516
          %v9229 = vmax.f32 %v9228, %v8522
          %v9230 = vmax.f32 %v9229, %v8526
          %v9231 = vmax.f32 %v9230, %v8532
          %v9232 = vmax.f32 %v9231, %v8536
          %v9233 = vrot.slane %v9232, 4
          %v9234 = vmax.f32 %v9232, %v9233
          %v9235 = vrot.slane %v9234, 2
          %v9236 = vmax.f32 %v9234, %v9235
          %v9237 = vrot.slane %v9236, 1
          %v9238 = vmax.f32 %v9236, %v9237
          %v9239 = vmax.f32 %v8653, %v8657
          %v9240 = vmax.f32 %v9239, %v8663
          %v9241 = vmax.f32 %v9240, %v8667
          %v9242 = vmax.f32 %v9241, %v8673
          %v9243 = vmax.f32 %v9242, %v8677
          %v9244 = vmax.f32 %v9243, %v8683
          %v9245 = vmax.f32 %v9244, %v8687
          %v9246 = vmax.f32 %v9245, %v8693
          %v9247 = vmax.f32 %v9246, %v8697
          %v9248 = vmax.f32 %v9247, %v8703
          %v9249 = vmax.f32 %v9248, %v8707
          %v9250 = vmax.f32 %v9249, %v8713
          %v9251 = vmax.f32 %v9250, %v8717
          %v9252 = vmax.f32 %v9251, %v8723
          %v9253 = vmax.f32 %v9252, %v8727
          %v9254 = vrot.slane %v9253, 4
          %v9255 = vmax.f32 %v9253, %v9254
          %v9256 = vrot.slane %v9255, 2
          %v9257 = vmax.f32 %v9255, %v9256
          %v9258 = vrot.slane %v9257, 1
          %v9259 = vmax.f32 %v9257, %v9258
          %v9260 = vmax.f32 %v8655, %v8659
          %v9261 = vmax.f32 %v9260, %v8665
          %v9262 = vmax.f32 %v9261, %v8669
          %v9263 = vmax.f32 %v9262, %v8675
          %v9264 = vmax.f32 %v9263, %v8679
          %v9265 = vmax.f32 %v9264, %v8685
          %v9266 = vmax.f32 %v9265, %v8689
          %v9267 = vmax.f32 %v9266, %v8695
          %v9268 = vmax.f32 %v9267, %v8699
          %v9269 = vmax.f32 %v9268, %v8705
          %v9270 = vmax.f32 %v9269, %v8709
          %v9271 = vmax.f32 %v9270, %v8715
          %v9272 = vmax.f32 %v9271, %v8719
          %v9273 = vmax.f32 %v9272, %v8725
          %v9274 = vmax.f32 %v9273, %v8729
          %v9275 = vrot.slane %v9274, 4
          %v9276 = vmax.f32 %v9274, %v9275
          %v9277 = vrot.slane %v9276, 2
          %v9278 = vmax.f32 %v9276, %v9277
          %v9279 = vrot.slane %v9278, 1
          %v9280 = vmax.f32 %v9278, %v9279
          %v9281 = vmax.f32 %v8846, %v8850
          %v9282 = vmax.f32 %v9281, %v8856
          %v9283 = vmax.f32 %v9282, %v8860
          %v9284 = vmax.f32 %v9283, %v8866
          %v9285 = vmax.f32 %v9284, %v8870
          %v9286 = vmax.f32 %v9285, %v8876
          %v9287 = vmax.f32 %v9286, %v8880
          %v9288 = vmax.f32 %v9287, %v8886
          %v9289 = vmax.f32 %v9288, %v8890
          %v9290 = vmax.f32 %v9289, %v8896
          %v9291 = vmax.f32 %v9290, %v8900
          %v9292 = vmax.f32 %v9291, %v8906
          %v9293 = vmax.f32 %v9292, %v8910
          %v9294 = vmax.f32 %v9293, %v8916
          %v9295 = vmax.f32 %v9294, %v8920
          %v9296 = vrot.slane %v9295, 4
          %v9297 = vmax.f32 %v9295, %v9296
          %v9298 = vrot.slane %v9297, 2
          %v9299 = vmax.f32 %v9297, %v9298
          %v9300 = vrot.slane %v9299, 1
          %v9301 = vmax.f32 %v9299, %v9300
          %v9302 = vmax.f32 %v8848, %v8852
          %v9303 = vmax.f32 %v9302, %v8858
          %v9304 = vmax.f32 %v9303, %v8862
          %v9305 = vmax.f32 %v9304, %v8868
          %v9306 = vmax.f32 %v9305, %v8872
          %v9307 = vmax.f32 %v9306, %v8878
          %v9308 = vmax.f32 %v9307, %v8882
          %v9309 = vmax.f32 %v9308, %v8888
          %v9310 = vmax.f32 %v9309, %v8892
          %v9311 = vmax.f32 %v9310, %v8898
          %v9312 = vmax.f32 %v9311, %v8902
          %v9313 = vmax.f32 %v9312, %v8908
          %v9314 = vmax.f32 %v9313, %v8912
          %v9315 = vmax.f32 %v9314, %v8918
          %v9316 = vmax.f32 %v9315, %v8922
          %v9317 = vrot.slane %v9316, 4
          %v9318 = vmax.f32 %v9316, %v9317
          %v9319 = vrot.slane %v9318, 2
          %v9320 = vmax.f32 %v9318, %v9319
          %v9321 = vrot.slane %v9320, 1
          %v9322 = vmax.f32 %v9320, %v9321
          %v9323 = vmax.f32 %v9039, %v9043
          %v9324 = vmax.f32 %v9323, %v9049
          %v9325 = vmax.f32 %v9324, %v9053
          %v9326 = vmax.f32 %v9325, %v9059
          %v9327 = vmax.f32 %v9326, %v9063
          %v9328 = vmax.f32 %v9327, %v9069
          %v9329 = vmax.f32 %v9328, %v9073
          %v9330 = vmax.f32 %v9329, %v9079
          %v9331 = vmax.f32 %v9330, %v9083
          %v9332 = vmax.f32 %v9331, %v9089
          %v9333 = vmax.f32 %v9332, %v9093
          %v9334 = vmax.f32 %v9333, %v9099
          %v9335 = vmax.f32 %v9334, %v9103
          %v9336 = vmax.f32 %v9335, %v9109
          %v9337 = vmax.f32 %v9336, %v9113
          %v9338 = vrot.slane %v9337, 4
          %v9339 = vmax.f32 %v9337, %v9338
          %v9340 = vrot.slane %v9339, 2
          %v9341 = vmax.f32 %v9339, %v9340
          %v9342 = vrot.slane %v9341, 1
          %v9343 = vmax.f32 %v9341, %v9342
          %v9344 = vmax.f32 %v9041, %v9045
          %v9345 = vmax.f32 %v9344, %v9051
          %v9346 = vmax.f32 %v9345, %v9055
          %v9347 = vmax.f32 %v9346, %v9061
          %v9348 = vmax.f32 %v9347, %v9065
          %v9349 = vmax.f32 %v9348, %v9071
          %v9350 = vmax.f32 %v9349, %v9075
          %v9351 = vmax.f32 %v9350, %v9081
          %v9352 = vmax.f32 %v9351, %v9085
          %v9353 = vmax.f32 %v9352, %v9091
          %v9354 = vmax.f32 %v9353, %v9095
          %v9355 = vmax.f32 %v9354, %v9101
          %v9356 = vmax.f32 %v9355, %v9105
          %v9357 = vmax.f32 %v9356, %v9111
          %v9358 = vmax.f32 %v9357, %v9115
          %v9359 = vrot.slane %v9358, 4
          %v9360 = vmax.f32 %v9358, %v9359
          %v9361 = vrot.slane %v9360, 2
          %v9362 = vmax.f32 %v9360, %v9361
          %v9363 = vrot.slane %v9362, 1
          %v9364 = vmax.f32 %v9362, %v9363
          %v9365 = vmax.f32 %v8540, %v8544
          %v9366 = vmax.f32 %v9365, %v8550
          %v9367 = vmax.f32 %v9366, %v8554
          %v9368 = vmax.f32 %v9367, %v8560
          %v9369 = vmax.f32 %v9368, %v8564
          %v9370 = vmax.f32 %v9369, %v8570
          %v9371 = vmax.f32 %v9370, %v8574
          %v9372 = vmax.f32 %v9371, %v8580
          %v9373 = vmax.f32 %v9372, %v8584
          %v9374 = vmax.f32 %v9373, %v8590
          %v9375 = vmax.f32 %v9374, %v8594
          %v9376 = vmax.f32 %v9375, %v8600
          %v9377 = vmax.f32 %v9376, %v8604
          %v9378 = vmax.f32 %v9377, %v8610
          %v9379 = vmax.f32 %v9378, %v8614
          %v9380 = vrot.slane %v9379, 4
          %v9381 = vmax.f32 %v9379, %v9380
          %v9382 = vrot.slane %v9381, 2
          %v9383 = vmax.f32 %v9381, %v9382
          %v9384 = vrot.slane %v9383, 1
          %v9385 = vmax.f32 %v9383, %v9384
          %v9386 = vmax.f32 %v8542, %v8546
          %v9387 = vmax.f32 %v9386, %v8552
          %v9388 = vmax.f32 %v9387, %v8556
          %v9389 = vmax.f32 %v9388, %v8562
          %v9390 = vmax.f32 %v9389, %v8566
          %v9391 = vmax.f32 %v9390, %v8572
          %v9392 = vmax.f32 %v9391, %v8576
          %v9393 = vmax.f32 %v9392, %v8582
          %v9394 = vmax.f32 %v9393, %v8586
          %v9395 = vmax.f32 %v9394, %v8592
          %v9396 = vmax.f32 %v9395, %v8596
          %v9397 = vmax.f32 %v9396, %v8602
          %v9398 = vmax.f32 %v9397, %v8606
          %v9399 = vmax.f32 %v9398, %v8612
          %v9400 = vmax.f32 %v9399, %v8616
          %v9401 = vrot.slane %v9400, 4
          %v9402 = vmax.f32 %v9400, %v9401
          %v9403 = vrot.slane %v9402, 2
          %v9404 = vmax.f32 %v9402, %v9403
          %v9405 = vrot.slane %v9404, 1
          %v9406 = vmax.f32 %v9404, %v9405
          %v9407 = vmax.f32 %v8733, %v8737
          %v9408 = vmax.f32 %v9407, %v8743
          %v9409 = vmax.f32 %v9408, %v8747
          %v9410 = vmax.f32 %v9409, %v8753
          %v9411 = vmax.f32 %v9410, %v8757
          %v9412 = vmax.f32 %v9411, %v8763
          %v9413 = vmax.f32 %v9412, %v8767
          %v9414 = vmax.f32 %v9413, %v8773
          %v9415 = vmax.f32 %v9414, %v8777
          %v9416 = vmax.f32 %v9415, %v8783
          %v9417 = vmax.f32 %v9416, %v8787
          %v9418 = vmax.f32 %v9417, %v8793
          %v9419 = vmax.f32 %v9418, %v8797
          %v9420 = vmax.f32 %v9419, %v8803
          %v9421 = vmax.f32 %v9420, %v8807
          %v9422 = vrot.slane %v9421, 4
          %v9423 = vmax.f32 %v9421, %v9422
          %v9424 = vrot.slane %v9423, 2
          %v9425 = vmax.f32 %v9423, %v9424
          %v9426 = vrot.slane %v9425, 1
          %v9427 = vmax.f32 %v9425, %v9426
          %v9428 = vmax.f32 %v8735, %v8739
          %v9429 = vmax.f32 %v9428, %v8745
          %v9430 = vmax.f32 %v9429, %v8749
          %v9431 = vmax.f32 %v9430, %v8755
          %v9432 = vmax.f32 %v9431, %v8759
          %v9433 = vmax.f32 %v9432, %v8765
          %v9434 = vmax.f32 %v9433, %v8769
          %v9435 = vmax.f32 %v9434, %v8775
          %v9436 = vmax.f32 %v9435, %v8779
          %v9437 = vmax.f32 %v9436, %v8785
          %v9438 = vmax.f32 %v9437, %v8789
          %v9439 = vmax.f32 %v9438, %v8795
          %v9440 = vmax.f32 %v9439, %v8799
          %v9441 = vmax.f32 %v9440, %v8805
          %v9442 = vmax.f32 %v9441, %v8809
          %v9443 = vrot.slane %v9442, 4
          %v9444 = vmax.f32 %v9442, %v9443
          %v9445 = vrot.slane %v9444, 2
          %v9446 = vmax.f32 %v9444, %v9445
          %v9447 = vrot.slane %v9446, 1
          %v9448 = vmax.f32 %v9446, %v9447
          %v9449 = vmax.f32 %v8926, %v8930
          %v9450 = vmax.f32 %v9449, %v8936
          %v9451 = vmax.f32 %v9450, %v8940
          %v9452 = vmax.f32 %v9451, %v8946
          %v9453 = vmax.f32 %v9452, %v8950
          %v9454 = vmax.f32 %v9453, %v8956
          %v9455 = vmax.f32 %v9454, %v8960
          %v9456 = vmax.f32 %v9455, %v8966
          %v9457 = vmax.f32 %v9456, %v8970
          %v9458 = vmax.f32 %v9457, %v8976
          %v9459 = vmax.f32 %v9458, %v8980
          %v9460 = vmax.f32 %v9459, %v8986
          %v9461 = vmax.f32 %v9460, %v8990
          %v9462 = vmax.f32 %v9461, %v8996
          %v9463 = vmax.f32 %v9462, %v9000
          %v9464 = vrot.slane %v9463, 4
          %v9465 = vmax.f32 %v9463, %v9464
          %v9466 = vrot.slane %v9465, 2
          %v9467 = vmax.f32 %v9465, %v9466
          %v9468 = vrot.slane %v9467, 1
          %v9469 = vmax.f32 %v9467, %v9468
          %v9470 = vmax.f32 %v8928, %v8932
          %v9471 = vmax.f32 %v9470, %v8938
          %v9472 = vmax.f32 %v9471, %v8942
          %v9473 = vmax.f32 %v9472, %v8948
          %v9474 = vmax.f32 %v9473, %v8952
          %v9475 = vmax.f32 %v9474, %v8958
          %v9476 = vmax.f32 %v9475, %v8962
          %v9477 = vmax.f32 %v9476, %v8968
          %v9478 = vmax.f32 %v9477, %v8972
          %v9479 = vmax.f32 %v9478, %v8978
          %v9480 = vmax.f32 %v9479, %v8982
          %v9481 = vmax.f32 %v9480, %v8988
          %v9482 = vmax.f32 %v9481, %v8992
          %v9483 = vmax.f32 %v9482, %v8998
          %v9484 = vmax.f32 %v9483, %v9002
          %v9485 = vrot.slane %v9484, 4
          %v9486 = vmax.f32 %v9484, %v9485
          %v9487 = vrot.slane %v9486, 2
          %v9488 = vmax.f32 %v9486, %v9487
          %v9489 = vrot.slane %v9488, 1
          %v9490 = vmax.f32 %v9488, %v9489
          %v9491 = vmax.f32 %v9119, %v9123
          %v9492 = vmax.f32 %v9491, %v9129
          %v9493 = vmax.f32 %v9492, %v9133
          %v9494 = vmax.f32 %v9493, %v9139
          %v9495 = vmax.f32 %v9494, %v9143
          %v9496 = vmax.f32 %v9495, %v9149
          %v9497 = vmax.f32 %v9496, %v9153
          %v9498 = vmax.f32 %v9497, %v9159
          %v9499 = vmax.f32 %v9498, %v9163
          %v9500 = vmax.f32 %v9499, %v9169
          %v9501 = vmax.f32 %v9500, %v9173
          %v9502 = vmax.f32 %v9501, %v9179
          %v9503 = vmax.f32 %v9502, %v9183
          %v9504 = vmax.f32 %v9503, %v9189
          %v9505 = vmax.f32 %v9504, %v9193
          %v9506 = vrot.slane %v9505, 4
          %v9507 = vmax.f32 %v9505, %v9506
          %v9508 = vrot.slane %v9507, 2
          %v9509 = vmax.f32 %v9507, %v9508
          %v9510 = vrot.slane %v9509, 1
          %v9511 = vmax.f32 %v9509, %v9510
          %v9512 = vmax.f32 %v9121, %v9125
          %v9513 = vmax.f32 %v9512, %v9131
          %v9514 = vmax.f32 %v9513, %v9135
          %v9515 = vmax.f32 %v9514, %v9141
          %v9516 = vmax.f32 %v9515, %v9145
          %v9517 = vmax.f32 %v9516, %v9151
          %v9518 = vmax.f32 %v9517, %v9155
          %v9519 = vmax.f32 %v9518, %v9161
          %v9520 = vmax.f32 %v9519, %v9165
          %v9521 = vmax.f32 %v9520, %v9171
          %v9522 = vmax.f32 %v9521, %v9175
          %v9523 = vmax.f32 %v9522, %v9181
          %v9524 = vmax.f32 %v9523, %v9185
          %v9525 = vmax.f32 %v9524, %v9191
          %v9526 = vmax.f32 %v9525, %v9195
          %v9527 = vrot.slane %v9526, 4
          %v9528 = vmax.f32 %v9526, %v9527
          %v9529 = vrot.slane %v9528, 2
          %v9530 = vmax.f32 %v9528, %v9529
          %v9531 = vrot.slane %v9530, 1
          %v9532 = vmax.f32 %v9530, %v9531
          %vm9533 = vcmask 1040384
          %v9534 = vsel %vm9533, %v9217, %v9385
          %v9535 = vsel %vm9533, %v9238, %v9406
          %v9536 = vsel %vm9533, %v9259, %v9427
          %v9537 = vsel %vm9533, %v9280, %v9448
          %v9538 = vsel %vm9533, %v9301, %v9469
          %v9539 = vsel %vm9533, %v9322, %v9490
          %v9540 = vsel %vm9533, %v9343, %v9511
          %v9541 = vsel %vm9533, %v9364, %v9532
          %v9542 = vmax.f32 %v6379, %v9534
          %v9543 = vmax.f32 %v6380, %v9535
          %v9544 = vmax.f32 %v6381, %v9536
          %v9545 = vmax.f32 %v6382, %v9537
          %v9546 = vmax.f32 %v6383, %v9538
          %v9547 = vmax.f32 %v6384, %v9539
          %v9548 = vmax.f32 %v6385, %v9540
          %v9549 = vmax.f32 %v6386, %v9541
        $region172: #{tpu_custom_call.1} parent=111 // loop_footer
          %s6378 = sadd.s32 1, %s6374
        $region173: #{tpu_custom_call.1} parent=111 // loop_footer_branch
          %6373 = sbr.rel target = $region169
        $region174: #{tpu_custom_call.1} parent=111 // loop_exit
          _
        %v9558 = vcombine.low %v6379, %v6380
        %v9559 = vcombine.low %v6381, %v6382
        %v9561 = vunpack.c.l.s4 1983009808
        %v9562 = vunpack.c.0.s8 %v9561
        %v9563 = vlaneseq
        %v9564 = vshrl.u32 %v9563, 7
        %v9565 = vsub.s32 %v9562, %v9564
        %v9566 = vrot.slane %v9558, %v9565
        %v9568 = vunpack.c.l.s4 1983009808
        %v9569 = vunpack.c.0.s8 %v9568
        %v9570 = vlaneseq
        %v9571 = vshrl.u32 %v9570, 7
        %v9572 = vsub.s32 %v9569, %v9571
        %v9573 = vrot.slane %v9559, %v9572
        %v9574 = vcombine.low %v9566, %v9573
        %v9575 = vcombine.low %v6383, %v6384
        %v9576 = vcombine.low %v6385, %v6386
        %v9578 = vunpack.c.l.s4 1983009808
        %v9579 = vunpack.c.0.s8 %v9578
        %v9580 = vlaneseq
        %v9581 = vshrl.u32 %v9580, 7
        %v9582 = vsub.s32 %v9579, %v9581
        %v9583 = vrot.slane %v9575, %v9582
        %v9585 = vunpack.c.l.s4 1983009808
        %v9586 = vunpack.c.0.s8 %v9585
        %v9587 = vlaneseq
        %v9588 = vshrl.u32 %v9587, 7
        %v9589 = vsub.s32 %v9586, %v9588
        %v9590 = vrot.slane %v9576, %v9589
        %v9591 = vcombine.low %v9583, %v9590
        %9594 = vst [vmem:[%s898] sm:$0xff] %v9574
        %9595 = vst [vmem:[%s898 + $0x8] sm:$0xff] %v9591
        %s9596 = sand.u32 %s545, 1
        %s9597 = scalar_lea.sflag [#allocation4], %s9596
        %s9598 = sand.u32 %s545, 1
        %s9599 = smul.addr %s9598, 16
        %s9600 = scalar_lea.vmem [#allocation22], %s9599
        %s9601 = sand.u32 %s571, 1
        %s9602 = scalar_lea.sflag [#allocation24], %s9601
        %s9603 = sand.u32 %s571, 1
        %s9604 = smul.addr %s9603, 2
        %s9605 = scalar_lea.vmem [#allocation23], %s9604
        // Predicated region
        $region175: #{tpu_custom_call.1} parent=111 // pred_check
          %p9606 = pneg %p555
        $region176: #{tpu_custom_call.1} parent=111 // pred_check_branch
          %9608 = sbr.rel (%p9606) target = $region178
        $region177: #{tpu_custom_call.1} parent=111 // pred_region
          %s9610 = ssub.s32 256, 256
          %9611 = vsyncadd %s9597, %s9610
          %s9612 = smul.addr %s49, 8
          %s9613 = smul.addr %s9612, 32
          %s9614 = scalar_lea.hbm %s23, %s9613
          %s9616 = sshll.u32 %s9600, 4
          %s9617 = int_to_ptr.vmem [resolvable:$true] %s9616
          %9619 = dma.vmem_to_hbm [thread:$0]  %s9617, 256, %s9614, %s9597
        $region178: #{tpu_custom_call.1} parent=111 // pred_fallthru
          _
        // Predicated region
        $region179: #{tpu_custom_call.1} parent=111 // pred_check
          %p9620 = pneg %p581
        $region180: #{tpu_custom_call.1} parent=111 // pred_check_branch
          %9622 = sbr.rel (%p9620) target = $region182
        $region181: #{tpu_custom_call.1} parent=111 // pred_region
          %s9624 = ssub.s32 32, 32
          %9625 = vsyncadd %s9602, %s9624
          %s9626 = smul.addr %s49, 32
          %s9627 = scalar_lea.hbm %s24, %s9626
          %s9629 = sshll.u32 %s9605, 4
          %s9630 = int_to_ptr.vmem [resolvable:$true] %s9629
          %9632 = dma.vmem_to_hbm [thread:$0]  %s9630, 32, %s9627, %s9602
        $region182: #{tpu_custom_call.1} parent=111 // pred_fallthru
          _
      $region112: #{tpu_custom_call.1} parent=5 // pred_fallthru
        _
      %p9633 = scmp.le.s32.totalorder 2, %s44
      // Predicated region
      $region183: #{tpu_custom_call.1} parent=5 // pred_check
        %p9634 = pneg %p9633
      $region184: #{tpu_custom_call.1} parent=5 // pred_check_branch
        %9636 = sbr.rel (%p9634) target = $region186
      $region185: #{tpu_custom_call.1} parent=5 // pred_region
        %s9637 = ssub.s32 %s44, 2
        // Predicated region
        $region187: #{tpu_custom_call.1} parent=185 // pred_check
          %p9638 = pneg %p561
        $region188: #{tpu_custom_call.1} parent=185 // pred_check_branch
          %9640 = sbr.rel (%p9638) target = $region190
        $region189: #{tpu_custom_call.1} parent=185 // pred_region
          %s9641 = sand.u32 %s546, 1
          %s9642 = scalar_lea.sflag [#allocation4], %s9641
          %s9643 = sand.u32 %s546, 1
          %s9644 = smul.addr %s9643, 16
          %s9645 = scalar_lea.vmem [#allocation22], %s9644
          %9646 = dma.done %s9642, 256
        $region190: #{tpu_custom_call.1} parent=185 // pred_fallthru
          _
        // Predicated region
        $region191: #{tpu_custom_call.1} parent=185 // pred_check
          %p9647 = pneg %p587
        $region192: #{tpu_custom_call.1} parent=185 // pred_check_branch
          %9649 = sbr.rel (%p9647) target = $region194
        $region193: #{tpu_custom_call.1} parent=185 // pred_region
          %s9650 = sand.u32 %s572, 1
          %s9651 = scalar_lea.sflag [#allocation24], %s9650
          %s9652 = sand.u32 %s572, 1
          %s9653 = smul.addr %s9652, 2
          %s9654 = scalar_lea.vmem [#allocation23], %s9653
          %9655 = dma.done %s9651, 32
        $region194: #{tpu_custom_call.1} parent=185 // pred_fallthru
          _
      $region186: #{tpu_custom_call.1} parent=5 // pred_fallthru
        _
    $region6: #{tpu_custom_call.1} parent=1 // loop_footer
      %s48 = sadd.s32 1, %s44
    $region7: #{tpu_custom_call.1} parent=1 // loop_footer_branch
      %43 = sbr.rel target = $region3
    $region8: #{tpu_custom_call.1} parent=1 // loop_exit
      _
    %9656 = vsyncpa [#allocation3], 1
    %s9657 = scalar_lea.sflag [#allocation3], 1
    %9658 = vsyncpa %s9657, 1
    %9659 = vsyncpa [#allocation6], 1
    %9660 = vsyncpa [#allocation9], 1
    %9661 = vsyncpa [#allocation12], 1
    %9662 = vsyncpa [#allocation15], 1
    %9663 = vsyncpa [#allocation18], 1
    %9664 = vsyncpa [#allocation21], 1
    %9665 = vsyncpa [#allocation4], 1
    %s9666 = scalar_lea.sflag [#allocation4], 1
    %9667 = vsyncpa %s9666, 1
    %9668 = vsyncpa [#allocation24], 1
    %s9669 = scalar_lea.sflag [#allocation24], 1
    %9670 = vsyncpa %s9669, 1

</llo_original>
